<compile_context>
chip_gen: v5e
topology: v5e:2x2
jax: 0.10.0
libtpu: 0.0.40
codegen_flags: <defaults>
</compile_context>

<pallas_src>
import jax
import jax.numpy as jnp
from jax.experimental import pallas as pl
from jax.experimental.pallas import tpu as pltpu

# ---------------- model dimensions (small, consistent with the module) -----
B = 2                      # batch
CIN = 1                    # conv input channels (MNIST-like)
H = W = 28                 # spatial (28x28 -> AdaptiveMaxPool2d((14,14)) == MaxPool2d(2))
CONV_CH = 8                # conv_channels
HIDDEN = 100               # fc1 out_features
NUM_CLASSES = 10           # fc2 out_features
POOL = 14                  # pooled spatial size
FC1_IN = CONV_CH * POOL * POOL
PROWS = POOL * B           # 28 pooled rows, index = ph*B + b
PCOLS = CONV_CH * POOL     # 112 pooled cols, index = c*POOL + pw


# ---------------- fused Pallas kernel ---------------------------------------
def fused_kernel(xq_ref, wc_ref, bc_ref, w1_ref, b1_ref, w2_ref, b2_ref,
                 o_ref, pooled_ref):
    # xq_ref : (4, 2*15, 15) VMEM  parity planes of the padded input:
    #          xq[2*pi+pj, u*B+b, v] = xpad[b, 2u+pi, 2v+pj]
    # wc_ref : (CONV_CH, 9) SMEM   conv taps, dy-major
    # bc_ref : (CONV_CH,)  SMEM    conv bias
    # w1_ref : (POOL, PCOLS, HIDDEN) VMEM   fc1 weight, permuted at init
    # b1_ref : (1, HIDDEN) VMEM
    # w2_ref : (HIDDEN, NUM_CLASSES) VMEM
    # b2_ref : (1, NUM_CLASSES) VMEM
    # o_ref  : (B, NUM_CLASSES) VMEM output
    # pooled_ref : (PROWS, PCOLS) VMEM scratch (pooled activations)

    planes = [xq_ref[p] for p in range(4)]                 # each (30, 15)

    # 16 stride-2 shifted views of the padded input:
    #   S[r, s][ph*B + b, pw] = xpad[b, 2*ph + r, 2*pw + s]
    S = {}
    for r in range(4):
        for s in range(4):
            pln = planes[2 * (r % 2) + (s % 2)]
            S[(r, s)] = pln[(r // 2) * B:(r // 2) * B + PROWS,
                            (s // 2):(s // 2) + POOL]

    # conv(3x3, pad=1) + tanh + 2x2 max-pool, one output channel at a time
    # (VPU path: 9 scalar FMAs per pooling phase; scalars come from SMEM).
    for c in range(CONV_CH):
        wts = [wc_ref[c, t] for t in range(9)]
        bias = bc_ref[c]
        pooled_c = None
        for i in (0, 1):                                   # pooling phase (row)
            for j in (0, 1):                               # pooling phase (col)
                acc = S[(i, j)] * wts[0]
                for t in range(1, 9):
                    dy, dx = divmod(t, 3)
                    acc = acc + S[(i + dy, j + dx)] * wts[t]
                y_ij = jnp.tanh(acc + bias)                # (PROWS, POOL)
                pooled_c = y_ij if pooled_c is None else jnp.maximum(pooled_c, y_ij)
        pooled_ref[:, c * POOL:(c + 1) * POOL] = pooled_c  # lane block c

    # fc1 (+bias, ReLU) as POOL accumulated matmuls over the pooled-row index,
    # then fc2.  w1 was permuted at init so no activation reshuffle is needed.
    h = jnp.zeros((B, HIDDEN), jnp.float32)
    for ph in range(POOL):
        lhs = pooled_ref[pl.ds(ph * B, B), :]              # (B, PCOLS)
        h = h + jnp.dot(lhs, w1_ref[ph], preferred_element_type=jnp.float32)
    h = jnp.maximum(h + b1_ref[...], 0.0)
    o_ref[...] = (jnp.dot(h, w2_ref[...], preferred_element_type=jnp.float32)
                  + b2_ref[...])


_VMEM = pl.BlockSpec(memory_space=pltpu.MemorySpace.VMEM)
_SMEM = pl.BlockSpec(memory_space=pltpu.MemorySpace.SMEM)


def fused_forward(xq, wc9, bc, w1r, b1r, w2r, b2r):
    return pl.pallas_call(
        fused_kernel,
        out_shape=jax.ShapeDtypeStruct((B, NUM_CLASSES), jnp.float32),
        in_specs=[_VMEM, _SMEM, _SMEM, _VMEM, _VMEM, _VMEM, _VMEM],
        out_specs=_VMEM,
        scratch_shapes=[pltpu.VMEM((PROWS, PCOLS), jnp.float32)],
        compiler_params=pltpu.CompilerParams(vmem_limit_bytes=8 * 1024 * 1024),
        cost_estimate=pl.CostEstimate(flops=900_000,
                                      transcendentals=B * CONV_CH * H * W,
                                      bytes_accessed=700_000),
    )(xq, wc9, bc, w1r, b1r, w2r, b2r)


# ---------------- params (torch layout) + one-time packing ------------------
def init_params(key):
    ks = jax.random.split(key, 6)
    wc = jax.random.normal(ks[0], (CONV_CH, CIN, 3, 3), jnp.float32) * 0.1
    bc = jax.random.normal(ks[1], (CONV_CH,), jnp.float32) * 0.1
    w1 = jax.random.normal(ks[2], (HIDDEN, FC1_IN), jnp.float32) * 0.02
    b1 = jax.random.normal(ks[3], (HIDDEN,), jnp.float32) * 0.02
    w2 = jax.random.normal(ks[4], (NUM_CLASSES, HIDDEN), jnp.float32) * 0.05
    b2 = jax.random.normal(ks[5], (NUM_CLASSES,), jnp.float32) * 0.05
    return dict(wc=wc, bc=bc, w1=w1, b1=b1, w2=w2, b2=b2)


def pack_params(params):
    # One-time (init-time) rearrangement: forward() never touches weight layout.
    wc9 = params["wc"].reshape(CONV_CH, 9)                       # (8, 9), dy-major taps
    bc = params["bc"]                                            # (8,)
    # fc1 weight: torch flatten order is c*196 + ph*14 + pw; permute to
    # [ph, c*14+pw, n] to match the kernel's pooled layout.
    w1r = (params["w1"].T                                        # (1568, 100)
           .reshape(CONV_CH, POOL, POOL, HIDDEN)                 # [c, ph, pw, n]
           .transpose(1, 0, 2, 3)                                # [ph, c, pw, n]
           .reshape(POOL, PCOLS, HIDDEN))                        # (14, 112, 100)
    b1r = params["b1"].reshape(1, HIDDEN)
    w2r = params["w2"].T                                         # (100, 10)
    b2r = params["b2"].reshape(1, NUM_CLASSES)
    return dict(wc9=wc9, bc=bc, w1r=w1r, b1r=b1r, w2r=w2r, b2r=b2r)


# ---------------- forward ----------------------------------------------------
def forward(x, packed):
    # x: (B, 1, 28, 28) NCHW float32
    # pad=1 and parity (space-to-depth) split: 3 tiny XLA ops on a ~7 KB tensor.
    xpad = jnp.pad(x[:, 0], ((0, 0), (1, 1), (1, 1)))            # (B, 30, 30)
    xq = (xpad.reshape(B, 15, 2, 15, 2)                          # [b, u, pi, v, pj]
              .transpose(2, 4, 1, 0, 3)                          # [pi, pj, u, b, v]
              .reshape(4, 15 * B, 15))                           # (4, 30, 15)
    # TODO(synk): symmetric_padding(x, prd=1) and LaterallyConnectedLayer3 (lcl)
    # sources were not provided with the module; applied here as identity.
    return fused_forward(xq, packed["wc9"], packed["bc"], packed["w1r"],
                         packed["b1r"], packed["w2r"], packed["b2r"])


# ---------------- pure-JAX reference (torch semantics) ----------------------
def forward_ref(x, params):
    y = jax.lax.conv_general_dilated(
        x, params["wc"], window_strides=(1, 1), padding=((1, 1), (1, 1)),
        dimension_numbers=("NCHW", "OIHW", "NCHW"))
    y = jnp.tanh(y + params["bc"][None, :, None, None])
    y = y.reshape(B, CONV_CH, POOL, 2, POOL, 2).max(axis=(3, 5))
    y = y.reshape(B, FC1_IN)
    h = jnp.maximum(y @ params["w1"].T + params["b1"], 0.0)
    return h @ params["w2"].T + params["b2"]


if __name__ == "__main__":
    key = jax.random.PRNGKey(0)
    kx, kp = jax.random.split(key)
    x = jax.random.normal(kx, (B, CIN, H, W), jnp.float32)
    params = init_params(kp)        # torch-layout weights
    packed = pack_params(params)    # one-time packing (init-time)

    fwd = jax.jit(forward)
    out = jax.block_until_ready(fwd(x, packed))

    ref = forward_ref(x, params)
    assert out.shape == (B, NUM_CLASSES)
    assert jnp.allclose(out, ref, atol=1e-4, rtol=1e-4), "mismatch vs JAX reference"
    print("KERNEL_OK")
</pallas_src>

<mosaic_0001>
module attributes {stable_mosaic.version = 11 : i64} {
  func.func @fused_kernel(%arg0: memref<4x30x15xf32, #tpu.memory_space<vmem>>, %arg1: memref<8x9xf32, #tpu.memory_space<smem>>, %arg2: memref<8xf32, #tpu.memory_space<smem>>, %arg3: memref<14x112x100xf32, #tpu.memory_space<vmem>>, %arg4: memref<1x100xf32, #tpu.memory_space<vmem>>, %arg5: memref<100x10xf32, #tpu.memory_space<vmem>>, %arg6: memref<1x10xf32, #tpu.memory_space<vmem>>, %arg7: memref<2x10xf32, #tpu.memory_space<vmem>>, %arg8: memref<28x112xf32, #tpu.memory_space<vmem>>) attributes {dimension_semantics = [], scalar_prefetch = 0 : i64, scratch_operands = 1 : i64, tpu.core_type = #tpu.core_type<tc>} {
    %c0 = arith.constant 0 : index
    %c0_0 = arith.constant 0 : index
    %c0_1 = arith.constant 0 : index
    %0 = vector.load %arg0[%c0, %c0_0, %c0_1] : memref<4x30x15xf32, #tpu.memory_space<vmem>>, vector<1x30x15xf32>
    %1 = vector.shape_cast %0 : vector<1x30x15xf32> to vector<30x15xf32>
    %c1 = arith.constant 1 : index
    %c0_2 = arith.constant 0 : index
    %c0_3 = arith.constant 0 : index
    %2 = vector.load %arg0[%c1, %c0_2, %c0_3] : memref<4x30x15xf32, #tpu.memory_space<vmem>>, vector<1x30x15xf32>
    %3 = vector.shape_cast %2 : vector<1x30x15xf32> to vector<30x15xf32>
    %c2 = arith.constant 2 : index
    %c0_4 = arith.constant 0 : index
    %c0_5 = arith.constant 0 : index
    %4 = vector.load %arg0[%c2, %c0_4, %c0_5] : memref<4x30x15xf32, #tpu.memory_space<vmem>>, vector<1x30x15xf32>
    %5 = vector.shape_cast %4 : vector<1x30x15xf32> to vector<30x15xf32>
    %c3 = arith.constant 3 : index
    %c0_6 = arith.constant 0 : index
    %c0_7 = arith.constant 0 : index
    %6 = vector.load %arg0[%c3, %c0_6, %c0_7] : memref<4x30x15xf32, #tpu.memory_space<vmem>>, vector<1x30x15xf32>
    %7 = vector.shape_cast %6 : vector<1x30x15xf32> to vector<30x15xf32>
    %8 = vector.extract_strided_slice %1 {offsets = [0, 0], sizes = [28, 14], strides = [1, 1]} : vector<30x15xf32> to vector<28x14xf32>
    %9 = vector.extract_strided_slice %3 {offsets = [0, 0], sizes = [28, 14], strides = [1, 1]} : vector<30x15xf32> to vector<28x14xf32>
    %10 = vector.extract_strided_slice %1 {offsets = [0, 1], sizes = [28, 14], strides = [1, 1]} : vector<30x15xf32> to vector<28x14xf32>
    %11 = vector.extract_strided_slice %3 {offsets = [0, 1], sizes = [28, 14], strides = [1, 1]} : vector<30x15xf32> to vector<28x14xf32>
    %12 = vector.extract_strided_slice %5 {offsets = [0, 0], sizes = [28, 14], strides = [1, 1]} : vector<30x15xf32> to vector<28x14xf32>
    %13 = vector.extract_strided_slice %7 {offsets = [0, 0], sizes = [28, 14], strides = [1, 1]} : vector<30x15xf32> to vector<28x14xf32>
    %14 = vector.extract_strided_slice %5 {offsets = [0, 1], sizes = [28, 14], strides = [1, 1]} : vector<30x15xf32> to vector<28x14xf32>
    %15 = vector.extract_strided_slice %7 {offsets = [0, 1], sizes = [28, 14], strides = [1, 1]} : vector<30x15xf32> to vector<28x14xf32>
    %16 = vector.extract_strided_slice %1 {offsets = [2, 0], sizes = [28, 14], strides = [1, 1]} : vector<30x15xf32> to vector<28x14xf32>
    %17 = vector.extract_strided_slice %3 {offsets = [2, 0], sizes = [28, 14], strides = [1, 1]} : vector<30x15xf32> to vector<28x14xf32>
    %18 = vector.extract_strided_slice %1 {offsets = [2, 1], sizes = [28, 14], strides = [1, 1]} : vector<30x15xf32> to vector<28x14xf32>
    %19 = vector.extract_strided_slice %3 {offsets = [2, 1], sizes = [28, 14], strides = [1, 1]} : vector<30x15xf32> to vector<28x14xf32>
    %20 = vector.extract_strided_slice %5 {offsets = [2, 0], sizes = [28, 14], strides = [1, 1]} : vector<30x15xf32> to vector<28x14xf32>
    %21 = vector.extract_strided_slice %7 {offsets = [2, 0], sizes = [28, 14], strides = [1, 1]} : vector<30x15xf32> to vector<28x14xf32>
    %22 = vector.extract_strided_slice %5 {offsets = [2, 1], sizes = [28, 14], strides = [1, 1]} : vector<30x15xf32> to vector<28x14xf32>
    %23 = vector.extract_strided_slice %7 {offsets = [2, 1], sizes = [28, 14], strides = [1, 1]} : vector<30x15xf32> to vector<28x14xf32>
    %c0_8 = arith.constant 0 : index
    %c0_9 = arith.constant 0 : index
    %24 = memref.load %arg1[%c0_8, %c0_9] : memref<8x9xf32, #tpu.memory_space<smem>>
    %c0_10 = arith.constant 0 : index
    %c1_11 = arith.constant 1 : index
    %25 = memref.load %arg1[%c0_10, %c1_11] : memref<8x9xf32, #tpu.memory_space<smem>>
    %c0_12 = arith.constant 0 : index
    %c2_13 = arith.constant 2 : index
    %26 = memref.load %arg1[%c0_12, %c2_13] : memref<8x9xf32, #tpu.memory_space<smem>>
    %c0_14 = arith.constant 0 : index
    %c3_15 = arith.constant 3 : index
    %27 = memref.load %arg1[%c0_14, %c3_15] : memref<8x9xf32, #tpu.memory_space<smem>>
    %c0_16 = arith.constant 0 : index
    %c4 = arith.constant 4 : index
    %28 = memref.load %arg1[%c0_16, %c4] : memref<8x9xf32, #tpu.memory_space<smem>>
    %c0_17 = arith.constant 0 : index
    %c5 = arith.constant 5 : index
    %29 = memref.load %arg1[%c0_17, %c5] : memref<8x9xf32, #tpu.memory_space<smem>>
    %c0_18 = arith.constant 0 : index
    %c6 = arith.constant 6 : index
    %30 = memref.load %arg1[%c0_18, %c6] : memref<8x9xf32, #tpu.memory_space<smem>>
    %c0_19 = arith.constant 0 : index
    %c7 = arith.constant 7 : index
    %31 = memref.load %arg1[%c0_19, %c7] : memref<8x9xf32, #tpu.memory_space<smem>>
    %c0_20 = arith.constant 0 : index
    %c8 = arith.constant 8 : index
    %32 = memref.load %arg1[%c0_20, %c8] : memref<8x9xf32, #tpu.memory_space<smem>>
    %c0_21 = arith.constant 0 : index
    %33 = memref.load %arg2[%c0_21] : memref<8xf32, #tpu.memory_space<smem>>
    %34 = vector.broadcast %24 : f32 to vector<28x14xf32>
    %35 = arith.mulf %8, %34 : vector<28x14xf32>
    %36 = vector.broadcast %25 : f32 to vector<28x14xf32>
    %37 = arith.mulf %9, %36 : vector<28x14xf32>
    %38 = arith.addf %35, %37 : vector<28x14xf32>
    %39 = vector.broadcast %26 : f32 to vector<28x14xf32>
    %40 = arith.mulf %10, %39 : vector<28x14xf32>
    %41 = arith.addf %38, %40 : vector<28x14xf32>
    %42 = vector.broadcast %27 : f32 to vector<28x14xf32>
    %43 = arith.mulf %12, %42 : vector<28x14xf32>
    %44 = arith.addf %41, %43 : vector<28x14xf32>
    %45 = vector.broadcast %28 : f32 to vector<28x14xf32>
    %46 = arith.mulf %13, %45 : vector<28x14xf32>
    %47 = arith.addf %44, %46 : vector<28x14xf32>
    %48 = vector.broadcast %29 : f32 to vector<28x14xf32>
    %49 = arith.mulf %14, %48 : vector<28x14xf32>
    %50 = arith.addf %47, %49 : vector<28x14xf32>
    %51 = vector.broadcast %30 : f32 to vector<28x14xf32>
    %52 = arith.mulf %16, %51 : vector<28x14xf32>
    %53 = arith.addf %50, %52 : vector<28x14xf32>
    %54 = vector.broadcast %31 : f32 to vector<28x14xf32>
    %55 = arith.mulf %17, %54 : vector<28x14xf32>
    %56 = arith.addf %53, %55 : vector<28x14xf32>
    %57 = vector.broadcast %32 : f32 to vector<28x14xf32>
    %58 = arith.mulf %18, %57 : vector<28x14xf32>
    %59 = arith.addf %56, %58 : vector<28x14xf32>
    %60 = vector.broadcast %33 : f32 to vector<28x14xf32>
    %61 = arith.addf %59, %60 : vector<28x14xf32>
    %62 = math.tanh %61 : vector<28x14xf32>
    %63 = vector.broadcast %24 : f32 to vector<28x14xf32>
    %64 = arith.mulf %9, %63 : vector<28x14xf32>
    %65 = vector.broadcast %25 : f32 to vector<28x14xf32>
    %66 = arith.mulf %10, %65 : vector<28x14xf32>
    %67 = arith.addf %64, %66 : vector<28x14xf32>
    %68 = vector.broadcast %26 : f32 to vector<28x14xf32>
    %69 = arith.mulf %11, %68 : vector<28x14xf32>
    %70 = arith.addf %67, %69 : vector<28x14xf32>
    %71 = vector.broadcast %27 : f32 to vector<28x14xf32>
    %72 = arith.mulf %13, %71 : vector<28x14xf32>
    %73 = arith.addf %70, %72 : vector<28x14xf32>
    %74 = vector.broadcast %28 : f32 to vector<28x14xf32>
    %75 = arith.mulf %14, %74 : vector<28x14xf32>
    %76 = arith.addf %73, %75 : vector<28x14xf32>
    %77 = vector.broadcast %29 : f32 to vector<28x14xf32>
    %78 = arith.mulf %15, %77 : vector<28x14xf32>
    %79 = arith.addf %76, %78 : vector<28x14xf32>
    %80 = vector.broadcast %30 : f32 to vector<28x14xf32>
    %81 = arith.mulf %17, %80 : vector<28x14xf32>
    %82 = arith.addf %79, %81 : vector<28x14xf32>
    %83 = vector.broadcast %31 : f32 to vector<28x14xf32>
    %84 = arith.mulf %18, %83 : vector<28x14xf32>
    %85 = arith.addf %82, %84 : vector<28x14xf32>
    %86 = vector.broadcast %32 : f32 to vector<28x14xf32>
    %87 = arith.mulf %19, %86 : vector<28x14xf32>
    %88 = arith.addf %85, %87 : vector<28x14xf32>
    %89 = vector.broadcast %33 : f32 to vector<28x14xf32>
    %90 = arith.addf %88, %89 : vector<28x14xf32>
    %91 = math.tanh %90 : vector<28x14xf32>
    %92 = arith.maximumf %62, %91 : vector<28x14xf32>
    %93 = vector.broadcast %24 : f32 to vector<28x14xf32>
    %94 = arith.mulf %12, %93 : vector<28x14xf32>
    %95 = vector.broadcast %25 : f32 to vector<28x14xf32>
    %96 = arith.mulf %13, %95 : vector<28x14xf32>
    %97 = arith.addf %94, %96 : vector<28x14xf32>
    %98 = vector.broadcast %26 : f32 to vector<28x14xf32>
    %99 = arith.mulf %14, %98 : vector<28x14xf32>
    %100 = arith.addf %97, %99 : vector<28x14xf32>
    %101 = vector.broadcast %27 : f32 to vector<28x14xf32>
    %102 = arith.mulf %16, %101 : vector<28x14xf32>
    %103 = arith.addf %100, %102 : vector<28x14xf32>
    %104 = vector.broadcast %28 : f32 to vector<28x14xf32>
    %105 = arith.mulf %17, %104 : vector<28x14xf32>
    %106 = arith.addf %103, %105 : vector<28x14xf32>
    %107 = vector.broadcast %29 : f32 to vector<28x14xf32>
    %108 = arith.mulf %18, %107 : vector<28x14xf32>
    %109 = arith.addf %106, %108 : vector<28x14xf32>
    %110 = vector.broadcast %30 : f32 to vector<28x14xf32>
    %111 = arith.mulf %20, %110 : vector<28x14xf32>
    %112 = arith.addf %109, %111 : vector<28x14xf32>
    %113 = vector.broadcast %31 : f32 to vector<28x14xf32>
    %114 = arith.mulf %21, %113 : vector<28x14xf32>
    %115 = arith.addf %112, %114 : vector<28x14xf32>
    %116 = vector.broadcast %32 : f32 to vector<28x14xf32>
    %117 = arith.mulf %22, %116 : vector<28x14xf32>
    %118 = arith.addf %115, %117 : vector<28x14xf32>
    %119 = vector.broadcast %33 : f32 to vector<28x14xf32>
    %120 = arith.addf %118, %119 : vector<28x14xf32>
    %121 = math.tanh %120 : vector<28x14xf32>
    %122 = arith.maximumf %92, %121 : vector<28x14xf32>
    %123 = vector.broadcast %24 : f32 to vector<28x14xf32>
    %124 = arith.mulf %13, %123 : vector<28x14xf32>
    %125 = vector.broadcast %25 : f32 to vector<28x14xf32>
    %126 = arith.mulf %14, %125 : vector<28x14xf32>
    %127 = arith.addf %124, %126 : vector<28x14xf32>
    %128 = vector.broadcast %26 : f32 to vector<28x14xf32>
    %129 = arith.mulf %15, %128 : vector<28x14xf32>
    %130 = arith.addf %127, %129 : vector<28x14xf32>
    %131 = vector.broadcast %27 : f32 to vector<28x14xf32>
    %132 = arith.mulf %17, %131 : vector<28x14xf32>
    %133 = arith.addf %130, %132 : vector<28x14xf32>
    %134 = vector.broadcast %28 : f32 to vector<28x14xf32>
    %135 = arith.mulf %18, %134 : vector<28x14xf32>
    %136 = arith.addf %133, %135 : vector<28x14xf32>
    %137 = vector.broadcast %29 : f32 to vector<28x14xf32>
    %138 = arith.mulf %19, %137 : vector<28x14xf32>
    %139 = arith.addf %136, %138 : vector<28x14xf32>
    %140 = vector.broadcast %30 : f32 to vector<28x14xf32>
    %141 = arith.mulf %21, %140 : vector<28x14xf32>
    %142 = arith.addf %139, %141 : vector<28x14xf32>
    %143 = vector.broadcast %31 : f32 to vector<28x14xf32>
    %144 = arith.mulf %22, %143 : vector<28x14xf32>
    %145 = arith.addf %142, %144 : vector<28x14xf32>
    %146 = vector.broadcast %32 : f32 to vector<28x14xf32>
    %147 = arith.mulf %23, %146 : vector<28x14xf32>
    %148 = arith.addf %145, %147 : vector<28x14xf32>
    %149 = vector.broadcast %33 : f32 to vector<28x14xf32>
    %150 = arith.addf %148, %149 : vector<28x14xf32>
    %151 = math.tanh %150 : vector<28x14xf32>
    %152 = arith.maximumf %122, %151 : vector<28x14xf32>
    %c0_22 = arith.constant 0 : index
    %c0_23 = arith.constant 0 : index
    %153 = vector.load %arg8[%c0_22, %c0_23] : memref<28x112xf32, #tpu.memory_space<vmem>>, vector<28x14xf32>
    tpu.vector_store %arg8[%c0_22, %c0_23], %152 {strides = array<i32>} : memref<28x112xf32, #tpu.memory_space<vmem>>, vector<28x14xf32>,
    %c1_24 = arith.constant 1 : index
    %c0_25 = arith.constant 0 : index
    %154 = memref.load %arg1[%c1_24, %c0_25] : memref<8x9xf32, #tpu.memory_space<smem>>
    %c1_26 = arith.constant 1 : index
    %c1_27 = arith.constant 1 : index
    %155 = memref.load %arg1[%c1_26, %c1_27] : memref<8x9xf32, #tpu.memory_space<smem>>
    %c1_28 = arith.constant 1 : index
    %c2_29 = arith.constant 2 : index
    %156 = memref.load %arg1[%c1_28, %c2_29] : memref<8x9xf32, #tpu.memory_space<smem>>
    %c1_30 = arith.constant 1 : index
    %c3_31 = arith.constant 3 : index
    %157 = memref.load %arg1[%c1_30, %c3_31] : memref<8x9xf32, #tpu.memory_space<smem>>
    %c1_32 = arith.constant 1 : index
    %c4_33 = arith.constant 4 : index
    %158 = memref.load %arg1[%c1_32, %c4_33] : memref<8x9xf32, #tpu.memory_space<smem>>
    %c1_34 = arith.constant 1 : index
    %c5_35 = arith.constant 5 : index
    %159 = memref.load %arg1[%c1_34, %c5_35] : memref<8x9xf32, #tpu.memory_space<smem>>
    %c1_36 = arith.constant 1 : index
    %c6_37 = arith.constant 6 : index
    %160 = memref.load %arg1[%c1_36, %c6_37] : memref<8x9xf32, #tpu.memory_space<smem>>
    %c1_38 = arith.constant 1 : index
    %c7_39 = arith.constant 7 : index
    %161 = memref.load %arg1[%c1_38, %c7_39] : memref<8x9xf32, #tpu.memory_space<smem>>
    %c1_40 = arith.constant 1 : index
    %c8_41 = arith.constant 8 : index
    %162 = memref.load %arg1[%c1_40, %c8_41] : memref<8x9xf32, #tpu.memory_space<smem>>
    %c1_42 = arith.constant 1 : index
    %163 = memref.load %arg2[%c1_42] : memref<8xf32, #tpu.memory_space<smem>>
    %164 = vector.broadcast %154 : f32 to vector<28x14xf32>
    %165 = arith.mulf %8, %164 : vector<28x14xf32>
    %166 = vector.broadcast %155 : f32 to vector<28x14xf32>
    %167 = arith.mulf %9, %166 : vector<28x14xf32>
    %168 = arith.addf %165, %167 : vector<28x14xf32>
    %169 = vector.broadcast %156 : f32 to vector<28x14xf32>
    %170 = arith.mulf %10, %169 : vector<28x14xf32>
    %171 = arith.addf %168, %170 : vector<28x14xf32>
    %172 = vector.broadcast %157 : f32 to vector<28x14xf32>
    %173 = arith.mulf %12, %172 : vector<28x14xf32>
    %174 = arith.addf %171, %173 : vector<28x14xf32>
    %175 = vector.broadcast %158 : f32 to vector<28x14xf32>
    %176 = arith.mulf %13, %175 : vector<28x14xf32>
    %177 = arith.addf %174, %176 : vector<28x14xf32>
    %178 = vector.broadcast %159 : f32 to vector<28x14xf32>
    %179 = arith.mulf %14, %178 : vector<28x14xf32>
    %180 = arith.addf %177, %179 : vector<28x14xf32>
    %181 = vector.broadcast %160 : f32 to vector<28x14xf32>
    %182 = arith.mulf %16, %181 : vector<28x14xf32>
    %183 = arith.addf %180, %182 : vector<28x14xf32>
    %184 = vector.broadcast %161 : f32 to vector<28x14xf32>
    %185 = arith.mulf %17, %184 : vector<28x14xf32>
    %186 = arith.addf %183, %185 : vector<28x14xf32>
    %187 = vector.broadcast %162 : f32 to vector<28x14xf32>
    %188 = arith.mulf %18, %187 : vector<28x14xf32>
    %189 = arith.addf %186, %188 : vector<28x14xf32>
    %190 = vector.broadcast %163 : f32 to vector<28x14xf32>
    %191 = arith.addf %189, %190 : vector<28x14xf32>
    %192 = math.tanh %191 : vector<28x14xf32>
    %193 = vector.broadcast %154 : f32 to vector<28x14xf32>
    %194 = arith.mulf %9, %193 : vector<28x14xf32>
    %195 = vector.broadcast %155 : f32 to vector<28x14xf32>
    %196 = arith.mulf %10, %195 : vector<28x14xf32>
    %197 = arith.addf %194, %196 : vector<28x14xf32>
    %198 = vector.broadcast %156 : f32 to vector<28x14xf32>
    %199 = arith.mulf %11, %198 : vector<28x14xf32>
    %200 = arith.addf %197, %199 : vector<28x14xf32>
    %201 = vector.broadcast %157 : f32 to vector<28x14xf32>
    %202 = arith.mulf %13, %201 : vector<28x14xf32>
    %203 = arith.addf %200, %202 : vector<28x14xf32>
    %204 = vector.broadcast %158 : f32 to vector<28x14xf32>
    %205 = arith.mulf %14, %204 : vector<28x14xf32>
    %206 = arith.addf %203, %205 : vector<28x14xf32>
    %207 = vector.broadcast %159 : f32 to vector<28x14xf32>
    %208 = arith.mulf %15, %207 : vector<28x14xf32>
    %209 = arith.addf %206, %208 : vector<28x14xf32>
    %210 = vector.broadcast %160 : f32 to vector<28x14xf32>
    %211 = arith.mulf %17, %210 : vector<28x14xf32>
    %212 = arith.addf %209, %211 : vector<28x14xf32>
    %213 = vector.broadcast %161 : f32 to vector<28x14xf32>
    %214 = arith.mulf %18, %213 : vector<28x14xf32>
    %215 = arith.addf %212, %214 : vector<28x14xf32>
    %216 = vector.broadcast %162 : f32 to vector<28x14xf32>
    %217 = arith.mulf %19, %216 : vector<28x14xf32>
    %218 = arith.addf %215, %217 : vector<28x14xf32>
    %219 = vector.broadcast %163 : f32 to vector<28x14xf32>
    %220 = arith.addf %218, %219 : vector<28x14xf32>
    %221 = math.tanh %220 : vector<28x14xf32>
    %222 = arith.maximumf %192, %221 : vector<28x14xf32>
    %223 = vector.broadcast %154 : f32 to vector<28x14xf32>
    %224 = arith.mulf %12, %223 : vector<28x14xf32>
    %225 = vector.broadcast %155 : f32 to vector<28x14xf32>
    %226 = arith.mulf %13, %225 : vector<28x14xf32>
    %227 = arith.addf %224, %226 : vector<28x14xf32>
    %228 = vector.broadcast %156 : f32 to vector<28x14xf32>
    %229 = arith.mulf %14, %228 : vector<28x14xf32>
    %230 = arith.addf %227, %229 : vector<28x14xf32>
    %231 = vector.broadcast %157 : f32 to vector<28x14xf32>
    %232 = arith.mulf %16, %231 : vector<28x14xf32>
    %233 = arith.addf %230, %232 : vector<28x14xf32>
    %234 = vector.broadcast %158 : f32 to vector<28x14xf32>
    %235 = arith.mulf %17, %234 : vector<28x14xf32>
    %236 = arith.addf %233, %235 : vector<28x14xf32>
    %237 = vector.broadcast %159 : f32 to vector<28x14xf32>
    %238 = arith.mulf %18, %237 : vector<28x14xf32>
    %239 = arith.addf %236, %238 : vector<28x14xf32>
    %240 = vector.broadcast %160 : f32 to vector<28x14xf32>
    %241 = arith.mulf %20, %240 : vector<28x14xf32>
    %242 = arith.addf %239, %241 : vector<28x14xf32>
    %243 = vector.broadcast %161 : f32 to vector<28x14xf32>
    %244 = arith.mulf %21, %243 : vector<28x14xf32>
    %245 = arith.addf %242, %244 : vector<28x14xf32>
    %246 = vector.broadcast %162 : f32 to vector<28x14xf32>
    %247 = arith.mulf %22, %246 : vector<28x14xf32>
    %248 = arith.addf %245, %247 : vector<28x14xf32>
    %249 = vector.broadcast %163 : f32 to vector<28x14xf32>
    %250 = arith.addf %248, %249 : vector<28x14xf32>
    %251 = math.tanh %250 : vector<28x14xf32>
    %252 = arith.maximumf %222, %251 : vector<28x14xf32>
    %253 = vector.broadcast %154 : f32 to vector<28x14xf32>
    %254 = arith.mulf %13, %253 : vector<28x14xf32>
    %255 = vector.broadcast %155 : f32 to vector<28x14xf32>
    %256 = arith.mulf %14, %255 : vector<28x14xf32>
    %257 = arith.addf %254, %256 : vector<28x14xf32>
    %258 = vector.broadcast %156 : f32 to vector<28x14xf32>
    %259 = arith.mulf %15, %258 : vector<28x14xf32>
    %260 = arith.addf %257, %259 : vector<28x14xf32>
    %261 = vector.broadcast %157 : f32 to vector<28x14xf32>
    %262 = arith.mulf %17, %261 : vector<28x14xf32>
    %263 = arith.addf %260, %262 : vector<28x14xf32>
    %264 = vector.broadcast %158 : f32 to vector<28x14xf32>
    %265 = arith.mulf %18, %264 : vector<28x14xf32>
    %266 = arith.addf %263, %265 : vector<28x14xf32>
    %267 = vector.broadcast %159 : f32 to vector<28x14xf32>
    %268 = arith.mulf %19, %267 : vector<28x14xf32>
    %269 = arith.addf %266, %268 : vector<28x14xf32>
    %270 = vector.broadcast %160 : f32 to vector<28x14xf32>
    %271 = arith.mulf %21, %270 : vector<28x14xf32>
    %272 = arith.addf %269, %271 : vector<28x14xf32>
    %273 = vector.broadcast %161 : f32 to vector<28x14xf32>
    %274 = arith.mulf %22, %273 : vector<28x14xf32>
    %275 = arith.addf %272, %274 : vector<28x14xf32>
    %276 = vector.broadcast %162 : f32 to vector<28x14xf32>
    %277 = arith.mulf %23, %276 : vector<28x14xf32>
    %278 = arith.addf %275, %277 : vector<28x14xf32>
    %279 = vector.broadcast %163 : f32 to vector<28x14xf32>
    %280 = arith.addf %278, %279 : vector<28x14xf32>
    %281 = math.tanh %280 : vector<28x14xf32>
    %282 = arith.maximumf %252, %281 : vector<28x14xf32>
    %c0_43 = arith.constant 0 : index
    %c14 = arith.constant 14 : index
    %283 = vector.load %arg8[%c0_43, %c14] : memref<28x112xf32, #tpu.memory_space<vmem>>, vector<28x14xf32>
    tpu.vector_store %arg8[%c0_43, %c14], %282 {strides = array<i32>} : memref<28x112xf32, #tpu.memory_space<vmem>>, vector<28x14xf32>,
    %c2_44 = arith.constant 2 : index
    %c0_45 = arith.constant 0 : index
    %284 = memref.load %arg1[%c2_44, %c0_45] : memref<8x9xf32, #tpu.memory_space<smem>>
    %c2_46 = arith.constant 2 : index
    %c1_47 = arith.constant 1 : index
    %285 = memref.load %arg1[%c2_46, %c1_47] : memref<8x9xf32, #tpu.memory_space<smem>>
    %c2_48 = arith.constant 2 : index
    %c2_49 = arith.constant 2 : index
    %286 = memref.load %arg1[%c2_48, %c2_49] : memref<8x9xf32, #tpu.memory_space<smem>>
    %c2_50 = arith.constant 2 : index
    %c3_51 = arith.constant 3 : index
    %287 = memref.load %arg1[%c2_50, %c3_51] : memref<8x9xf32, #tpu.memory_space<smem>>
    %c2_52 = arith.constant 2 : index
    %c4_53 = arith.constant 4 : index
    %288 = memref.load %arg1[%c2_52, %c4_53] : memref<8x9xf32, #tpu.memory_space<smem>>
    %c2_54 = arith.constant 2 : index
    %c5_55 = arith.constant 5 : index
    %289 = memref.load %arg1[%c2_54, %c5_55] : memref<8x9xf32, #tpu.memory_space<smem>>
    %c2_56 = arith.constant 2 : index
    %c6_57 = arith.constant 6 : index
    %290 = memref.load %arg1[%c2_56, %c6_57] : memref<8x9xf32, #tpu.memory_space<smem>>
    %c2_58 = arith.constant 2 : index
    %c7_59 = arith.constant 7 : index
    %291 = memref.load %arg1[%c2_58, %c7_59] : memref<8x9xf32, #tpu.memory_space<smem>>
    %c2_60 = arith.constant 2 : index
    %c8_61 = arith.constant 8 : index
    %292 = memref.load %arg1[%c2_60, %c8_61] : memref<8x9xf32, #tpu.memory_space<smem>>
    %c2_62 = arith.constant 2 : index
    %293 = memref.load %arg2[%c2_62] : memref<8xf32, #tpu.memory_space<smem>>
    %294 = vector.broadcast %284 : f32 to vector<28x14xf32>
    %295 = arith.mulf %8, %294 : vector<28x14xf32>
    %296 = vector.broadcast %285 : f32 to vector<28x14xf32>
    %297 = arith.mulf %9, %296 : vector<28x14xf32>
    %298 = arith.addf %295, %297 : vector<28x14xf32>
    %299 = vector.broadcast %286 : f32 to vector<28x14xf32>
    %300 = arith.mulf %10, %299 : vector<28x14xf32>
    %301 = arith.addf %298, %300 : vector<28x14xf32>
    %302 = vector.broadcast %287 : f32 to vector<28x14xf32>
    %303 = arith.mulf %12, %302 : vector<28x14xf32>
    %304 = arith.addf %301, %303 : vector<28x14xf32>
    %305 = vector.broadcast %288 : f32 to vector<28x14xf32>
    %306 = arith.mulf %13, %305 : vector<28x14xf32>
    %307 = arith.addf %304, %306 : vector<28x14xf32>
    %308 = vector.broadcast %289 : f32 to vector<28x14xf32>
    %309 = arith.mulf %14, %308 : vector<28x14xf32>
    %310 = arith.addf %307, %309 : vector<28x14xf32>
    %311 = vector.broadcast %290 : f32 to vector<28x14xf32>
    %312 = arith.mulf %16, %311 : vector<28x14xf32>
    %313 = arith.addf %310, %312 : vector<28x14xf32>
    %314 = vector.broadcast %291 : f32 to vector<28x14xf32>
    %315 = arith.mulf %17, %314 : vector<28x14xf32>
    %316 = arith.addf %313, %315 : vector<28x14xf32>
    %317 = vector.broadcast %292 : f32 to vector<28x14xf32>
    %318 = arith.mulf %18, %317 : vector<28x14xf32>
    %319 = arith.addf %316, %318 : vector<28x14xf32>
    %320 = vector.broadcast %293 : f32 to vector<28x14xf32>
    %321 = arith.addf %319, %320 : vector<28x14xf32>
    %322 = math.tanh %321 : vector<28x14xf32>
    %323 = vector.broadcast %284 : f32 to vector<28x14xf32>
    %324 = arith.mulf %9, %323 : vector<28x14xf32>
    %325 = vector.broadcast %285 : f32 to vector<28x14xf32>
    %326 = arith.mulf %10, %325 : vector<28x14xf32>
    %327 = arith.addf %324, %326 : vector<28x14xf32>
    %328 = vector.broadcast %286 : f32 to vector<28x14xf32>
    %329 = arith.mulf %11, %328 : vector<28x14xf32>
    %330 = arith.addf %327, %329 : vector<28x14xf32>
    %331 = vector.broadcast %287 : f32 to vector<28x14xf32>
    %332 = arith.mulf %13, %331 : vector<28x14xf32>
    %333 = arith.addf %330, %332 : vector<28x14xf32>
    %334 = vector.broadcast %288 : f32 to vector<28x14xf32>
    %335 = arith.mulf %14, %334 : vector<28x14xf32>
    %336 = arith.addf %333, %335 : vector<28x14xf32>
    %337 = vector.broadcast %289 : f32 to vector<28x14xf32>
    %338 = arith.mulf %15, %337 : vector<28x14xf32>
    %339 = arith.addf %336, %338 : vector<28x14xf32>
    %340 = vector.broadcast %290 : f32 to vector<28x14xf32>
    %341 = arith.mulf %17, %340 : vector<28x14xf32>
    %342 = arith.addf %339, %341 : vector<28x14xf32>
    %343 = vector.broadcast %291 : f32 to vector<28x14xf32>
    %344 = arith.mulf %18, %343 : vector<28x14xf32>
    %345 = arith.addf %342, %344 : vector<28x14xf32>
    %346 = vector.broadcast %292 : f32 to vector<28x14xf32>
    %347 = arith.mulf %19, %346 : vector<28x14xf32>
    %348 = arith.addf %345, %347 : vector<28x14xf32>
    %349 = vector.broadcast %293 : f32 to vector<28x14xf32>
    %350 = arith.addf %348, %349 : vector<28x14xf32>
    %351 = math.tanh %350 : vector<28x14xf32>
    %352 = arith.maximumf %322, %351 : vector<28x14xf32>
    %353 = vector.broadcast %284 : f32 to vector<28x14xf32>
    %354 = arith.mulf %12, %353 : vector<28x14xf32>
    %355 = vector.broadcast %285 : f32 to vector<28x14xf32>
    %356 = arith.mulf %13, %355 : vector<28x14xf32>
    %357 = arith.addf %354, %356 : vector<28x14xf32>
    %358 = vector.broadcast %286 : f32 to vector<28x14xf32>
    %359 = arith.mulf %14, %358 : vector<28x14xf32>
    %360 = arith.addf %357, %359 : vector<28x14xf32>
    %361 = vector.broadcast %287 : f32 to vector<28x14xf32>
    %362 = arith.mulf %16, %361 : vector<28x14xf32>
    %363 = arith.addf %360, %362 : vector<28x14xf32>
    %364 = vector.broadcast %288 : f32 to vector<28x14xf32>
    %365 = arith.mulf %17, %364 : vector<28x14xf32>
    %366 = arith.addf %363, %365 : vector<28x14xf32>
    %367 = vector.broadcast %289 : f32 to vector<28x14xf32>
    %368 = arith.mulf %18, %367 : vector<28x14xf32>
    %369 = arith.addf %366, %368 : vector<28x14xf32>
    %370 = vector.broadcast %290 : f32 to vector<28x14xf32>
    %371 = arith.mulf %20, %370 : vector<28x14xf32>
    %372 = arith.addf %369, %371 : vector<28x14xf32>
    %373 = vector.broadcast %291 : f32 to vector<28x14xf32>
    %374 = arith.mulf %21, %373 : vector<28x14xf32>
    %375 = arith.addf %372, %374 : vector<28x14xf32>
    %376 = vector.broadcast %292 : f32 to vector<28x14xf32>
    %377 = arith.mulf %22, %376 : vector<28x14xf32>
    %378 = arith.addf %375, %377 : vector<28x14xf32>
    %379 = vector.broadcast %293 : f32 to vector<28x14xf32>
    %380 = arith.addf %378, %379 : vector<28x14xf32>
    %381 = math.tanh %380 : vector<28x14xf32>
    %382 = arith.maximumf %352, %381 : vector<28x14xf32>
    %383 = vector.broadcast %284 : f32 to vector<28x14xf32>
    %384 = arith.mulf %13, %383 : vector<28x14xf32>
    %385 = vector.broadcast %285 : f32 to vector<28x14xf32>
    %386 = arith.mulf %14, %385 : vector<28x14xf32>
    %387 = arith.addf %384, %386 : vector<28x14xf32>
    %388 = vector.broadcast %286 : f32 to vector<28x14xf32>
    %389 = arith.mulf %15, %388 : vector<28x14xf32>
    %390 = arith.addf %387, %389 : vector<28x14xf32>
    %391 = vector.broadcast %287 : f32 to vector<28x14xf32>
    %392 = arith.mulf %17, %391 : vector<28x14xf32>
    %393 = arith.addf %390, %392 : vector<28x14xf32>
    %394 = vector.broadcast %288 : f32 to vector<28x14xf32>
    %395 = arith.mulf %18, %394 : vector<28x14xf32>
    %396 = arith.addf %393, %395 : vector<28x14xf32>
    %397 = vector.broadcast %289 : f32 to vector<28x14xf32>
    %398 = arith.mulf %19, %397 : vector<28x14xf32>
    %399 = arith.addf %396, %398 : vector<28x14xf32>
    %400 = vector.broadcast %290 : f32 to vector<28x14xf32>
    %401 = arith.mulf %21, %400 : vector<28x14xf32>
    %402 = arith.addf %399, %401 : vector<28x14xf32>
    %403 = vector.broadcast %291 : f32 to vector<28x14xf32>
    %404 = arith.mulf %22, %403 : vector<28x14xf32>
    %405 = arith.addf %402, %404 : vector<28x14xf32>
    %406 = vector.broadcast %292 : f32 to vector<28x14xf32>
    %407 = arith.mulf %23, %406 : vector<28x14xf32>
    %408 = arith.addf %405, %407 : vector<28x14xf32>
    %409 = vector.broadcast %293 : f32 to vector<28x14xf32>
    %410 = arith.addf %408, %409 : vector<28x14xf32>
    %411 = math.tanh %410 : vector<28x14xf32>
    %412 = arith.maximumf %382, %411 : vector<28x14xf32>
    %c0_63 = arith.constant 0 : index
    %c28 = arith.constant 28 : index
    %413 = vector.load %arg8[%c0_63, %c28] : memref<28x112xf32, #tpu.memory_space<vmem>>, vector<28x14xf32>
    tpu.vector_store %arg8[%c0_63, %c28], %412 {strides = array<i32>} : memref<28x112xf32, #tpu.memory_space<vmem>>, vector<28x14xf32>,
    %c3_64 = arith.constant 3 : index
    %c0_65 = arith.constant 0 : index
    %414 = memref.load %arg1[%c3_64, %c0_65] : memref<8x9xf32, #tpu.memory_space<smem>>
    %c3_66 = arith.constant 3 : index
    %c1_67 = arith.constant 1 : index
    %415 = memref.load %arg1[%c3_66, %c1_67] : memref<8x9xf32, #tpu.memory_space<smem>>
    %c3_68 = arith.constant 3 : index
    %c2_69 = arith.constant 2 : index
    %416 = memref.load %arg1[%c3_68, %c2_69] : memref<8x9xf32, #tpu.memory_space<smem>>
    %c3_70 = arith.constant 3 : index
    %c3_71 = arith.constant 3 : index
    %417 = memref.load %arg1[%c3_70, %c3_71] : memref<8x9xf32, #tpu.memory_space<smem>>
    %c3_72 = arith.constant 3 : index
    %c4_73 = arith.constant 4 : index
    %418 = memref.load %arg1[%c3_72, %c4_73] : memref<8x9xf32, #tpu.memory_space<smem>>
    %c3_74 = arith.constant 3 : index
    %c5_75 = arith.constant 5 : index
    %419 = memref.load %arg1[%c3_74, %c5_75] : memref<8x9xf32, #tpu.memory_space<smem>>
    %c3_76 = arith.constant 3 : index
    %c6_77 = arith.constant 6 : index
    %420 = memref.load %arg1[%c3_76, %c6_77] : memref<8x9xf32, #tpu.memory_space<smem>>
    %c3_78 = arith.constant 3 : index
    %c7_79 = arith.constant 7 : index
    %421 = memref.load %arg1[%c3_78, %c7_79] : memref<8x9xf32, #tpu.memory_space<smem>>
    %c3_80 = arith.constant 3 : index
    %c8_81 = arith.constant 8 : index
    %422 = memref.load %arg1[%c3_80, %c8_81] : memref<8x9xf32, #tpu.memory_space<smem>>
    %c3_82 = arith.constant 3 : index
    %423 = memref.load %arg2[%c3_82] : memref<8xf32, #tpu.memory_space<smem>>
    %424 = vector.broadcast %414 : f32 to vector<28x14xf32>
    %425 = arith.mulf %8, %424 : vector<28x14xf32>
    %426 = vector.broadcast %415 : f32 to vector<28x14xf32>
    %427 = arith.mulf %9, %426 : vector<28x14xf32>
    %428 = arith.addf %425, %427 : vector<28x14xf32>
    %429 = vector.broadcast %416 : f32 to vector<28x14xf32>
    %430 = arith.mulf %10, %429 : vector<28x14xf32>
    %431 = arith.addf %428, %430 : vector<28x14xf32>
    %432 = vector.broadcast %417 : f32 to vector<28x14xf32>
    %433 = arith.mulf %12, %432 : vector<28x14xf32>
    %434 = arith.addf %431, %433 : vector<28x14xf32>
    %435 = vector.broadcast %418 : f32 to vector<28x14xf32>
    %436 = arith.mulf %13, %435 : vector<28x14xf32>
    %437 = arith.addf %434, %436 : vector<28x14xf32>
    %438 = vector.broadcast %419 : f32 to vector<28x14xf32>
    %439 = arith.mulf %14, %438 : vector<28x14xf32>
    %440 = arith.addf %437, %439 : vector<28x14xf32>
    %441 = vector.broadcast %420 : f32 to vector<28x14xf32>
    %442 = arith.mulf %16, %441 : vector<28x14xf32>
    %443 = arith.addf %440, %442 : vector<28x14xf32>
    %444 = vector.broadcast %421 : f32 to vector<28x14xf32>
    %445 = arith.mulf %17, %444 : vector<28x14xf32>
    %446 = arith.addf %443, %445 : vector<28x14xf32>
    %447 = vector.broadcast %422 : f32 to vector<28x14xf32>
    %448 = arith.mulf %18, %447 : vector<28x14xf32>
    %449 = arith.addf %446, %448 : vector<28x14xf32>
    %450 = vector.broadcast %423 : f32 to vector<28x14xf32>
    %451 = arith.addf %449, %450 : vector<28x14xf32>
    %452 = math.tanh %451 : vector<28x14xf32>
    %453 = vector.broadcast %414 : f32 to vector<28x14xf32>
    %454 = arith.mulf %9, %453 : vector<28x14xf32>
    %455 = vector.broadcast %415 : f32 to vector<28x14xf32>
    %456 = arith.mulf %10, %455 : vector<28x14xf32>
    %457 = arith.addf %454, %456 : vector<28x14xf32>
    %458 = vector.broadcast %416 : f32 to vector<28x14xf32>
    %459 = arith.mulf %11, %458 : vector<28x14xf32>
    %460 = arith.addf %457, %459 : vector<28x14xf32>
    %461 = vector.broadcast %417 : f32 to vector<28x14xf32>
    %462 = arith.mulf %13, %461 : vector<28x14xf32>
    %463 = arith.addf %460, %462 : vector<28x14xf32>
    %464 = vector.broadcast %418 : f32 to vector<28x14xf32>
    %465 = arith.mulf %14, %464 : vector<28x14xf32>
    %466 = arith.addf %463, %465 : vector<28x14xf32>
    %467 = vector.broadcast %419 : f32 to vector<28x14xf32>
    %468 = arith.mulf %15, %467 : vector<28x14xf32>
    %469 = arith.addf %466, %468 : vector<28x14xf32>
    %470 = vector.broadcast %420 : f32 to vector<28x14xf32>
    %471 = arith.mulf %17, %470 : vector<28x14xf32>
    %472 = arith.addf %469, %471 : vector<28x14xf32>
    %473 = vector.broadcast %421 : f32 to vector<28x14xf32>
    %474 = arith.mulf %18, %473 : vector<28x14xf32>
    %475 = arith.addf %472, %474 : vector<28x14xf32>
    %476 = vector.broadcast %422 : f32 to vector<28x14xf32>
    %477 = arith.mulf %19, %476 : vector<28x14xf32>
    %478 = arith.addf %475, %477 : vector<28x14xf32>
    %479 = vector.broadcast %423 : f32 to vector<28x14xf32>
    %480 = arith.addf %478, %479 : vector<28x14xf32>
    %481 = math.tanh %480 : vector<28x14xf32>
    %482 = arith.maximumf %452, %481 : vector<28x14xf32>
    %483 = vector.broadcast %414 : f32 to vector<28x14xf32>
    %484 = arith.mulf %12, %483 : vector<28x14xf32>
    %485 = vector.broadcast %415 : f32 to vector<28x14xf32>
    %486 = arith.mulf %13, %485 : vector<28x14xf32>
    %487 = arith.addf %484, %486 : vector<28x14xf32>
    %488 = vector.broadcast %416 : f32 to vector<28x14xf32>
    %489 = arith.mulf %14, %488 : vector<28x14xf32>
    %490 = arith.addf %487, %489 : vector<28x14xf32>
    %491 = vector.broadcast %417 : f32 to vector<28x14xf32>
    %492 = arith.mulf %16, %491 : vector<28x14xf32>
    %493 = arith.addf %490, %492 : vector<28x14xf32>
    %494 = vector.broadcast %418 : f32 to vector<28x14xf32>
    %495 = arith.mulf %17, %494 : vector<28x14xf32>
    %496 = arith.addf %493, %495 : vector<28x14xf32>
    %497 = vector.broadcast %419 : f32 to vector<28x14xf32>
    %498 = arith.mulf %18, %497 : vector<28x14xf32>
    %499 = arith.addf %496, %498 : vector<28x14xf32>
    %500 = vector.broadcast %420 : f32 to vector<28x14xf32>
    %501 = arith.mulf %20, %500 : vector<28x14xf32>
    %502 = arith.addf %499, %501 : vector<28x14xf32>
    %503 = vector.broadcast %421 : f32 to vector<28x14xf32>
    %504 = arith.mulf %21, %503 : vector<28x14xf32>
    %505 = arith.addf %502, %504 : vector<28x14xf32>
    %506 = vector.broadcast %422 : f32 to vector<28x14xf32>
    %507 = arith.mulf %22, %506 : vector<28x14xf32>
    %508 = arith.addf %505, %507 : vector<28x14xf32>
    %509 = vector.broadcast %423 : f32 to vector<28x14xf32>
    %510 = arith.addf %508, %509 : vector<28x14xf32>
    %511 = math.tanh %510 : vector<28x14xf32>
    %512 = arith.maximumf %482, %511 : vector<28x14xf32>
    %513 = vector.broadcast %414 : f32 to vector<28x14xf32>
    %514 = arith.mulf %13, %513 : vector<28x14xf32>
    %515 = vector.broadcast %415 : f32 to vector<28x14xf32>
    %516 = arith.mulf %14, %515 : vector<28x14xf32>
    %517 = arith.addf %514, %516 : vector<28x14xf32>
    %518 = vector.broadcast %416 : f32 to vector<28x14xf32>
    %519 = arith.mulf %15, %518 : vector<28x14xf32>
    %520 = arith.addf %517, %519 : vector<28x14xf32>
    %521 = vector.broadcast %417 : f32 to vector<28x14xf32>
    %522 = arith.mulf %17, %521 : vector<28x14xf32>
    %523 = arith.addf %520, %522 : vector<28x14xf32>
    %524 = vector.broadcast %418 : f32 to vector<28x14xf32>
    %525 = arith.mulf %18, %524 : vector<28x14xf32>
    %526 = arith.addf %523, %525 : vector<28x14xf32>
    %527 = vector.broadcast %419 : f32 to vector<28x14xf32>
    %528 = arith.mulf %19, %527 : vector<28x14xf32>
    %529 = arith.addf %526, %528 : vector<28x14xf32>
    %530 = vector.broadcast %420 : f32 to vector<28x14xf32>
    %531 = arith.mulf %21, %530 : vector<28x14xf32>
    %532 = arith.addf %529, %531 : vector<28x14xf32>
    %533 = vector.broadcast %421 : f32 to vector<28x14xf32>
    %534 = arith.mulf %22, %533 : vector<28x14xf32>
    %535 = arith.addf %532, %534 : vector<28x14xf32>
    %536 = vector.broadcast %422 : f32 to vector<28x14xf32>
    %537 = arith.mulf %23, %536 : vector<28x14xf32>
    %538 = arith.addf %535, %537 : vector<28x14xf32>
    %539 = vector.broadcast %423 : f32 to vector<28x14xf32>
    %540 = arith.addf %538, %539 : vector<28x14xf32>
    %541 = math.tanh %540 : vector<28x14xf32>
    %542 = arith.maximumf %512, %541 : vector<28x14xf32>
    %c0_83 = arith.constant 0 : index
    %c42 = arith.constant 42 : index
    %543 = vector.load %arg8[%c0_83, %c42] : memref<28x112xf32, #tpu.memory_space<vmem>>, vector<28x14xf32>
    tpu.vector_store %arg8[%c0_83, %c42], %542 {strides = array<i32>} : memref<28x112xf32, #tpu.memory_space<vmem>>, vector<28x14xf32>,
    %c4_84 = arith.constant 4 : index
    %c0_85 = arith.constant 0 : index
    %544 = memref.load %arg1[%c4_84, %c0_85] : memref<8x9xf32, #tpu.memory_space<smem>>
    %c4_86 = arith.constant 4 : index
    %c1_87 = arith.constant 1 : index
    %545 = memref.load %arg1[%c4_86, %c1_87] : memref<8x9xf32, #tpu.memory_space<smem>>
    %c4_88 = arith.constant 4 : index
    %c2_89 = arith.constant 2 : index
    %546 = memref.load %arg1[%c4_88, %c2_89] : memref<8x9xf32, #tpu.memory_space<smem>>
    %c4_90 = arith.constant 4 : index
    %c3_91 = arith.constant 3 : index
    %547 = memref.load %arg1[%c4_90, %c3_91] : memref<8x9xf32, #tpu.memory_space<smem>>
    %c4_92 = arith.constant 4 : index
    %c4_93 = arith.constant 4 : index
    %548 = memref.load %arg1[%c4_92, %c4_93] : memref<8x9xf32, #tpu.memory_space<smem>>
    %c4_94 = arith.constant 4 : index
    %c5_95 = arith.constant 5 : index
    %549 = memref.load %arg1[%c4_94, %c5_95] : memref<8x9xf32, #tpu.memory_space<smem>>
    %c4_96 = arith.constant 4 : index
    %c6_97 = arith.constant 6 : index
    %550 = memref.load %arg1[%c4_96, %c6_97] : memref<8x9xf32, #tpu.memory_space<smem>>
    %c4_98 = arith.constant 4 : index
    %c7_99 = arith.constant 7 : index
    %551 = memref.load %arg1[%c4_98, %c7_99] : memref<8x9xf32, #tpu.memory_space<smem>>
    %c4_100 = arith.constant 4 : index
    %c8_101 = arith.constant 8 : index
    %552 = memref.load %arg1[%c4_100, %c8_101] : memref<8x9xf32, #tpu.memory_space<smem>>
    %c4_102 = arith.constant 4 : index
    %553 = memref.load %arg2[%c4_102] : memref<8xf32, #tpu.memory_space<smem>>
    %554 = vector.broadcast %544 : f32 to vector<28x14xf32>
    %555 = arith.mulf %8, %554 : vector<28x14xf32>
    %556 = vector.broadcast %545 : f32 to vector<28x14xf32>
    %557 = arith.mulf %9, %556 : vector<28x14xf32>
    %558 = arith.addf %555, %557 : vector<28x14xf32>
    %559 = vector.broadcast %546 : f32 to vector<28x14xf32>
    %560 = arith.mulf %10, %559 : vector<28x14xf32>
    %561 = arith.addf %558, %560 : vector<28x14xf32>
    %562 = vector.broadcast %547 : f32 to vector<28x14xf32>
    %563 = arith.mulf %12, %562 : vector<28x14xf32>
    %564 = arith.addf %561, %563 : vector<28x14xf32>
    %565 = vector.broadcast %548 : f32 to vector<28x14xf32>
    %566 = arith.mulf %13, %565 : vector<28x14xf32>
    %567 = arith.addf %564, %566 : vector<28x14xf32>
    %568 = vector.broadcast %549 : f32 to vector<28x14xf32>
    %569 = arith.mulf %14, %568 : vector<28x14xf32>
    %570 = arith.addf %567, %569 : vector<28x14xf32>
    %571 = vector.broadcast %550 : f32 to vector<28x14xf32>
    %572 = arith.mulf %16, %571 : vector<28x14xf32>
    %573 = arith.addf %570, %572 : vector<28x14xf32>
    %574 = vector.broadcast %551 : f32 to vector<28x14xf32>
    %575 = arith.mulf %17, %574 : vector<28x14xf32>
    %576 = arith.addf %573, %575 : vector<28x14xf32>
    %577 = vector.broadcast %552 : f32 to vector<28x14xf32>
    %578 = arith.mulf %18, %577 : vector<28x14xf32>
    %579 = arith.addf %576, %578 : vector<28x14xf32>
    %580 = vector.broadcast %553 : f32 to vector<28x14xf32>
    %581 = arith.addf %579, %580 : vector<28x14xf32>
    %582 = math.tanh %581 : vector<28x14xf32>
    %583 = vector.broadcast %544 : f32 to vector<28x14xf32>
    %584 = arith.mulf %9, %583 : vector<28x14xf32>
    %585 = vector.broadcast %545 : f32 to vector<28x14xf32>
    %586 = arith.mulf %10, %585 : vector<28x14xf32>
    %587 = arith.addf %584, %586 : vector<28x14xf32>
    %588 = vector.broadcast %546 : f32 to vector<28x14xf32>
    %589 = arith.mulf %11, %588 : vector<28x14xf32>
    %590 = arith.addf %587, %589 : vector<28x14xf32>
    %591 = vector.broadcast %547 : f32 to vector<28x14xf32>
    %592 = arith.mulf %13, %591 : vector<28x14xf32>
    %593 = arith.addf %590, %592 : vector<28x14xf32>
    %594 = vector.broadcast %548 : f32 to vector<28x14xf32>
    %595 = arith.mulf %14, %594 : vector<28x14xf32>
    %596 = arith.addf %593, %595 : vector<28x14xf32>
    %597 = vector.broadcast %549 : f32 to vector<28x14xf32>
    %598 = arith.mulf %15, %597 : vector<28x14xf32>
    %599 = arith.addf %596, %598 : vector<28x14xf32>
    %600 = vector.broadcast %550 : f32 to vector<28x14xf32>
    %601 = arith.mulf %17, %600 : vector<28x14xf32>
    %602 = arith.addf %599, %601 : vector<28x14xf32>
    %603 = vector.broadcast %551 : f32 to vector<28x14xf32>
    %604 = arith.mulf %18, %603 : vector<28x14xf32>
    %605 = arith.addf %602, %604 : vector<28x14xf32>
    %606 = vector.broadcast %552 : f32 to vector<28x14xf32>
    %607 = arith.mulf %19, %606 : vector<28x14xf32>
    %608 = arith.addf %605, %607 : vector<28x14xf32>
    %609 = vector.broadcast %553 : f32 to vector<28x14xf32>
    %610 = arith.addf %608, %609 : vector<28x14xf32>
    %611 = math.tanh %610 : vector<28x14xf32>
    %612 = arith.maximumf %582, %611 : vector<28x14xf32>
    %613 = vector.broadcast %544 : f32 to vector<28x14xf32>
    %614 = arith.mulf %12, %613 : vector<28x14xf32>
    %615 = vector.broadcast %545 : f32 to vector<28x14xf32>
    %616 = arith.mulf %13, %615 : vector<28x14xf32>
    %617 = arith.addf %614, %616 : vector<28x14xf32>
    %618 = vector.broadcast %546 : f32 to vector<28x14xf32>
    %619 = arith.mulf %14, %618 : vector<28x14xf32>
    %620 = arith.addf %617, %619 : vector<28x14xf32>
    %621 = vector.broadcast %547 : f32 to vector<28x14xf32>
    %622 = arith.mulf %16, %621 : vector<28x14xf32>
    %623 = arith.addf %620, %622 : vector<28x14xf32>
    %624 = vector.broadcast %548 : f32 to vector<28x14xf32>
    %625 = arith.mulf %17, %624 : vector<28x14xf32>
    %626 = arith.addf %623, %625 : vector<28x14xf32>
    %627 = vector.broadcast %549 : f32 to vector<28x14xf32>
    %628 = arith.mulf %18, %627 : vector<28x14xf32>
    %629 = arith.addf %626, %628 : vector<28x14xf32>
    %630 = vector.broadcast %550 : f32 to vector<28x14xf32>
    %631 = arith.mulf %20, %630 : vector<28x14xf32>
    %632 = arith.addf %629, %631 : vector<28x14xf32>
    %633 = vector.broadcast %551 : f32 to vector<28x14xf32>
    %634 = arith.mulf %21, %633 : vector<28x14xf32>
    %635 = arith.addf %632, %634 : vector<28x14xf32>
    %636 = vector.broadcast %552 : f32 to vector<28x14xf32>
    %637 = arith.mulf %22, %636 : vector<28x14xf32>
    %638 = arith.addf %635, %637 : vector<28x14xf32>
    %639 = vector.broadcast %553 : f32 to vector<28x14xf32>
    %640 = arith.addf %638, %639 : vector<28x14xf32>
    %641 = math.tanh %640 : vector<28x14xf32>
    %642 = arith.maximumf %612, %641 : vector<28x14xf32>
    %643 = vector.broadcast %544 : f32 to vector<28x14xf32>
    %644 = arith.mulf %13, %643 : vector<28x14xf32>
    %645 = vector.broadcast %545 : f32 to vector<28x14xf32>
    %646 = arith.mulf %14, %645 : vector<28x14xf32>
    %647 = arith.addf %644, %646 : vector<28x14xf32>
    %648 = vector.broadcast %546 : f32 to vector<28x14xf32>
    %649 = arith.mulf %15, %648 : vector<28x14xf32>
    %650 = arith.addf %647, %649 : vector<28x14xf32>
    %651 = vector.broadcast %547 : f32 to vector<28x14xf32>
    %652 = arith.mulf %17, %651 : vector<28x14xf32>
    %653 = arith.addf %650, %652 : vector<28x14xf32>
    %654 = vector.broadcast %548 : f32 to vector<28x14xf32>
    %655 = arith.mulf %18, %654 : vector<28x14xf32>
    %656 = arith.addf %653, %655 : vector<28x14xf32>
    %657 = vector.broadcast %549 : f32 to vector<28x14xf32>
    %658 = arith.mulf %19, %657 : vector<28x14xf32>
    %659 = arith.addf %656, %658 : vector<28x14xf32>
    %660 = vector.broadcast %550 : f32 to vector<28x14xf32>
    %661 = arith.mulf %21, %660 : vector<28x14xf32>
    %662 = arith.addf %659, %661 : vector<28x14xf32>
    %663 = vector.broadcast %551 : f32 to vector<28x14xf32>
    %664 = arith.mulf %22, %663 : vector<28x14xf32>
    %665 = arith.addf %662, %664 : vector<28x14xf32>
    %666 = vector.broadcast %552 : f32 to vector<28x14xf32>
    %667 = arith.mulf %23, %666 : vector<28x14xf32>
    %668 = arith.addf %665, %667 : vector<28x14xf32>
    %669 = vector.broadcast %553 : f32 to vector<28x14xf32>
    %670 = arith.addf %668, %669 : vector<28x14xf32>
    %671 = math.tanh %670 : vector<28x14xf32>
    %672 = arith.maximumf %642, %671 : vector<28x14xf32>
    %c0_103 = arith.constant 0 : index
    %c56 = arith.constant 56 : index
    %673 = vector.load %arg8[%c0_103, %c56] : memref<28x112xf32, #tpu.memory_space<vmem>>, vector<28x14xf32>
    tpu.vector_store %arg8[%c0_103, %c56], %672 {strides = array<i32>} : memref<28x112xf32, #tpu.memory_space<vmem>>, vector<28x14xf32>,
    %c5_104 = arith.constant 5 : index
    %c0_105 = arith.constant 0 : index
    %674 = memref.load %arg1[%c5_104, %c0_105] : memref<8x9xf32, #tpu.memory_space<smem>>
    %c5_106 = arith.constant 5 : index
    %c1_107 = arith.constant 1 : index
    %675 = memref.load %arg1[%c5_106, %c1_107] : memref<8x9xf32, #tpu.memory_space<smem>>
    %c5_108 = arith.constant 5 : index
    %c2_109 = arith.constant 2 : index
    %676 = memref.load %arg1[%c5_108, %c2_109] : memref<8x9xf32, #tpu.memory_space<smem>>
    %c5_110 = arith.constant 5 : index
    %c3_111 = arith.constant 3 : index
    %677 = memref.load %arg1[%c5_110, %c3_111] : memref<8x9xf32, #tpu.memory_space<smem>>
    %c5_112 = arith.constant 5 : index
    %c4_113 = arith.constant 4 : index
    %678 = memref.load %arg1[%c5_112, %c4_113] : memref<8x9xf32, #tpu.memory_space<smem>>
    %c5_114 = arith.constant 5 : index
    %c5_115 = arith.constant 5 : index
    %679 = memref.load %arg1[%c5_114, %c5_115] : memref<8x9xf32, #tpu.memory_space<smem>>
    %c5_116 = arith.constant 5 : index
    %c6_117 = arith.constant 6 : index
    %680 = memref.load %arg1[%c5_116, %c6_117] : memref<8x9xf32, #tpu.memory_space<smem>>
    %c5_118 = arith.constant 5 : index
    %c7_119 = arith.constant 7 : index
    %681 = memref.load %arg1[%c5_118, %c7_119] : memref<8x9xf32, #tpu.memory_space<smem>>
    %c5_120 = arith.constant 5 : index
    %c8_121 = arith.constant 8 : index
    %682 = memref.load %arg1[%c5_120, %c8_121] : memref<8x9xf32, #tpu.memory_space<smem>>
    %c5_122 = arith.constant 5 : index
    %683 = memref.load %arg2[%c5_122] : memref<8xf32, #tpu.memory_space<smem>>
    %684 = vector.broadcast %674 : f32 to vector<28x14xf32>
    %685 = arith.mulf %8, %684 : vector<28x14xf32>
    %686 = vector.broadcast %675 : f32 to vector<28x14xf32>
    %687 = arith.mulf %9, %686 : vector<28x14xf32>
    %688 = arith.addf %685, %687 : vector<28x14xf32>
    %689 = vector.broadcast %676 : f32 to vector<28x14xf32>
    %690 = arith.mulf %10, %689 : vector<28x14xf32>
    %691 = arith.addf %688, %690 : vector<28x14xf32>
    %692 = vector.broadcast %677 : f32 to vector<28x14xf32>
    %693 = arith.mulf %12, %692 : vector<28x14xf32>
    %694 = arith.addf %691, %693 : vector<28x14xf32>
    %695 = vector.broadcast %678 : f32 to vector<28x14xf32>
    %696 = arith.mulf %13, %695 : vector<28x14xf32>
    %697 = arith.addf %694, %696 : vector<28x14xf32>
    %698 = vector.broadcast %679 : f32 to vector<28x14xf32>
    %699 = arith.mulf %14, %698 : vector<28x14xf32>
    %700 = arith.addf %697, %699 : vector<28x14xf32>
    %701 = vector.broadcast %680 : f32 to vector<28x14xf32>
    %702 = arith.mulf %16, %701 : vector<28x14xf32>
    %703 = arith.addf %700, %702 : vector<28x14xf32>
    %704 = vector.broadcast %681 : f32 to vector<28x14xf32>
    %705 = arith.mulf %17, %704 : vector<28x14xf32>
    %706 = arith.addf %703, %705 : vector<28x14xf32>
    %707 = vector.broadcast %682 : f32 to vector<28x14xf32>
    %708 = arith.mulf %18, %707 : vector<28x14xf32>
    %709 = arith.addf %706, %708 : vector<28x14xf32>
    %710 = vector.broadcast %683 : f32 to vector<28x14xf32>
    %711 = arith.addf %709, %710 : vector<28x14xf32>
    %712 = math.tanh %711 : vector<28x14xf32>
    %713 = vector.broadcast %674 : f32 to vector<28x14xf32>
    %714 = arith.mulf %9, %713 : vector<28x14xf32>
    %715 = vector.broadcast %675 : f32 to vector<28x14xf32>
    %716 = arith.mulf %10, %715 : vector<28x14xf32>
    %717 = arith.addf %714, %716 : vector<28x14xf32>
    %718 = vector.broadcast %676 : f32 to vector<28x14xf32>
    %719 = arith.mulf %11, %718 : vector<28x14xf32>
    %720 = arith.addf %717, %719 : vector<28x14xf32>
    %721 = vector.broadcast %677 : f32 to vector<28x14xf32>
    %722 = arith.mulf %13, %721 : vector<28x14xf32>
    %723 = arith.addf %720, %722 : vector<28x14xf32>
    %724 = vector.broadcast %678 : f32 to vector<28x14xf32>
    %725 = arith.mulf %14, %724 : vector<28x14xf32>
    %726 = arith.addf %723, %725 : vector<28x14xf32>
    %727 = vector.broadcast %679 : f32 to vector<28x14xf32>
    %728 = arith.mulf %15, %727 : vector<28x14xf32>
    %729 = arith.addf %726, %728 : vector<28x14xf32>
    %730 = vector.broadcast %680 : f32 to vector<28x14xf32>
    %731 = arith.mulf %17, %730 : vector<28x14xf32>
    %732 = arith.addf %729, %731 : vector<28x14xf32>
    %733 = vector.broadcast %681 : f32 to vector<28x14xf32>
    %734 = arith.mulf %18, %733 : vector<28x14xf32>
    %735 = arith.addf %732, %734 : vector<28x14xf32>
    %736 = vector.broadcast %682 : f32 to vector<28x14xf32>
    %737 = arith.mulf %19, %736 : vector<28x14xf32>
    %738 = arith.addf %735, %737 : vector<28x14xf32>
    %739 = vector.broadcast %683 : f32 to vector<28x14xf32>
    %740 = arith.addf %738, %739 : vector<28x14xf32>
    %741 = math.tanh %740 : vector<28x14xf32>
    %742 = arith.maximumf %712, %741 : vector<28x14xf32>
    %743 = vector.broadcast %674 : f32 to vector<28x14xf32>
    %744 = arith.mulf %12, %743 : vector<28x14xf32>
    %745 = vector.broadcast %675 : f32 to vector<28x14xf32>
    %746 = arith.mulf %13, %745 : vector<28x14xf32>
    %747 = arith.addf %744, %746 : vector<28x14xf32>
    %748 = vector.broadcast %676 : f32 to vector<28x14xf32>
    %749 = arith.mulf %14, %748 : vector<28x14xf32>
    %750 = arith.addf %747, %749 : vector<28x14xf32>
    %751 = vector.broadcast %677 : f32 to vector<28x14xf32>
    %752 = arith.mulf %16, %751 : vector<28x14xf32>
    %753 = arith.addf %750, %752 : vector<28x14xf32>
    %754 = vector.broadcast %678 : f32 to vector<28x14xf32>
    %755 = arith.mulf %17, %754 : vector<28x14xf32>
    %756 = arith.addf %753, %755 : vector<28x14xf32>
    %757 = vector.broadcast %679 : f32 to vector<28x14xf32>
    %758 = arith.mulf %18, %757 : vector<28x14xf32>
    %759 = arith.addf %756, %758 : vector<28x14xf32>
    %760 = vector.broadcast %680 : f32 to vector<28x14xf32>
    %761 = arith.mulf %20, %760 : vector<28x14xf32>
    %762 = arith.addf %759, %761 : vector<28x14xf32>
    %763 = vector.broadcast %681 : f32 to vector<28x14xf32>
    %764 = arith.mulf %21, %763 : vector<28x14xf32>
    %765 = arith.addf %762, %764 : vector<28x14xf32>
    %766 = vector.broadcast %682 : f32 to vector<28x14xf32>
    %767 = arith.mulf %22, %766 : vector<28x14xf32>
    %768 = arith.addf %765, %767 : vector<28x14xf32>
    %769 = vector.broadcast %683 : f32 to vector<28x14xf32>
    %770 = arith.addf %768, %769 : vector<28x14xf32>
    %771 = math.tanh %770 : vector<28x14xf32>
    %772 = arith.maximumf %742, %771 : vector<28x14xf32>
    %773 = vector.broadcast %674 : f32 to vector<28x14xf32>
    %774 = arith.mulf %13, %773 : vector<28x14xf32>
    %775 = vector.broadcast %675 : f32 to vector<28x14xf32>
    %776 = arith.mulf %14, %775 : vector<28x14xf32>
    %777 = arith.addf %774, %776 : vector<28x14xf32>
    %778 = vector.broadcast %676 : f32 to vector<28x14xf32>
    %779 = arith.mulf %15, %778 : vector<28x14xf32>
    %780 = arith.addf %777, %779 : vector<28x14xf32>
    %781 = vector.broadcast %677 : f32 to vector<28x14xf32>
    %782 = arith.mulf %17, %781 : vector<28x14xf32>
    %783 = arith.addf %780, %782 : vector<28x14xf32>
    %784 = vector.broadcast %678 : f32 to vector<28x14xf32>
    %785 = arith.mulf %18, %784 : vector<28x14xf32>
    %786 = arith.addf %783, %785 : vector<28x14xf32>
    %787 = vector.broadcast %679 : f32 to vector<28x14xf32>
    %788 = arith.mulf %19, %787 : vector<28x14xf32>
    %789 = arith.addf %786, %788 : vector<28x14xf32>
    %790 = vector.broadcast %680 : f32 to vector<28x14xf32>
    %791 = arith.mulf %21, %790 : vector<28x14xf32>
    %792 = arith.addf %789, %791 : vector<28x14xf32>
    %793 = vector.broadcast %681 : f32 to vector<28x14xf32>
    %794 = arith.mulf %22, %793 : vector<28x14xf32>
    %795 = arith.addf %792, %794 : vector<28x14xf32>
    %796 = vector.broadcast %682 : f32 to vector<28x14xf32>
    %797 = arith.mulf %23, %796 : vector<28x14xf32>
    %798 = arith.addf %795, %797 : vector<28x14xf32>
    %799 = vector.broadcast %683 : f32 to vector<28x14xf32>
    %800 = arith.addf %798, %799 : vector<28x14xf32>
    %801 = math.tanh %800 : vector<28x14xf32>
    %802 = arith.maximumf %772, %801 : vector<28x14xf32>
    %c0_123 = arith.constant 0 : index
    %c70 = arith.constant 70 : index
    %803 = vector.load %arg8[%c0_123, %c70] : memref<28x112xf32, #tpu.memory_space<vmem>>, vector<28x14xf32>
    tpu.vector_store %arg8[%c0_123, %c70], %802 {strides = array<i32>} : memref<28x112xf32, #tpu.memory_space<vmem>>, vector<28x14xf32>,
    %c6_124 = arith.constant 6 : index
    %c0_125 = arith.constant 0 : index
    %804 = memref.load %arg1[%c6_124, %c0_125] : memref<8x9xf32, #tpu.memory_space<smem>>
    %c6_126 = arith.constant 6 : index
    %c1_127 = arith.constant 1 : index
    %805 = memref.load %arg1[%c6_126, %c1_127] : memref<8x9xf32, #tpu.memory_space<smem>>
    %c6_128 = arith.constant 6 : index
    %c2_129 = arith.constant 2 : index
    %806 = memref.load %arg1[%c6_128, %c2_129] : memref<8x9xf32, #tpu.memory_space<smem>>
    %c6_130 = arith.constant 6 : index
    %c3_131 = arith.constant 3 : index
    %807 = memref.load %arg1[%c6_130, %c3_131] : memref<8x9xf32, #tpu.memory_space<smem>>
    %c6_132 = arith.constant 6 : index
    %c4_133 = arith.constant 4 : index
    %808 = memref.load %arg1[%c6_132, %c4_133] : memref<8x9xf32, #tpu.memory_space<smem>>
    %c6_134 = arith.constant 6 : index
    %c5_135 = arith.constant 5 : index
    %809 = memref.load %arg1[%c6_134, %c5_135] : memref<8x9xf32, #tpu.memory_space<smem>>
    %c6_136 = arith.constant 6 : index
    %c6_137 = arith.constant 6 : index
    %810 = memref.load %arg1[%c6_136, %c6_137] : memref<8x9xf32, #tpu.memory_space<smem>>
    %c6_138 = arith.constant 6 : index
    %c7_139 = arith.constant 7 : index
    %811 = memref.load %arg1[%c6_138, %c7_139] : memref<8x9xf32, #tpu.memory_space<smem>>
    %c6_140 = arith.constant 6 : index
    %c8_141 = arith.constant 8 : index
    %812 = memref.load %arg1[%c6_140, %c8_141] : memref<8x9xf32, #tpu.memory_space<smem>>
    %c6_142 = arith.constant 6 : index
    %813 = memref.load %arg2[%c6_142] : memref<8xf32, #tpu.memory_space<smem>>
    %814 = vector.broadcast %804 : f32 to vector<28x14xf32>
    %815 = arith.mulf %8, %814 : vector<28x14xf32>
    %816 = vector.broadcast %805 : f32 to vector<28x14xf32>
    %817 = arith.mulf %9, %816 : vector<28x14xf32>
    %818 = arith.addf %815, %817 : vector<28x14xf32>
    %819 = vector.broadcast %806 : f32 to vector<28x14xf32>
    %820 = arith.mulf %10, %819 : vector<28x14xf32>
    %821 = arith.addf %818, %820 : vector<28x14xf32>
    %822 = vector.broadcast %807 : f32 to vector<28x14xf32>
    %823 = arith.mulf %12, %822 : vector<28x14xf32>
    %824 = arith.addf %821, %823 : vector<28x14xf32>
    %825 = vector.broadcast %808 : f32 to vector<28x14xf32>
    %826 = arith.mulf %13, %825 : vector<28x14xf32>
    %827 = arith.addf %824, %826 : vector<28x14xf32>
    %828 = vector.broadcast %809 : f32 to vector<28x14xf32>
    %829 = arith.mulf %14, %828 : vector<28x14xf32>
    %830 = arith.addf %827, %829 : vector<28x14xf32>
    %831 = vector.broadcast %810 : f32 to vector<28x14xf32>
    %832 = arith.mulf %16, %831 : vector<28x14xf32>
    %833 = arith.addf %830, %832 : vector<28x14xf32>
    %834 = vector.broadcast %811 : f32 to vector<28x14xf32>
    %835 = arith.mulf %17, %834 : vector<28x14xf32>
    %836 = arith.addf %833, %835 : vector<28x14xf32>
    %837 = vector.broadcast %812 : f32 to vector<28x14xf32>
    %838 = arith.mulf %18, %837 : vector<28x14xf32>
    %839 = arith.addf %836, %838 : vector<28x14xf32>
    %840 = vector.broadcast %813 : f32 to vector<28x14xf32>
    %841 = arith.addf %839, %840 : vector<28x14xf32>
    %842 = math.tanh %841 : vector<28x14xf32>
    %843 = vector.broadcast %804 : f32 to vector<28x14xf32>
    %844 = arith.mulf %9, %843 : vector<28x14xf32>
    %845 = vector.broadcast %805 : f32 to vector<28x14xf32>
    %846 = arith.mulf %10, %845 : vector<28x14xf32>
    %847 = arith.addf %844, %846 : vector<28x14xf32>
    %848 = vector.broadcast %806 : f32 to vector<28x14xf32>
    %849 = arith.mulf %11, %848 : vector<28x14xf32>
    %850 = arith.addf %847, %849 : vector<28x14xf32>
    %851 = vector.broadcast %807 : f32 to vector<28x14xf32>
    %852 = arith.mulf %13, %851 : vector<28x14xf32>
    %853 = arith.addf %850, %852 : vector<28x14xf32>
    %854 = vector.broadcast %808 : f32 to vector<28x14xf32>
    %855 = arith.mulf %14, %854 : vector<28x14xf32>
    %856 = arith.addf %853, %855 : vector<28x14xf32>
    %857 = vector.broadcast %809 : f32 to vector<28x14xf32>
    %858 = arith.mulf %15, %857 : vector<28x14xf32>
    %859 = arith.addf %856, %858 : vector<28x14xf32>
    %860 = vector.broadcast %810 : f32 to vector<28x14xf32>
    %861 = arith.mulf %17, %860 : vector<28x14xf32>
    %862 = arith.addf %859, %861 : vector<28x14xf32>
    %863 = vector.broadcast %811 : f32 to vector<28x14xf32>
    %864 = arith.mulf %18, %863 : vector<28x14xf32>
    %865 = arith.addf %862, %864 : vector<28x14xf32>
    %866 = vector.broadcast %812 : f32 to vector<28x14xf32>
    %867 = arith.mulf %19, %866 : vector<28x14xf32>
    %868 = arith.addf %865, %867 : vector<28x14xf32>
    %869 = vector.broadcast %813 : f32 to vector<28x14xf32>
    %870 = arith.addf %868, %869 : vector<28x14xf32>
    %871 = math.tanh %870 : vector<28x14xf32>
    %872 = arith.maximumf %842, %871 : vector<28x14xf32>
    %873 = vector.broadcast %804 : f32 to vector<28x14xf32>
    %874 = arith.mulf %12, %873 : vector<28x14xf32>
    %875 = vector.broadcast %805 : f32 to vector<28x14xf32>
    %876 = arith.mulf %13, %875 : vector<28x14xf32>
    %877 = arith.addf %874, %876 : vector<28x14xf32>
    %878 = vector.broadcast %806 : f32 to vector<28x14xf32>
    %879 = arith.mulf %14, %878 : vector<28x14xf32>
    %880 = arith.addf %877, %879 : vector<28x14xf32>
    %881 = vector.broadcast %807 : f32 to vector<28x14xf32>
    %882 = arith.mulf %16, %881 : vector<28x14xf32>
    %883 = arith.addf %880, %882 : vector<28x14xf32>
    %884 = vector.broadcast %808 : f32 to vector<28x14xf32>
    %885 = arith.mulf %17, %884 : vector<28x14xf32>
    %886 = arith.addf %883, %885 : vector<28x14xf32>
    %887 = vector.broadcast %809 : f32 to vector<28x14xf32>
    %888 = arith.mulf %18, %887 : vector<28x14xf32>
    %889 = arith.addf %886, %888 : vector<28x14xf32>
    %890 = vector.broadcast %810 : f32 to vector<28x14xf32>
    %891 = arith.mulf %20, %890 : vector<28x14xf32>
    %892 = arith.addf %889, %891 : vector<28x14xf32>
    %893 = vector.broadcast %811 : f32 to vector<28x14xf32>
    %894 = arith.mulf %21, %893 : vector<28x14xf32>
    %895 = arith.addf %892, %894 : vector<28x14xf32>
    %896 = vector.broadcast %812 : f32 to vector<28x14xf32>
    %897 = arith.mulf %22, %896 : vector<28x14xf32>
    %898 = arith.addf %895, %897 : vector<28x14xf32>
    %899 = vector.broadcast %813 : f32 to vector<28x14xf32>
    %900 = arith.addf %898, %899 : vector<28x14xf32>
    %901 = math.tanh %900 : vector<28x14xf32>
    %902 = arith.maximumf %872, %901 : vector<28x14xf32>
    %903 = vector.broadcast %804 : f32 to vector<28x14xf32>
    %904 = arith.mulf %13, %903 : vector<28x14xf32>
    %905 = vector.broadcast %805 : f32 to vector<28x14xf32>
    %906 = arith.mulf %14, %905 : vector<28x14xf32>
    %907 = arith.addf %904, %906 : vector<28x14xf32>
    %908 = vector.broadcast %806 : f32 to vector<28x14xf32>
    %909 = arith.mulf %15, %908 : vector<28x14xf32>
    %910 = arith.addf %907, %909 : vector<28x14xf32>
    %911 = vector.broadcast %807 : f32 to vector<28x14xf32>
    %912 = arith.mulf %17, %911 : vector<28x14xf32>
    %913 = arith.addf %910, %912 : vector<28x14xf32>
    %914 = vector.broadcast %808 : f32 to vector<28x14xf32>
    %915 = arith.mulf %18, %914 : vector<28x14xf32>
    %916 = arith.addf %913, %915 : vector<28x14xf32>
    %917 = vector.broadcast %809 : f32 to vector<28x14xf32>
    %918 = arith.mulf %19, %917 : vector<28x14xf32>
    %919 = arith.addf %916, %918 : vector<28x14xf32>
    %920 = vector.broadcast %810 : f32 to vector<28x14xf32>
    %921 = arith.mulf %21, %920 : vector<28x14xf32>
    %922 = arith.addf %919, %921 : vector<28x14xf32>
    %923 = vector.broadcast %811 : f32 to vector<28x14xf32>
    %924 = arith.mulf %22, %923 : vector<28x14xf32>
    %925 = arith.addf %922, %924 : vector<28x14xf32>
    %926 = vector.broadcast %812 : f32 to vector<28x14xf32>
    %927 = arith.mulf %23, %926 : vector<28x14xf32>
    %928 = arith.addf %925, %927 : vector<28x14xf32>
    %929 = vector.broadcast %813 : f32 to vector<28x14xf32>
    %930 = arith.addf %928, %929 : vector<28x14xf32>
    %931 = math.tanh %930 : vector<28x14xf32>
    %932 = arith.maximumf %902, %931 : vector<28x14xf32>
    %c0_143 = arith.constant 0 : index
    %c84 = arith.constant 84 : index
    %933 = vector.load %arg8[%c0_143, %c84] : memref<28x112xf32, #tpu.memory_space<vmem>>, vector<28x14xf32>
    tpu.vector_store %arg8[%c0_143, %c84], %932 {strides = array<i32>} : memref<28x112xf32, #tpu.memory_space<vmem>>, vector<28x14xf32>,
    %c7_144 = arith.constant 7 : index
    %c0_145 = arith.constant 0 : index
    %934 = memref.load %arg1[%c7_144, %c0_145] : memref<8x9xf32, #tpu.memory_space<smem>>
    %c7_146 = arith.constant 7 : index
    %c1_147 = arith.constant 1 : index
    %935 = memref.load %arg1[%c7_146, %c1_147] : memref<8x9xf32, #tpu.memory_space<smem>>
    %c7_148 = arith.constant 7 : index
    %c2_149 = arith.constant 2 : index
    %936 = memref.load %arg1[%c7_148, %c2_149] : memref<8x9xf32, #tpu.memory_space<smem>>
    %c7_150 = arith.constant 7 : index
    %c3_151 = arith.constant 3 : index
    %937 = memref.load %arg1[%c7_150, %c3_151] : memref<8x9xf32, #tpu.memory_space<smem>>
    %c7_152 = arith.constant 7 : index
    %c4_153 = arith.constant 4 : index
    %938 = memref.load %arg1[%c7_152, %c4_153] : memref<8x9xf32, #tpu.memory_space<smem>>
    %c7_154 = arith.constant 7 : index
    %c5_155 = arith.constant 5 : index
    %939 = memref.load %arg1[%c7_154, %c5_155] : memref<8x9xf32, #tpu.memory_space<smem>>
    %c7_156 = arith.constant 7 : index
    %c6_157 = arith.constant 6 : index
    %940 = memref.load %arg1[%c7_156, %c6_157] : memref<8x9xf32, #tpu.memory_space<smem>>
    %c7_158 = arith.constant 7 : index
    %c7_159 = arith.constant 7 : index
    %941 = memref.load %arg1[%c7_158, %c7_159] : memref<8x9xf32, #tpu.memory_space<smem>>
    %c7_160 = arith.constant 7 : index
    %c8_161 = arith.constant 8 : index
    %942 = memref.load %arg1[%c7_160, %c8_161] : memref<8x9xf32, #tpu.memory_space<smem>>
    %c7_162 = arith.constant 7 : index
    %943 = memref.load %arg2[%c7_162] : memref<8xf32, #tpu.memory_space<smem>>
    %944 = vector.broadcast %934 : f32 to vector<28x14xf32>
    %945 = arith.mulf %8, %944 : vector<28x14xf32>
    %946 = vector.broadcast %935 : f32 to vector<28x14xf32>
    %947 = arith.mulf %9, %946 : vector<28x14xf32>
    %948 = arith.addf %945, %947 : vector<28x14xf32>
    %949 = vector.broadcast %936 : f32 to vector<28x14xf32>
    %950 = arith.mulf %10, %949 : vector<28x14xf32>
    %951 = arith.addf %948, %950 : vector<28x14xf32>
    %952 = vector.broadcast %937 : f32 to vector<28x14xf32>
    %953 = arith.mulf %12, %952 : vector<28x14xf32>
    %954 = arith.addf %951, %953 : vector<28x14xf32>
    %955 = vector.broadcast %938 : f32 to vector<28x14xf32>
    %956 = arith.mulf %13, %955 : vector<28x14xf32>
    %957 = arith.addf %954, %956 : vector<28x14xf32>
    %958 = vector.broadcast %939 : f32 to vector<28x14xf32>
    %959 = arith.mulf %14, %958 : vector<28x14xf32>
    %960 = arith.addf %957, %959 : vector<28x14xf32>
    %961 = vector.broadcast %940 : f32 to vector<28x14xf32>
    %962 = arith.mulf %16, %961 : vector<28x14xf32>
    %963 = arith.addf %960, %962 : vector<28x14xf32>
    %964 = vector.broadcast %941 : f32 to vector<28x14xf32>
    %965 = arith.mulf %17, %964 : vector<28x14xf32>
    %966 = arith.addf %963, %965 : vector<28x14xf32>
    %967 = vector.broadcast %942 : f32 to vector<28x14xf32>
    %968 = arith.mulf %18, %967 : vector<28x14xf32>
    %969 = arith.addf %966, %968 : vector<28x14xf32>
    %970 = vector.broadcast %943 : f32 to vector<28x14xf32>
    %971 = arith.addf %969, %970 : vector<28x14xf32>
    %972 = math.tanh %971 : vector<28x14xf32>
    %973 = vector.broadcast %934 : f32 to vector<28x14xf32>
    %974 = arith.mulf %9, %973 : vector<28x14xf32>
    %975 = vector.broadcast %935 : f32 to vector<28x14xf32>
    %976 = arith.mulf %10, %975 : vector<28x14xf32>
    %977 = arith.addf %974, %976 : vector<28x14xf32>
    %978 = vector.broadcast %936 : f32 to vector<28x14xf32>
    %979 = arith.mulf %11, %978 : vector<28x14xf32>
    %980 = arith.addf %977, %979 : vector<28x14xf32>
    %981 = vector.broadcast %937 : f32 to vector<28x14xf32>
    %982 = arith.mulf %13, %981 : vector<28x14xf32>
    %983 = arith.addf %980, %982 : vector<28x14xf32>
    %984 = vector.broadcast %938 : f32 to vector<28x14xf32>
    %985 = arith.mulf %14, %984 : vector<28x14xf32>
    %986 = arith.addf %983, %985 : vector<28x14xf32>
    %987 = vector.broadcast %939 : f32 to vector<28x14xf32>
    %988 = arith.mulf %15, %987 : vector<28x14xf32>
    %989 = arith.addf %986, %988 : vector<28x14xf32>
    %990 = vector.broadcast %940 : f32 to vector<28x14xf32>
    %991 = arith.mulf %17, %990 : vector<28x14xf32>
    %992 = arith.addf %989, %991 : vector<28x14xf32>
    %993 = vector.broadcast %941 : f32 to vector<28x14xf32>
    %994 = arith.mulf %18, %993 : vector<28x14xf32>
    %995 = arith.addf %992, %994 : vector<28x14xf32>
    %996 = vector.broadcast %942 : f32 to vector<28x14xf32>
    %997 = arith.mulf %19, %996 : vector<28x14xf32>
    %998 = arith.addf %995, %997 : vector<28x14xf32>
    %999 = vector.broadcast %943 : f32 to vector<28x14xf32>
    %1000 = arith.addf %998, %999 : vector<28x14xf32>
    %1001 = math.tanh %1000 : vector<28x14xf32>
    %1002 = arith.maximumf %972, %1001 : vector<28x14xf32>
    %1003 = vector.broadcast %934 : f32 to vector<28x14xf32>
    %1004 = arith.mulf %12, %1003 : vector<28x14xf32>
    %1005 = vector.broadcast %935 : f32 to vector<28x14xf32>
    %1006 = arith.mulf %13, %1005 : vector<28x14xf32>
    %1007 = arith.addf %1004, %1006 : vector<28x14xf32>
    %1008 = vector.broadcast %936 : f32 to vector<28x14xf32>
    %1009 = arith.mulf %14, %1008 : vector<28x14xf32>
    %1010 = arith.addf %1007, %1009 : vector<28x14xf32>
    %1011 = vector.broadcast %937 : f32 to vector<28x14xf32>
    %1012 = arith.mulf %16, %1011 : vector<28x14xf32>
    %1013 = arith.addf %1010, %1012 : vector<28x14xf32>
    %1014 = vector.broadcast %938 : f32 to vector<28x14xf32>
    %1015 = arith.mulf %17, %1014 : vector<28x14xf32>
    %1016 = arith.addf %1013, %1015 : vector<28x14xf32>
    %1017 = vector.broadcast %939 : f32 to vector<28x14xf32>
    %1018 = arith.mulf %18, %1017 : vector<28x14xf32>
    %1019 = arith.addf %1016, %1018 : vector<28x14xf32>
    %1020 = vector.broadcast %940 : f32 to vector<28x14xf32>
    %1021 = arith.mulf %20, %1020 : vector<28x14xf32>
    %1022 = arith.addf %1019, %1021 : vector<28x14xf32>
    %1023 = vector.broadcast %941 : f32 to vector<28x14xf32>
    %1024 = arith.mulf %21, %1023 : vector<28x14xf32>
    %1025 = arith.addf %1022, %1024 : vector<28x14xf32>
    %1026 = vector.broadcast %942 : f32 to vector<28x14xf32>
    %1027 = arith.mulf %22, %1026 : vector<28x14xf32>
    %1028 = arith.addf %1025, %1027 : vector<28x14xf32>
    %1029 = vector.broadcast %943 : f32 to vector<28x14xf32>
    %1030 = arith.addf %1028, %1029 : vector<28x14xf32>
    %1031 = math.tanh %1030 : vector<28x14xf32>
    %1032 = arith.maximumf %1002, %1031 : vector<28x14xf32>
    %1033 = vector.broadcast %934 : f32 to vector<28x14xf32>
    %1034 = arith.mulf %13, %1033 : vector<28x14xf32>
    %1035 = vector.broadcast %935 : f32 to vector<28x14xf32>
    %1036 = arith.mulf %14, %1035 : vector<28x14xf32>
    %1037 = arith.addf %1034, %1036 : vector<28x14xf32>
    %1038 = vector.broadcast %936 : f32 to vector<28x14xf32>
    %1039 = arith.mulf %15, %1038 : vector<28x14xf32>
    %1040 = arith.addf %1037, %1039 : vector<28x14xf32>
    %1041 = vector.broadcast %937 : f32 to vector<28x14xf32>
    %1042 = arith.mulf %17, %1041 : vector<28x14xf32>
    %1043 = arith.addf %1040, %1042 : vector<28x14xf32>
    %1044 = vector.broadcast %938 : f32 to vector<28x14xf32>
    %1045 = arith.mulf %18, %1044 : vector<28x14xf32>
    %1046 = arith.addf %1043, %1045 : vector<28x14xf32>
    %1047 = vector.broadcast %939 : f32 to vector<28x14xf32>
    %1048 = arith.mulf %19, %1047 : vector<28x14xf32>
    %1049 = arith.addf %1046, %1048 : vector<28x14xf32>
    %1050 = vector.broadcast %940 : f32 to vector<28x14xf32>
    %1051 = arith.mulf %21, %1050 : vector<28x14xf32>
    %1052 = arith.addf %1049, %1051 : vector<28x14xf32>
    %1053 = vector.broadcast %941 : f32 to vector<28x14xf32>
    %1054 = arith.mulf %22, %1053 : vector<28x14xf32>
    %1055 = arith.addf %1052, %1054 : vector<28x14xf32>
    %1056 = vector.broadcast %942 : f32 to vector<28x14xf32>
    %1057 = arith.mulf %23, %1056 : vector<28x14xf32>
    %1058 = arith.addf %1055, %1057 : vector<28x14xf32>
    %1059 = vector.broadcast %943 : f32 to vector<28x14xf32>
    %1060 = arith.addf %1058, %1059 : vector<28x14xf32>
    %1061 = math.tanh %1060 : vector<28x14xf32>
    %1062 = arith.maximumf %1032, %1061 : vector<28x14xf32>
    %c0_163 = arith.constant 0 : index
    %c98 = arith.constant 98 : index
    %1063 = vector.load %arg8[%c0_163, %c98] : memref<28x112xf32, #tpu.memory_space<vmem>>, vector<28x14xf32>
    tpu.vector_store %arg8[%c0_163, %c98], %1062 {strides = array<i32>} : memref<28x112xf32, #tpu.memory_space<vmem>>, vector<28x14xf32>,
    %cst = arith.constant 0.000000e+00 : f32
    %1064 = vector.broadcast %cst : f32 to vector<2x100xf32>
    %c0_164 = arith.constant 0 : index
    %c0_165 = arith.constant 0 : index
    %1065 = vector.load %arg8[%c0_164, %c0_165] : memref<28x112xf32, #tpu.memory_space<vmem>>, vector<2x112xf32>
    %c0_166 = arith.constant 0 : index
    %c0_167 = arith.constant 0 : index
    %c0_168 = arith.constant 0 : index
    %1066 = vector.load %arg3[%c0_166, %c0_167, %c0_168] : memref<14x112x100xf32, #tpu.memory_space<vmem>>, vector<1x112x100xf32>
    %1067 = vector.shape_cast %1066 : vector<1x112x100xf32> to vector<112x100xf32>
    %cst_169 = arith.constant dense<0.000000e+00> : vector<2x100xf32>
    %1068 = tpu.matmul %1065, %1067, %cst_169 {dimension_numbers = #tpu.dot_dimension_numbers<[1], [0], [0], [1], [0, 0, 1, 1], [], []>} : vector<2x112xf32>, vector<112x100xf32>, vector<2x100xf32> -> vector<2x100xf32>
    %1069 = arith.addf %1064, %1068 : vector<2x100xf32>
    %c2_170 = arith.constant 2 : index
    %c0_171 = arith.constant 0 : index
    %1070 = vector.load %arg8[%c2_170, %c0_171] : memref<28x112xf32, #tpu.memory_space<vmem>>, vector<2x112xf32>
    %c1_172 = arith.constant 1 : index
    %c0_173 = arith.constant 0 : index
    %c0_174 = arith.constant 0 : index
    %1071 = vector.load %arg3[%c1_172, %c0_173, %c0_174] : memref<14x112x100xf32, #tpu.memory_space<vmem>>, vector<1x112x100xf32>
    %1072 = vector.shape_cast %1071 : vector<1x112x100xf32> to vector<112x100xf32>
    %cst_175 = arith.constant dense<0.000000e+00> : vector<2x100xf32>
    %1073 = tpu.matmul %1070, %1072, %cst_175 {dimension_numbers = #tpu.dot_dimension_numbers<[1], [0], [0], [1], [0, 0, 1, 1], [], []>} : vector<2x112xf32>, vector<112x100xf32>, vector<2x100xf32> -> vector<2x100xf32>
    %1074 = arith.addf %1069, %1073 : vector<2x100xf32>
    %c4_176 = arith.constant 4 : index
    %c0_177 = arith.constant 0 : index
    %1075 = vector.load %arg8[%c4_176, %c0_177] : memref<28x112xf32, #tpu.memory_space<vmem>>, vector<2x112xf32>
    %c2_178 = arith.constant 2 : index
    %c0_179 = arith.constant 0 : index
    %c0_180 = arith.constant 0 : index
    %1076 = vector.load %arg3[%c2_178, %c0_179, %c0_180] : memref<14x112x100xf32, #tpu.memory_space<vmem>>, vector<1x112x100xf32>
    %1077 = vector.shape_cast %1076 : vector<1x112x100xf32> to vector<112x100xf32>
    %cst_181 = arith.constant dense<0.000000e+00> : vector<2x100xf32>
    %1078 = tpu.matmul %1075, %1077, %cst_181 {dimension_numbers = #tpu.dot_dimension_numbers<[1], [0], [0], [1], [0, 0, 1, 1], [], []>} : vector<2x112xf32>, vector<112x100xf32>, vector<2x100xf32> -> vector<2x100xf32>
    %1079 = arith.addf %1074, %1078 : vector<2x100xf32>
    %c6_182 = arith.constant 6 : index
    %c0_183 = arith.constant 0 : index
    %1080 = vector.load %arg8[%c6_182, %c0_183] : memref<28x112xf32, #tpu.memory_space<vmem>>, vector<2x112xf32>
    %c3_184 = arith.constant 3 : index
    %c0_185 = arith.constant 0 : index
    %c0_186 = arith.constant 0 : index
    %1081 = vector.load %arg3[%c3_184, %c0_185, %c0_186] : memref<14x112x100xf32, #tpu.memory_space<vmem>>, vector<1x112x100xf32>
    %1082 = vector.shape_cast %1081 : vector<1x112x100xf32> to vector<112x100xf32>
    %cst_187 = arith.constant dense<0.000000e+00> : vector<2x100xf32>
    %1083 = tpu.matmul %1080, %1082, %cst_187 {dimension_numbers = #tpu.dot_dimension_numbers<[1], [0], [0], [1], [0, 0, 1, 1], [], []>} : vector<2x112xf32>, vector<112x100xf32>, vector<2x100xf32> -> vector<2x100xf32>
    %1084 = arith.addf %1079, %1083 : vector<2x100xf32>
    %c8_188 = arith.constant 8 : index
    %c0_189 = arith.constant 0 : index
    %1085 = vector.load %arg8[%c8_188, %c0_189] : memref<28x112xf32, #tpu.memory_space<vmem>>, vector<2x112xf32>
    %c4_190 = arith.constant 4 : index
    %c0_191 = arith.constant 0 : index
    %c0_192 = arith.constant 0 : index
    %1086 = vector.load %arg3[%c4_190, %c0_191, %c0_192] : memref<14x112x100xf32, #tpu.memory_space<vmem>>, vector<1x112x100xf32>
    %1087 = vector.shape_cast %1086 : vector<1x112x100xf32> to vector<112x100xf32>
    %cst_193 = arith.constant dense<0.000000e+00> : vector<2x100xf32>
    %1088 = tpu.matmul %1085, %1087, %cst_193 {dimension_numbers = #tpu.dot_dimension_numbers<[1], [0], [0], [1], [0, 0, 1, 1], [], []>} : vector<2x112xf32>, vector<112x100xf32>, vector<2x100xf32> -> vector<2x100xf32>
    %1089 = arith.addf %1084, %1088 : vector<2x100xf32>
    %c10 = arith.constant 10 : index
    %c0_194 = arith.constant 0 : index
    %1090 = vector.load %arg8[%c10, %c0_194] : memref<28x112xf32, #tpu.memory_space<vmem>>, vector<2x112xf32>
    %c5_195 = arith.constant 5 : index
    %c0_196 = arith.constant 0 : index
    %c0_197 = arith.constant 0 : index
    %1091 = vector.load %arg3[%c5_195, %c0_196, %c0_197] : memref<14x112x100xf32, #tpu.memory_space<vmem>>, vector<1x112x100xf32>
    %1092 = vector.shape_cast %1091 : vector<1x112x100xf32> to vector<112x100xf32>
    %cst_198 = arith.constant dense<0.000000e+00> : vector<2x100xf32>
    %1093 = tpu.matmul %1090, %1092, %cst_198 {dimension_numbers = #tpu.dot_dimension_numbers<[1], [0], [0], [1], [0, 0, 1, 1], [], []>} : vector<2x112xf32>, vector<112x100xf32>, vector<2x100xf32> -> vector<2x100xf32>
    %1094 = arith.addf %1089, %1093 : vector<2x100xf32>
    %c12 = arith.constant 12 : index
    %c0_199 = arith.constant 0 : index
    %1095 = vector.load %arg8[%c12, %c0_199] : memref<28x112xf32, #tpu.memory_space<vmem>>, vector<2x112xf32>
    %c6_200 = arith.constant 6 : index
    %c0_201 = arith.constant 0 : index
    %c0_202 = arith.constant 0 : index
    %1096 = vector.load %arg3[%c6_200, %c0_201, %c0_202] : memref<14x112x100xf32, #tpu.memory_space<vmem>>, vector<1x112x100xf32>
    %1097 = vector.shape_cast %1096 : vector<1x112x100xf32> to vector<112x100xf32>
    %cst_203 = arith.constant dense<0.000000e+00> : vector<2x100xf32>
    %1098 = tpu.matmul %1095, %1097, %cst_203 {dimension_numbers = #tpu.dot_dimension_numbers<[1], [0], [0], [1], [0, 0, 1, 1], [], []>} : vector<2x112xf32>, vector<112x100xf32>, vector<2x100xf32> -> vector<2x100xf32>
    %1099 = arith.addf %1094, %1098 : vector<2x100xf32>
    %c14_204 = arith.constant 14 : index
    %c0_205 = arith.constant 0 : index
    %1100 = vector.load %arg8[%c14_204, %c0_205] : memref<28x112xf32, #tpu.memory_space<vmem>>, vector<2x112xf32>
    %c7_206 = arith.constant 7 : index
    %c0_207 = arith.constant 0 : index
    %c0_208 = arith.constant 0 : index
    %1101 = vector.load %arg3[%c7_206, %c0_207, %c0_208] : memref<14x112x100xf32, #tpu.memory_space<vmem>>, vector<1x112x100xf32>
    %1102 = vector.shape_cast %1101 : vector<1x112x100xf32> to vector<112x100xf32>
    %cst_209 = arith.constant dense<0.000000e+00> : vector<2x100xf32>
    %1103 = tpu.matmul %1100, %1102, %cst_209 {dimension_numbers = #tpu.dot_dimension_numbers<[1], [0], [0], [1], [0, 0, 1, 1], [], []>} : vector<2x112xf32>, vector<112x100xf32>, vector<2x100xf32> -> vector<2x100xf32>
    %1104 = arith.addf %1099, %1103 : vector<2x100xf32>
    %c16 = arith.constant 16 : index
    %c0_210 = arith.constant 0 : index
    %1105 = vector.load %arg8[%c16, %c0_210] : memref<28x112xf32, #tpu.memory_space<vmem>>, vector<2x112xf32>
    %c8_211 = arith.constant 8 : index
    %c0_212 = arith.constant 0 : index
    %c0_213 = arith.constant 0 : index
    %1106 = vector.load %arg3[%c8_211, %c0_212, %c0_213] : memref<14x112x100xf32, #tpu.memory_space<vmem>>, vector<1x112x100xf32>
    %1107 = vector.shape_cast %1106 : vector<1x112x100xf32> to vector<112x100xf32>
    %cst_214 = arith.constant dense<0.000000e+00> : vector<2x100xf32>
    %1108 = tpu.matmul %1105, %1107, %cst_214 {dimension_numbers = #tpu.dot_dimension_numbers<[1], [0], [0], [1], [0, 0, 1, 1], [], []>} : vector<2x112xf32>, vector<112x100xf32>, vector<2x100xf32> -> vector<2x100xf32>
    %1109 = arith.addf %1104, %1108 : vector<2x100xf32>
    %c18 = arith.constant 18 : index
    %c0_215 = arith.constant 0 : index
    %1110 = vector.load %arg8[%c18, %c0_215] : memref<28x112xf32, #tpu.memory_space<vmem>>, vector<2x112xf32>
    %c9 = arith.constant 9 : index
    %c0_216 = arith.constant 0 : index
    %c0_217 = arith.constant 0 : index
    %1111 = vector.load %arg3[%c9, %c0_216, %c0_217] : memref<14x112x100xf32, #tpu.memory_space<vmem>>, vector<1x112x100xf32>
    %1112 = vector.shape_cast %1111 : vector<1x112x100xf32> to vector<112x100xf32>
    %cst_218 = arith.constant dense<0.000000e+00> : vector<2x100xf32>
    %1113 = tpu.matmul %1110, %1112, %cst_218 {dimension_numbers = #tpu.dot_dimension_numbers<[1], [0], [0], [1], [0, 0, 1, 1], [], []>} : vector<2x112xf32>, vector<112x100xf32>, vector<2x100xf32> -> vector<2x100xf32>
    %1114 = arith.addf %1109, %1113 : vector<2x100xf32>
    %c20 = arith.constant 20 : index
    %c0_219 = arith.constant 0 : index
    %1115 = vector.load %arg8[%c20, %c0_219] : memref<28x112xf32, #tpu.memory_space<vmem>>, vector<2x112xf32>
    %c10_220 = arith.constant 10 : index
    %c0_221 = arith.constant 0 : index
    %c0_222 = arith.constant 0 : index
    %1116 = vector.load %arg3[%c10_220, %c0_221, %c0_222] : memref<14x112x100xf32, #tpu.memory_space<vmem>>, vector<1x112x100xf32>
    %1117 = vector.shape_cast %1116 : vector<1x112x100xf32> to vector<112x100xf32>
    %cst_223 = arith.constant dense<0.000000e+00> : vector<2x100xf32>
    %1118 = tpu.matmul %1115, %1117, %cst_223 {dimension_numbers = #tpu.dot_dimension_numbers<[1], [0], [0], [1], [0, 0, 1, 1], [], []>} : vector<2x112xf32>, vector<112x100xf32>, vector<2x100xf32> -> vector<2x100xf32>
    %1119 = arith.addf %1114, %1118 : vector<2x100xf32>
    %c22 = arith.constant 22 : index
    %c0_224 = arith.constant 0 : index
    %1120 = vector.load %arg8[%c22, %c0_224] : memref<28x112xf32, #tpu.memory_space<vmem>>, vector<2x112xf32>
    %c11 = arith.constant 11 : index
    %c0_225 = arith.constant 0 : index
    %c0_226 = arith.constant 0 : index
    %1121 = vector.load %arg3[%c11, %c0_225, %c0_226] : memref<14x112x100xf32, #tpu.memory_space<vmem>>, vector<1x112x100xf32>
    %1122 = vector.shape_cast %1121 : vector<1x112x100xf32> to vector<112x100xf32>
    %cst_227 = arith.constant dense<0.000000e+00> : vector<2x100xf32>
    %1123 = tpu.matmul %1120, %1122, %cst_227 {dimension_numbers = #tpu.dot_dimension_numbers<[1], [0], [0], [1], [0, 0, 1, 1], [], []>} : vector<2x112xf32>, vector<112x100xf32>, vector<2x100xf32> -> vector<2x100xf32>
    %1124 = arith.addf %1119, %1123 : vector<2x100xf32>
    %c24 = arith.constant 24 : index
    %c0_228 = arith.constant 0 : index
    %1125 = vector.load %arg8[%c24, %c0_228] : memref<28x112xf32, #tpu.memory_space<vmem>>, vector<2x112xf32>
    %c12_229 = arith.constant 12 : index
    %c0_230 = arith.constant 0 : index
    %c0_231 = arith.constant 0 : index
    %1126 = vector.load %arg3[%c12_229, %c0_230, %c0_231] : memref<14x112x100xf32, #tpu.memory_space<vmem>>, vector<1x112x100xf32>
    %1127 = vector.shape_cast %1126 : vector<1x112x100xf32> to vector<112x100xf32>
    %cst_232 = arith.constant dense<0.000000e+00> : vector<2x100xf32>
    %1128 = tpu.matmul %1125, %1127, %cst_232 {dimension_numbers = #tpu.dot_dimension_numbers<[1], [0], [0], [1], [0, 0, 1, 1], [], []>} : vector<2x112xf32>, vector<112x100xf32>, vector<2x100xf32> -> vector<2x100xf32>
    %1129 = arith.addf %1124, %1128 : vector<2x100xf32>
    %c26 = arith.constant 26 : index
    %c0_233 = arith.constant 0 : index
    %1130 = vector.load %arg8[%c26, %c0_233] : memref<28x112xf32, #tpu.memory_space<vmem>>, vector<2x112xf32>
    %c13 = arith.constant 13 : index
    %c0_234 = arith.constant 0 : index
    %c0_235 = arith.constant 0 : index
    %1131 = vector.load %arg3[%c13, %c0_234, %c0_235] : memref<14x112x100xf32, #tpu.memory_space<vmem>>, vector<1x112x100xf32>
    %1132 = vector.shape_cast %1131 : vector<1x112x100xf32> to vector<112x100xf32>
    %cst_236 = arith.constant dense<0.000000e+00> : vector<2x100xf32>
    %1133 = tpu.matmul %1130, %1132, %cst_236 {dimension_numbers = #tpu.dot_dimension_numbers<[1], [0], [0], [1], [0, 0, 1, 1], [], []>} : vector<2x112xf32>, vector<112x100xf32>, vector<2x100xf32> -> vector<2x100xf32>
    %1134 = arith.addf %1129, %1133 : vector<2x100xf32>
    %c0_237 = arith.constant 0 : index
    %c0_238 = arith.constant 0 : index
    %1135 = vector.load %arg4[%c0_237, %c0_238] : memref<1x100xf32, #tpu.memory_space<vmem>>, vector<1x100xf32>
    %1136 = vector.broadcast %1135 : vector<1x100xf32> to vector<2x100xf32>
    %1137 = arith.addf %1134, %1136 : vector<2x100xf32>
    %cst_239 = arith.constant 0.000000e+00 : f32
    %1138 = vector.broadcast %cst_239 : f32 to vector<2x100xf32>
    %1139 = arith.maximumf %1137, %1138 : vector<2x100xf32>
    %c0_240 = arith.constant 0 : index
    %c0_241 = arith.constant 0 : index
    %1140 = vector.load %arg5[%c0_240, %c0_241] : memref<100x10xf32, #tpu.memory_space<vmem>>, vector<100x10xf32>
    %cst_242 = arith.constant dense<0.000000e+00> : vector<2x10xf32>
    %1141 = tpu.matmul %1139, %1140, %cst_242 {dimension_numbers = #tpu.dot_dimension_numbers<[1], [0], [0], [1], [0, 0, 1, 1], [], []>} : vector<2x100xf32>, vector<100x10xf32>, vector<2x10xf32> -> vector<2x10xf32>
    %c0_243 = arith.constant 0 : index
    %c0_244 = arith.constant 0 : index
    %1142 = vector.load %arg6[%c0_243, %c0_244] : memref<1x10xf32, #tpu.memory_space<vmem>>, vector<1x10xf32>
    %1143 = vector.broadcast %1142 : vector<1x10xf32> to vector<2x10xf32>
    %1144 = arith.addf %1141, %1143 : vector<2x10xf32>
    %c0_245 = arith.constant 0 : index
    %c0_246 = arith.constant 0 : index
    %1145 = vector.load %arg7[%c0_245, %c0_246] : memref<2x10xf32, #tpu.memory_space<vmem>>, vector<2x10xf32>
    tpu.vector_store %arg7[%c0_245, %c0_246], %1144 {strides = array<i32>} : memref<2x10xf32, #tpu.memory_space<vmem>>, vector<2x10xf32>,
    return
  }
}

</mosaic_0001>

<llo_original>
// kernel: forward.1
$region0: #{forward.1}
  #allocation0 [shape = 'u32[]', space=smem, size = 0x4, offset = 0x4, fixed_abs, tag = 'smem constant byte address 0x4 - core index']
  #allocation1 [shape = 'u32[72,128]{1,0:T(1,128)}', space=vmem, size = 0x9000, scoped, tag = 'internal scratch']
  #allocation2 [shape = 'f32[28,112]{1,0:T(8,128)}', space=vmem, size = 0x4000, scoped, tag = 'scratch operand']
  %s0 = inlined_call_operand.vmem [shape: f32[4,30,15], index: 0, kind: input, shape index: {}]
  %s1 = inlined_call_operand.vmem [shape: f32[8,9], index: 1, kind: input, shape index: {}]
  %s2 = inlined_call_operand.vmem [shape: f32[8], index: 2, kind: input, shape index: {}]
  %s3 = inlined_call_operand.vmem [shape: f32[14,112,100], index: 3, kind: input, shape index: {}]
  %s4 = inlined_call_operand.vmem [shape: f32[1,100], index: 4, kind: input, shape index: {}]
  %s5 = inlined_call_operand.vmem [shape: f32[100,10], index: 5, kind: input, shape index: {}]
  %s6 = inlined_call_operand.vmem [shape: f32[1,10], index: 6, kind: input, shape index: {}]
  %s7 = inlined_call_operand.hbm [shape: f32[2,10], index: 7, kind: output, shape index: {}]
  %s8 = sld [smem:[#allocation0]]
  $region46: #{forward.1} parent=0
    _
  %s10 = ssub.s32 1, %s8
  %s11 = scalar_select 0, %s10, %s8
  $region1: #{forward.1} parent=0
    #allocation3 [shape = 'u8[4096]{0}', space=smem, size = 0x1000, scoped, tag = 'input window, operand 1, single buffered']
    #allocation4 [shape = 's32[1]{0}', space=sflag, size = 0x4, scoped, tag = 'scoped memory for forward.1']
    #allocation5 [shape = 's32[1]{0}', space=sflag, size = 0x4, scoped, tag = 'scoped memory for forward.1']
    #allocation6 [shape = 'u8[512]{0}', space=smem, size = 0x200, scoped, tag = 'input window, operand 2, single buffered']
    #allocation7 [shape = 's32[1]{0}', space=sflag, size = 0x4, scoped, tag = 'scoped memory for forward.1']
    #allocation8 [shape = 'u8[1024]{0}', space=vmem, size = 0x400, scoped, tag = 'output window, operand 0, single buffered']
    %12 = vsyncpa [#allocation5], 0
    %13 = vsyncpa [#allocation7], 0
    %14 = vsyncpa [#allocation4], 0
    // Predicated region
    $region2: #{forward.1} parent=1 // pred_check
      _
    $region3: #{forward.1} parent=1 // pred_check_branch
      %16 = sbr.rel (0) target = $region5
    $region4: #{forward.1} parent=1 // pred_region
      _
    $region5: #{forward.1} parent=1 // pred_fallthru
      _
    // Predicated region
    $region6: #{forward.1} parent=1 // pred_check
      _
    $region7: #{forward.1} parent=1 // pred_check_branch
      %18 = sbr.rel (0) target = $region9
    $region8: #{forward.1} parent=1 // pred_region
      %20 = vsyncadd [#allocation5], 0
      %s22 = sshll.u32 %s1, 4
      %s23 = int_to_ptr.vmem [resolvable:$true] %s22
      %25 = dma.vmem_to_smem %s23, 128, [#allocation3], [#allocation5]
    $region9: #{forward.1} parent=1 // pred_fallthru
      _
    // Predicated region
    $region10: #{forward.1} parent=1 // pred_check
      _
    $region11: #{forward.1} parent=1 // pred_check_branch
      %27 = sbr.rel (0) target = $region13
    $region12: #{forward.1} parent=1 // pred_region
      %29 = vsyncadd [#allocation7], 0
      %s31 = sshll.u32 %s2, 4
      %s32 = int_to_ptr.vmem [resolvable:$true] %s31
      %34 = dma.vmem_to_smem %s32, 16, [#allocation6], [#allocation7]
    $region13: #{forward.1} parent=1 // pred_fallthru
      _
    // Predicated region
    $region14: #{forward.1} parent=1 // pred_check
      _
    $region15: #{forward.1} parent=1 // pred_check_branch
      %36 = sbr.rel (0) target = $region17
    $region16: #{forward.1} parent=1 // pred_region
      _
    $region17: #{forward.1} parent=1 // pred_fallthru
      _
    // Predicated region
    $region18: #{forward.1} parent=1 // pred_check
      _
    $region19: #{forward.1} parent=1 // pred_check_branch
      %38 = sbr.rel (0) target = $region21
    $region20: #{forward.1} parent=1 // pred_region
      _
    $region21: #{forward.1} parent=1 // pred_fallthru
      _
    // Predicated region
    $region22: #{forward.1} parent=1 // pred_check
      _
    $region23: #{forward.1} parent=1 // pred_check_branch
      %40 = sbr.rel (0) target = $region25
    $region24: #{forward.1} parent=1 // pred_region
      _
    $region25: #{forward.1} parent=1 // pred_fallthru
      _
    // Predicated region
    $region26: #{forward.1} parent=1 // pred_check
      _
    $region27: #{forward.1} parent=1 // pred_check_branch
      %42 = sbr.rel (0) target = $region29
    $region28: #{forward.1} parent=1 // pred_region
      _
    $region29: #{forward.1} parent=1 // pred_fallthru
      _
    // Predicated region
    $region30: #{forward.1} parent=1 // pred_check
      _
    $region31: #{forward.1} parent=1 // pred_check_branch
      %44 = sbr.rel (0) target = $region33
    $region32: #{forward.1} parent=1 // pred_region
      %46 = dma.done [#allocation5], 128
    $region33: #{forward.1} parent=1 // pred_fallthru
      _
    // Predicated region
    $region34: #{forward.1} parent=1 // pred_check
      _
    $region35: #{forward.1} parent=1 // pred_check_branch
      %48 = sbr.rel (0) target = $region37
    $region36: #{forward.1} parent=1 // pred_region
      %50 = dma.done [#allocation7], 16
    $region37: #{forward.1} parent=1 // pred_fallthru
      _
    %51 = sfence
    %v52 = vld [vmem:[%s0] sm:$0xff]
    %v53 = vld [vmem:[%s0 + $0x8] sm:$0xff]
    %v54 = vld [vmem:[%s0 + $0x10] sm:$0xff]
    %v55 = vld [vmem:[%s0 + $0x18] sm:$0x3f]
    %s56 = scalar_lea.vmem %s0, 32
    %v57 = vld [vmem:[%s56] sm:$0xff]
    %v58 = vld [vmem:[%s56 + $0x8] sm:$0xff]
    %v59 = vld [vmem:[%s56 + $0x10] sm:$0xff]
    %v60 = vld [vmem:[%s56 + $0x18] sm:$0x3f]
    %s61 = scalar_lea.vmem %s0, 64
    %v62 = vld [vmem:[%s61] sm:$0xff]
    %v63 = vld [vmem:[%s61 + $0x8] sm:$0xff]
    %v64 = vld [vmem:[%s61 + $0x10] sm:$0xff]
    %v65 = vld [vmem:[%s61 + $0x18] sm:$0x3f]
    %s66 = scalar_lea.vmem %s0, 96
    %v67 = vld [vmem:[%s66] sm:$0xff]
    %v68 = vld [vmem:[%s66 + $0x8] sm:$0xff]
    %v69 = vld [vmem:[%s66 + $0x10] sm:$0xff]
    %v70 = vld [vmem:[%s66 + $0x18] sm:$0x3f]
    %s71 = sld [smem:[#allocation3]]
    %s72 = sld [smem:[#allocation3 + $0x1]]
    %s73 = sld [smem:[#allocation3 + $0x2]]
    %s74 = sld [smem:[#allocation3 + $0x3]]
    %s75 = sld [smem:[#allocation3 + $0x4]]
    %s76 = sld [smem:[#allocation3 + $0x5]]
    %s77 = sld [smem:[#allocation3 + $0x6]]
    %s78 = sld [smem:[#allocation3 + $0x7]]
    %s79 = sld [smem:[#allocation3 + $0x8]]
    %s80 = sld [smem:[#allocation6]]
    %v81 = vstv %s71
    %v82 = vmul.f32 %v52, %v81
    %v83 = vmul.f32 %v53, %v81
    %v84 = vmul.f32 %v54, %v81
    %v85 = vmul.f32 %v55, %v81
    %v86 = vstv %s72
    %v87 = vmul.f32 %v57, %v86
    %v88 = vmul.f32 %v58, %v86
    %v89 = vmul.f32 %v59, %v86
    %v90 = vmul.f32 %v60, %v86
    %v91 = vadd.f32 %v82, %v87
    %v92 = vadd.f32 %v83, %v88
    %v93 = vadd.f32 %v84, %v89
    %v94 = vadd.f32 %v85, %v90
    %v95 = vstv %s73
    %v96 = vmul.f32 %v52, %v95
    %v97 = vmul.f32 %v53, %v95
    %v98 = vmul.f32 %v54, %v95
    %v99 = vmul.f32 %v55, %v95
    %104 = vrot.lane.b32.xlu0 %v96, 127
    %v105 = vpop.permute.xlu0 %104
    %106 = vrot.lane.b32.xlu0 %v97, 127
    %v107 = vpop.permute.xlu0 %106
    %108 = vrot.lane.b32.xlu0 %v98, 127
    %v109 = vpop.permute.xlu0 %108
    %110 = vrot.lane.b32.xlu0 %v99, 127
    %v111 = vpop.permute.xlu0 %110
    %v116 = vadd.f32 %v91, %v105
    %v117 = vadd.f32 %v92, %v107
    %v118 = vadd.f32 %v93, %v109
    %v119 = vadd.f32 %v94, %v111
    %v120 = vstv %s74
    %v121 = vmul.f32 %v62, %v120
    %v122 = vmul.f32 %v63, %v120
    %v123 = vmul.f32 %v64, %v120
    %v124 = vmul.f32 %v65, %v120
    %v125 = vadd.f32 %v116, %v121
    %v126 = vadd.f32 %v117, %v122
    %v127 = vadd.f32 %v118, %v123
    %v128 = vadd.f32 %v119, %v124
    %v129 = vstv %s75
    %v130 = vmul.f32 %v67, %v129
    %v131 = vmul.f32 %v68, %v129
    %v132 = vmul.f32 %v69, %v129
    %v133 = vmul.f32 %v70, %v129
    %v134 = vadd.f32 %v125, %v130
    %v135 = vadd.f32 %v126, %v131
    %v136 = vadd.f32 %v127, %v132
    %v137 = vadd.f32 %v128, %v133
    %v138 = vstv %s76
    %v139 = vmul.f32 %v62, %v138
    %v140 = vmul.f32 %v63, %v138
    %v141 = vmul.f32 %v64, %v138
    %v142 = vmul.f32 %v65, %v138
    %147 = vrot.lane.b32.xlu0 %v139, 127
    %v148 = vpop.permute.xlu0 %147
    %149 = vrot.lane.b32.xlu0 %v140, 127
    %v150 = vpop.permute.xlu0 %149
    %151 = vrot.lane.b32.xlu0 %v141, 127
    %v152 = vpop.permute.xlu0 %151
    %153 = vrot.lane.b32.xlu0 %v142, 127
    %v154 = vpop.permute.xlu0 %153
    %v159 = vadd.f32 %v134, %v148
    %v160 = vadd.f32 %v135, %v150
    %v161 = vadd.f32 %v136, %v152
    %v162 = vadd.f32 %v137, %v154
    %v163 = vstv %s77
    %v164 = vmul.f32 %v52, %v163
    %v165 = vmul.f32 %v53, %v163
    %v166 = vmul.f32 %v54, %v163
    %v167 = vmul.f32 %v55, %v163
    %vm172 = vcmask 1045504
    %v173 = vrot.slane %v164, 2
    %v174 = vrot.slane %v165, 2
    %v175 = vsel %vm172, %v173, %v174
    %v176 = vrot.slane %v166, 2
    %v177 = vsel %vm172, %v174, %v176
    %v178 = vrot.slane %v167, 2
    %v179 = vsel %vm172, %v176, %v178
    %v184 = vadd.f32 %v159, %v175
    %v185 = vadd.f32 %v160, %v177
    %v186 = vadd.f32 %v161, %v179
    %v187 = vadd.f32 %v162, %v178
    %v188 = vstv %s78
    %v189 = vmul.f32 %v57, %v188
    %v190 = vmul.f32 %v58, %v188
    %v191 = vmul.f32 %v59, %v188
    %v192 = vmul.f32 %v60, %v188
    %v197 = vrot.slane %v189, 2
    %v198 = vrot.slane %v190, 2
    %v199 = vsel %vm172, %v197, %v198
    %v200 = vrot.slane %v191, 2
    %v201 = vsel %vm172, %v198, %v200
    %v202 = vrot.slane %v192, 2
    %v203 = vsel %vm172, %v200, %v202
    %v208 = vadd.f32 %v184, %v199
    %v209 = vadd.f32 %v185, %v201
    %v210 = vadd.f32 %v186, %v203
    %v211 = vadd.f32 %v187, %v202
    %v212 = vstv %s79
    %v213 = vmul.f32 %v52, %v212
    %v214 = vmul.f32 %v53, %v212
    %v215 = vmul.f32 %v54, %v212
    %v216 = vmul.f32 %v55, %v212
    %v221 = vrot.slane %v213, 2
    %v222 = vrot.slane %v214, 2
    %v223 = vsel %vm172, %v221, %v222
    %v224 = vrot.slane %v215, 2
    %v225 = vsel %vm172, %v222, %v224
    %v226 = vrot.slane %v216, 2
    %v227 = vsel %vm172, %v224, %v226
    %228 = vrot.lane.b32.xlu0 %v223, 127
    %v229 = vpop.permute.xlu0 %228
    %230 = vrot.lane.b32.xlu0 %v225, 127
    %v231 = vpop.permute.xlu0 %230
    %232 = vrot.lane.b32.xlu0 %v227, 127
    %v233 = vpop.permute.xlu0 %232
    %234 = vrot.lane.b32.xlu0 %v226, 127
    %v235 = vpop.permute.xlu0 %234
    %v240 = vadd.f32 %v208, %v229
    %v241 = vadd.f32 %v209, %v231
    %v242 = vadd.f32 %v210, %v233
    %v243 = vadd.f32 %v211, %v235
    %v244 = vstv %s80
    %v245 = vadd.f32 %v240, %v244
    %v246 = vadd.f32 %v241, %v244
    %v247 = vadd.f32 %v242, %v244
    %v248 = vadd.f32 %v243, %v244
    %v249 = vtanh.pop %v245
    %v250 = vtanh.pop %v246
    %v251 = vtanh.pop %v247
    %v252 = vtanh.pop %v248
    %v253 = vmul.f32 %v57, %v81
    %v254 = vmul.f32 %v58, %v81
    %v255 = vmul.f32 %v59, %v81
    %v256 = vmul.f32 %v60, %v81
    %v257 = vmul.f32 %v52, %v86
    %v258 = vmul.f32 %v53, %v86
    %v259 = vmul.f32 %v54, %v86
    %v260 = vmul.f32 %v55, %v86
    %265 = vrot.lane.b32.xlu0 %v257, 127
    %v266 = vpop.permute.xlu0 %265
    %267 = vrot.lane.b32.xlu0 %v258, 127
    %v268 = vpop.permute.xlu0 %267
    %269 = vrot.lane.b32.xlu0 %v259, 127
    %v270 = vpop.permute.xlu0 %269
    %271 = vrot.lane.b32.xlu0 %v260, 127
    %v272 = vpop.permute.xlu0 %271
    %v277 = vadd.f32 %v253, %v266
    %v278 = vadd.f32 %v254, %v268
    %v279 = vadd.f32 %v255, %v270
    %v280 = vadd.f32 %v256, %v272
    %v281 = vmul.f32 %v57, %v95
    %v282 = vmul.f32 %v58, %v95
    %v283 = vmul.f32 %v59, %v95
    %v284 = vmul.f32 %v60, %v95
    %289 = vrot.lane.b32.xlu0 %v281, 127
    %v290 = vpop.permute.xlu0 %289
    %291 = vrot.lane.b32.xlu0 %v282, 127
    %v292 = vpop.permute.xlu0 %291
    %293 = vrot.lane.b32.xlu0 %v283, 127
    %v294 = vpop.permute.xlu0 %293
    %295 = vrot.lane.b32.xlu0 %v284, 127
    %v296 = vpop.permute.xlu0 %295
    %v301 = vadd.f32 %v277, %v290
    %v302 = vadd.f32 %v278, %v292
    %v303 = vadd.f32 %v279, %v294
    %v304 = vadd.f32 %v280, %v296
    %v305 = vmul.f32 %v67, %v120
    %v306 = vmul.f32 %v68, %v120
    %v307 = vmul.f32 %v69, %v120
    %v308 = vmul.f32 %v70, %v120
    %v309 = vadd.f32 %v301, %v305
    %v310 = vadd.f32 %v302, %v306
    %v311 = vadd.f32 %v303, %v307
    %v312 = vadd.f32 %v304, %v308
    %v313 = vmul.f32 %v62, %v129
    %v314 = vmul.f32 %v63, %v129
    %v315 = vmul.f32 %v64, %v129
    %v316 = vmul.f32 %v65, %v129
    %321 = vrot.lane.b32.xlu0 %v313, 127
    %v322 = vpop.permute.xlu0 %321
    %323 = vrot.lane.b32.xlu0 %v314, 127
    %v324 = vpop.permute.xlu0 %323
    %325 = vrot.lane.b32.xlu0 %v315, 127
    %v326 = vpop.permute.xlu0 %325
    %327 = vrot.lane.b32.xlu0 %v316, 127
    %v328 = vpop.permute.xlu0 %327
    %v333 = vadd.f32 %v309, %v322
    %v334 = vadd.f32 %v310, %v324
    %v335 = vadd.f32 %v311, %v326
    %v336 = vadd.f32 %v312, %v328
    %v337 = vmul.f32 %v67, %v138
    %v338 = vmul.f32 %v68, %v138
    %v339 = vmul.f32 %v69, %v138
    %v340 = vmul.f32 %v70, %v138
    %345 = vrot.lane.b32.xlu0 %v337, 127
    %v346 = vpop.permute.xlu0 %345
    %347 = vrot.lane.b32.xlu0 %v338, 127
    %v348 = vpop.permute.xlu0 %347
    %349 = vrot.lane.b32.xlu0 %v339, 127
    %v350 = vpop.permute.xlu0 %349
    %351 = vrot.lane.b32.xlu0 %v340, 127
    %v352 = vpop.permute.xlu0 %351
    %v357 = vadd.f32 %v333, %v346
    %v358 = vadd.f32 %v334, %v348
    %v359 = vadd.f32 %v335, %v350
    %v360 = vadd.f32 %v336, %v352
    %v361 = vmul.f32 %v57, %v163
    %v362 = vmul.f32 %v58, %v163
    %v363 = vmul.f32 %v59, %v163
    %v364 = vmul.f32 %v60, %v163
    %v369 = vrot.slane %v361, 2
    %v370 = vrot.slane %v362, 2
    %v371 = vsel %vm172, %v369, %v370
    %v372 = vrot.slane %v363, 2
    %v373 = vsel %vm172, %v370, %v372
    %v374 = vrot.slane %v364, 2
    %v375 = vsel %vm172, %v372, %v374
    %v380 = vadd.f32 %v357, %v371
    %v381 = vadd.f32 %v358, %v373
    %v382 = vadd.f32 %v359, %v375
    %v383 = vadd.f32 %v360, %v374
    %v384 = vmul.f32 %v52, %v188
    %v385 = vmul.f32 %v53, %v188
    %v386 = vmul.f32 %v54, %v188
    %v387 = vmul.f32 %v55, %v188
    %v392 = vrot.slane %v384, 2
    %v393 = vrot.slane %v385, 2
    %v394 = vsel %vm172, %v392, %v393
    %v395 = vrot.slane %v386, 2
    %v396 = vsel %vm172, %v393, %v395
    %v397 = vrot.slane %v387, 2
    %v398 = vsel %vm172, %v395, %v397
    %399 = vrot.lane.b32.xlu0 %v394, 127
    %v400 = vpop.permute.xlu0 %399
    %401 = vrot.lane.b32.xlu0 %v396, 127
    %v402 = vpop.permute.xlu0 %401
    %403 = vrot.lane.b32.xlu0 %v398, 127
    %v404 = vpop.permute.xlu0 %403
    %405 = vrot.lane.b32.xlu0 %v397, 127
    %v406 = vpop.permute.xlu0 %405
    %v411 = vadd.f32 %v380, %v400
    %v412 = vadd.f32 %v381, %v402
    %v413 = vadd.f32 %v382, %v404
    %v414 = vadd.f32 %v383, %v406
    %v415 = vmul.f32 %v57, %v212
    %v416 = vmul.f32 %v58, %v212
    %v417 = vmul.f32 %v59, %v212
    %v418 = vmul.f32 %v60, %v212
    %v423 = vrot.slane %v415, 2
    %v424 = vrot.slane %v416, 2
    %v425 = vsel %vm172, %v423, %v424
    %v426 = vrot.slane %v417, 2
    %v427 = vsel %vm172, %v424, %v426
    %v428 = vrot.slane %v418, 2
    %v429 = vsel %vm172, %v426, %v428
    %430 = vrot.lane.b32.xlu0 %v425, 127
    %v431 = vpop.permute.xlu0 %430
    %432 = vrot.lane.b32.xlu0 %v427, 127
    %v433 = vpop.permute.xlu0 %432
    %434 = vrot.lane.b32.xlu0 %v429, 127
    %v435 = vpop.permute.xlu0 %434
    %436 = vrot.lane.b32.xlu0 %v428, 127
    %v437 = vpop.permute.xlu0 %436
    %v442 = vadd.f32 %v411, %v431
    %v443 = vadd.f32 %v412, %v433
    %v444 = vadd.f32 %v413, %v435
    %v445 = vadd.f32 %v414, %v437
    %v446 = vadd.f32 %v442, %v244
    %v447 = vadd.f32 %v443, %v244
    %v448 = vadd.f32 %v444, %v244
    %v449 = vadd.f32 %v445, %v244
    %v450 = vtanh.pop %v446
    %v451 = vtanh.pop %v447
    %v452 = vtanh.pop %v448
    %v453 = vtanh.pop %v449
    %v454 = vmax.f32 %v249, %v450
    %v455 = vmax.f32 %v250, %v451
    %v456 = vmax.f32 %v251, %v452
    %v457 = vmax.f32 %v252, %v453
    %v458 = vmul.f32 %v62, %v81
    %v459 = vmul.f32 %v63, %v81
    %v460 = vmul.f32 %v64, %v81
    %v461 = vmul.f32 %v65, %v81
    %v462 = vmul.f32 %v67, %v86
    %v463 = vmul.f32 %v68, %v86
    %v464 = vmul.f32 %v69, %v86
    %v465 = vmul.f32 %v70, %v86
    %v466 = vadd.f32 %v458, %v462
    %v467 = vadd.f32 %v459, %v463
    %v468 = vadd.f32 %v460, %v464
    %v469 = vadd.f32 %v461, %v465
    %v470 = vmul.f32 %v62, %v95
    %v471 = vmul.f32 %v63, %v95
    %v472 = vmul.f32 %v64, %v95
    %v473 = vmul.f32 %v65, %v95
    %478 = vrot.lane.b32.xlu0 %v470, 127
    %v479 = vpop.permute.xlu0 %478
    %480 = vrot.lane.b32.xlu0 %v471, 127
    %v481 = vpop.permute.xlu0 %480
    %482 = vrot.lane.b32.xlu0 %v472, 127
    %v483 = vpop.permute.xlu0 %482
    %484 = vrot.lane.b32.xlu0 %v473, 127
    %v485 = vpop.permute.xlu0 %484
    %v490 = vadd.f32 %v466, %v479
    %v491 = vadd.f32 %v467, %v481
    %v492 = vadd.f32 %v468, %v483
    %v493 = vadd.f32 %v469, %v485
    %v494 = vmul.f32 %v52, %v120
    %v495 = vmul.f32 %v53, %v120
    %v496 = vmul.f32 %v54, %v120
    %v497 = vmul.f32 %v55, %v120
    %v502 = vrot.slane %v494, 2
    %v503 = vrot.slane %v495, 2
    %v504 = vsel %vm172, %v502, %v503
    %v505 = vrot.slane %v496, 2
    %v506 = vsel %vm172, %v503, %v505
    %v507 = vrot.slane %v497, 2
    %v508 = vsel %vm172, %v505, %v507
    %v513 = vadd.f32 %v490, %v504
    %v514 = vadd.f32 %v491, %v506
    %v515 = vadd.f32 %v492, %v508
    %v516 = vadd.f32 %v493, %v507
    %v517 = vmul.f32 %v57, %v129
    %v518 = vmul.f32 %v58, %v129
    %v519 = vmul.f32 %v59, %v129
    %v520 = vmul.f32 %v60, %v129
    %v525 = vrot.slane %v517, 2
    %v526 = vrot.slane %v518, 2
    %v527 = vsel %vm172, %v525, %v526
    %v528 = vrot.slane %v519, 2
    %v529 = vsel %vm172, %v526, %v528
    %v530 = vrot.slane %v520, 2
    %v531 = vsel %vm172, %v528, %v530
    %v536 = vadd.f32 %v513, %v527
    %v537 = vadd.f32 %v514, %v529
    %v538 = vadd.f32 %v515, %v531
    %v539 = vadd.f32 %v516, %v530
    %v540 = vmul.f32 %v52, %v138
    %v541 = vmul.f32 %v53, %v138
    %v542 = vmul.f32 %v54, %v138
    %v543 = vmul.f32 %v55, %v138
    %v548 = vrot.slane %v540, 2
    %v549 = vrot.slane %v541, 2
    %v550 = vsel %vm172, %v548, %v549
    %v551 = vrot.slane %v542, 2
    %v552 = vsel %vm172, %v549, %v551
    %v553 = vrot.slane %v543, 2
    %v554 = vsel %vm172, %v551, %v553
    %555 = vrot.lane.b32.xlu0 %v550, 127
    %v556 = vpop.permute.xlu0 %555
    %557 = vrot.lane.b32.xlu0 %v552, 127
    %v558 = vpop.permute.xlu0 %557
    %559 = vrot.lane.b32.xlu0 %v554, 127
    %v560 = vpop.permute.xlu0 %559
    %561 = vrot.lane.b32.xlu0 %v553, 127
    %v562 = vpop.permute.xlu0 %561
    %v567 = vadd.f32 %v536, %v556
    %v568 = vadd.f32 %v537, %v558
    %v569 = vadd.f32 %v538, %v560
    %v570 = vadd.f32 %v539, %v562
    %v571 = vmul.f32 %v62, %v163
    %v572 = vmul.f32 %v63, %v163
    %v573 = vmul.f32 %v64, %v163
    %v574 = vmul.f32 %v65, %v163
    %v579 = vrot.slane %v571, 2
    %v580 = vrot.slane %v572, 2
    %v581 = vsel %vm172, %v579, %v580
    %v582 = vrot.slane %v573, 2
    %v583 = vsel %vm172, %v580, %v582
    %v584 = vrot.slane %v574, 2
    %v585 = vsel %vm172, %v582, %v584
    %v590 = vadd.f32 %v567, %v581
    %v591 = vadd.f32 %v568, %v583
    %v592 = vadd.f32 %v569, %v585
    %v593 = vadd.f32 %v570, %v584
    %v594 = vmul.f32 %v67, %v188
    %v595 = vmul.f32 %v68, %v188
    %v596 = vmul.f32 %v69, %v188
    %v597 = vmul.f32 %v70, %v188
    %v602 = vrot.slane %v594, 2
    %v603 = vrot.slane %v595, 2
    %v604 = vsel %vm172, %v602, %v603
    %v605 = vrot.slane %v596, 2
    %v606 = vsel %vm172, %v603, %v605
    %v607 = vrot.slane %v597, 2
    %v608 = vsel %vm172, %v605, %v607
    %v613 = vadd.f32 %v590, %v604
    %v614 = vadd.f32 %v591, %v606
    %v615 = vadd.f32 %v592, %v608
    %v616 = vadd.f32 %v593, %v607
    %v617 = vmul.f32 %v62, %v212
    %v618 = vmul.f32 %v63, %v212
    %v619 = vmul.f32 %v64, %v212
    %v620 = vmul.f32 %v65, %v212
    %v625 = vrot.slane %v617, 2
    %v626 = vrot.slane %v618, 2
    %v627 = vsel %vm172, %v625, %v626
    %v628 = vrot.slane %v619, 2
    %v629 = vsel %vm172, %v626, %v628
    %v630 = vrot.slane %v620, 2
    %v631 = vsel %vm172, %v628, %v630
    %632 = vrot.lane.b32.xlu0 %v627, 127
    %v633 = vpop.permute.xlu0 %632
    %634 = vrot.lane.b32.xlu0 %v629, 127
    %v635 = vpop.permute.xlu0 %634
    %636 = vrot.lane.b32.xlu0 %v631, 127
    %v637 = vpop.permute.xlu0 %636
    %638 = vrot.lane.b32.xlu0 %v630, 127
    %v639 = vpop.permute.xlu0 %638
    %v644 = vadd.f32 %v613, %v633
    %v645 = vadd.f32 %v614, %v635
    %v646 = vadd.f32 %v615, %v637
    %v647 = vadd.f32 %v616, %v639
    %v648 = vadd.f32 %v644, %v244
    %v649 = vadd.f32 %v645, %v244
    %v650 = vadd.f32 %v646, %v244
    %v651 = vadd.f32 %v647, %v244
    %v652 = vtanh.pop %v648
    %v653 = vtanh.pop %v649
    %v654 = vtanh.pop %v650
    %v655 = vtanh.pop %v651
    %v656 = vmax.f32 %v454, %v652
    %v657 = vmax.f32 %v455, %v653
    %v658 = vmax.f32 %v456, %v654
    %v659 = vmax.f32 %v457, %v655
    %v660 = vmul.f32 %v67, %v81
    %v661 = vmul.f32 %v68, %v81
    %v662 = vmul.f32 %v69, %v81
    %v663 = vmul.f32 %v70, %v81
    %v664 = vmul.f32 %v62, %v86
    %v665 = vmul.f32 %v63, %v86
    %v666 = vmul.f32 %v64, %v86
    %v667 = vmul.f32 %v65, %v86
    %672 = vrot.lane.b32.xlu0 %v664, 127
    %v673 = vpop.permute.xlu0 %672
    %674 = vrot.lane.b32.xlu0 %v665, 127
    %v675 = vpop.permute.xlu0 %674
    %676 = vrot.lane.b32.xlu0 %v666, 127
    %v677 = vpop.permute.xlu0 %676
    %678 = vrot.lane.b32.xlu0 %v667, 127
    %v679 = vpop.permute.xlu0 %678
    %v684 = vadd.f32 %v660, %v673
    %v685 = vadd.f32 %v661, %v675
    %v686 = vadd.f32 %v662, %v677
    %v687 = vadd.f32 %v663, %v679
    %v688 = vmul.f32 %v67, %v95
    %v689 = vmul.f32 %v68, %v95
    %v690 = vmul.f32 %v69, %v95
    %v691 = vmul.f32 %v70, %v95
    %696 = vrot.lane.b32.xlu0 %v688, 127
    %v697 = vpop.permute.xlu0 %696
    %698 = vrot.lane.b32.xlu0 %v689, 127
    %v699 = vpop.permute.xlu0 %698
    %700 = vrot.lane.b32.xlu0 %v690, 127
    %v701 = vpop.permute.xlu0 %700
    %702 = vrot.lane.b32.xlu0 %v691, 127
    %v703 = vpop.permute.xlu0 %702
    %v708 = vadd.f32 %v684, %v697
    %v709 = vadd.f32 %v685, %v699
    %v710 = vadd.f32 %v686, %v701
    %v711 = vadd.f32 %v687, %v703
    %v712 = vmul.f32 %v57, %v120
    %v713 = vmul.f32 %v58, %v120
    %v714 = vmul.f32 %v59, %v120
    %v715 = vmul.f32 %v60, %v120
    %v720 = vrot.slane %v712, 2
    %v721 = vrot.slane %v713, 2
    %v722 = vsel %vm172, %v720, %v721
    %v723 = vrot.slane %v714, 2
    %v724 = vsel %vm172, %v721, %v723
    %v725 = vrot.slane %v715, 2
    %v726 = vsel %vm172, %v723, %v725
    %v731 = vadd.f32 %v708, %v722
    %v732 = vadd.f32 %v709, %v724
    %v733 = vadd.f32 %v710, %v726
    %v734 = vadd.f32 %v711, %v725
    %v735 = vmul.f32 %v52, %v129
    %v736 = vmul.f32 %v53, %v129
    %v737 = vmul.f32 %v54, %v129
    %v738 = vmul.f32 %v55, %v129
    %v743 = vrot.slane %v735, 2
    %v744 = vrot.slane %v736, 2
    %v745 = vsel %vm172, %v743, %v744
    %v746 = vrot.slane %v737, 2
    %v747 = vsel %vm172, %v744, %v746
    %v748 = vrot.slane %v738, 2
    %v749 = vsel %vm172, %v746, %v748
    %750 = vrot.lane.b32.xlu0 %v745, 127
    %v751 = vpop.permute.xlu0 %750
    %752 = vrot.lane.b32.xlu0 %v747, 127
    %v753 = vpop.permute.xlu0 %752
    %754 = vrot.lane.b32.xlu0 %v749, 127
    %v755 = vpop.permute.xlu0 %754
    %756 = vrot.lane.b32.xlu0 %v748, 127
    %v757 = vpop.permute.xlu0 %756
    %v762 = vadd.f32 %v731, %v751
    %v763 = vadd.f32 %v732, %v753
    %v764 = vadd.f32 %v733, %v755
    %v765 = vadd.f32 %v734, %v757
    %v766 = vmul.f32 %v57, %v138
    %v767 = vmul.f32 %v58, %v138
    %v768 = vmul.f32 %v59, %v138
    %v769 = vmul.f32 %v60, %v138
    %v774 = vrot.slane %v766, 2
    %v775 = vrot.slane %v767, 2
    %v776 = vsel %vm172, %v774, %v775
    %v777 = vrot.slane %v768, 2
    %v778 = vsel %vm172, %v775, %v777
    %v779 = vrot.slane %v769, 2
    %v780 = vsel %vm172, %v777, %v779
    %781 = vrot.lane.b32.xlu0 %v776, 127
    %v782 = vpop.permute.xlu0 %781
    %783 = vrot.lane.b32.xlu0 %v778, 127
    %v784 = vpop.permute.xlu0 %783
    %785 = vrot.lane.b32.xlu0 %v780, 127
    %v786 = vpop.permute.xlu0 %785
    %787 = vrot.lane.b32.xlu0 %v779, 127
    %v788 = vpop.permute.xlu0 %787
    %v793 = vadd.f32 %v762, %v782
    %v794 = vadd.f32 %v763, %v784
    %v795 = vadd.f32 %v764, %v786
    %v796 = vadd.f32 %v765, %v788
    %v797 = vmul.f32 %v67, %v163
    %v798 = vmul.f32 %v68, %v163
    %v799 = vmul.f32 %v69, %v163
    %v800 = vmul.f32 %v70, %v163
    %v805 = vrot.slane %v797, 2
    %v806 = vrot.slane %v798, 2
    %v807 = vsel %vm172, %v805, %v806
    %v808 = vrot.slane %v799, 2
    %v809 = vsel %vm172, %v806, %v808
    %v810 = vrot.slane %v800, 2
    %v811 = vsel %vm172, %v808, %v810
    %v816 = vadd.f32 %v793, %v807
    %v817 = vadd.f32 %v794, %v809
    %v818 = vadd.f32 %v795, %v811
    %v819 = vadd.f32 %v796, %v810
    %v820 = vmul.f32 %v62, %v188
    %v821 = vmul.f32 %v63, %v188
    %v822 = vmul.f32 %v64, %v188
    %v823 = vmul.f32 %v65, %v188
    %v828 = vrot.slane %v820, 2
    %v829 = vrot.slane %v821, 2
    %v830 = vsel %vm172, %v828, %v829
    %v831 = vrot.slane %v822, 2
    %v832 = vsel %vm172, %v829, %v831
    %v833 = vrot.slane %v823, 2
    %v834 = vsel %vm172, %v831, %v833
    %835 = vrot.lane.b32.xlu0 %v830, 127
    %v836 = vpop.permute.xlu0 %835
    %837 = vrot.lane.b32.xlu0 %v832, 127
    %v838 = vpop.permute.xlu0 %837
    %839 = vrot.lane.b32.xlu0 %v834, 127
    %v840 = vpop.permute.xlu0 %839
    %841 = vrot.lane.b32.xlu0 %v833, 127
    %v842 = vpop.permute.xlu0 %841
    %v847 = vadd.f32 %v816, %v836
    %v848 = vadd.f32 %v817, %v838
    %v849 = vadd.f32 %v818, %v840
    %v850 = vadd.f32 %v819, %v842
    %v851 = vmul.f32 %v67, %v212
    %v852 = vmul.f32 %v68, %v212
    %v853 = vmul.f32 %v69, %v212
    %v854 = vmul.f32 %v70, %v212
    %v859 = vrot.slane %v851, 2
    %v860 = vrot.slane %v852, 2
    %v861 = vsel %vm172, %v859, %v860
    %v862 = vrot.slane %v853, 2
    %v863 = vsel %vm172, %v860, %v862
    %v864 = vrot.slane %v854, 2
    %v865 = vsel %vm172, %v862, %v864
    %866 = vrot.lane.b32.xlu0 %v861, 127
    %v867 = vpop.permute.xlu0 %866
    %868 = vrot.lane.b32.xlu0 %v863, 127
    %v869 = vpop.permute.xlu0 %868
    %870 = vrot.lane.b32.xlu0 %v865, 127
    %v871 = vpop.permute.xlu0 %870
    %872 = vrot.lane.b32.xlu0 %v864, 127
    %v873 = vpop.permute.xlu0 %872
    %v878 = vadd.f32 %v847, %v867
    %v879 = vadd.f32 %v848, %v869
    %v880 = vadd.f32 %v849, %v871
    %v881 = vadd.f32 %v850, %v873
    %v882 = vadd.f32 %v878, %v244
    %v883 = vadd.f32 %v879, %v244
    %v884 = vadd.f32 %v880, %v244
    %v885 = vadd.f32 %v881, %v244
    %v886 = vtanh.pop %v882
    %v887 = vtanh.pop %v883
    %v888 = vtanh.pop %v884
    %v889 = vtanh.pop %v885
    %v890 = vmax.f32 %v656, %v886
    %v891 = vmax.f32 %v657, %v887
    %v892 = vmax.f32 %v658, %v888
    %v893 = vmax.f32 %v659, %v889
    %vm894 = vcmask 113664
    %895 = vst.msk [vmem:[#allocation2] sm:$0xff] %vm894, %v890
    %896 = vst.msk [vmem:[#allocation2 + $0x8] sm:$0xff] %vm894, %v891
    %897 = vst.msk [vmem:[#allocation2 + $0x10] sm:$0xff] %vm894, %v892
    %vm898 = vcmask 109568
    %899 = vst.msk [vmem:[#allocation2 + $0x18] sm:$0xf] %vm898, %v893
    %s900 = sld [smem:[#allocation3 + $0x80]]
    %s901 = sld [smem:[#allocation3 + $0x81]]
    %s902 = sld [smem:[#allocation3 + $0x82]]
    %s903 = sld [smem:[#allocation3 + $0x83]]
    %s904 = sld [smem:[#allocation3 + $0x84]]
    %s905 = sld [smem:[#allocation3 + $0x85]]
    %s906 = sld [smem:[#allocation3 + $0x86]]
    %s907 = sld [smem:[#allocation3 + $0x87]]
    %s908 = sld [smem:[#allocation3 + $0x88]]
    %s909 = sld [smem:[#allocation6 + $0x1]]
    %v910 = vstv %s900
    %v911 = vmul.f32 %v52, %v910
    %v912 = vmul.f32 %v53, %v910
    %v913 = vmul.f32 %v54, %v910
    %v914 = vmul.f32 %v55, %v910
    %v915 = vstv %s901
    %v916 = vmul.f32 %v57, %v915
    %v917 = vmul.f32 %v58, %v915
    %v918 = vmul.f32 %v59, %v915
    %v919 = vmul.f32 %v60, %v915
    %v920 = vadd.f32 %v911, %v916
    %v921 = vadd.f32 %v912, %v917
    %v922 = vadd.f32 %v913, %v918
    %v923 = vadd.f32 %v914, %v919
    %v924 = vstv %s902
    %v925 = vmul.f32 %v52, %v924
    %v926 = vmul.f32 %v53, %v924
    %v927 = vmul.f32 %v54, %v924
    %v928 = vmul.f32 %v55, %v924
    %933 = vrot.lane.b32.xlu0 %v925, 127
    %v934 = vpop.permute.xlu0 %933
    %935 = vrot.lane.b32.xlu0 %v926, 127
    %v936 = vpop.permute.xlu0 %935
    %937 = vrot.lane.b32.xlu0 %v927, 127
    %v938 = vpop.permute.xlu0 %937
    %939 = vrot.lane.b32.xlu0 %v928, 127
    %v940 = vpop.permute.xlu0 %939
    %v945 = vadd.f32 %v920, %v934
    %v946 = vadd.f32 %v921, %v936
    %v947 = vadd.f32 %v922, %v938
    %v948 = vadd.f32 %v923, %v940
    %v949 = vstv %s903
    %v950 = vmul.f32 %v62, %v949
    %v951 = vmul.f32 %v63, %v949
    %v952 = vmul.f32 %v64, %v949
    %v953 = vmul.f32 %v65, %v949
    %v954 = vadd.f32 %v945, %v950
    %v955 = vadd.f32 %v946, %v951
    %v956 = vadd.f32 %v947, %v952
    %v957 = vadd.f32 %v948, %v953
    %v958 = vstv %s904
    %v959 = vmul.f32 %v67, %v958
    %v960 = vmul.f32 %v68, %v958
    %v961 = vmul.f32 %v69, %v958
    %v962 = vmul.f32 %v70, %v958
    %v963 = vadd.f32 %v954, %v959
    %v964 = vadd.f32 %v955, %v960
    %v965 = vadd.f32 %v956, %v961
    %v966 = vadd.f32 %v957, %v962
    %v967 = vstv %s905
    %v968 = vmul.f32 %v62, %v967
    %v969 = vmul.f32 %v63, %v967
    %v970 = vmul.f32 %v64, %v967
    %v971 = vmul.f32 %v65, %v967
    %976 = vrot.lane.b32.xlu0 %v968, 127
    %v977 = vpop.permute.xlu0 %976
    %978 = vrot.lane.b32.xlu0 %v969, 127
    %v979 = vpop.permute.xlu0 %978
    %980 = vrot.lane.b32.xlu0 %v970, 127
    %v981 = vpop.permute.xlu0 %980
    %982 = vrot.lane.b32.xlu0 %v971, 127
    %v983 = vpop.permute.xlu0 %982
    %v988 = vadd.f32 %v963, %v977
    %v989 = vadd.f32 %v964, %v979
    %v990 = vadd.f32 %v965, %v981
    %v991 = vadd.f32 %v966, %v983
    %v992 = vstv %s906
    %v993 = vmul.f32 %v52, %v992
    %v994 = vmul.f32 %v53, %v992
    %v995 = vmul.f32 %v54, %v992
    %v996 = vmul.f32 %v55, %v992
    %v1001 = vrot.slane %v993, 2
    %v1002 = vrot.slane %v994, 2
    %v1003 = vsel %vm172, %v1001, %v1002
    %v1004 = vrot.slane %v995, 2
    %v1005 = vsel %vm172, %v1002, %v1004
    %v1006 = vrot.slane %v996, 2
    %v1007 = vsel %vm172, %v1004, %v1006
    %v1012 = vadd.f32 %v988, %v1003
    %v1013 = vadd.f32 %v989, %v1005
    %v1014 = vadd.f32 %v990, %v1007
    %v1015 = vadd.f32 %v991, %v1006
    %v1016 = vstv %s907
    %v1017 = vmul.f32 %v57, %v1016
    %v1018 = vmul.f32 %v58, %v1016
    %v1019 = vmul.f32 %v59, %v1016
    %v1020 = vmul.f32 %v60, %v1016
    %v1025 = vrot.slane %v1017, 2
    %v1026 = vrot.slane %v1018, 2
    %v1027 = vsel %vm172, %v1025, %v1026
    %v1028 = vrot.slane %v1019, 2
    %v1029 = vsel %vm172, %v1026, %v1028
    %v1030 = vrot.slane %v1020, 2
    %v1031 = vsel %vm172, %v1028, %v1030
    %v1036 = vadd.f32 %v1012, %v1027
    %v1037 = vadd.f32 %v1013, %v1029
    %v1038 = vadd.f32 %v1014, %v1031
    %v1039 = vadd.f32 %v1015, %v1030
    %v1040 = vstv %s908
    %v1041 = vmul.f32 %v52, %v1040
    %v1042 = vmul.f32 %v53, %v1040
    %v1043 = vmul.f32 %v54, %v1040
    %v1044 = vmul.f32 %v55, %v1040
    %v1049 = vrot.slane %v1041, 2
    %v1050 = vrot.slane %v1042, 2
    %v1051 = vsel %vm172, %v1049, %v1050
    %v1052 = vrot.slane %v1043, 2
    %v1053 = vsel %vm172, %v1050, %v1052
    %v1054 = vrot.slane %v1044, 2
    %v1055 = vsel %vm172, %v1052, %v1054
    %1056 = vrot.lane.b32.xlu0 %v1051, 127
    %v1057 = vpop.permute.xlu0 %1056
    %1058 = vrot.lane.b32.xlu0 %v1053, 127
    %v1059 = vpop.permute.xlu0 %1058
    %1060 = vrot.lane.b32.xlu0 %v1055, 127
    %v1061 = vpop.permute.xlu0 %1060
    %1062 = vrot.lane.b32.xlu0 %v1054, 127
    %v1063 = vpop.permute.xlu0 %1062
    %v1068 = vadd.f32 %v1036, %v1057
    %v1069 = vadd.f32 %v1037, %v1059
    %v1070 = vadd.f32 %v1038, %v1061
    %v1071 = vadd.f32 %v1039, %v1063
    %v1072 = vstv %s909
    %v1073 = vadd.f32 %v1068, %v1072
    %v1074 = vadd.f32 %v1069, %v1072
    %v1075 = vadd.f32 %v1070, %v1072
    %v1076 = vadd.f32 %v1071, %v1072
    %v1077 = vtanh.pop %v1073
    %v1078 = vtanh.pop %v1074
    %v1079 = vtanh.pop %v1075
    %v1080 = vtanh.pop %v1076
    %v1081 = vmul.f32 %v57, %v910
    %v1082 = vmul.f32 %v58, %v910
    %v1083 = vmul.f32 %v59, %v910
    %v1084 = vmul.f32 %v60, %v910
    %v1085 = vmul.f32 %v52, %v915
    %v1086 = vmul.f32 %v53, %v915
    %v1087 = vmul.f32 %v54, %v915
    %v1088 = vmul.f32 %v55, %v915
    %1093 = vrot.lane.b32.xlu0 %v1085, 127
    %v1094 = vpop.permute.xlu0 %1093
    %1095 = vrot.lane.b32.xlu0 %v1086, 127
    %v1096 = vpop.permute.xlu0 %1095
    %1097 = vrot.lane.b32.xlu0 %v1087, 127
    %v1098 = vpop.permute.xlu0 %1097
    %1099 = vrot.lane.b32.xlu0 %v1088, 127
    %v1100 = vpop.permute.xlu0 %1099
    %v1105 = vadd.f32 %v1081, %v1094
    %v1106 = vadd.f32 %v1082, %v1096
    %v1107 = vadd.f32 %v1083, %v1098
    %v1108 = vadd.f32 %v1084, %v1100
    %v1109 = vmul.f32 %v57, %v924
    %v1110 = vmul.f32 %v58, %v924
    %v1111 = vmul.f32 %v59, %v924
    %v1112 = vmul.f32 %v60, %v924
    %1117 = vrot.lane.b32.xlu0 %v1109, 127
    %v1118 = vpop.permute.xlu0 %1117
    %1119 = vrot.lane.b32.xlu0 %v1110, 127
    %v1120 = vpop.permute.xlu0 %1119
    %1121 = vrot.lane.b32.xlu0 %v1111, 127
    %v1122 = vpop.permute.xlu0 %1121
    %1123 = vrot.lane.b32.xlu0 %v1112, 127
    %v1124 = vpop.permute.xlu0 %1123
    %v1129 = vadd.f32 %v1105, %v1118
    %v1130 = vadd.f32 %v1106, %v1120
    %v1131 = vadd.f32 %v1107, %v1122
    %v1132 = vadd.f32 %v1108, %v1124
    %v1133 = vmul.f32 %v67, %v949
    %v1134 = vmul.f32 %v68, %v949
    %v1135 = vmul.f32 %v69, %v949
    %v1136 = vmul.f32 %v70, %v949
    %v1137 = vadd.f32 %v1129, %v1133
    %v1138 = vadd.f32 %v1130, %v1134
    %v1139 = vadd.f32 %v1131, %v1135
    %v1140 = vadd.f32 %v1132, %v1136
    %v1141 = vmul.f32 %v62, %v958
    %v1142 = vmul.f32 %v63, %v958
    %v1143 = vmul.f32 %v64, %v958
    %v1144 = vmul.f32 %v65, %v958
    %1149 = vrot.lane.b32.xlu0 %v1141, 127
    %v1150 = vpop.permute.xlu0 %1149
    %1151 = vrot.lane.b32.xlu0 %v1142, 127
    %v1152 = vpop.permute.xlu0 %1151
    %1153 = vrot.lane.b32.xlu0 %v1143, 127
    %v1154 = vpop.permute.xlu0 %1153
    %1155 = vrot.lane.b32.xlu0 %v1144, 127
    %v1156 = vpop.permute.xlu0 %1155
    %v1161 = vadd.f32 %v1137, %v1150
    %v1162 = vadd.f32 %v1138, %v1152
    %v1163 = vadd.f32 %v1139, %v1154
    %v1164 = vadd.f32 %v1140, %v1156
    %v1165 = vmul.f32 %v67, %v967
    %v1166 = vmul.f32 %v68, %v967
    %v1167 = vmul.f32 %v69, %v967
    %v1168 = vmul.f32 %v70, %v967
    %1173 = vrot.lane.b32.xlu0 %v1165, 127
    %v1174 = vpop.permute.xlu0 %1173
    %1175 = vrot.lane.b32.xlu0 %v1166, 127
    %v1176 = vpop.permute.xlu0 %1175
    %1177 = vrot.lane.b32.xlu0 %v1167, 127
    %v1178 = vpop.permute.xlu0 %1177
    %1179 = vrot.lane.b32.xlu0 %v1168, 127
    %v1180 = vpop.permute.xlu0 %1179
    %v1185 = vadd.f32 %v1161, %v1174
    %v1186 = vadd.f32 %v1162, %v1176
    %v1187 = vadd.f32 %v1163, %v1178
    %v1188 = vadd.f32 %v1164, %v1180
    %v1189 = vmul.f32 %v57, %v992
    %v1190 = vmul.f32 %v58, %v992
    %v1191 = vmul.f32 %v59, %v992
    %v1192 = vmul.f32 %v60, %v992
    %v1197 = vrot.slane %v1189, 2
    %v1198 = vrot.slane %v1190, 2
    %v1199 = vsel %vm172, %v1197, %v1198
    %v1200 = vrot.slane %v1191, 2
    %v1201 = vsel %vm172, %v1198, %v1200
    %v1202 = vrot.slane %v1192, 2
    %v1203 = vsel %vm172, %v1200, %v1202
    %v1208 = vadd.f32 %v1185, %v1199
    %v1209 = vadd.f32 %v1186, %v1201
    %v1210 = vadd.f32 %v1187, %v1203
    %v1211 = vadd.f32 %v1188, %v1202
    %v1212 = vmul.f32 %v52, %v1016
    %v1213 = vmul.f32 %v53, %v1016
    %v1214 = vmul.f32 %v54, %v1016
    %v1215 = vmul.f32 %v55, %v1016
    %v1220 = vrot.slane %v1212, 2
    %v1221 = vrot.slane %v1213, 2
    %v1222 = vsel %vm172, %v1220, %v1221
    %v1223 = vrot.slane %v1214, 2
    %v1224 = vsel %vm172, %v1221, %v1223
    %v1225 = vrot.slane %v1215, 2
    %v1226 = vsel %vm172, %v1223, %v1225
    %1227 = vrot.lane.b32.xlu0 %v1222, 127
    %v1228 = vpop.permute.xlu0 %1227
    %1229 = vrot.lane.b32.xlu0 %v1224, 127
    %v1230 = vpop.permute.xlu0 %1229
    %1231 = vrot.lane.b32.xlu0 %v1226, 127
    %v1232 = vpop.permute.xlu0 %1231
    %1233 = vrot.lane.b32.xlu0 %v1225, 127
    %v1234 = vpop.permute.xlu0 %1233
    %v1239 = vadd.f32 %v1208, %v1228
    %v1240 = vadd.f32 %v1209, %v1230
    %v1241 = vadd.f32 %v1210, %v1232
    %v1242 = vadd.f32 %v1211, %v1234
    %v1243 = vmul.f32 %v57, %v1040
    %v1244 = vmul.f32 %v58, %v1040
    %v1245 = vmul.f32 %v59, %v1040
    %v1246 = vmul.f32 %v60, %v1040
    %v1251 = vrot.slane %v1243, 2
    %v1252 = vrot.slane %v1244, 2
    %v1253 = vsel %vm172, %v1251, %v1252
    %v1254 = vrot.slane %v1245, 2
    %v1255 = vsel %vm172, %v1252, %v1254
    %v1256 = vrot.slane %v1246, 2
    %v1257 = vsel %vm172, %v1254, %v1256
    %1258 = vrot.lane.b32.xlu0 %v1253, 127
    %v1259 = vpop.permute.xlu0 %1258
    %1260 = vrot.lane.b32.xlu0 %v1255, 127
    %v1261 = vpop.permute.xlu0 %1260
    %1262 = vrot.lane.b32.xlu0 %v1257, 127
    %v1263 = vpop.permute.xlu0 %1262
    %1264 = vrot.lane.b32.xlu0 %v1256, 127
    %v1265 = vpop.permute.xlu0 %1264
    %v1270 = vadd.f32 %v1239, %v1259
    %v1271 = vadd.f32 %v1240, %v1261
    %v1272 = vadd.f32 %v1241, %v1263
    %v1273 = vadd.f32 %v1242, %v1265
    %v1274 = vadd.f32 %v1270, %v1072
    %v1275 = vadd.f32 %v1271, %v1072
    %v1276 = vadd.f32 %v1272, %v1072
    %v1277 = vadd.f32 %v1273, %v1072
    %v1278 = vtanh.pop %v1274
    %v1279 = vtanh.pop %v1275
    %v1280 = vtanh.pop %v1276
    %v1281 = vtanh.pop %v1277
    %v1282 = vmax.f32 %v1077, %v1278
    %v1283 = vmax.f32 %v1078, %v1279
    %v1284 = vmax.f32 %v1079, %v1280
    %v1285 = vmax.f32 %v1080, %v1281
    %v1286 = vmul.f32 %v62, %v910
    %v1287 = vmul.f32 %v63, %v910
    %v1288 = vmul.f32 %v64, %v910
    %v1289 = vmul.f32 %v65, %v910
    %v1290 = vmul.f32 %v67, %v915
    %v1291 = vmul.f32 %v68, %v915
    %v1292 = vmul.f32 %v69, %v915
    %v1293 = vmul.f32 %v70, %v915
    %v1294 = vadd.f32 %v1286, %v1290
    %v1295 = vadd.f32 %v1287, %v1291
    %v1296 = vadd.f32 %v1288, %v1292
    %v1297 = vadd.f32 %v1289, %v1293
    %v1298 = vmul.f32 %v62, %v924
    %v1299 = vmul.f32 %v63, %v924
    %v1300 = vmul.f32 %v64, %v924
    %v1301 = vmul.f32 %v65, %v924
    %1306 = vrot.lane.b32.xlu0 %v1298, 127
    %v1307 = vpop.permute.xlu0 %1306
    %1308 = vrot.lane.b32.xlu0 %v1299, 127
    %v1309 = vpop.permute.xlu0 %1308
    %1310 = vrot.lane.b32.xlu0 %v1300, 127
    %v1311 = vpop.permute.xlu0 %1310
    %1312 = vrot.lane.b32.xlu0 %v1301, 127
    %v1313 = vpop.permute.xlu0 %1312
    %v1318 = vadd.f32 %v1294, %v1307
    %v1319 = vadd.f32 %v1295, %v1309
    %v1320 = vadd.f32 %v1296, %v1311
    %v1321 = vadd.f32 %v1297, %v1313
    %v1322 = vmul.f32 %v52, %v949
    %v1323 = vmul.f32 %v53, %v949
    %v1324 = vmul.f32 %v54, %v949
    %v1325 = vmul.f32 %v55, %v949
    %v1330 = vrot.slane %v1322, 2
    %v1331 = vrot.slane %v1323, 2
    %v1332 = vsel %vm172, %v1330, %v1331
    %v1333 = vrot.slane %v1324, 2
    %v1334 = vsel %vm172, %v1331, %v1333
    %v1335 = vrot.slane %v1325, 2
    %v1336 = vsel %vm172, %v1333, %v1335
    %v1341 = vadd.f32 %v1318, %v1332
    %v1342 = vadd.f32 %v1319, %v1334
    %v1343 = vadd.f32 %v1320, %v1336
    %v1344 = vadd.f32 %v1321, %v1335
    %v1345 = vmul.f32 %v57, %v958
    %v1346 = vmul.f32 %v58, %v958
    %v1347 = vmul.f32 %v59, %v958
    %v1348 = vmul.f32 %v60, %v958
    %v1353 = vrot.slane %v1345, 2
    %v1354 = vrot.slane %v1346, 2
    %v1355 = vsel %vm172, %v1353, %v1354
    %v1356 = vrot.slane %v1347, 2
    %v1357 = vsel %vm172, %v1354, %v1356
    %v1358 = vrot.slane %v1348, 2
    %v1359 = vsel %vm172, %v1356, %v1358
    %v1364 = vadd.f32 %v1341, %v1355
    %v1365 = vadd.f32 %v1342, %v1357
    %v1366 = vadd.f32 %v1343, %v1359
    %v1367 = vadd.f32 %v1344, %v1358
    %v1368 = vmul.f32 %v52, %v967
    %v1369 = vmul.f32 %v53, %v967
    %v1370 = vmul.f32 %v54, %v967
    %v1371 = vmul.f32 %v55, %v967
    %v1376 = vrot.slane %v1368, 2
    %v1377 = vrot.slane %v1369, 2
    %v1378 = vsel %vm172, %v1376, %v1377
    %v1379 = vrot.slane %v1370, 2
    %v1380 = vsel %vm172, %v1377, %v1379
    %v1381 = vrot.slane %v1371, 2
    %v1382 = vsel %vm172, %v1379, %v1381
    %1383 = vrot.lane.b32.xlu0 %v1378, 127
    %v1384 = vpop.permute.xlu0 %1383
    %1385 = vrot.lane.b32.xlu0 %v1380, 127
    %v1386 = vpop.permute.xlu0 %1385
    %1387 = vrot.lane.b32.xlu0 %v1382, 127
    %v1388 = vpop.permute.xlu0 %1387
    %1389 = vrot.lane.b32.xlu0 %v1381, 127
    %v1390 = vpop.permute.xlu0 %1389
    %v1395 = vadd.f32 %v1364, %v1384
    %v1396 = vadd.f32 %v1365, %v1386
    %v1397 = vadd.f32 %v1366, %v1388
    %v1398 = vadd.f32 %v1367, %v1390
    %v1399 = vmul.f32 %v62, %v992
    %v1400 = vmul.f32 %v63, %v992
    %v1401 = vmul.f32 %v64, %v992
    %v1402 = vmul.f32 %v65, %v992
    %v1407 = vrot.slane %v1399, 2
    %v1408 = vrot.slane %v1400, 2
    %v1409 = vsel %vm172, %v1407, %v1408
    %v1410 = vrot.slane %v1401, 2
    %v1411 = vsel %vm172, %v1408, %v1410
    %v1412 = vrot.slane %v1402, 2
    %v1413 = vsel %vm172, %v1410, %v1412
    %v1418 = vadd.f32 %v1395, %v1409
    %v1419 = vadd.f32 %v1396, %v1411
    %v1420 = vadd.f32 %v1397, %v1413
    %v1421 = vadd.f32 %v1398, %v1412
    %v1422 = vmul.f32 %v67, %v1016
    %v1423 = vmul.f32 %v68, %v1016
    %v1424 = vmul.f32 %v69, %v1016
    %v1425 = vmul.f32 %v70, %v1016
    %v1430 = vrot.slane %v1422, 2
    %v1431 = vrot.slane %v1423, 2
    %v1432 = vsel %vm172, %v1430, %v1431
    %v1433 = vrot.slane %v1424, 2
    %v1434 = vsel %vm172, %v1431, %v1433
    %v1435 = vrot.slane %v1425, 2
    %v1436 = vsel %vm172, %v1433, %v1435
    %v1441 = vadd.f32 %v1418, %v1432
    %v1442 = vadd.f32 %v1419, %v1434
    %v1443 = vadd.f32 %v1420, %v1436
    %v1444 = vadd.f32 %v1421, %v1435
    %v1445 = vmul.f32 %v62, %v1040
    %v1446 = vmul.f32 %v63, %v1040
    %v1447 = vmul.f32 %v64, %v1040
    %v1448 = vmul.f32 %v65, %v1040
    %v1453 = vrot.slane %v1445, 2
    %v1454 = vrot.slane %v1446, 2
    %v1455 = vsel %vm172, %v1453, %v1454
    %v1456 = vrot.slane %v1447, 2
    %v1457 = vsel %vm172, %v1454, %v1456
    %v1458 = vrot.slane %v1448, 2
    %v1459 = vsel %vm172, %v1456, %v1458
    %1460 = vrot.lane.b32.xlu0 %v1455, 127
    %v1461 = vpop.permute.xlu0 %1460
    %1462 = vrot.lane.b32.xlu0 %v1457, 127
    %v1463 = vpop.permute.xlu0 %1462
    %1464 = vrot.lane.b32.xlu0 %v1459, 127
    %v1465 = vpop.permute.xlu0 %1464
    %1466 = vrot.lane.b32.xlu0 %v1458, 127
    %v1467 = vpop.permute.xlu0 %1466
    %v1472 = vadd.f32 %v1441, %v1461
    %v1473 = vadd.f32 %v1442, %v1463
    %v1474 = vadd.f32 %v1443, %v1465
    %v1475 = vadd.f32 %v1444, %v1467
    %v1476 = vadd.f32 %v1472, %v1072
    %v1477 = vadd.f32 %v1473, %v1072
    %v1478 = vadd.f32 %v1474, %v1072
    %v1479 = vadd.f32 %v1475, %v1072
    %v1480 = vtanh.pop %v1476
    %v1481 = vtanh.pop %v1477
    %v1482 = vtanh.pop %v1478
    %v1483 = vtanh.pop %v1479
    %v1484 = vmax.f32 %v1282, %v1480
    %v1485 = vmax.f32 %v1283, %v1481
    %v1486 = vmax.f32 %v1284, %v1482
    %v1487 = vmax.f32 %v1285, %v1483
    %v1488 = vmul.f32 %v67, %v910
    %v1489 = vmul.f32 %v68, %v910
    %v1490 = vmul.f32 %v69, %v910
    %v1491 = vmul.f32 %v70, %v910
    %v1492 = vmul.f32 %v62, %v915
    %v1493 = vmul.f32 %v63, %v915
    %v1494 = vmul.f32 %v64, %v915
    %v1495 = vmul.f32 %v65, %v915
    %1500 = vrot.lane.b32.xlu0 %v1492, 127
    %v1501 = vpop.permute.xlu0 %1500
    %1502 = vrot.lane.b32.xlu0 %v1493, 127
    %v1503 = vpop.permute.xlu0 %1502
    %1504 = vrot.lane.b32.xlu0 %v1494, 127
    %v1505 = vpop.permute.xlu0 %1504
    %1506 = vrot.lane.b32.xlu0 %v1495, 127
    %v1507 = vpop.permute.xlu0 %1506
    %v1512 = vadd.f32 %v1488, %v1501
    %v1513 = vadd.f32 %v1489, %v1503
    %v1514 = vadd.f32 %v1490, %v1505
    %v1515 = vadd.f32 %v1491, %v1507
    %v1516 = vmul.f32 %v67, %v924
    %v1517 = vmul.f32 %v68, %v924
    %v1518 = vmul.f32 %v69, %v924
    %v1519 = vmul.f32 %v70, %v924
    %1524 = vrot.lane.b32.xlu0 %v1516, 127
    %v1525 = vpop.permute.xlu0 %1524
    %1526 = vrot.lane.b32.xlu0 %v1517, 127
    %v1527 = vpop.permute.xlu0 %1526
    %1528 = vrot.lane.b32.xlu0 %v1518, 127
    %v1529 = vpop.permute.xlu0 %1528
    %1530 = vrot.lane.b32.xlu0 %v1519, 127
    %v1531 = vpop.permute.xlu0 %1530
    %v1536 = vadd.f32 %v1512, %v1525
    %v1537 = vadd.f32 %v1513, %v1527
    %v1538 = vadd.f32 %v1514, %v1529
    %v1539 = vadd.f32 %v1515, %v1531
    %v1540 = vmul.f32 %v57, %v949
    %v1541 = vmul.f32 %v58, %v949
    %v1542 = vmul.f32 %v59, %v949
    %v1543 = vmul.f32 %v60, %v949
    %v1548 = vrot.slane %v1540, 2
    %v1549 = vrot.slane %v1541, 2
    %v1550 = vsel %vm172, %v1548, %v1549
    %v1551 = vrot.slane %v1542, 2
    %v1552 = vsel %vm172, %v1549, %v1551
    %v1553 = vrot.slane %v1543, 2
    %v1554 = vsel %vm172, %v1551, %v1553
    %v1559 = vadd.f32 %v1536, %v1550
    %v1560 = vadd.f32 %v1537, %v1552
    %v1561 = vadd.f32 %v1538, %v1554
    %v1562 = vadd.f32 %v1539, %v1553
    %v1563 = vmul.f32 %v52, %v958
    %v1564 = vmul.f32 %v53, %v958
    %v1565 = vmul.f32 %v54, %v958
    %v1566 = vmul.f32 %v55, %v958
    %v1571 = vrot.slane %v1563, 2
    %v1572 = vrot.slane %v1564, 2
    %v1573 = vsel %vm172, %v1571, %v1572
    %v1574 = vrot.slane %v1565, 2
    %v1575 = vsel %vm172, %v1572, %v1574
    %v1576 = vrot.slane %v1566, 2
    %v1577 = vsel %vm172, %v1574, %v1576
    %1578 = vrot.lane.b32.xlu0 %v1573, 127
    %v1579 = vpop.permute.xlu0 %1578
    %1580 = vrot.lane.b32.xlu0 %v1575, 127
    %v1581 = vpop.permute.xlu0 %1580
    %1582 = vrot.lane.b32.xlu0 %v1577, 127
    %v1583 = vpop.permute.xlu0 %1582
    %1584 = vrot.lane.b32.xlu0 %v1576, 127
    %v1585 = vpop.permute.xlu0 %1584
    %v1590 = vadd.f32 %v1559, %v1579
    %v1591 = vadd.f32 %v1560, %v1581
    %v1592 = vadd.f32 %v1561, %v1583
    %v1593 = vadd.f32 %v1562, %v1585
    %v1594 = vmul.f32 %v57, %v967
    %v1595 = vmul.f32 %v58, %v967
    %v1596 = vmul.f32 %v59, %v967
    %v1597 = vmul.f32 %v60, %v967
    %v1602 = vrot.slane %v1594, 2
    %v1603 = vrot.slane %v1595, 2
    %v1604 = vsel %vm172, %v1602, %v1603
    %v1605 = vrot.slane %v1596, 2
    %v1606 = vsel %vm172, %v1603, %v1605
    %v1607 = vrot.slane %v1597, 2
    %v1608 = vsel %vm172, %v1605, %v1607
    %1609 = vrot.lane.b32.xlu0 %v1604, 127
    %v1610 = vpop.permute.xlu0 %1609
    %1611 = vrot.lane.b32.xlu0 %v1606, 127
    %v1612 = vpop.permute.xlu0 %1611
    %1613 = vrot.lane.b32.xlu0 %v1608, 127
    %v1614 = vpop.permute.xlu0 %1613
    %1615 = vrot.lane.b32.xlu0 %v1607, 127
    %v1616 = vpop.permute.xlu0 %1615
    %v1621 = vadd.f32 %v1590, %v1610
    %v1622 = vadd.f32 %v1591, %v1612
    %v1623 = vadd.f32 %v1592, %v1614
    %v1624 = vadd.f32 %v1593, %v1616
    %v1625 = vmul.f32 %v67, %v992
    %v1626 = vmul.f32 %v68, %v992
    %v1627 = vmul.f32 %v69, %v992
    %v1628 = vmul.f32 %v70, %v992
    %v1633 = vrot.slane %v1625, 2
    %v1634 = vrot.slane %v1626, 2
    %v1635 = vsel %vm172, %v1633, %v1634
    %v1636 = vrot.slane %v1627, 2
    %v1637 = vsel %vm172, %v1634, %v1636
    %v1638 = vrot.slane %v1628, 2
    %v1639 = vsel %vm172, %v1636, %v1638
    %v1644 = vadd.f32 %v1621, %v1635
    %v1645 = vadd.f32 %v1622, %v1637
    %v1646 = vadd.f32 %v1623, %v1639
    %v1647 = vadd.f32 %v1624, %v1638
    %v1648 = vmul.f32 %v62, %v1016
    %v1649 = vmul.f32 %v63, %v1016
    %v1650 = vmul.f32 %v64, %v1016
    %v1651 = vmul.f32 %v65, %v1016
    %v1656 = vrot.slane %v1648, 2
    %v1657 = vrot.slane %v1649, 2
    %v1658 = vsel %vm172, %v1656, %v1657
    %v1659 = vrot.slane %v1650, 2
    %v1660 = vsel %vm172, %v1657, %v1659
    %v1661 = vrot.slane %v1651, 2
    %v1662 = vsel %vm172, %v1659, %v1661
    %1663 = vrot.lane.b32.xlu0 %v1658, 127
    %v1664 = vpop.permute.xlu0 %1663
    %1665 = vrot.lane.b32.xlu0 %v1660, 127
    %v1666 = vpop.permute.xlu0 %1665
    %1667 = vrot.lane.b32.xlu0 %v1662, 127
    %v1668 = vpop.permute.xlu0 %1667
    %1669 = vrot.lane.b32.xlu0 %v1661, 127
    %v1670 = vpop.permute.xlu0 %1669
    %v1675 = vadd.f32 %v1644, %v1664
    %v1676 = vadd.f32 %v1645, %v1666
    %v1677 = vadd.f32 %v1646, %v1668
    %v1678 = vadd.f32 %v1647, %v1670
    %v1679 = vmul.f32 %v67, %v1040
    %v1680 = vmul.f32 %v68, %v1040
    %v1681 = vmul.f32 %v69, %v1040
    %v1682 = vmul.f32 %v70, %v1040
    %v1687 = vrot.slane %v1679, 2
    %v1688 = vrot.slane %v1680, 2
    %v1689 = vsel %vm172, %v1687, %v1688
    %v1690 = vrot.slane %v1681, 2
    %v1691 = vsel %vm172, %v1688, %v1690
    %v1692 = vrot.slane %v1682, 2
    %v1693 = vsel %vm172, %v1690, %v1692
    %1694 = vrot.lane.b32.xlu0 %v1689, 127
    %v1695 = vpop.permute.xlu0 %1694
    %1696 = vrot.lane.b32.xlu0 %v1691, 127
    %v1697 = vpop.permute.xlu0 %1696
    %1698 = vrot.lane.b32.xlu0 %v1693, 127
    %v1699 = vpop.permute.xlu0 %1698
    %1700 = vrot.lane.b32.xlu0 %v1692, 127
    %v1701 = vpop.permute.xlu0 %1700
    %v1706 = vadd.f32 %v1675, %v1695
    %v1707 = vadd.f32 %v1676, %v1697
    %v1708 = vadd.f32 %v1677, %v1699
    %v1709 = vadd.f32 %v1678, %v1701
    %v1710 = vadd.f32 %v1706, %v1072
    %v1711 = vadd.f32 %v1707, %v1072
    %v1712 = vadd.f32 %v1708, %v1072
    %v1713 = vadd.f32 %v1709, %v1072
    %v1714 = vtanh.pop %v1710
    %v1715 = vtanh.pop %v1711
    %v1716 = vtanh.pop %v1712
    %v1717 = vtanh.pop %v1713
    %v1718 = vmax.f32 %v1484, %v1714
    %v1719 = vmax.f32 %v1485, %v1715
    %v1720 = vmax.f32 %v1486, %v1716
    %v1721 = vmax.f32 %v1487, %v1717
    %1726 = vrot.lane.b32.xlu0 %v1718, 14
    %v1727 = vpop.permute.xlu0 %1726
    %1728 = vrot.lane.b32.xlu0 %v1719, 14
    %v1729 = vpop.permute.xlu0 %1728
    %1730 = vrot.lane.b32.xlu0 %v1720, 14
    %v1731 = vpop.permute.xlu0 %1730
    %1732 = vrot.lane.b32.xlu0 %v1721, 14
    %v1733 = vpop.permute.xlu0 %1732
    %vm1738 = vcmask 228464
    %1739 = vst.msk [vmem:[#allocation2] sm:$0xff] %vm1738, %v1727
    %1740 = vst.msk [vmem:[#allocation2 + $0x8] sm:$0xff] %vm1738, %v1729
    %1741 = vst.msk [vmem:[#allocation2 + $0x10] sm:$0xff] %vm1738, %v1731
    %vm1742 = vcmask 224368
    %1743 = vst.msk [vmem:[#allocation2 + $0x18] sm:$0xf] %vm1742, %v1733
    %s1744 = sld [smem:[#allocation3 + $0x100]]
    %s1745 = sld [smem:[#allocation3 + $0x101]]
    %s1746 = sld [smem:[#allocation3 + $0x102]]
    %s1747 = sld [smem:[#allocation3 + $0x103]]
    %s1748 = sld [smem:[#allocation3 + $0x104]]
    %s1749 = sld [smem:[#allocation3 + $0x105]]
    %s1750 = sld [smem:[#allocation3 + $0x106]]
    %s1751 = sld [smem:[#allocation3 + $0x107]]
    %s1752 = sld [smem:[#allocation3 + $0x108]]
    %s1753 = sld [smem:[#allocation6 + $0x2]]
    %v1754 = vstv %s1744
    %v1755 = vmul.f32 %v52, %v1754
    %v1756 = vmul.f32 %v53, %v1754
    %v1757 = vmul.f32 %v54, %v1754
    %v1758 = vmul.f32 %v55, %v1754
    %v1759 = vstv %s1745
    %v1760 = vmul.f32 %v57, %v1759
    %v1761 = vmul.f32 %v58, %v1759
    %v1762 = vmul.f32 %v59, %v1759
    %v1763 = vmul.f32 %v60, %v1759
    %v1764 = vadd.f32 %v1755, %v1760
    %v1765 = vadd.f32 %v1756, %v1761
    %v1766 = vadd.f32 %v1757, %v1762
    %v1767 = vadd.f32 %v1758, %v1763
    %v1768 = vstv %s1746
    %v1769 = vmul.f32 %v52, %v1768
    %v1770 = vmul.f32 %v53, %v1768
    %v1771 = vmul.f32 %v54, %v1768
    %v1772 = vmul.f32 %v55, %v1768
    %1777 = vrot.lane.b32.xlu0 %v1769, 127
    %v1778 = vpop.permute.xlu0 %1777
    %1779 = vrot.lane.b32.xlu0 %v1770, 127
    %v1780 = vpop.permute.xlu0 %1779
    %1781 = vrot.lane.b32.xlu0 %v1771, 127
    %v1782 = vpop.permute.xlu0 %1781
    %1783 = vrot.lane.b32.xlu0 %v1772, 127
    %v1784 = vpop.permute.xlu0 %1783
    %v1789 = vadd.f32 %v1764, %v1778
    %v1790 = vadd.f32 %v1765, %v1780
    %v1791 = vadd.f32 %v1766, %v1782
    %v1792 = vadd.f32 %v1767, %v1784
    %v1793 = vstv %s1747
    %v1794 = vmul.f32 %v62, %v1793
    %v1795 = vmul.f32 %v63, %v1793
    %v1796 = vmul.f32 %v64, %v1793
    %v1797 = vmul.f32 %v65, %v1793
    %v1798 = vadd.f32 %v1789, %v1794
    %v1799 = vadd.f32 %v1790, %v1795
    %v1800 = vadd.f32 %v1791, %v1796
    %v1801 = vadd.f32 %v1792, %v1797
    %v1802 = vstv %s1748
    %v1803 = vmul.f32 %v67, %v1802
    %v1804 = vmul.f32 %v68, %v1802
    %v1805 = vmul.f32 %v69, %v1802
    %v1806 = vmul.f32 %v70, %v1802
    %v1807 = vadd.f32 %v1798, %v1803
    %v1808 = vadd.f32 %v1799, %v1804
    %v1809 = vadd.f32 %v1800, %v1805
    %v1810 = vadd.f32 %v1801, %v1806
    %v1811 = vstv %s1749
    %v1812 = vmul.f32 %v62, %v1811
    %v1813 = vmul.f32 %v63, %v1811
    %v1814 = vmul.f32 %v64, %v1811
    %v1815 = vmul.f32 %v65, %v1811
    %1820 = vrot.lane.b32.xlu0 %v1812, 127
    %v1821 = vpop.permute.xlu0 %1820
    %1822 = vrot.lane.b32.xlu0 %v1813, 127
    %v1823 = vpop.permute.xlu0 %1822
    %1824 = vrot.lane.b32.xlu0 %v1814, 127
    %v1825 = vpop.permute.xlu0 %1824
    %1826 = vrot.lane.b32.xlu0 %v1815, 127
    %v1827 = vpop.permute.xlu0 %1826
    %v1832 = vadd.f32 %v1807, %v1821
    %v1833 = vadd.f32 %v1808, %v1823
    %v1834 = vadd.f32 %v1809, %v1825
    %v1835 = vadd.f32 %v1810, %v1827
    %v1836 = vstv %s1750
    %v1837 = vmul.f32 %v52, %v1836
    %v1838 = vmul.f32 %v53, %v1836
    %v1839 = vmul.f32 %v54, %v1836
    %v1840 = vmul.f32 %v55, %v1836
    %v1845 = vrot.slane %v1837, 2
    %v1846 = vrot.slane %v1838, 2
    %v1847 = vsel %vm172, %v1845, %v1846
    %v1848 = vrot.slane %v1839, 2
    %v1849 = vsel %vm172, %v1846, %v1848
    %v1850 = vrot.slane %v1840, 2
    %v1851 = vsel %vm172, %v1848, %v1850
    %v1856 = vadd.f32 %v1832, %v1847
    %v1857 = vadd.f32 %v1833, %v1849
    %v1858 = vadd.f32 %v1834, %v1851
    %v1859 = vadd.f32 %v1835, %v1850
    %v1860 = vstv %s1751
    %v1861 = vmul.f32 %v57, %v1860
    %v1862 = vmul.f32 %v58, %v1860
    %v1863 = vmul.f32 %v59, %v1860
    %v1864 = vmul.f32 %v60, %v1860
    %v1869 = vrot.slane %v1861, 2
    %v1870 = vrot.slane %v1862, 2
    %v1871 = vsel %vm172, %v1869, %v1870
    %v1872 = vrot.slane %v1863, 2
    %v1873 = vsel %vm172, %v1870, %v1872
    %v1874 = vrot.slane %v1864, 2
    %v1875 = vsel %vm172, %v1872, %v1874
    %v1880 = vadd.f32 %v1856, %v1871
    %v1881 = vadd.f32 %v1857, %v1873
    %v1882 = vadd.f32 %v1858, %v1875
    %v1883 = vadd.f32 %v1859, %v1874
    %v1884 = vstv %s1752
    %v1885 = vmul.f32 %v52, %v1884
    %v1886 = vmul.f32 %v53, %v1884
    %v1887 = vmul.f32 %v54, %v1884
    %v1888 = vmul.f32 %v55, %v1884
    %v1893 = vrot.slane %v1885, 2
    %v1894 = vrot.slane %v1886, 2
    %v1895 = vsel %vm172, %v1893, %v1894
    %v1896 = vrot.slane %v1887, 2
    %v1897 = vsel %vm172, %v1894, %v1896
    %v1898 = vrot.slane %v1888, 2
    %v1899 = vsel %vm172, %v1896, %v1898
    %1900 = vrot.lane.b32.xlu0 %v1895, 127
    %v1901 = vpop.permute.xlu0 %1900
    %1902 = vrot.lane.b32.xlu0 %v1897, 127
    %v1903 = vpop.permute.xlu0 %1902
    %1904 = vrot.lane.b32.xlu0 %v1899, 127
    %v1905 = vpop.permute.xlu0 %1904
    %1906 = vrot.lane.b32.xlu0 %v1898, 127
    %v1907 = vpop.permute.xlu0 %1906
    %v1912 = vadd.f32 %v1880, %v1901
    %v1913 = vadd.f32 %v1881, %v1903
    %v1914 = vadd.f32 %v1882, %v1905
    %v1915 = vadd.f32 %v1883, %v1907
    %v1916 = vstv %s1753
    %v1917 = vadd.f32 %v1912, %v1916
    %v1918 = vadd.f32 %v1913, %v1916
    %v1919 = vadd.f32 %v1914, %v1916
    %v1920 = vadd.f32 %v1915, %v1916
    %v1921 = vtanh.pop %v1917
    %v1922 = vtanh.pop %v1918
    %v1923 = vtanh.pop %v1919
    %v1924 = vtanh.pop %v1920
    %v1925 = vmul.f32 %v57, %v1754
    %v1926 = vmul.f32 %v58, %v1754
    %v1927 = vmul.f32 %v59, %v1754
    %v1928 = vmul.f32 %v60, %v1754
    %v1929 = vmul.f32 %v52, %v1759
    %v1930 = vmul.f32 %v53, %v1759
    %v1931 = vmul.f32 %v54, %v1759
    %v1932 = vmul.f32 %v55, %v1759
    %1937 = vrot.lane.b32.xlu0 %v1929, 127
    %v1938 = vpop.permute.xlu0 %1937
    %1939 = vrot.lane.b32.xlu0 %v1930, 127
    %v1940 = vpop.permute.xlu0 %1939
    %1941 = vrot.lane.b32.xlu0 %v1931, 127
    %v1942 = vpop.permute.xlu0 %1941
    %1943 = vrot.lane.b32.xlu0 %v1932, 127
    %v1944 = vpop.permute.xlu0 %1943
    %v1949 = vadd.f32 %v1925, %v1938
    %v1950 = vadd.f32 %v1926, %v1940
    %v1951 = vadd.f32 %v1927, %v1942
    %v1952 = vadd.f32 %v1928, %v1944
    %v1953 = vmul.f32 %v57, %v1768
    %v1954 = vmul.f32 %v58, %v1768
    %v1955 = vmul.f32 %v59, %v1768
    %v1956 = vmul.f32 %v60, %v1768
    %1961 = vrot.lane.b32.xlu0 %v1953, 127
    %v1962 = vpop.permute.xlu0 %1961
    %1963 = vrot.lane.b32.xlu0 %v1954, 127
    %v1964 = vpop.permute.xlu0 %1963
    %1965 = vrot.lane.b32.xlu0 %v1955, 127
    %v1966 = vpop.permute.xlu0 %1965
    %1967 = vrot.lane.b32.xlu0 %v1956, 127
    %v1968 = vpop.permute.xlu0 %1967
    %v1973 = vadd.f32 %v1949, %v1962
    %v1974 = vadd.f32 %v1950, %v1964
    %v1975 = vadd.f32 %v1951, %v1966
    %v1976 = vadd.f32 %v1952, %v1968
    %v1977 = vmul.f32 %v67, %v1793
    %v1978 = vmul.f32 %v68, %v1793
    %v1979 = vmul.f32 %v69, %v1793
    %v1980 = vmul.f32 %v70, %v1793
    %v1981 = vadd.f32 %v1973, %v1977
    %v1982 = vadd.f32 %v1974, %v1978
    %v1983 = vadd.f32 %v1975, %v1979
    %v1984 = vadd.f32 %v1976, %v1980
    %v1985 = vmul.f32 %v62, %v1802
    %v1986 = vmul.f32 %v63, %v1802
    %v1987 = vmul.f32 %v64, %v1802
    %v1988 = vmul.f32 %v65, %v1802
    %1993 = vrot.lane.b32.xlu0 %v1985, 127
    %v1994 = vpop.permute.xlu0 %1993
    %1995 = vrot.lane.b32.xlu0 %v1986, 127
    %v1996 = vpop.permute.xlu0 %1995
    %1997 = vrot.lane.b32.xlu0 %v1987, 127
    %v1998 = vpop.permute.xlu0 %1997
    %1999 = vrot.lane.b32.xlu0 %v1988, 127
    %v2000 = vpop.permute.xlu0 %1999
    %v2005 = vadd.f32 %v1981, %v1994
    %v2006 = vadd.f32 %v1982, %v1996
    %v2007 = vadd.f32 %v1983, %v1998
    %v2008 = vadd.f32 %v1984, %v2000
    %v2009 = vmul.f32 %v67, %v1811
    %v2010 = vmul.f32 %v68, %v1811
    %v2011 = vmul.f32 %v69, %v1811
    %v2012 = vmul.f32 %v70, %v1811
    %2017 = vrot.lane.b32.xlu0 %v2009, 127
    %v2018 = vpop.permute.xlu0 %2017
    %2019 = vrot.lane.b32.xlu0 %v2010, 127
    %v2020 = vpop.permute.xlu0 %2019
    %2021 = vrot.lane.b32.xlu0 %v2011, 127
    %v2022 = vpop.permute.xlu0 %2021
    %2023 = vrot.lane.b32.xlu0 %v2012, 127
    %v2024 = vpop.permute.xlu0 %2023
    %v2029 = vadd.f32 %v2005, %v2018
    %v2030 = vadd.f32 %v2006, %v2020
    %v2031 = vadd.f32 %v2007, %v2022
    %v2032 = vadd.f32 %v2008, %v2024
    %v2033 = vmul.f32 %v57, %v1836
    %v2034 = vmul.f32 %v58, %v1836
    %v2035 = vmul.f32 %v59, %v1836
    %v2036 = vmul.f32 %v60, %v1836
    %v2041 = vrot.slane %v2033, 2
    %v2042 = vrot.slane %v2034, 2
    %v2043 = vsel %vm172, %v2041, %v2042
    %v2044 = vrot.slane %v2035, 2
    %v2045 = vsel %vm172, %v2042, %v2044
    %v2046 = vrot.slane %v2036, 2
    %v2047 = vsel %vm172, %v2044, %v2046
    %v2052 = vadd.f32 %v2029, %v2043
    %v2053 = vadd.f32 %v2030, %v2045
    %v2054 = vadd.f32 %v2031, %v2047
    %v2055 = vadd.f32 %v2032, %v2046
    %v2056 = vmul.f32 %v52, %v1860
    %v2057 = vmul.f32 %v53, %v1860
    %v2058 = vmul.f32 %v54, %v1860
    %v2059 = vmul.f32 %v55, %v1860
    %v2064 = vrot.slane %v2056, 2
    %v2065 = vrot.slane %v2057, 2
    %v2066 = vsel %vm172, %v2064, %v2065
    %v2067 = vrot.slane %v2058, 2
    %v2068 = vsel %vm172, %v2065, %v2067
    %v2069 = vrot.slane %v2059, 2
    %v2070 = vsel %vm172, %v2067, %v2069
    %2071 = vrot.lane.b32.xlu0 %v2066, 127
    %v2072 = vpop.permute.xlu0 %2071
    %2073 = vrot.lane.b32.xlu0 %v2068, 127
    %v2074 = vpop.permute.xlu0 %2073
    %2075 = vrot.lane.b32.xlu0 %v2070, 127
    %v2076 = vpop.permute.xlu0 %2075
    %2077 = vrot.lane.b32.xlu0 %v2069, 127
    %v2078 = vpop.permute.xlu0 %2077
    %v2083 = vadd.f32 %v2052, %v2072
    %v2084 = vadd.f32 %v2053, %v2074
    %v2085 = vadd.f32 %v2054, %v2076
    %v2086 = vadd.f32 %v2055, %v2078
    %v2087 = vmul.f32 %v57, %v1884
    %v2088 = vmul.f32 %v58, %v1884
    %v2089 = vmul.f32 %v59, %v1884
    %v2090 = vmul.f32 %v60, %v1884
    %v2095 = vrot.slane %v2087, 2
    %v2096 = vrot.slane %v2088, 2
    %v2097 = vsel %vm172, %v2095, %v2096
    %v2098 = vrot.slane %v2089, 2
    %v2099 = vsel %vm172, %v2096, %v2098
    %v2100 = vrot.slane %v2090, 2
    %v2101 = vsel %vm172, %v2098, %v2100
    %2102 = vrot.lane.b32.xlu0 %v2097, 127
    %v2103 = vpop.permute.xlu0 %2102
    %2104 = vrot.lane.b32.xlu0 %v2099, 127
    %v2105 = vpop.permute.xlu0 %2104
    %2106 = vrot.lane.b32.xlu0 %v2101, 127
    %v2107 = vpop.permute.xlu0 %2106
    %2108 = vrot.lane.b32.xlu0 %v2100, 127
    %v2109 = vpop.permute.xlu0 %2108
    %v2114 = vadd.f32 %v2083, %v2103
    %v2115 = vadd.f32 %v2084, %v2105
    %v2116 = vadd.f32 %v2085, %v2107
    %v2117 = vadd.f32 %v2086, %v2109
    %v2118 = vadd.f32 %v2114, %v1916
    %v2119 = vadd.f32 %v2115, %v1916
    %v2120 = vadd.f32 %v2116, %v1916
    %v2121 = vadd.f32 %v2117, %v1916
    %v2122 = vtanh.pop %v2118
    %v2123 = vtanh.pop %v2119
    %v2124 = vtanh.pop %v2120
    %v2125 = vtanh.pop %v2121
    %v2126 = vmax.f32 %v1921, %v2122
    %v2127 = vmax.f32 %v1922, %v2123
    %v2128 = vmax.f32 %v1923, %v2124
    %v2129 = vmax.f32 %v1924, %v2125
    %v2130 = vmul.f32 %v62, %v1754
    %v2131 = vmul.f32 %v63, %v1754
    %v2132 = vmul.f32 %v64, %v1754
    %v2133 = vmul.f32 %v65, %v1754
    %v2134 = vmul.f32 %v67, %v1759
    %v2135 = vmul.f32 %v68, %v1759
    %v2136 = vmul.f32 %v69, %v1759
    %v2137 = vmul.f32 %v70, %v1759
    %v2138 = vadd.f32 %v2130, %v2134
    %v2139 = vadd.f32 %v2131, %v2135
    %v2140 = vadd.f32 %v2132, %v2136
    %v2141 = vadd.f32 %v2133, %v2137
    %v2142 = vmul.f32 %v62, %v1768
    %v2143 = vmul.f32 %v63, %v1768
    %v2144 = vmul.f32 %v64, %v1768
    %v2145 = vmul.f32 %v65, %v1768
    %2150 = vrot.lane.b32.xlu0 %v2142, 127
    %v2151 = vpop.permute.xlu0 %2150
    %2152 = vrot.lane.b32.xlu0 %v2143, 127
    %v2153 = vpop.permute.xlu0 %2152
    %2154 = vrot.lane.b32.xlu0 %v2144, 127
    %v2155 = vpop.permute.xlu0 %2154
    %2156 = vrot.lane.b32.xlu0 %v2145, 127
    %v2157 = vpop.permute.xlu0 %2156
    %v2162 = vadd.f32 %v2138, %v2151
    %v2163 = vadd.f32 %v2139, %v2153
    %v2164 = vadd.f32 %v2140, %v2155
    %v2165 = vadd.f32 %v2141, %v2157
    %v2166 = vmul.f32 %v52, %v1793
    %v2167 = vmul.f32 %v53, %v1793
    %v2168 = vmul.f32 %v54, %v1793
    %v2169 = vmul.f32 %v55, %v1793
    %v2174 = vrot.slane %v2166, 2
    %v2175 = vrot.slane %v2167, 2
    %v2176 = vsel %vm172, %v2174, %v2175
    %v2177 = vrot.slane %v2168, 2
    %v2178 = vsel %vm172, %v2175, %v2177
    %v2179 = vrot.slane %v2169, 2
    %v2180 = vsel %vm172, %v2177, %v2179
    %v2185 = vadd.f32 %v2162, %v2176
    %v2186 = vadd.f32 %v2163, %v2178
    %v2187 = vadd.f32 %v2164, %v2180
    %v2188 = vadd.f32 %v2165, %v2179
    %v2189 = vmul.f32 %v57, %v1802
    %v2190 = vmul.f32 %v58, %v1802
    %v2191 = vmul.f32 %v59, %v1802
    %v2192 = vmul.f32 %v60, %v1802
    %v2197 = vrot.slane %v2189, 2
    %v2198 = vrot.slane %v2190, 2
    %v2199 = vsel %vm172, %v2197, %v2198
    %v2200 = vrot.slane %v2191, 2
    %v2201 = vsel %vm172, %v2198, %v2200
    %v2202 = vrot.slane %v2192, 2
    %v2203 = vsel %vm172, %v2200, %v2202
    %v2208 = vadd.f32 %v2185, %v2199
    %v2209 = vadd.f32 %v2186, %v2201
    %v2210 = vadd.f32 %v2187, %v2203
    %v2211 = vadd.f32 %v2188, %v2202
    %v2212 = vmul.f32 %v52, %v1811
    %v2213 = vmul.f32 %v53, %v1811
    %v2214 = vmul.f32 %v54, %v1811
    %v2215 = vmul.f32 %v55, %v1811
    %v2220 = vrot.slane %v2212, 2
    %v2221 = vrot.slane %v2213, 2
    %v2222 = vsel %vm172, %v2220, %v2221
    %v2223 = vrot.slane %v2214, 2
    %v2224 = vsel %vm172, %v2221, %v2223
    %v2225 = vrot.slane %v2215, 2
    %v2226 = vsel %vm172, %v2223, %v2225
    %2227 = vrot.lane.b32.xlu0 %v2222, 127
    %v2228 = vpop.permute.xlu0 %2227
    %2229 = vrot.lane.b32.xlu0 %v2224, 127
    %v2230 = vpop.permute.xlu0 %2229
    %2231 = vrot.lane.b32.xlu0 %v2226, 127
    %v2232 = vpop.permute.xlu0 %2231
    %2233 = vrot.lane.b32.xlu0 %v2225, 127
    %v2234 = vpop.permute.xlu0 %2233
    %v2239 = vadd.f32 %v2208, %v2228
    %v2240 = vadd.f32 %v2209, %v2230
    %v2241 = vadd.f32 %v2210, %v2232
    %v2242 = vadd.f32 %v2211, %v2234
    %v2243 = vmul.f32 %v62, %v1836
    %v2244 = vmul.f32 %v63, %v1836
    %v2245 = vmul.f32 %v64, %v1836
    %v2246 = vmul.f32 %v65, %v1836
    %v2251 = vrot.slane %v2243, 2
    %v2252 = vrot.slane %v2244, 2
    %v2253 = vsel %vm172, %v2251, %v2252
    %v2254 = vrot.slane %v2245, 2
    %v2255 = vsel %vm172, %v2252, %v2254
    %v2256 = vrot.slane %v2246, 2
    %v2257 = vsel %vm172, %v2254, %v2256
    %v2262 = vadd.f32 %v2239, %v2253
    %v2263 = vadd.f32 %v2240, %v2255
    %v2264 = vadd.f32 %v2241, %v2257
    %v2265 = vadd.f32 %v2242, %v2256
    %v2266 = vmul.f32 %v67, %v1860
    %v2267 = vmul.f32 %v68, %v1860
    %v2268 = vmul.f32 %v69, %v1860
    %v2269 = vmul.f32 %v70, %v1860
    %v2274 = vrot.slane %v2266, 2
    %v2275 = vrot.slane %v2267, 2
    %v2276 = vsel %vm172, %v2274, %v2275
    %v2277 = vrot.slane %v2268, 2
    %v2278 = vsel %vm172, %v2275, %v2277
    %v2279 = vrot.slane %v2269, 2
    %v2280 = vsel %vm172, %v2277, %v2279
    %v2285 = vadd.f32 %v2262, %v2276
    %v2286 = vadd.f32 %v2263, %v2278
    %v2287 = vadd.f32 %v2264, %v2280
    %v2288 = vadd.f32 %v2265, %v2279
    %v2289 = vmul.f32 %v62, %v1884
    %v2290 = vmul.f32 %v63, %v1884
    %v2291 = vmul.f32 %v64, %v1884
    %v2292 = vmul.f32 %v65, %v1884
    %v2297 = vrot.slane %v2289, 2
    %v2298 = vrot.slane %v2290, 2
    %v2299 = vsel %vm172, %v2297, %v2298
    %v2300 = vrot.slane %v2291, 2
    %v2301 = vsel %vm172, %v2298, %v2300
    %v2302 = vrot.slane %v2292, 2
    %v2303 = vsel %vm172, %v2300, %v2302
    %2304 = vrot.lane.b32.xlu0 %v2299, 127
    %v2305 = vpop.permute.xlu0 %2304
    %2306 = vrot.lane.b32.xlu0 %v2301, 127
    %v2307 = vpop.permute.xlu0 %2306
    %2308 = vrot.lane.b32.xlu0 %v2303, 127
    %v2309 = vpop.permute.xlu0 %2308
    %2310 = vrot.lane.b32.xlu0 %v2302, 127
    %v2311 = vpop.permute.xlu0 %2310
    %v2316 = vadd.f32 %v2285, %v2305
    %v2317 = vadd.f32 %v2286, %v2307
    %v2318 = vadd.f32 %v2287, %v2309
    %v2319 = vadd.f32 %v2288, %v2311
    %v2320 = vadd.f32 %v2316, %v1916
    %v2321 = vadd.f32 %v2317, %v1916
    %v2322 = vadd.f32 %v2318, %v1916
    %v2323 = vadd.f32 %v2319, %v1916
    %v2324 = vtanh.pop %v2320
    %v2325 = vtanh.pop %v2321
    %v2326 = vtanh.pop %v2322
    %v2327 = vtanh.pop %v2323
    %v2328 = vmax.f32 %v2126, %v2324
    %v2329 = vmax.f32 %v2127, %v2325
    %v2330 = vmax.f32 %v2128, %v2326
    %v2331 = vmax.f32 %v2129, %v2327
    %v2332 = vmul.f32 %v67, %v1754
    %v2333 = vmul.f32 %v68, %v1754
    %v2334 = vmul.f32 %v69, %v1754
    %v2335 = vmul.f32 %v70, %v1754
    %v2336 = vmul.f32 %v62, %v1759
    %v2337 = vmul.f32 %v63, %v1759
    %v2338 = vmul.f32 %v64, %v1759
    %v2339 = vmul.f32 %v65, %v1759
    %2344 = vrot.lane.b32.xlu0 %v2336, 127
    %v2345 = vpop.permute.xlu0 %2344
    %2346 = vrot.lane.b32.xlu0 %v2337, 127
    %v2347 = vpop.permute.xlu0 %2346
    %2348 = vrot.lane.b32.xlu0 %v2338, 127
    %v2349 = vpop.permute.xlu0 %2348
    %2350 = vrot.lane.b32.xlu0 %v2339, 127
    %v2351 = vpop.permute.xlu0 %2350
    %v2356 = vadd.f32 %v2332, %v2345
    %v2357 = vadd.f32 %v2333, %v2347
    %v2358 = vadd.f32 %v2334, %v2349
    %v2359 = vadd.f32 %v2335, %v2351
    %v2360 = vmul.f32 %v67, %v1768
    %v2361 = vmul.f32 %v68, %v1768
    %v2362 = vmul.f32 %v69, %v1768
    %v2363 = vmul.f32 %v70, %v1768
    %2368 = vrot.lane.b32.xlu0 %v2360, 127
    %v2369 = vpop.permute.xlu0 %2368
    %2370 = vrot.lane.b32.xlu0 %v2361, 127
    %v2371 = vpop.permute.xlu0 %2370
    %2372 = vrot.lane.b32.xlu0 %v2362, 127
    %v2373 = vpop.permute.xlu0 %2372
    %2374 = vrot.lane.b32.xlu0 %v2363, 127
    %v2375 = vpop.permute.xlu0 %2374
    %v2380 = vadd.f32 %v2356, %v2369
    %v2381 = vadd.f32 %v2357, %v2371
    %v2382 = vadd.f32 %v2358, %v2373
    %v2383 = vadd.f32 %v2359, %v2375
    %v2384 = vmul.f32 %v57, %v1793
    %v2385 = vmul.f32 %v58, %v1793
    %v2386 = vmul.f32 %v59, %v1793
    %v2387 = vmul.f32 %v60, %v1793
    %v2392 = vrot.slane %v2384, 2
    %v2393 = vrot.slane %v2385, 2
    %v2394 = vsel %vm172, %v2392, %v2393
    %v2395 = vrot.slane %v2386, 2
    %v2396 = vsel %vm172, %v2393, %v2395
    %v2397 = vrot.slane %v2387, 2
    %v2398 = vsel %vm172, %v2395, %v2397
    %v2403 = vadd.f32 %v2380, %v2394
    %v2404 = vadd.f32 %v2381, %v2396
    %v2405 = vadd.f32 %v2382, %v2398
    %v2406 = vadd.f32 %v2383, %v2397
    %v2407 = vmul.f32 %v52, %v1802
    %v2408 = vmul.f32 %v53, %v1802
    %v2409 = vmul.f32 %v54, %v1802
    %v2410 = vmul.f32 %v55, %v1802
    %v2415 = vrot.slane %v2407, 2
    %v2416 = vrot.slane %v2408, 2
    %v2417 = vsel %vm172, %v2415, %v2416
    %v2418 = vrot.slane %v2409, 2
    %v2419 = vsel %vm172, %v2416, %v2418
    %v2420 = vrot.slane %v2410, 2
    %v2421 = vsel %vm172, %v2418, %v2420
    %2422 = vrot.lane.b32.xlu0 %v2417, 127
    %v2423 = vpop.permute.xlu0 %2422
    %2424 = vrot.lane.b32.xlu0 %v2419, 127
    %v2425 = vpop.permute.xlu0 %2424
    %2426 = vrot.lane.b32.xlu0 %v2421, 127
    %v2427 = vpop.permute.xlu0 %2426
    %2428 = vrot.lane.b32.xlu0 %v2420, 127
    %v2429 = vpop.permute.xlu0 %2428
    %v2434 = vadd.f32 %v2403, %v2423
    %v2435 = vadd.f32 %v2404, %v2425
    %v2436 = vadd.f32 %v2405, %v2427
    %v2437 = vadd.f32 %v2406, %v2429
    %v2438 = vmul.f32 %v57, %v1811
    %v2439 = vmul.f32 %v58, %v1811
    %v2440 = vmul.f32 %v59, %v1811
    %v2441 = vmul.f32 %v60, %v1811
    %v2446 = vrot.slane %v2438, 2
    %v2447 = vrot.slane %v2439, 2
    %v2448 = vsel %vm172, %v2446, %v2447
    %v2449 = vrot.slane %v2440, 2
    %v2450 = vsel %vm172, %v2447, %v2449
    %v2451 = vrot.slane %v2441, 2
    %v2452 = vsel %vm172, %v2449, %v2451
    %2453 = vrot.lane.b32.xlu0 %v2448, 127
    %v2454 = vpop.permute.xlu0 %2453
    %2455 = vrot.lane.b32.xlu0 %v2450, 127
    %v2456 = vpop.permute.xlu0 %2455
    %2457 = vrot.lane.b32.xlu0 %v2452, 127
    %v2458 = vpop.permute.xlu0 %2457
    %2459 = vrot.lane.b32.xlu0 %v2451, 127
    %v2460 = vpop.permute.xlu0 %2459
    %v2465 = vadd.f32 %v2434, %v2454
    %v2466 = vadd.f32 %v2435, %v2456
    %v2467 = vadd.f32 %v2436, %v2458
    %v2468 = vadd.f32 %v2437, %v2460
    %v2469 = vmul.f32 %v67, %v1836
    %v2470 = vmul.f32 %v68, %v1836
    %v2471 = vmul.f32 %v69, %v1836
    %v2472 = vmul.f32 %v70, %v1836
    %v2477 = vrot.slane %v2469, 2
    %v2478 = vrot.slane %v2470, 2
    %v2479 = vsel %vm172, %v2477, %v2478
    %v2480 = vrot.slane %v2471, 2
    %v2481 = vsel %vm172, %v2478, %v2480
    %v2482 = vrot.slane %v2472, 2
    %v2483 = vsel %vm172, %v2480, %v2482
    %v2488 = vadd.f32 %v2465, %v2479
    %v2489 = vadd.f32 %v2466, %v2481
    %v2490 = vadd.f32 %v2467, %v2483
    %v2491 = vadd.f32 %v2468, %v2482
    %v2492 = vmul.f32 %v62, %v1860
    %v2493 = vmul.f32 %v63, %v1860
    %v2494 = vmul.f32 %v64, %v1860
    %v2495 = vmul.f32 %v65, %v1860
    %v2500 = vrot.slane %v2492, 2
    %v2501 = vrot.slane %v2493, 2
    %v2502 = vsel %vm172, %v2500, %v2501
    %v2503 = vrot.slane %v2494, 2
    %v2504 = vsel %vm172, %v2501, %v2503
    %v2505 = vrot.slane %v2495, 2
    %v2506 = vsel %vm172, %v2503, %v2505
    %2507 = vrot.lane.b32.xlu0 %v2502, 127
    %v2508 = vpop.permute.xlu0 %2507
    %2509 = vrot.lane.b32.xlu0 %v2504, 127
    %v2510 = vpop.permute.xlu0 %2509
    %2511 = vrot.lane.b32.xlu0 %v2506, 127
    %v2512 = vpop.permute.xlu0 %2511
    %2513 = vrot.lane.b32.xlu0 %v2505, 127
    %v2514 = vpop.permute.xlu0 %2513
    %v2519 = vadd.f32 %v2488, %v2508
    %v2520 = vadd.f32 %v2489, %v2510
    %v2521 = vadd.f32 %v2490, %v2512
    %v2522 = vadd.f32 %v2491, %v2514
    %v2523 = vmul.f32 %v67, %v1884
    %v2524 = vmul.f32 %v68, %v1884
    %v2525 = vmul.f32 %v69, %v1884
    %v2526 = vmul.f32 %v70, %v1884
    %v2531 = vrot.slane %v2523, 2
    %v2532 = vrot.slane %v2524, 2
    %v2533 = vsel %vm172, %v2531, %v2532
    %v2534 = vrot.slane %v2525, 2
    %v2535 = vsel %vm172, %v2532, %v2534
    %v2536 = vrot.slane %v2526, 2
    %v2537 = vsel %vm172, %v2534, %v2536
    %2538 = vrot.lane.b32.xlu0 %v2533, 127
    %v2539 = vpop.permute.xlu0 %2538
    %2540 = vrot.lane.b32.xlu0 %v2535, 127
    %v2541 = vpop.permute.xlu0 %2540
    %2542 = vrot.lane.b32.xlu0 %v2537, 127
    %v2543 = vpop.permute.xlu0 %2542
    %2544 = vrot.lane.b32.xlu0 %v2536, 127
    %v2545 = vpop.permute.xlu0 %2544
    %v2550 = vadd.f32 %v2519, %v2539
    %v2551 = vadd.f32 %v2520, %v2541
    %v2552 = vadd.f32 %v2521, %v2543
    %v2553 = vadd.f32 %v2522, %v2545
    %v2554 = vadd.f32 %v2550, %v1916
    %v2555 = vadd.f32 %v2551, %v1916
    %v2556 = vadd.f32 %v2552, %v1916
    %v2557 = vadd.f32 %v2553, %v1916
    %v2558 = vtanh.pop %v2554
    %v2559 = vtanh.pop %v2555
    %v2560 = vtanh.pop %v2556
    %v2561 = vtanh.pop %v2557
    %v2562 = vmax.f32 %v2328, %v2558
    %v2563 = vmax.f32 %v2329, %v2559
    %v2564 = vmax.f32 %v2330, %v2560
    %v2565 = vmax.f32 %v2331, %v2561
    %2570 = vrot.lane.b32.xlu0 %v2562, 28
    %v2571 = vpop.permute.xlu0 %2570
    %2572 = vrot.lane.b32.xlu0 %v2563, 28
    %v2573 = vpop.permute.xlu0 %2572
    %2574 = vrot.lane.b32.xlu0 %v2564, 28
    %v2575 = vpop.permute.xlu0 %2574
    %2576 = vrot.lane.b32.xlu0 %v2565, 28
    %v2577 = vpop.permute.xlu0 %2576
    %vm2582 = vcmask 343264
    %2583 = vst.msk [vmem:[#allocation2] sm:$0xff] %vm2582, %v2571
    %2584 = vst.msk [vmem:[#allocation2 + $0x8] sm:$0xff] %vm2582, %v2573
    %2585 = vst.msk [vmem:[#allocation2 + $0x10] sm:$0xff] %vm2582, %v2575
    %vm2586 = vcmask 339168
    %2587 = vst.msk [vmem:[#allocation2 + $0x18] sm:$0xf] %vm2586, %v2577
    %s2588 = sld [smem:[#allocation3 + $0x180]]
    %s2589 = sld [smem:[#allocation3 + $0x181]]
    %s2590 = sld [smem:[#allocation3 + $0x182]]
    %s2591 = sld [smem:[#allocation3 + $0x183]]
    %s2592 = sld [smem:[#allocation3 + $0x184]]
    %s2593 = sld [smem:[#allocation3 + $0x185]]
    %s2594 = sld [smem:[#allocation3 + $0x186]]
    %s2595 = sld [smem:[#allocation3 + $0x187]]
    %s2596 = sld [smem:[#allocation3 + $0x188]]
    %s2597 = sld [smem:[#allocation6 + $0x3]]
    %v2598 = vstv %s2588
    %v2599 = vmul.f32 %v52, %v2598
    %v2600 = vmul.f32 %v53, %v2598
    %v2601 = vmul.f32 %v54, %v2598
    %v2602 = vmul.f32 %v55, %v2598
    %v2603 = vstv %s2589
    %v2604 = vmul.f32 %v57, %v2603
    %v2605 = vmul.f32 %v58, %v2603
    %v2606 = vmul.f32 %v59, %v2603
    %v2607 = vmul.f32 %v60, %v2603
    %v2608 = vadd.f32 %v2599, %v2604
    %v2609 = vadd.f32 %v2600, %v2605
    %v2610 = vadd.f32 %v2601, %v2606
    %v2611 = vadd.f32 %v2602, %v2607
    %v2612 = vstv %s2590
    %v2613 = vmul.f32 %v52, %v2612
    %v2614 = vmul.f32 %v53, %v2612
    %v2615 = vmul.f32 %v54, %v2612
    %v2616 = vmul.f32 %v55, %v2612
    %2621 = vrot.lane.b32.xlu0 %v2613, 127
    %v2622 = vpop.permute.xlu0 %2621
    %2623 = vrot.lane.b32.xlu0 %v2614, 127
    %v2624 = vpop.permute.xlu0 %2623
    %2625 = vrot.lane.b32.xlu0 %v2615, 127
    %v2626 = vpop.permute.xlu0 %2625
    %2627 = vrot.lane.b32.xlu0 %v2616, 127
    %v2628 = vpop.permute.xlu0 %2627
    %v2633 = vadd.f32 %v2608, %v2622
    %v2634 = vadd.f32 %v2609, %v2624
    %v2635 = vadd.f32 %v2610, %v2626
    %v2636 = vadd.f32 %v2611, %v2628
    %v2637 = vstv %s2591
    %v2638 = vmul.f32 %v62, %v2637
    %v2639 = vmul.f32 %v63, %v2637
    %v2640 = vmul.f32 %v64, %v2637
    %v2641 = vmul.f32 %v65, %v2637
    %v2642 = vadd.f32 %v2633, %v2638
    %v2643 = vadd.f32 %v2634, %v2639
    %v2644 = vadd.f32 %v2635, %v2640
    %v2645 = vadd.f32 %v2636, %v2641
    %v2646 = vstv %s2592
    %v2647 = vmul.f32 %v67, %v2646
    %v2648 = vmul.f32 %v68, %v2646
    %v2649 = vmul.f32 %v69, %v2646
    %v2650 = vmul.f32 %v70, %v2646
    %v2651 = vadd.f32 %v2642, %v2647
    %v2652 = vadd.f32 %v2643, %v2648
    %v2653 = vadd.f32 %v2644, %v2649
    %v2654 = vadd.f32 %v2645, %v2650
    %v2655 = vstv %s2593
    %v2656 = vmul.f32 %v62, %v2655
    %v2657 = vmul.f32 %v63, %v2655
    %v2658 = vmul.f32 %v64, %v2655
    %v2659 = vmul.f32 %v65, %v2655
    %2664 = vrot.lane.b32.xlu0 %v2656, 127
    %v2665 = vpop.permute.xlu0 %2664
    %2666 = vrot.lane.b32.xlu0 %v2657, 127
    %v2667 = vpop.permute.xlu0 %2666
    %2668 = vrot.lane.b32.xlu0 %v2658, 127
    %v2669 = vpop.permute.xlu0 %2668
    %2670 = vrot.lane.b32.xlu0 %v2659, 127
    %v2671 = vpop.permute.xlu0 %2670
    %v2676 = vadd.f32 %v2651, %v2665
    %v2677 = vadd.f32 %v2652, %v2667
    %v2678 = vadd.f32 %v2653, %v2669
    %v2679 = vadd.f32 %v2654, %v2671
    %v2680 = vstv %s2594
    %v2681 = vmul.f32 %v52, %v2680
    %v2682 = vmul.f32 %v53, %v2680
    %v2683 = vmul.f32 %v54, %v2680
    %v2684 = vmul.f32 %v55, %v2680
    %v2689 = vrot.slane %v2681, 2
    %v2690 = vrot.slane %v2682, 2
    %v2691 = vsel %vm172, %v2689, %v2690
    %v2692 = vrot.slane %v2683, 2
    %v2693 = vsel %vm172, %v2690, %v2692
    %v2694 = vrot.slane %v2684, 2
    %v2695 = vsel %vm172, %v2692, %v2694
    %v2700 = vadd.f32 %v2676, %v2691
    %v2701 = vadd.f32 %v2677, %v2693
    %v2702 = vadd.f32 %v2678, %v2695
    %v2703 = vadd.f32 %v2679, %v2694
    %v2704 = vstv %s2595
    %v2705 = vmul.f32 %v57, %v2704
    %v2706 = vmul.f32 %v58, %v2704
    %v2707 = vmul.f32 %v59, %v2704
    %v2708 = vmul.f32 %v60, %v2704
    %v2713 = vrot.slane %v2705, 2
    %v2714 = vrot.slane %v2706, 2
    %v2715 = vsel %vm172, %v2713, %v2714
    %v2716 = vrot.slane %v2707, 2
    %v2717 = vsel %vm172, %v2714, %v2716
    %v2718 = vrot.slane %v2708, 2
    %v2719 = vsel %vm172, %v2716, %v2718
    %v2724 = vadd.f32 %v2700, %v2715
    %v2725 = vadd.f32 %v2701, %v2717
    %v2726 = vadd.f32 %v2702, %v2719
    %v2727 = vadd.f32 %v2703, %v2718
    %v2728 = vstv %s2596
    %v2729 = vmul.f32 %v52, %v2728
    %v2730 = vmul.f32 %v53, %v2728
    %v2731 = vmul.f32 %v54, %v2728
    %v2732 = vmul.f32 %v55, %v2728
    %v2737 = vrot.slane %v2729, 2
    %v2738 = vrot.slane %v2730, 2
    %v2739 = vsel %vm172, %v2737, %v2738
    %v2740 = vrot.slane %v2731, 2
    %v2741 = vsel %vm172, %v2738, %v2740
    %v2742 = vrot.slane %v2732, 2
    %v2743 = vsel %vm172, %v2740, %v2742
    %2744 = vrot.lane.b32.xlu0 %v2739, 127
    %v2745 = vpop.permute.xlu0 %2744
    %2746 = vrot.lane.b32.xlu0 %v2741, 127
    %v2747 = vpop.permute.xlu0 %2746
    %2748 = vrot.lane.b32.xlu0 %v2743, 127
    %v2749 = vpop.permute.xlu0 %2748
    %2750 = vrot.lane.b32.xlu0 %v2742, 127
    %v2751 = vpop.permute.xlu0 %2750
    %v2756 = vadd.f32 %v2724, %v2745
    %v2757 = vadd.f32 %v2725, %v2747
    %v2758 = vadd.f32 %v2726, %v2749
    %v2759 = vadd.f32 %v2727, %v2751
    %v2760 = vstv %s2597
    %v2761 = vadd.f32 %v2756, %v2760
    %v2762 = vadd.f32 %v2757, %v2760
    %v2763 = vadd.f32 %v2758, %v2760
    %v2764 = vadd.f32 %v2759, %v2760
    %v2765 = vtanh.pop %v2761
    %v2766 = vtanh.pop %v2762
    %v2767 = vtanh.pop %v2763
    %v2768 = vtanh.pop %v2764
    %v2769 = vmul.f32 %v57, %v2598
    %v2770 = vmul.f32 %v58, %v2598
    %v2771 = vmul.f32 %v59, %v2598
    %v2772 = vmul.f32 %v60, %v2598
    %v2773 = vmul.f32 %v52, %v2603
    %v2774 = vmul.f32 %v53, %v2603
    %v2775 = vmul.f32 %v54, %v2603
    %v2776 = vmul.f32 %v55, %v2603
    %2781 = vrot.lane.b32.xlu0 %v2773, 127
    %v2782 = vpop.permute.xlu0 %2781
    %2783 = vrot.lane.b32.xlu0 %v2774, 127
    %v2784 = vpop.permute.xlu0 %2783
    %2785 = vrot.lane.b32.xlu0 %v2775, 127
    %v2786 = vpop.permute.xlu0 %2785
    %2787 = vrot.lane.b32.xlu0 %v2776, 127
    %v2788 = vpop.permute.xlu0 %2787
    %v2793 = vadd.f32 %v2769, %v2782
    %v2794 = vadd.f32 %v2770, %v2784
    %v2795 = vadd.f32 %v2771, %v2786
    %v2796 = vadd.f32 %v2772, %v2788
    %v2797 = vmul.f32 %v57, %v2612
    %v2798 = vmul.f32 %v58, %v2612
    %v2799 = vmul.f32 %v59, %v2612
    %v2800 = vmul.f32 %v60, %v2612
    %2805 = vrot.lane.b32.xlu0 %v2797, 127
    %v2806 = vpop.permute.xlu0 %2805
    %2807 = vrot.lane.b32.xlu0 %v2798, 127
    %v2808 = vpop.permute.xlu0 %2807
    %2809 = vrot.lane.b32.xlu0 %v2799, 127
    %v2810 = vpop.permute.xlu0 %2809
    %2811 = vrot.lane.b32.xlu0 %v2800, 127
    %v2812 = vpop.permute.xlu0 %2811
    %v2817 = vadd.f32 %v2793, %v2806
    %v2818 = vadd.f32 %v2794, %v2808
    %v2819 = vadd.f32 %v2795, %v2810
    %v2820 = vadd.f32 %v2796, %v2812
    %v2821 = vmul.f32 %v67, %v2637
    %v2822 = vmul.f32 %v68, %v2637
    %v2823 = vmul.f32 %v69, %v2637
    %v2824 = vmul.f32 %v70, %v2637
    %v2825 = vadd.f32 %v2817, %v2821
    %v2826 = vadd.f32 %v2818, %v2822
    %v2827 = vadd.f32 %v2819, %v2823
    %v2828 = vadd.f32 %v2820, %v2824
    %v2829 = vmul.f32 %v62, %v2646
    %v2830 = vmul.f32 %v63, %v2646
    %v2831 = vmul.f32 %v64, %v2646
    %v2832 = vmul.f32 %v65, %v2646
    %2837 = vrot.lane.b32.xlu0 %v2829, 127
    %v2838 = vpop.permute.xlu0 %2837
    %2839 = vrot.lane.b32.xlu0 %v2830, 127
    %v2840 = vpop.permute.xlu0 %2839
    %2841 = vrot.lane.b32.xlu0 %v2831, 127
    %v2842 = vpop.permute.xlu0 %2841
    %2843 = vrot.lane.b32.xlu0 %v2832, 127
    %v2844 = vpop.permute.xlu0 %2843
    %v2849 = vadd.f32 %v2825, %v2838
    %v2850 = vadd.f32 %v2826, %v2840
    %v2851 = vadd.f32 %v2827, %v2842
    %v2852 = vadd.f32 %v2828, %v2844
    %v2853 = vmul.f32 %v67, %v2655
    %v2854 = vmul.f32 %v68, %v2655
    %v2855 = vmul.f32 %v69, %v2655
    %v2856 = vmul.f32 %v70, %v2655
    %2861 = vrot.lane.b32.xlu0 %v2853, 127
    %v2862 = vpop.permute.xlu0 %2861
    %2863 = vrot.lane.b32.xlu0 %v2854, 127
    %v2864 = vpop.permute.xlu0 %2863
    %2865 = vrot.lane.b32.xlu0 %v2855, 127
    %v2866 = vpop.permute.xlu0 %2865
    %2867 = vrot.lane.b32.xlu0 %v2856, 127
    %v2868 = vpop.permute.xlu0 %2867
    %v2873 = vadd.f32 %v2849, %v2862
    %v2874 = vadd.f32 %v2850, %v2864
    %v2875 = vadd.f32 %v2851, %v2866
    %v2876 = vadd.f32 %v2852, %v2868
    %v2877 = vmul.f32 %v57, %v2680
    %v2878 = vmul.f32 %v58, %v2680
    %v2879 = vmul.f32 %v59, %v2680
    %v2880 = vmul.f32 %v60, %v2680
    %v2885 = vrot.slane %v2877, 2
    %v2886 = vrot.slane %v2878, 2
    %v2887 = vsel %vm172, %v2885, %v2886
    %v2888 = vrot.slane %v2879, 2
    %v2889 = vsel %vm172, %v2886, %v2888
    %v2890 = vrot.slane %v2880, 2
    %v2891 = vsel %vm172, %v2888, %v2890
    %v2896 = vadd.f32 %v2873, %v2887
    %v2897 = vadd.f32 %v2874, %v2889
    %v2898 = vadd.f32 %v2875, %v2891
    %v2899 = vadd.f32 %v2876, %v2890
    %v2900 = vmul.f32 %v52, %v2704
    %v2901 = vmul.f32 %v53, %v2704
    %v2902 = vmul.f32 %v54, %v2704
    %v2903 = vmul.f32 %v55, %v2704
    %v2908 = vrot.slane %v2900, 2
    %v2909 = vrot.slane %v2901, 2
    %v2910 = vsel %vm172, %v2908, %v2909
    %v2911 = vrot.slane %v2902, 2
    %v2912 = vsel %vm172, %v2909, %v2911
    %v2913 = vrot.slane %v2903, 2
    %v2914 = vsel %vm172, %v2911, %v2913
    %2915 = vrot.lane.b32.xlu0 %v2910, 127
    %v2916 = vpop.permute.xlu0 %2915
    %2917 = vrot.lane.b32.xlu0 %v2912, 127
    %v2918 = vpop.permute.xlu0 %2917
    %2919 = vrot.lane.b32.xlu0 %v2914, 127
    %v2920 = vpop.permute.xlu0 %2919
    %2921 = vrot.lane.b32.xlu0 %v2913, 127
    %v2922 = vpop.permute.xlu0 %2921
    %v2927 = vadd.f32 %v2896, %v2916
    %v2928 = vadd.f32 %v2897, %v2918
    %v2929 = vadd.f32 %v2898, %v2920
    %v2930 = vadd.f32 %v2899, %v2922
    %v2931 = vmul.f32 %v57, %v2728
    %v2932 = vmul.f32 %v58, %v2728
    %v2933 = vmul.f32 %v59, %v2728
    %v2934 = vmul.f32 %v60, %v2728
    %v2939 = vrot.slane %v2931, 2
    %v2940 = vrot.slane %v2932, 2
    %v2941 = vsel %vm172, %v2939, %v2940
    %v2942 = vrot.slane %v2933, 2
    %v2943 = vsel %vm172, %v2940, %v2942
    %v2944 = vrot.slane %v2934, 2
    %v2945 = vsel %vm172, %v2942, %v2944
    %2946 = vrot.lane.b32.xlu0 %v2941, 127
    %v2947 = vpop.permute.xlu0 %2946
    %2948 = vrot.lane.b32.xlu0 %v2943, 127
    %v2949 = vpop.permute.xlu0 %2948
    %2950 = vrot.lane.b32.xlu0 %v2945, 127
    %v2951 = vpop.permute.xlu0 %2950
    %2952 = vrot.lane.b32.xlu0 %v2944, 127
    %v2953 = vpop.permute.xlu0 %2952
    %v2958 = vadd.f32 %v2927, %v2947
    %v2959 = vadd.f32 %v2928, %v2949
    %v2960 = vadd.f32 %v2929, %v2951
    %v2961 = vadd.f32 %v2930, %v2953
    %v2962 = vadd.f32 %v2958, %v2760
    %v2963 = vadd.f32 %v2959, %v2760
    %v2964 = vadd.f32 %v2960, %v2760
    %v2965 = vadd.f32 %v2961, %v2760
    %v2966 = vtanh.pop %v2962
    %v2967 = vtanh.pop %v2963
    %v2968 = vtanh.pop %v2964
    %v2969 = vtanh.pop %v2965
    %v2970 = vmax.f32 %v2765, %v2966
    %v2971 = vmax.f32 %v2766, %v2967
    %v2972 = vmax.f32 %v2767, %v2968
    %v2973 = vmax.f32 %v2768, %v2969
    %v2974 = vmul.f32 %v62, %v2598
    %v2975 = vmul.f32 %v63, %v2598
    %v2976 = vmul.f32 %v64, %v2598
    %v2977 = vmul.f32 %v65, %v2598
    %v2978 = vmul.f32 %v67, %v2603
    %v2979 = vmul.f32 %v68, %v2603
    %v2980 = vmul.f32 %v69, %v2603
    %v2981 = vmul.f32 %v70, %v2603
    %v2982 = vadd.f32 %v2974, %v2978
    %v2983 = vadd.f32 %v2975, %v2979
    %v2984 = vadd.f32 %v2976, %v2980
    %v2985 = vadd.f32 %v2977, %v2981
    %v2986 = vmul.f32 %v62, %v2612
    %v2987 = vmul.f32 %v63, %v2612
    %v2988 = vmul.f32 %v64, %v2612
    %v2989 = vmul.f32 %v65, %v2612
    %2994 = vrot.lane.b32.xlu0 %v2986, 127
    %v2995 = vpop.permute.xlu0 %2994
    %2996 = vrot.lane.b32.xlu0 %v2987, 127
    %v2997 = vpop.permute.xlu0 %2996
    %2998 = vrot.lane.b32.xlu0 %v2988, 127
    %v2999 = vpop.permute.xlu0 %2998
    %3000 = vrot.lane.b32.xlu0 %v2989, 127
    %v3001 = vpop.permute.xlu0 %3000
    %v3006 = vadd.f32 %v2982, %v2995
    %v3007 = vadd.f32 %v2983, %v2997
    %v3008 = vadd.f32 %v2984, %v2999
    %v3009 = vadd.f32 %v2985, %v3001
    %v3010 = vmul.f32 %v52, %v2637
    %v3011 = vmul.f32 %v53, %v2637
    %v3012 = vmul.f32 %v54, %v2637
    %v3013 = vmul.f32 %v55, %v2637
    %v3018 = vrot.slane %v3010, 2
    %v3019 = vrot.slane %v3011, 2
    %v3020 = vsel %vm172, %v3018, %v3019
    %v3021 = vrot.slane %v3012, 2
    %v3022 = vsel %vm172, %v3019, %v3021
    %v3023 = vrot.slane %v3013, 2
    %v3024 = vsel %vm172, %v3021, %v3023
    %v3029 = vadd.f32 %v3006, %v3020
    %v3030 = vadd.f32 %v3007, %v3022
    %v3031 = vadd.f32 %v3008, %v3024
    %v3032 = vadd.f32 %v3009, %v3023
    %v3033 = vmul.f32 %v57, %v2646
    %v3034 = vmul.f32 %v58, %v2646
    %v3035 = vmul.f32 %v59, %v2646
    %v3036 = vmul.f32 %v60, %v2646
    %v3041 = vrot.slane %v3033, 2
    %v3042 = vrot.slane %v3034, 2
    %v3043 = vsel %vm172, %v3041, %v3042
    %v3044 = vrot.slane %v3035, 2
    %v3045 = vsel %vm172, %v3042, %v3044
    %v3046 = vrot.slane %v3036, 2
    %v3047 = vsel %vm172, %v3044, %v3046
    %v3052 = vadd.f32 %v3029, %v3043
    %v3053 = vadd.f32 %v3030, %v3045
    %v3054 = vadd.f32 %v3031, %v3047
    %v3055 = vadd.f32 %v3032, %v3046
    %v3056 = vmul.f32 %v52, %v2655
    %v3057 = vmul.f32 %v53, %v2655
    %v3058 = vmul.f32 %v54, %v2655
    %v3059 = vmul.f32 %v55, %v2655
    %v3064 = vrot.slane %v3056, 2
    %v3065 = vrot.slane %v3057, 2
    %v3066 = vsel %vm172, %v3064, %v3065
    %v3067 = vrot.slane %v3058, 2
    %v3068 = vsel %vm172, %v3065, %v3067
    %v3069 = vrot.slane %v3059, 2
    %v3070 = vsel %vm172, %v3067, %v3069
    %3071 = vrot.lane.b32.xlu0 %v3066, 127
    %v3072 = vpop.permute.xlu0 %3071
    %3073 = vrot.lane.b32.xlu0 %v3068, 127
    %v3074 = vpop.permute.xlu0 %3073
    %3075 = vrot.lane.b32.xlu0 %v3070, 127
    %v3076 = vpop.permute.xlu0 %3075
    %3077 = vrot.lane.b32.xlu0 %v3069, 127
    %v3078 = vpop.permute.xlu0 %3077
    %v3083 = vadd.f32 %v3052, %v3072
    %v3084 = vadd.f32 %v3053, %v3074
    %v3085 = vadd.f32 %v3054, %v3076
    %v3086 = vadd.f32 %v3055, %v3078
    %v3087 = vmul.f32 %v62, %v2680
    %v3088 = vmul.f32 %v63, %v2680
    %v3089 = vmul.f32 %v64, %v2680
    %v3090 = vmul.f32 %v65, %v2680
    %v3095 = vrot.slane %v3087, 2
    %v3096 = vrot.slane %v3088, 2
    %v3097 = vsel %vm172, %v3095, %v3096
    %v3098 = vrot.slane %v3089, 2
    %v3099 = vsel %vm172, %v3096, %v3098
    %v3100 = vrot.slane %v3090, 2
    %v3101 = vsel %vm172, %v3098, %v3100
    %v3106 = vadd.f32 %v3083, %v3097
    %v3107 = vadd.f32 %v3084, %v3099
    %v3108 = vadd.f32 %v3085, %v3101
    %v3109 = vadd.f32 %v3086, %v3100
    %v3110 = vmul.f32 %v67, %v2704
    %v3111 = vmul.f32 %v68, %v2704
    %v3112 = vmul.f32 %v69, %v2704
    %v3113 = vmul.f32 %v70, %v2704
    %v3118 = vrot.slane %v3110, 2
    %v3119 = vrot.slane %v3111, 2
    %v3120 = vsel %vm172, %v3118, %v3119
    %v3121 = vrot.slane %v3112, 2
    %v3122 = vsel %vm172, %v3119, %v3121
    %v3123 = vrot.slane %v3113, 2
    %v3124 = vsel %vm172, %v3121, %v3123
    %v3129 = vadd.f32 %v3106, %v3120
    %v3130 = vadd.f32 %v3107, %v3122
    %v3131 = vadd.f32 %v3108, %v3124
    %v3132 = vadd.f32 %v3109, %v3123
    %v3133 = vmul.f32 %v62, %v2728
    %v3134 = vmul.f32 %v63, %v2728
    %v3135 = vmul.f32 %v64, %v2728
    %v3136 = vmul.f32 %v65, %v2728
    %v3141 = vrot.slane %v3133, 2
    %v3142 = vrot.slane %v3134, 2
    %v3143 = vsel %vm172, %v3141, %v3142
    %v3144 = vrot.slane %v3135, 2
    %v3145 = vsel %vm172, %v3142, %v3144
    %v3146 = vrot.slane %v3136, 2
    %v3147 = vsel %vm172, %v3144, %v3146
    %3148 = vrot.lane.b32.xlu0 %v3143, 127
    %v3149 = vpop.permute.xlu0 %3148
    %3150 = vrot.lane.b32.xlu0 %v3145, 127
    %v3151 = vpop.permute.xlu0 %3150
    %3152 = vrot.lane.b32.xlu0 %v3147, 127
    %v3153 = vpop.permute.xlu0 %3152
    %3154 = vrot.lane.b32.xlu0 %v3146, 127
    %v3155 = vpop.permute.xlu0 %3154
    %v3160 = vadd.f32 %v3129, %v3149
    %v3161 = vadd.f32 %v3130, %v3151
    %v3162 = vadd.f32 %v3131, %v3153
    %v3163 = vadd.f32 %v3132, %v3155
    %v3164 = vadd.f32 %v3160, %v2760
    %v3165 = vadd.f32 %v3161, %v2760
    %v3166 = vadd.f32 %v3162, %v2760
    %v3167 = vadd.f32 %v3163, %v2760
    %v3168 = vtanh.pop %v3164
    %v3169 = vtanh.pop %v3165
    %v3170 = vtanh.pop %v3166
    %v3171 = vtanh.pop %v3167
    %v3172 = vmax.f32 %v2970, %v3168
    %v3173 = vmax.f32 %v2971, %v3169
    %v3174 = vmax.f32 %v2972, %v3170
    %v3175 = vmax.f32 %v2973, %v3171
    %v3176 = vmul.f32 %v67, %v2598
    %v3177 = vmul.f32 %v68, %v2598
    %v3178 = vmul.f32 %v69, %v2598
    %v3179 = vmul.f32 %v70, %v2598
    %v3180 = vmul.f32 %v62, %v2603
    %v3181 = vmul.f32 %v63, %v2603
    %v3182 = vmul.f32 %v64, %v2603
    %v3183 = vmul.f32 %v65, %v2603
    %3188 = vrot.lane.b32.xlu0 %v3180, 127
    %v3189 = vpop.permute.xlu0 %3188
    %3190 = vrot.lane.b32.xlu0 %v3181, 127
    %v3191 = vpop.permute.xlu0 %3190
    %3192 = vrot.lane.b32.xlu0 %v3182, 127
    %v3193 = vpop.permute.xlu0 %3192
    %3194 = vrot.lane.b32.xlu0 %v3183, 127
    %v3195 = vpop.permute.xlu0 %3194
    %v3200 = vadd.f32 %v3176, %v3189
    %v3201 = vadd.f32 %v3177, %v3191
    %v3202 = vadd.f32 %v3178, %v3193
    %v3203 = vadd.f32 %v3179, %v3195
    %v3204 = vmul.f32 %v67, %v2612
    %v3205 = vmul.f32 %v68, %v2612
    %v3206 = vmul.f32 %v69, %v2612
    %v3207 = vmul.f32 %v70, %v2612
    %3212 = vrot.lane.b32.xlu0 %v3204, 127
    %v3213 = vpop.permute.xlu0 %3212
    %3214 = vrot.lane.b32.xlu0 %v3205, 127
    %v3215 = vpop.permute.xlu0 %3214
    %3216 = vrot.lane.b32.xlu0 %v3206, 127
    %v3217 = vpop.permute.xlu0 %3216
    %3218 = vrot.lane.b32.xlu0 %v3207, 127
    %v3219 = vpop.permute.xlu0 %3218
    %v3224 = vadd.f32 %v3200, %v3213
    %v3225 = vadd.f32 %v3201, %v3215
    %v3226 = vadd.f32 %v3202, %v3217
    %v3227 = vadd.f32 %v3203, %v3219
    %v3228 = vmul.f32 %v57, %v2637
    %v3229 = vmul.f32 %v58, %v2637
    %v3230 = vmul.f32 %v59, %v2637
    %v3231 = vmul.f32 %v60, %v2637
    %v3236 = vrot.slane %v3228, 2
    %v3237 = vrot.slane %v3229, 2
    %v3238 = vsel %vm172, %v3236, %v3237
    %v3239 = vrot.slane %v3230, 2
    %v3240 = vsel %vm172, %v3237, %v3239
    %v3241 = vrot.slane %v3231, 2
    %v3242 = vsel %vm172, %v3239, %v3241
    %v3247 = vadd.f32 %v3224, %v3238
    %v3248 = vadd.f32 %v3225, %v3240
    %v3249 = vadd.f32 %v3226, %v3242
    %v3250 = vadd.f32 %v3227, %v3241
    %v3251 = vmul.f32 %v52, %v2646
    %v3252 = vmul.f32 %v53, %v2646
    %v3253 = vmul.f32 %v54, %v2646
    %v3254 = vmul.f32 %v55, %v2646
    %v3259 = vrot.slane %v3251, 2
    %v3260 = vrot.slane %v3252, 2
    %v3261 = vsel %vm172, %v3259, %v3260
    %v3262 = vrot.slane %v3253, 2
    %v3263 = vsel %vm172, %v3260, %v3262
    %v3264 = vrot.slane %v3254, 2
    %v3265 = vsel %vm172, %v3262, %v3264
    %3266 = vrot.lane.b32.xlu0 %v3261, 127
    %v3267 = vpop.permute.xlu0 %3266
    %3268 = vrot.lane.b32.xlu0 %v3263, 127
    %v3269 = vpop.permute.xlu0 %3268
    %3270 = vrot.lane.b32.xlu0 %v3265, 127
    %v3271 = vpop.permute.xlu0 %3270
    %3272 = vrot.lane.b32.xlu0 %v3264, 127
    %v3273 = vpop.permute.xlu0 %3272
    %v3278 = vadd.f32 %v3247, %v3267
    %v3279 = vadd.f32 %v3248, %v3269
    %v3280 = vadd.f32 %v3249, %v3271
    %v3281 = vadd.f32 %v3250, %v3273
    %v3282 = vmul.f32 %v57, %v2655
    %v3283 = vmul.f32 %v58, %v2655
    %v3284 = vmul.f32 %v59, %v2655
    %v3285 = vmul.f32 %v60, %v2655
    %v3290 = vrot.slane %v3282, 2
    %v3291 = vrot.slane %v3283, 2
    %v3292 = vsel %vm172, %v3290, %v3291
    %v3293 = vrot.slane %v3284, 2
    %v3294 = vsel %vm172, %v3291, %v3293
    %v3295 = vrot.slane %v3285, 2
    %v3296 = vsel %vm172, %v3293, %v3295
    %3297 = vrot.lane.b32.xlu0 %v3292, 127
    %v3298 = vpop.permute.xlu0 %3297
    %3299 = vrot.lane.b32.xlu0 %v3294, 127
    %v3300 = vpop.permute.xlu0 %3299
    %3301 = vrot.lane.b32.xlu0 %v3296, 127
    %v3302 = vpop.permute.xlu0 %3301
    %3303 = vrot.lane.b32.xlu0 %v3295, 127
    %v3304 = vpop.permute.xlu0 %3303
    %v3309 = vadd.f32 %v3278, %v3298
    %v3310 = vadd.f32 %v3279, %v3300
    %v3311 = vadd.f32 %v3280, %v3302
    %v3312 = vadd.f32 %v3281, %v3304
    %v3313 = vmul.f32 %v67, %v2680
    %v3314 = vmul.f32 %v68, %v2680
    %v3315 = vmul.f32 %v69, %v2680
    %v3316 = vmul.f32 %v70, %v2680
    %v3321 = vrot.slane %v3313, 2
    %v3322 = vrot.slane %v3314, 2
    %v3323 = vsel %vm172, %v3321, %v3322
    %v3324 = vrot.slane %v3315, 2
    %v3325 = vsel %vm172, %v3322, %v3324
    %v3326 = vrot.slane %v3316, 2
    %v3327 = vsel %vm172, %v3324, %v3326
    %v3332 = vadd.f32 %v3309, %v3323
    %v3333 = vadd.f32 %v3310, %v3325
    %v3334 = vadd.f32 %v3311, %v3327
    %v3335 = vadd.f32 %v3312, %v3326
    %v3336 = vmul.f32 %v62, %v2704
    %v3337 = vmul.f32 %v63, %v2704
    %v3338 = vmul.f32 %v64, %v2704
    %v3339 = vmul.f32 %v65, %v2704
    %v3344 = vrot.slane %v3336, 2
    %v3345 = vrot.slane %v3337, 2
    %v3346 = vsel %vm172, %v3344, %v3345
    %v3347 = vrot.slane %v3338, 2
    %v3348 = vsel %vm172, %v3345, %v3347
    %v3349 = vrot.slane %v3339, 2
    %v3350 = vsel %vm172, %v3347, %v3349
    %3351 = vrot.lane.b32.xlu0 %v3346, 127
    %v3352 = vpop.permute.xlu0 %3351
    %3353 = vrot.lane.b32.xlu0 %v3348, 127
    %v3354 = vpop.permute.xlu0 %3353
    %3355 = vrot.lane.b32.xlu0 %v3350, 127
    %v3356 = vpop.permute.xlu0 %3355
    %3357 = vrot.lane.b32.xlu0 %v3349, 127
    %v3358 = vpop.permute.xlu0 %3357
    %v3363 = vadd.f32 %v3332, %v3352
    %v3364 = vadd.f32 %v3333, %v3354
    %v3365 = vadd.f32 %v3334, %v3356
    %v3366 = vadd.f32 %v3335, %v3358
    %v3367 = vmul.f32 %v67, %v2728
    %v3368 = vmul.f32 %v68, %v2728
    %v3369 = vmul.f32 %v69, %v2728
    %v3370 = vmul.f32 %v70, %v2728
    %v3375 = vrot.slane %v3367, 2
    %v3376 = vrot.slane %v3368, 2
    %v3377 = vsel %vm172, %v3375, %v3376
    %v3378 = vrot.slane %v3369, 2
    %v3379 = vsel %vm172, %v3376, %v3378
    %v3380 = vrot.slane %v3370, 2
    %v3381 = vsel %vm172, %v3378, %v3380
    %3382 = vrot.lane.b32.xlu0 %v3377, 127
    %v3383 = vpop.permute.xlu0 %3382
    %3384 = vrot.lane.b32.xlu0 %v3379, 127
    %v3385 = vpop.permute.xlu0 %3384
    %3386 = vrot.lane.b32.xlu0 %v3381, 127
    %v3387 = vpop.permute.xlu0 %3386
    %3388 = vrot.lane.b32.xlu0 %v3380, 127
    %v3389 = vpop.permute.xlu0 %3388
    %v3394 = vadd.f32 %v3363, %v3383
    %v3395 = vadd.f32 %v3364, %v3385
    %v3396 = vadd.f32 %v3365, %v3387
    %v3397 = vadd.f32 %v3366, %v3389
    %v3398 = vadd.f32 %v3394, %v2760
    %v3399 = vadd.f32 %v3395, %v2760
    %v3400 = vadd.f32 %v3396, %v2760
    %v3401 = vadd.f32 %v3397, %v2760
    %v3402 = vtanh.pop %v3398
    %v3403 = vtanh.pop %v3399
    %v3404 = vtanh.pop %v3400
    %v3405 = vtanh.pop %v3401
    %v3406 = vmax.f32 %v3172, %v3402
    %v3407 = vmax.f32 %v3173, %v3403
    %v3408 = vmax.f32 %v3174, %v3404
    %v3409 = vmax.f32 %v3175, %v3405
    %3414 = vrot.lane.b32.xlu0 %v3406, 42
    %v3415 = vpop.permute.xlu0 %3414
    %3416 = vrot.lane.b32.xlu0 %v3407, 42
    %v3417 = vpop.permute.xlu0 %3416
    %3418 = vrot.lane.b32.xlu0 %v3408, 42
    %v3419 = vpop.permute.xlu0 %3418
    %3420 = vrot.lane.b32.xlu0 %v3409, 42
    %v3421 = vpop.permute.xlu0 %3420
    %vm3426 = vcmask 458064
    %3427 = vst.msk [vmem:[#allocation2] sm:$0xff] %vm3426, %v3415
    %3428 = vst.msk [vmem:[#allocation2 + $0x8] sm:$0xff] %vm3426, %v3417
    %3429 = vst.msk [vmem:[#allocation2 + $0x10] sm:$0xff] %vm3426, %v3419
    %vm3430 = vcmask 453968
    %3431 = vst.msk [vmem:[#allocation2 + $0x18] sm:$0xf] %vm3430, %v3421
    %s3432 = sld [smem:[#allocation3 + $0x200]]
    %s3433 = sld [smem:[#allocation3 + $0x201]]
    %s3434 = sld [smem:[#allocation3 + $0x202]]
    %s3435 = sld [smem:[#allocation3 + $0x203]]
    %s3436 = sld [smem:[#allocation3 + $0x204]]
    %s3437 = sld [smem:[#allocation3 + $0x205]]
    %s3438 = sld [smem:[#allocation3 + $0x206]]
    %s3439 = sld [smem:[#allocation3 + $0x207]]
    %s3440 = sld [smem:[#allocation3 + $0x208]]
    %s3441 = sld [smem:[#allocation6 + $0x4]]
    %v3442 = vstv %s3432
    %v3443 = vmul.f32 %v52, %v3442
    %v3444 = vmul.f32 %v53, %v3442
    %v3445 = vmul.f32 %v54, %v3442
    %v3446 = vmul.f32 %v55, %v3442
    %v3447 = vstv %s3433
    %v3448 = vmul.f32 %v57, %v3447
    %v3449 = vmul.f32 %v58, %v3447
    %v3450 = vmul.f32 %v59, %v3447
    %v3451 = vmul.f32 %v60, %v3447
    %v3452 = vadd.f32 %v3443, %v3448
    %v3453 = vadd.f32 %v3444, %v3449
    %v3454 = vadd.f32 %v3445, %v3450
    %v3455 = vadd.f32 %v3446, %v3451
    %v3456 = vstv %s3434
    %v3457 = vmul.f32 %v52, %v3456
    %v3458 = vmul.f32 %v53, %v3456
    %v3459 = vmul.f32 %v54, %v3456
    %v3460 = vmul.f32 %v55, %v3456
    %3465 = vrot.lane.b32.xlu0 %v3457, 127
    %v3466 = vpop.permute.xlu0 %3465
    %3467 = vrot.lane.b32.xlu0 %v3458, 127
    %v3468 = vpop.permute.xlu0 %3467
    %3469 = vrot.lane.b32.xlu0 %v3459, 127
    %v3470 = vpop.permute.xlu0 %3469
    %3471 = vrot.lane.b32.xlu0 %v3460, 127
    %v3472 = vpop.permute.xlu0 %3471
    %v3477 = vadd.f32 %v3452, %v3466
    %v3478 = vadd.f32 %v3453, %v3468
    %v3479 = vadd.f32 %v3454, %v3470
    %v3480 = vadd.f32 %v3455, %v3472
    %v3481 = vstv %s3435
    %v3482 = vmul.f32 %v62, %v3481
    %v3483 = vmul.f32 %v63, %v3481
    %v3484 = vmul.f32 %v64, %v3481
    %v3485 = vmul.f32 %v65, %v3481
    %v3486 = vadd.f32 %v3477, %v3482
    %v3487 = vadd.f32 %v3478, %v3483
    %v3488 = vadd.f32 %v3479, %v3484
    %v3489 = vadd.f32 %v3480, %v3485
    %v3490 = vstv %s3436
    %v3491 = vmul.f32 %v67, %v3490
    %v3492 = vmul.f32 %v68, %v3490
    %v3493 = vmul.f32 %v69, %v3490
    %v3494 = vmul.f32 %v70, %v3490
    %v3495 = vadd.f32 %v3486, %v3491
    %v3496 = vadd.f32 %v3487, %v3492
    %v3497 = vadd.f32 %v3488, %v3493
    %v3498 = vadd.f32 %v3489, %v3494
    %v3499 = vstv %s3437
    %v3500 = vmul.f32 %v62, %v3499
    %v3501 = vmul.f32 %v63, %v3499
    %v3502 = vmul.f32 %v64, %v3499
    %v3503 = vmul.f32 %v65, %v3499
    %3508 = vrot.lane.b32.xlu0 %v3500, 127
    %v3509 = vpop.permute.xlu0 %3508
    %3510 = vrot.lane.b32.xlu0 %v3501, 127
    %v3511 = vpop.permute.xlu0 %3510
    %3512 = vrot.lane.b32.xlu0 %v3502, 127
    %v3513 = vpop.permute.xlu0 %3512
    %3514 = vrot.lane.b32.xlu0 %v3503, 127
    %v3515 = vpop.permute.xlu0 %3514
    %v3520 = vadd.f32 %v3495, %v3509
    %v3521 = vadd.f32 %v3496, %v3511
    %v3522 = vadd.f32 %v3497, %v3513
    %v3523 = vadd.f32 %v3498, %v3515
    %v3524 = vstv %s3438
    %v3525 = vmul.f32 %v52, %v3524
    %v3526 = vmul.f32 %v53, %v3524
    %v3527 = vmul.f32 %v54, %v3524
    %v3528 = vmul.f32 %v55, %v3524
    %v3533 = vrot.slane %v3525, 2
    %v3534 = vrot.slane %v3526, 2
    %v3535 = vsel %vm172, %v3533, %v3534
    %v3536 = vrot.slane %v3527, 2
    %v3537 = vsel %vm172, %v3534, %v3536
    %v3538 = vrot.slane %v3528, 2
    %v3539 = vsel %vm172, %v3536, %v3538
    %v3544 = vadd.f32 %v3520, %v3535
    %v3545 = vadd.f32 %v3521, %v3537
    %v3546 = vadd.f32 %v3522, %v3539
    %v3547 = vadd.f32 %v3523, %v3538
    %v3548 = vstv %s3439
    %v3549 = vmul.f32 %v57, %v3548
    %v3550 = vmul.f32 %v58, %v3548
    %v3551 = vmul.f32 %v59, %v3548
    %v3552 = vmul.f32 %v60, %v3548
    %v3557 = vrot.slane %v3549, 2
    %v3558 = vrot.slane %v3550, 2
    %v3559 = vsel %vm172, %v3557, %v3558
    %v3560 = vrot.slane %v3551, 2
    %v3561 = vsel %vm172, %v3558, %v3560
    %v3562 = vrot.slane %v3552, 2
    %v3563 = vsel %vm172, %v3560, %v3562
    %v3568 = vadd.f32 %v3544, %v3559
    %v3569 = vadd.f32 %v3545, %v3561
    %v3570 = vadd.f32 %v3546, %v3563
    %v3571 = vadd.f32 %v3547, %v3562
    %v3572 = vstv %s3440
    %v3573 = vmul.f32 %v52, %v3572
    %v3574 = vmul.f32 %v53, %v3572
    %v3575 = vmul.f32 %v54, %v3572
    %v3576 = vmul.f32 %v55, %v3572
    %v3581 = vrot.slane %v3573, 2
    %v3582 = vrot.slane %v3574, 2
    %v3583 = vsel %vm172, %v3581, %v3582
    %v3584 = vrot.slane %v3575, 2
    %v3585 = vsel %vm172, %v3582, %v3584
    %v3586 = vrot.slane %v3576, 2
    %v3587 = vsel %vm172, %v3584, %v3586
    %3588 = vrot.lane.b32.xlu0 %v3583, 127
    %v3589 = vpop.permute.xlu0 %3588
    %3590 = vrot.lane.b32.xlu0 %v3585, 127
    %v3591 = vpop.permute.xlu0 %3590
    %3592 = vrot.lane.b32.xlu0 %v3587, 127
    %v3593 = vpop.permute.xlu0 %3592
    %3594 = vrot.lane.b32.xlu0 %v3586, 127
    %v3595 = vpop.permute.xlu0 %3594
    %v3600 = vadd.f32 %v3568, %v3589
    %v3601 = vadd.f32 %v3569, %v3591
    %v3602 = vadd.f32 %v3570, %v3593
    %v3603 = vadd.f32 %v3571, %v3595
    %v3604 = vstv %s3441
    %v3605 = vadd.f32 %v3600, %v3604
    %v3606 = vadd.f32 %v3601, %v3604
    %v3607 = vadd.f32 %v3602, %v3604
    %v3608 = vadd.f32 %v3603, %v3604
    %v3609 = vtanh.pop %v3605
    %v3610 = vtanh.pop %v3606
    %v3611 = vtanh.pop %v3607
    %v3612 = vtanh.pop %v3608
    %v3613 = vmul.f32 %v57, %v3442
    %v3614 = vmul.f32 %v58, %v3442
    %v3615 = vmul.f32 %v59, %v3442
    %v3616 = vmul.f32 %v60, %v3442
    %v3617 = vmul.f32 %v52, %v3447
    %v3618 = vmul.f32 %v53, %v3447
    %v3619 = vmul.f32 %v54, %v3447
    %v3620 = vmul.f32 %v55, %v3447
    %3625 = vrot.lane.b32.xlu0 %v3617, 127
    %v3626 = vpop.permute.xlu0 %3625
    %3627 = vrot.lane.b32.xlu0 %v3618, 127
    %v3628 = vpop.permute.xlu0 %3627
    %3629 = vrot.lane.b32.xlu0 %v3619, 127
    %v3630 = vpop.permute.xlu0 %3629
    %3631 = vrot.lane.b32.xlu0 %v3620, 127
    %v3632 = vpop.permute.xlu0 %3631
    %v3637 = vadd.f32 %v3613, %v3626
    %v3638 = vadd.f32 %v3614, %v3628
    %v3639 = vadd.f32 %v3615, %v3630
    %v3640 = vadd.f32 %v3616, %v3632
    %v3641 = vmul.f32 %v57, %v3456
    %v3642 = vmul.f32 %v58, %v3456
    %v3643 = vmul.f32 %v59, %v3456
    %v3644 = vmul.f32 %v60, %v3456
    %3649 = vrot.lane.b32.xlu0 %v3641, 127
    %v3650 = vpop.permute.xlu0 %3649
    %3651 = vrot.lane.b32.xlu0 %v3642, 127
    %v3652 = vpop.permute.xlu0 %3651
    %3653 = vrot.lane.b32.xlu0 %v3643, 127
    %v3654 = vpop.permute.xlu0 %3653
    %3655 = vrot.lane.b32.xlu0 %v3644, 127
    %v3656 = vpop.permute.xlu0 %3655
    %v3661 = vadd.f32 %v3637, %v3650
    %v3662 = vadd.f32 %v3638, %v3652
    %v3663 = vadd.f32 %v3639, %v3654
    %v3664 = vadd.f32 %v3640, %v3656
    %v3665 = vmul.f32 %v67, %v3481
    %v3666 = vmul.f32 %v68, %v3481
    %v3667 = vmul.f32 %v69, %v3481
    %v3668 = vmul.f32 %v70, %v3481
    %v3669 = vadd.f32 %v3661, %v3665
    %v3670 = vadd.f32 %v3662, %v3666
    %v3671 = vadd.f32 %v3663, %v3667
    %v3672 = vadd.f32 %v3664, %v3668
    %v3673 = vmul.f32 %v62, %v3490
    %v3674 = vmul.f32 %v63, %v3490
    %v3675 = vmul.f32 %v64, %v3490
    %v3676 = vmul.f32 %v65, %v3490
    %3681 = vrot.lane.b32.xlu0 %v3673, 127
    %v3682 = vpop.permute.xlu0 %3681
    %3683 = vrot.lane.b32.xlu0 %v3674, 127
    %v3684 = vpop.permute.xlu0 %3683
    %3685 = vrot.lane.b32.xlu0 %v3675, 127
    %v3686 = vpop.permute.xlu0 %3685
    %3687 = vrot.lane.b32.xlu0 %v3676, 127
    %v3688 = vpop.permute.xlu0 %3687
    %v3693 = vadd.f32 %v3669, %v3682
    %v3694 = vadd.f32 %v3670, %v3684
    %v3695 = vadd.f32 %v3671, %v3686
    %v3696 = vadd.f32 %v3672, %v3688
    %v3697 = vmul.f32 %v67, %v3499
    %v3698 = vmul.f32 %v68, %v3499
    %v3699 = vmul.f32 %v69, %v3499
    %v3700 = vmul.f32 %v70, %v3499
    %3705 = vrot.lane.b32.xlu0 %v3697, 127
    %v3706 = vpop.permute.xlu0 %3705
    %3707 = vrot.lane.b32.xlu0 %v3698, 127
    %v3708 = vpop.permute.xlu0 %3707
    %3709 = vrot.lane.b32.xlu0 %v3699, 127
    %v3710 = vpop.permute.xlu0 %3709
    %3711 = vrot.lane.b32.xlu0 %v3700, 127
    %v3712 = vpop.permute.xlu0 %3711
    %v3717 = vadd.f32 %v3693, %v3706
    %v3718 = vadd.f32 %v3694, %v3708
    %v3719 = vadd.f32 %v3695, %v3710
    %v3720 = vadd.f32 %v3696, %v3712
    %v3721 = vmul.f32 %v57, %v3524
    %v3722 = vmul.f32 %v58, %v3524
    %v3723 = vmul.f32 %v59, %v3524
    %v3724 = vmul.f32 %v60, %v3524
    %v3729 = vrot.slane %v3721, 2
    %v3730 = vrot.slane %v3722, 2
    %v3731 = vsel %vm172, %v3729, %v3730
    %v3732 = vrot.slane %v3723, 2
    %v3733 = vsel %vm172, %v3730, %v3732
    %v3734 = vrot.slane %v3724, 2
    %v3735 = vsel %vm172, %v3732, %v3734
    %v3740 = vadd.f32 %v3717, %v3731
    %v3741 = vadd.f32 %v3718, %v3733
    %v3742 = vadd.f32 %v3719, %v3735
    %v3743 = vadd.f32 %v3720, %v3734
    %v3744 = vmul.f32 %v52, %v3548
    %v3745 = vmul.f32 %v53, %v3548
    %v3746 = vmul.f32 %v54, %v3548
    %v3747 = vmul.f32 %v55, %v3548
    %v3752 = vrot.slane %v3744, 2
    %v3753 = vrot.slane %v3745, 2
    %v3754 = vsel %vm172, %v3752, %v3753
    %v3755 = vrot.slane %v3746, 2
    %v3756 = vsel %vm172, %v3753, %v3755
    %v3757 = vrot.slane %v3747, 2
    %v3758 = vsel %vm172, %v3755, %v3757
    %3759 = vrot.lane.b32.xlu0 %v3754, 127
    %v3760 = vpop.permute.xlu0 %3759
    %3761 = vrot.lane.b32.xlu0 %v3756, 127
    %v3762 = vpop.permute.xlu0 %3761
    %3763 = vrot.lane.b32.xlu0 %v3758, 127
    %v3764 = vpop.permute.xlu0 %3763
    %3765 = vrot.lane.b32.xlu0 %v3757, 127
    %v3766 = vpop.permute.xlu0 %3765
    %v3771 = vadd.f32 %v3740, %v3760
    %v3772 = vadd.f32 %v3741, %v3762
    %v3773 = vadd.f32 %v3742, %v3764
    %v3774 = vadd.f32 %v3743, %v3766
    %v3775 = vmul.f32 %v57, %v3572
    %v3776 = vmul.f32 %v58, %v3572
    %v3777 = vmul.f32 %v59, %v3572
    %v3778 = vmul.f32 %v60, %v3572
    %v3783 = vrot.slane %v3775, 2
    %v3784 = vrot.slane %v3776, 2
    %v3785 = vsel %vm172, %v3783, %v3784
    %v3786 = vrot.slane %v3777, 2
    %v3787 = vsel %vm172, %v3784, %v3786
    %v3788 = vrot.slane %v3778, 2
    %v3789 = vsel %vm172, %v3786, %v3788
    %3790 = vrot.lane.b32.xlu0 %v3785, 127
    %v3791 = vpop.permute.xlu0 %3790
    %3792 = vrot.lane.b32.xlu0 %v3787, 127
    %v3793 = vpop.permute.xlu0 %3792
    %3794 = vrot.lane.b32.xlu0 %v3789, 127
    %v3795 = vpop.permute.xlu0 %3794
    %3796 = vrot.lane.b32.xlu0 %v3788, 127
    %v3797 = vpop.permute.xlu0 %3796
    %v3802 = vadd.f32 %v3771, %v3791
    %v3803 = vadd.f32 %v3772, %v3793
    %v3804 = vadd.f32 %v3773, %v3795
    %v3805 = vadd.f32 %v3774, %v3797
    %v3806 = vadd.f32 %v3802, %v3604
    %v3807 = vadd.f32 %v3803, %v3604
    %v3808 = vadd.f32 %v3804, %v3604
    %v3809 = vadd.f32 %v3805, %v3604
    %v3810 = vtanh.pop %v3806
    %v3811 = vtanh.pop %v3807
    %v3812 = vtanh.pop %v3808
    %v3813 = vtanh.pop %v3809
    %v3814 = vmax.f32 %v3609, %v3810
    %v3815 = vmax.f32 %v3610, %v3811
    %v3816 = vmax.f32 %v3611, %v3812
    %v3817 = vmax.f32 %v3612, %v3813
    %v3818 = vmul.f32 %v62, %v3442
    %v3819 = vmul.f32 %v63, %v3442
    %v3820 = vmul.f32 %v64, %v3442
    %v3821 = vmul.f32 %v65, %v3442
    %v3822 = vmul.f32 %v67, %v3447
    %v3823 = vmul.f32 %v68, %v3447
    %v3824 = vmul.f32 %v69, %v3447
    %v3825 = vmul.f32 %v70, %v3447
    %v3826 = vadd.f32 %v3818, %v3822
    %v3827 = vadd.f32 %v3819, %v3823
    %v3828 = vadd.f32 %v3820, %v3824
    %v3829 = vadd.f32 %v3821, %v3825
    %v3830 = vmul.f32 %v62, %v3456
    %v3831 = vmul.f32 %v63, %v3456
    %v3832 = vmul.f32 %v64, %v3456
    %v3833 = vmul.f32 %v65, %v3456
    %3838 = vrot.lane.b32.xlu0 %v3830, 127
    %v3839 = vpop.permute.xlu0 %3838
    %3840 = vrot.lane.b32.xlu0 %v3831, 127
    %v3841 = vpop.permute.xlu0 %3840
    %3842 = vrot.lane.b32.xlu0 %v3832, 127
    %v3843 = vpop.permute.xlu0 %3842
    %3844 = vrot.lane.b32.xlu0 %v3833, 127
    %v3845 = vpop.permute.xlu0 %3844
    %v3850 = vadd.f32 %v3826, %v3839
    %v3851 = vadd.f32 %v3827, %v3841
    %v3852 = vadd.f32 %v3828, %v3843
    %v3853 = vadd.f32 %v3829, %v3845
    %v3854 = vmul.f32 %v52, %v3481
    %v3855 = vmul.f32 %v53, %v3481
    %v3856 = vmul.f32 %v54, %v3481
    %v3857 = vmul.f32 %v55, %v3481
    %v3862 = vrot.slane %v3854, 2
    %v3863 = vrot.slane %v3855, 2
    %v3864 = vsel %vm172, %v3862, %v3863
    %v3865 = vrot.slane %v3856, 2
    %v3866 = vsel %vm172, %v3863, %v3865
    %v3867 = vrot.slane %v3857, 2
    %v3868 = vsel %vm172, %v3865, %v3867
    %v3873 = vadd.f32 %v3850, %v3864
    %v3874 = vadd.f32 %v3851, %v3866
    %v3875 = vadd.f32 %v3852, %v3868
    %v3876 = vadd.f32 %v3853, %v3867
    %v3877 = vmul.f32 %v57, %v3490
    %v3878 = vmul.f32 %v58, %v3490
    %v3879 = vmul.f32 %v59, %v3490
    %v3880 = vmul.f32 %v60, %v3490
    %v3885 = vrot.slane %v3877, 2
    %v3886 = vrot.slane %v3878, 2
    %v3887 = vsel %vm172, %v3885, %v3886
    %v3888 = vrot.slane %v3879, 2
    %v3889 = vsel %vm172, %v3886, %v3888
    %v3890 = vrot.slane %v3880, 2
    %v3891 = vsel %vm172, %v3888, %v3890
    %v3896 = vadd.f32 %v3873, %v3887
    %v3897 = vadd.f32 %v3874, %v3889
    %v3898 = vadd.f32 %v3875, %v3891
    %v3899 = vadd.f32 %v3876, %v3890
    %v3900 = vmul.f32 %v52, %v3499
    %v3901 = vmul.f32 %v53, %v3499
    %v3902 = vmul.f32 %v54, %v3499
    %v3903 = vmul.f32 %v55, %v3499
    %v3908 = vrot.slane %v3900, 2
    %v3909 = vrot.slane %v3901, 2
    %v3910 = vsel %vm172, %v3908, %v3909
    %v3911 = vrot.slane %v3902, 2
    %v3912 = vsel %vm172, %v3909, %v3911
    %v3913 = vrot.slane %v3903, 2
    %v3914 = vsel %vm172, %v3911, %v3913
    %3915 = vrot.lane.b32.xlu0 %v3910, 127
    %v3916 = vpop.permute.xlu0 %3915
    %3917 = vrot.lane.b32.xlu0 %v3912, 127
    %v3918 = vpop.permute.xlu0 %3917
    %3919 = vrot.lane.b32.xlu0 %v3914, 127
    %v3920 = vpop.permute.xlu0 %3919
    %3921 = vrot.lane.b32.xlu0 %v3913, 127
    %v3922 = vpop.permute.xlu0 %3921
    %v3927 = vadd.f32 %v3896, %v3916
    %v3928 = vadd.f32 %v3897, %v3918
    %v3929 = vadd.f32 %v3898, %v3920
    %v3930 = vadd.f32 %v3899, %v3922
    %v3931 = vmul.f32 %v62, %v3524
    %v3932 = vmul.f32 %v63, %v3524
    %v3933 = vmul.f32 %v64, %v3524
    %v3934 = vmul.f32 %v65, %v3524
    %v3939 = vrot.slane %v3931, 2
    %v3940 = vrot.slane %v3932, 2
    %v3941 = vsel %vm172, %v3939, %v3940
    %v3942 = vrot.slane %v3933, 2
    %v3943 = vsel %vm172, %v3940, %v3942
    %v3944 = vrot.slane %v3934, 2
    %v3945 = vsel %vm172, %v3942, %v3944
    %v3950 = vadd.f32 %v3927, %v3941
    %v3951 = vadd.f32 %v3928, %v3943
    %v3952 = vadd.f32 %v3929, %v3945
    %v3953 = vadd.f32 %v3930, %v3944
    %v3954 = vmul.f32 %v67, %v3548
    %v3955 = vmul.f32 %v68, %v3548
    %v3956 = vmul.f32 %v69, %v3548
    %v3957 = vmul.f32 %v70, %v3548
    %v3962 = vrot.slane %v3954, 2
    %v3963 = vrot.slane %v3955, 2
    %v3964 = vsel %vm172, %v3962, %v3963
    %v3965 = vrot.slane %v3956, 2
    %v3966 = vsel %vm172, %v3963, %v3965
    %v3967 = vrot.slane %v3957, 2
    %v3968 = vsel %vm172, %v3965, %v3967
    %v3973 = vadd.f32 %v3950, %v3964
    %v3974 = vadd.f32 %v3951, %v3966
    %v3975 = vadd.f32 %v3952, %v3968
    %v3976 = vadd.f32 %v3953, %v3967
    %v3977 = vmul.f32 %v62, %v3572
    %v3978 = vmul.f32 %v63, %v3572
    %v3979 = vmul.f32 %v64, %v3572
    %v3980 = vmul.f32 %v65, %v3572
    %v3985 = vrot.slane %v3977, 2
    %v3986 = vrot.slane %v3978, 2
    %v3987 = vsel %vm172, %v3985, %v3986
    %v3988 = vrot.slane %v3979, 2
    %v3989 = vsel %vm172, %v3986, %v3988
    %v3990 = vrot.slane %v3980, 2
    %v3991 = vsel %vm172, %v3988, %v3990
    %3992 = vrot.lane.b32.xlu0 %v3987, 127
    %v3993 = vpop.permute.xlu0 %3992
    %3994 = vrot.lane.b32.xlu0 %v3989, 127
    %v3995 = vpop.permute.xlu0 %3994
    %3996 = vrot.lane.b32.xlu0 %v3991, 127
    %v3997 = vpop.permute.xlu0 %3996
    %3998 = vrot.lane.b32.xlu0 %v3990, 127
    %v3999 = vpop.permute.xlu0 %3998
    %v4004 = vadd.f32 %v3973, %v3993
    %v4005 = vadd.f32 %v3974, %v3995
    %v4006 = vadd.f32 %v3975, %v3997
    %v4007 = vadd.f32 %v3976, %v3999
    %v4008 = vadd.f32 %v4004, %v3604
    %v4009 = vadd.f32 %v4005, %v3604
    %v4010 = vadd.f32 %v4006, %v3604
    %v4011 = vadd.f32 %v4007, %v3604
    %v4012 = vtanh.pop %v4008
    %v4013 = vtanh.pop %v4009
    %v4014 = vtanh.pop %v4010
    %v4015 = vtanh.pop %v4011
    %v4016 = vmax.f32 %v3814, %v4012
    %v4017 = vmax.f32 %v3815, %v4013
    %v4018 = vmax.f32 %v3816, %v4014
    %v4019 = vmax.f32 %v3817, %v4015
    %v4020 = vmul.f32 %v67, %v3442
    %v4021 = vmul.f32 %v68, %v3442
    %v4022 = vmul.f32 %v69, %v3442
    %v4023 = vmul.f32 %v70, %v3442
    %v4024 = vmul.f32 %v62, %v3447
    %v4025 = vmul.f32 %v63, %v3447
    %v4026 = vmul.f32 %v64, %v3447
    %v4027 = vmul.f32 %v65, %v3447
    %4032 = vrot.lane.b32.xlu0 %v4024, 127
    %v4033 = vpop.permute.xlu0 %4032
    %4034 = vrot.lane.b32.xlu0 %v4025, 127
    %v4035 = vpop.permute.xlu0 %4034
    %4036 = vrot.lane.b32.xlu0 %v4026, 127
    %v4037 = vpop.permute.xlu0 %4036
    %4038 = vrot.lane.b32.xlu0 %v4027, 127
    %v4039 = vpop.permute.xlu0 %4038
    %v4044 = vadd.f32 %v4020, %v4033
    %v4045 = vadd.f32 %v4021, %v4035
    %v4046 = vadd.f32 %v4022, %v4037
    %v4047 = vadd.f32 %v4023, %v4039
    %v4048 = vmul.f32 %v67, %v3456
    %v4049 = vmul.f32 %v68, %v3456
    %v4050 = vmul.f32 %v69, %v3456
    %v4051 = vmul.f32 %v70, %v3456
    %4056 = vrot.lane.b32.xlu0 %v4048, 127
    %v4057 = vpop.permute.xlu0 %4056
    %4058 = vrot.lane.b32.xlu0 %v4049, 127
    %v4059 = vpop.permute.xlu0 %4058
    %4060 = vrot.lane.b32.xlu0 %v4050, 127
    %v4061 = vpop.permute.xlu0 %4060
    %4062 = vrot.lane.b32.xlu0 %v4051, 127
    %v4063 = vpop.permute.xlu0 %4062
    %v4068 = vadd.f32 %v4044, %v4057
    %v4069 = vadd.f32 %v4045, %v4059
    %v4070 = vadd.f32 %v4046, %v4061
    %v4071 = vadd.f32 %v4047, %v4063
    %v4072 = vmul.f32 %v57, %v3481
    %v4073 = vmul.f32 %v58, %v3481
    %v4074 = vmul.f32 %v59, %v3481
    %v4075 = vmul.f32 %v60, %v3481
    %v4080 = vrot.slane %v4072, 2
    %v4081 = vrot.slane %v4073, 2
    %v4082 = vsel %vm172, %v4080, %v4081
    %v4083 = vrot.slane %v4074, 2
    %v4084 = vsel %vm172, %v4081, %v4083
    %v4085 = vrot.slane %v4075, 2
    %v4086 = vsel %vm172, %v4083, %v4085
    %v4091 = vadd.f32 %v4068, %v4082
    %v4092 = vadd.f32 %v4069, %v4084
    %v4093 = vadd.f32 %v4070, %v4086
    %v4094 = vadd.f32 %v4071, %v4085
    %v4095 = vmul.f32 %v52, %v3490
    %v4096 = vmul.f32 %v53, %v3490
    %v4097 = vmul.f32 %v54, %v3490
    %v4098 = vmul.f32 %v55, %v3490
    %v4103 = vrot.slane %v4095, 2
    %v4104 = vrot.slane %v4096, 2
    %v4105 = vsel %vm172, %v4103, %v4104
    %v4106 = vrot.slane %v4097, 2
    %v4107 = vsel %vm172, %v4104, %v4106
    %v4108 = vrot.slane %v4098, 2
    %v4109 = vsel %vm172, %v4106, %v4108
    %4110 = vrot.lane.b32.xlu0 %v4105, 127
    %v4111 = vpop.permute.xlu0 %4110
    %4112 = vrot.lane.b32.xlu0 %v4107, 127
    %v4113 = vpop.permute.xlu0 %4112
    %4114 = vrot.lane.b32.xlu0 %v4109, 127
    %v4115 = vpop.permute.xlu0 %4114
    %4116 = vrot.lane.b32.xlu0 %v4108, 127
    %v4117 = vpop.permute.xlu0 %4116
    %v4122 = vadd.f32 %v4091, %v4111
    %v4123 = vadd.f32 %v4092, %v4113
    %v4124 = vadd.f32 %v4093, %v4115
    %v4125 = vadd.f32 %v4094, %v4117
    %v4126 = vmul.f32 %v57, %v3499
    %v4127 = vmul.f32 %v58, %v3499
    %v4128 = vmul.f32 %v59, %v3499
    %v4129 = vmul.f32 %v60, %v3499
    %v4134 = vrot.slane %v4126, 2
    %v4135 = vrot.slane %v4127, 2
    %v4136 = vsel %vm172, %v4134, %v4135
    %v4137 = vrot.slane %v4128, 2
    %v4138 = vsel %vm172, %v4135, %v4137
    %v4139 = vrot.slane %v4129, 2
    %v4140 = vsel %vm172, %v4137, %v4139
    %4141 = vrot.lane.b32.xlu0 %v4136, 127
    %v4142 = vpop.permute.xlu0 %4141
    %4143 = vrot.lane.b32.xlu0 %v4138, 127
    %v4144 = vpop.permute.xlu0 %4143
    %4145 = vrot.lane.b32.xlu0 %v4140, 127
    %v4146 = vpop.permute.xlu0 %4145
    %4147 = vrot.lane.b32.xlu0 %v4139, 127
    %v4148 = vpop.permute.xlu0 %4147
    %v4153 = vadd.f32 %v4122, %v4142
    %v4154 = vadd.f32 %v4123, %v4144
    %v4155 = vadd.f32 %v4124, %v4146
    %v4156 = vadd.f32 %v4125, %v4148
    %v4157 = vmul.f32 %v67, %v3524
    %v4158 = vmul.f32 %v68, %v3524
    %v4159 = vmul.f32 %v69, %v3524
    %v4160 = vmul.f32 %v70, %v3524
    %v4165 = vrot.slane %v4157, 2
    %v4166 = vrot.slane %v4158, 2
    %v4167 = vsel %vm172, %v4165, %v4166
    %v4168 = vrot.slane %v4159, 2
    %v4169 = vsel %vm172, %v4166, %v4168
    %v4170 = vrot.slane %v4160, 2
    %v4171 = vsel %vm172, %v4168, %v4170
    %v4176 = vadd.f32 %v4153, %v4167
    %v4177 = vadd.f32 %v4154, %v4169
    %v4178 = vadd.f32 %v4155, %v4171
    %v4179 = vadd.f32 %v4156, %v4170
    %v4180 = vmul.f32 %v62, %v3548
    %v4181 = vmul.f32 %v63, %v3548
    %v4182 = vmul.f32 %v64, %v3548
    %v4183 = vmul.f32 %v65, %v3548
    %v4188 = vrot.slane %v4180, 2
    %v4189 = vrot.slane %v4181, 2
    %v4190 = vsel %vm172, %v4188, %v4189
    %v4191 = vrot.slane %v4182, 2
    %v4192 = vsel %vm172, %v4189, %v4191
    %v4193 = vrot.slane %v4183, 2
    %v4194 = vsel %vm172, %v4191, %v4193
    %4195 = vrot.lane.b32.xlu0 %v4190, 127
    %v4196 = vpop.permute.xlu0 %4195
    %4197 = vrot.lane.b32.xlu0 %v4192, 127
    %v4198 = vpop.permute.xlu0 %4197
    %4199 = vrot.lane.b32.xlu0 %v4194, 127
    %v4200 = vpop.permute.xlu0 %4199
    %4201 = vrot.lane.b32.xlu0 %v4193, 127
    %v4202 = vpop.permute.xlu0 %4201
    %v4207 = vadd.f32 %v4176, %v4196
    %v4208 = vadd.f32 %v4177, %v4198
    %v4209 = vadd.f32 %v4178, %v4200
    %v4210 = vadd.f32 %v4179, %v4202
    %v4211 = vmul.f32 %v67, %v3572
    %v4212 = vmul.f32 %v68, %v3572
    %v4213 = vmul.f32 %v69, %v3572
    %v4214 = vmul.f32 %v70, %v3572
    %v4219 = vrot.slane %v4211, 2
    %v4220 = vrot.slane %v4212, 2
    %v4221 = vsel %vm172, %v4219, %v4220
    %v4222 = vrot.slane %v4213, 2
    %v4223 = vsel %vm172, %v4220, %v4222
    %v4224 = vrot.slane %v4214, 2
    %v4225 = vsel %vm172, %v4222, %v4224
    %4226 = vrot.lane.b32.xlu0 %v4221, 127
    %v4227 = vpop.permute.xlu0 %4226
    %4228 = vrot.lane.b32.xlu0 %v4223, 127
    %v4229 = vpop.permute.xlu0 %4228
    %4230 = vrot.lane.b32.xlu0 %v4225, 127
    %v4231 = vpop.permute.xlu0 %4230
    %4232 = vrot.lane.b32.xlu0 %v4224, 127
    %v4233 = vpop.permute.xlu0 %4232
    %v4238 = vadd.f32 %v4207, %v4227
    %v4239 = vadd.f32 %v4208, %v4229
    %v4240 = vadd.f32 %v4209, %v4231
    %v4241 = vadd.f32 %v4210, %v4233
    %v4242 = vadd.f32 %v4238, %v3604
    %v4243 = vadd.f32 %v4239, %v3604
    %v4244 = vadd.f32 %v4240, %v3604
    %v4245 = vadd.f32 %v4241, %v3604
    %v4246 = vtanh.pop %v4242
    %v4247 = vtanh.pop %v4243
    %v4248 = vtanh.pop %v4244
    %v4249 = vtanh.pop %v4245
    %v4250 = vmax.f32 %v4016, %v4246
    %v4251 = vmax.f32 %v4017, %v4247
    %v4252 = vmax.f32 %v4018, %v4248
    %v4253 = vmax.f32 %v4019, %v4249
    %4258 = vrot.lane.b32.xlu0 %v4250, 56
    %v4259 = vpop.permute.xlu0 %4258
    %4260 = vrot.lane.b32.xlu0 %v4251, 56
    %v4261 = vpop.permute.xlu0 %4260
    %4262 = vrot.lane.b32.xlu0 %v4252, 56
    %v4263 = vpop.permute.xlu0 %4262
    %4264 = vrot.lane.b32.xlu0 %v4253, 56
    %v4265 = vpop.permute.xlu0 %4264
    %vm4270 = vcmask 572864
    %4271 = vst.msk [vmem:[#allocation2] sm:$0xff] %vm4270, %v4259
    %4272 = vst.msk [vmem:[#allocation2 + $0x8] sm:$0xff] %vm4270, %v4261
    %4273 = vst.msk [vmem:[#allocation2 + $0x10] sm:$0xff] %vm4270, %v4263
    %vm4274 = vcmask 568768
    %4275 = vst.msk [vmem:[#allocation2 + $0x18] sm:$0xf] %vm4274, %v4265
    %s4276 = sld [smem:[#allocation3 + $0x280]]
    %s4277 = sld [smem:[#allocation3 + $0x281]]
    %s4278 = sld [smem:[#allocation3 + $0x282]]
    %s4279 = sld [smem:[#allocation3 + $0x283]]
    %s4280 = sld [smem:[#allocation3 + $0x284]]
    %s4281 = sld [smem:[#allocation3 + $0x285]]
    %s4282 = sld [smem:[#allocation3 + $0x286]]
    %s4283 = sld [smem:[#allocation3 + $0x287]]
    %s4284 = sld [smem:[#allocation3 + $0x288]]
    %s4285 = sld [smem:[#allocation6 + $0x5]]
    %v4286 = vstv %s4276
    %v4287 = vmul.f32 %v52, %v4286
    %v4288 = vmul.f32 %v53, %v4286
    %v4289 = vmul.f32 %v54, %v4286
    %v4290 = vmul.f32 %v55, %v4286
    %v4291 = vstv %s4277
    %v4292 = vmul.f32 %v57, %v4291
    %v4293 = vmul.f32 %v58, %v4291
    %v4294 = vmul.f32 %v59, %v4291
    %v4295 = vmul.f32 %v60, %v4291
    %v4296 = vadd.f32 %v4287, %v4292
    %v4297 = vadd.f32 %v4288, %v4293
    %v4298 = vadd.f32 %v4289, %v4294
    %v4299 = vadd.f32 %v4290, %v4295
    %v4300 = vstv %s4278
    %v4301 = vmul.f32 %v52, %v4300
    %v4302 = vmul.f32 %v53, %v4300
    %v4303 = vmul.f32 %v54, %v4300
    %v4304 = vmul.f32 %v55, %v4300
    %4309 = vrot.lane.b32.xlu0 %v4301, 127
    %v4310 = vpop.permute.xlu0 %4309
    %4311 = vrot.lane.b32.xlu0 %v4302, 127
    %v4312 = vpop.permute.xlu0 %4311
    %4313 = vrot.lane.b32.xlu0 %v4303, 127
    %v4314 = vpop.permute.xlu0 %4313
    %4315 = vrot.lane.b32.xlu0 %v4304, 127
    %v4316 = vpop.permute.xlu0 %4315
    %v4321 = vadd.f32 %v4296, %v4310
    %v4322 = vadd.f32 %v4297, %v4312
    %v4323 = vadd.f32 %v4298, %v4314
    %v4324 = vadd.f32 %v4299, %v4316
    %v4325 = vstv %s4279
    %v4326 = vmul.f32 %v62, %v4325
    %v4327 = vmul.f32 %v63, %v4325
    %v4328 = vmul.f32 %v64, %v4325
    %v4329 = vmul.f32 %v65, %v4325
    %v4330 = vadd.f32 %v4321, %v4326
    %v4331 = vadd.f32 %v4322, %v4327
    %v4332 = vadd.f32 %v4323, %v4328
    %v4333 = vadd.f32 %v4324, %v4329
    %v4334 = vstv %s4280
    %v4335 = vmul.f32 %v67, %v4334
    %v4336 = vmul.f32 %v68, %v4334
    %v4337 = vmul.f32 %v69, %v4334
    %v4338 = vmul.f32 %v70, %v4334
    %v4339 = vadd.f32 %v4330, %v4335
    %v4340 = vadd.f32 %v4331, %v4336
    %v4341 = vadd.f32 %v4332, %v4337
    %v4342 = vadd.f32 %v4333, %v4338
    %v4343 = vstv %s4281
    %v4344 = vmul.f32 %v62, %v4343
    %v4345 = vmul.f32 %v63, %v4343
    %v4346 = vmul.f32 %v64, %v4343
    %v4347 = vmul.f32 %v65, %v4343
    %4352 = vrot.lane.b32.xlu0 %v4344, 127
    %v4353 = vpop.permute.xlu0 %4352
    %4354 = vrot.lane.b32.xlu0 %v4345, 127
    %v4355 = vpop.permute.xlu0 %4354
    %4356 = vrot.lane.b32.xlu0 %v4346, 127
    %v4357 = vpop.permute.xlu0 %4356
    %4358 = vrot.lane.b32.xlu0 %v4347, 127
    %v4359 = vpop.permute.xlu0 %4358
    %v4364 = vadd.f32 %v4339, %v4353
    %v4365 = vadd.f32 %v4340, %v4355
    %v4366 = vadd.f32 %v4341, %v4357
    %v4367 = vadd.f32 %v4342, %v4359
    %v4368 = vstv %s4282
    %v4369 = vmul.f32 %v52, %v4368
    %v4370 = vmul.f32 %v53, %v4368
    %v4371 = vmul.f32 %v54, %v4368
    %v4372 = vmul.f32 %v55, %v4368
    %v4377 = vrot.slane %v4369, 2
    %v4378 = vrot.slane %v4370, 2
    %v4379 = vsel %vm172, %v4377, %v4378
    %v4380 = vrot.slane %v4371, 2
    %v4381 = vsel %vm172, %v4378, %v4380
    %v4382 = vrot.slane %v4372, 2
    %v4383 = vsel %vm172, %v4380, %v4382
    %v4388 = vadd.f32 %v4364, %v4379
    %v4389 = vadd.f32 %v4365, %v4381
    %v4390 = vadd.f32 %v4366, %v4383
    %v4391 = vadd.f32 %v4367, %v4382
    %v4392 = vstv %s4283
    %v4393 = vmul.f32 %v57, %v4392
    %v4394 = vmul.f32 %v58, %v4392
    %v4395 = vmul.f32 %v59, %v4392
    %v4396 = vmul.f32 %v60, %v4392
    %v4401 = vrot.slane %v4393, 2
    %v4402 = vrot.slane %v4394, 2
    %v4403 = vsel %vm172, %v4401, %v4402
    %v4404 = vrot.slane %v4395, 2
    %v4405 = vsel %vm172, %v4402, %v4404
    %v4406 = vrot.slane %v4396, 2
    %v4407 = vsel %vm172, %v4404, %v4406
    %v4412 = vadd.f32 %v4388, %v4403
    %v4413 = vadd.f32 %v4389, %v4405
    %v4414 = vadd.f32 %v4390, %v4407
    %v4415 = vadd.f32 %v4391, %v4406
    %v4416 = vstv %s4284
    %v4417 = vmul.f32 %v52, %v4416
    %v4418 = vmul.f32 %v53, %v4416
    %v4419 = vmul.f32 %v54, %v4416
    %v4420 = vmul.f32 %v55, %v4416
    %v4425 = vrot.slane %v4417, 2
    %v4426 = vrot.slane %v4418, 2
    %v4427 = vsel %vm172, %v4425, %v4426
    %v4428 = vrot.slane %v4419, 2
    %v4429 = vsel %vm172, %v4426, %v4428
    %v4430 = vrot.slane %v4420, 2
    %v4431 = vsel %vm172, %v4428, %v4430
    %4432 = vrot.lane.b32.xlu0 %v4427, 127
    %v4433 = vpop.permute.xlu0 %4432
    %4434 = vrot.lane.b32.xlu0 %v4429, 127
    %v4435 = vpop.permute.xlu0 %4434
    %4436 = vrot.lane.b32.xlu0 %v4431, 127
    %v4437 = vpop.permute.xlu0 %4436
    %4438 = vrot.lane.b32.xlu0 %v4430, 127
    %v4439 = vpop.permute.xlu0 %4438
    %v4444 = vadd.f32 %v4412, %v4433
    %v4445 = vadd.f32 %v4413, %v4435
    %v4446 = vadd.f32 %v4414, %v4437
    %v4447 = vadd.f32 %v4415, %v4439
    %v4448 = vstv %s4285
    %v4449 = vadd.f32 %v4444, %v4448
    %v4450 = vadd.f32 %v4445, %v4448
    %v4451 = vadd.f32 %v4446, %v4448
    %v4452 = vadd.f32 %v4447, %v4448
    %v4453 = vtanh.pop %v4449
    %v4454 = vtanh.pop %v4450
    %v4455 = vtanh.pop %v4451
    %v4456 = vtanh.pop %v4452
    %v4457 = vmul.f32 %v57, %v4286
    %v4458 = vmul.f32 %v58, %v4286
    %v4459 = vmul.f32 %v59, %v4286
    %v4460 = vmul.f32 %v60, %v4286
    %v4461 = vmul.f32 %v52, %v4291
    %v4462 = vmul.f32 %v53, %v4291
    %v4463 = vmul.f32 %v54, %v4291
    %v4464 = vmul.f32 %v55, %v4291
    %4469 = vrot.lane.b32.xlu0 %v4461, 127
    %v4470 = vpop.permute.xlu0 %4469
    %4471 = vrot.lane.b32.xlu0 %v4462, 127
    %v4472 = vpop.permute.xlu0 %4471
    %4473 = vrot.lane.b32.xlu0 %v4463, 127
    %v4474 = vpop.permute.xlu0 %4473
    %4475 = vrot.lane.b32.xlu0 %v4464, 127
    %v4476 = vpop.permute.xlu0 %4475
    %v4481 = vadd.f32 %v4457, %v4470
    %v4482 = vadd.f32 %v4458, %v4472
    %v4483 = vadd.f32 %v4459, %v4474
    %v4484 = vadd.f32 %v4460, %v4476
    %v4485 = vmul.f32 %v57, %v4300
    %v4486 = vmul.f32 %v58, %v4300
    %v4487 = vmul.f32 %v59, %v4300
    %v4488 = vmul.f32 %v60, %v4300
    %4493 = vrot.lane.b32.xlu0 %v4485, 127
    %v4494 = vpop.permute.xlu0 %4493
    %4495 = vrot.lane.b32.xlu0 %v4486, 127
    %v4496 = vpop.permute.xlu0 %4495
    %4497 = vrot.lane.b32.xlu0 %v4487, 127
    %v4498 = vpop.permute.xlu0 %4497
    %4499 = vrot.lane.b32.xlu0 %v4488, 127
    %v4500 = vpop.permute.xlu0 %4499
    %v4505 = vadd.f32 %v4481, %v4494
    %v4506 = vadd.f32 %v4482, %v4496
    %v4507 = vadd.f32 %v4483, %v4498
    %v4508 = vadd.f32 %v4484, %v4500
    %v4509 = vmul.f32 %v67, %v4325
    %v4510 = vmul.f32 %v68, %v4325
    %v4511 = vmul.f32 %v69, %v4325
    %v4512 = vmul.f32 %v70, %v4325
    %v4513 = vadd.f32 %v4505, %v4509
    %v4514 = vadd.f32 %v4506, %v4510
    %v4515 = vadd.f32 %v4507, %v4511
    %v4516 = vadd.f32 %v4508, %v4512
    %v4517 = vmul.f32 %v62, %v4334
    %v4518 = vmul.f32 %v63, %v4334
    %v4519 = vmul.f32 %v64, %v4334
    %v4520 = vmul.f32 %v65, %v4334
    %4525 = vrot.lane.b32.xlu0 %v4517, 127
    %v4526 = vpop.permute.xlu0 %4525
    %4527 = vrot.lane.b32.xlu0 %v4518, 127
    %v4528 = vpop.permute.xlu0 %4527
    %4529 = vrot.lane.b32.xlu0 %v4519, 127
    %v4530 = vpop.permute.xlu0 %4529
    %4531 = vrot.lane.b32.xlu0 %v4520, 127
    %v4532 = vpop.permute.xlu0 %4531
    %v4537 = vadd.f32 %v4513, %v4526
    %v4538 = vadd.f32 %v4514, %v4528
    %v4539 = vadd.f32 %v4515, %v4530
    %v4540 = vadd.f32 %v4516, %v4532
    %v4541 = vmul.f32 %v67, %v4343
    %v4542 = vmul.f32 %v68, %v4343
    %v4543 = vmul.f32 %v69, %v4343
    %v4544 = vmul.f32 %v70, %v4343
    %4549 = vrot.lane.b32.xlu0 %v4541, 127
    %v4550 = vpop.permute.xlu0 %4549
    %4551 = vrot.lane.b32.xlu0 %v4542, 127
    %v4552 = vpop.permute.xlu0 %4551
    %4553 = vrot.lane.b32.xlu0 %v4543, 127
    %v4554 = vpop.permute.xlu0 %4553
    %4555 = vrot.lane.b32.xlu0 %v4544, 127
    %v4556 = vpop.permute.xlu0 %4555
    %v4561 = vadd.f32 %v4537, %v4550
    %v4562 = vadd.f32 %v4538, %v4552
    %v4563 = vadd.f32 %v4539, %v4554
    %v4564 = vadd.f32 %v4540, %v4556
    %v4565 = vmul.f32 %v57, %v4368
    %v4566 = vmul.f32 %v58, %v4368
    %v4567 = vmul.f32 %v59, %v4368
    %v4568 = vmul.f32 %v60, %v4368
    %v4573 = vrot.slane %v4565, 2
    %v4574 = vrot.slane %v4566, 2
    %v4575 = vsel %vm172, %v4573, %v4574
    %v4576 = vrot.slane %v4567, 2
    %v4577 = vsel %vm172, %v4574, %v4576
    %v4578 = vrot.slane %v4568, 2
    %v4579 = vsel %vm172, %v4576, %v4578
    %v4584 = vadd.f32 %v4561, %v4575
    %v4585 = vadd.f32 %v4562, %v4577
    %v4586 = vadd.f32 %v4563, %v4579
    %v4587 = vadd.f32 %v4564, %v4578
    %v4588 = vmul.f32 %v52, %v4392
    %v4589 = vmul.f32 %v53, %v4392
    %v4590 = vmul.f32 %v54, %v4392
    %v4591 = vmul.f32 %v55, %v4392
    %v4596 = vrot.slane %v4588, 2
    %v4597 = vrot.slane %v4589, 2
    %v4598 = vsel %vm172, %v4596, %v4597
    %v4599 = vrot.slane %v4590, 2
    %v4600 = vsel %vm172, %v4597, %v4599
    %v4601 = vrot.slane %v4591, 2
    %v4602 = vsel %vm172, %v4599, %v4601
    %4603 = vrot.lane.b32.xlu0 %v4598, 127
    %v4604 = vpop.permute.xlu0 %4603
    %4605 = vrot.lane.b32.xlu0 %v4600, 127
    %v4606 = vpop.permute.xlu0 %4605
    %4607 = vrot.lane.b32.xlu0 %v4602, 127
    %v4608 = vpop.permute.xlu0 %4607
    %4609 = vrot.lane.b32.xlu0 %v4601, 127
    %v4610 = vpop.permute.xlu0 %4609
    %v4615 = vadd.f32 %v4584, %v4604
    %v4616 = vadd.f32 %v4585, %v4606
    %v4617 = vadd.f32 %v4586, %v4608
    %v4618 = vadd.f32 %v4587, %v4610
    %v4619 = vmul.f32 %v57, %v4416
    %v4620 = vmul.f32 %v58, %v4416
    %v4621 = vmul.f32 %v59, %v4416
    %v4622 = vmul.f32 %v60, %v4416
    %v4627 = vrot.slane %v4619, 2
    %v4628 = vrot.slane %v4620, 2
    %v4629 = vsel %vm172, %v4627, %v4628
    %v4630 = vrot.slane %v4621, 2
    %v4631 = vsel %vm172, %v4628, %v4630
    %v4632 = vrot.slane %v4622, 2
    %v4633 = vsel %vm172, %v4630, %v4632
    %4634 = vrot.lane.b32.xlu0 %v4629, 127
    %v4635 = vpop.permute.xlu0 %4634
    %4636 = vrot.lane.b32.xlu0 %v4631, 127
    %v4637 = vpop.permute.xlu0 %4636
    %4638 = vrot.lane.b32.xlu0 %v4633, 127
    %v4639 = vpop.permute.xlu0 %4638
    %4640 = vrot.lane.b32.xlu0 %v4632, 127
    %v4641 = vpop.permute.xlu0 %4640
    %v4646 = vadd.f32 %v4615, %v4635
    %v4647 = vadd.f32 %v4616, %v4637
    %v4648 = vadd.f32 %v4617, %v4639
    %v4649 = vadd.f32 %v4618, %v4641
    %v4650 = vadd.f32 %v4646, %v4448
    %v4651 = vadd.f32 %v4647, %v4448
    %v4652 = vadd.f32 %v4648, %v4448
    %v4653 = vadd.f32 %v4649, %v4448
    %v4654 = vtanh.pop %v4650
    %v4655 = vtanh.pop %v4651
    %v4656 = vtanh.pop %v4652
    %v4657 = vtanh.pop %v4653
    %v4658 = vmax.f32 %v4453, %v4654
    %v4659 = vmax.f32 %v4454, %v4655
    %v4660 = vmax.f32 %v4455, %v4656
    %v4661 = vmax.f32 %v4456, %v4657
    %v4662 = vmul.f32 %v62, %v4286
    %v4663 = vmul.f32 %v63, %v4286
    %v4664 = vmul.f32 %v64, %v4286
    %v4665 = vmul.f32 %v65, %v4286
    %v4666 = vmul.f32 %v67, %v4291
    %v4667 = vmul.f32 %v68, %v4291
    %v4668 = vmul.f32 %v69, %v4291
    %v4669 = vmul.f32 %v70, %v4291
    %v4670 = vadd.f32 %v4662, %v4666
    %v4671 = vadd.f32 %v4663, %v4667
    %v4672 = vadd.f32 %v4664, %v4668
    %v4673 = vadd.f32 %v4665, %v4669
    %v4674 = vmul.f32 %v62, %v4300
    %v4675 = vmul.f32 %v63, %v4300
    %v4676 = vmul.f32 %v64, %v4300
    %v4677 = vmul.f32 %v65, %v4300
    %4682 = vrot.lane.b32.xlu0 %v4674, 127
    %v4683 = vpop.permute.xlu0 %4682
    %4684 = vrot.lane.b32.xlu0 %v4675, 127
    %v4685 = vpop.permute.xlu0 %4684
    %4686 = vrot.lane.b32.xlu0 %v4676, 127
    %v4687 = vpop.permute.xlu0 %4686
    %4688 = vrot.lane.b32.xlu0 %v4677, 127
    %v4689 = vpop.permute.xlu0 %4688
    %v4694 = vadd.f32 %v4670, %v4683
    %v4695 = vadd.f32 %v4671, %v4685
    %v4696 = vadd.f32 %v4672, %v4687
    %v4697 = vadd.f32 %v4673, %v4689
    %v4698 = vmul.f32 %v52, %v4325
    %v4699 = vmul.f32 %v53, %v4325
    %v4700 = vmul.f32 %v54, %v4325
    %v4701 = vmul.f32 %v55, %v4325
    %v4706 = vrot.slane %v4698, 2
    %v4707 = vrot.slane %v4699, 2
    %v4708 = vsel %vm172, %v4706, %v4707
    %v4709 = vrot.slane %v4700, 2
    %v4710 = vsel %vm172, %v4707, %v4709
    %v4711 = vrot.slane %v4701, 2
    %v4712 = vsel %vm172, %v4709, %v4711
    %v4717 = vadd.f32 %v4694, %v4708
    %v4718 = vadd.f32 %v4695, %v4710
    %v4719 = vadd.f32 %v4696, %v4712
    %v4720 = vadd.f32 %v4697, %v4711
    %v4721 = vmul.f32 %v57, %v4334
    %v4722 = vmul.f32 %v58, %v4334
    %v4723 = vmul.f32 %v59, %v4334
    %v4724 = vmul.f32 %v60, %v4334
    %v4729 = vrot.slane %v4721, 2
    %v4730 = vrot.slane %v4722, 2
    %v4731 = vsel %vm172, %v4729, %v4730
    %v4732 = vrot.slane %v4723, 2
    %v4733 = vsel %vm172, %v4730, %v4732
    %v4734 = vrot.slane %v4724, 2
    %v4735 = vsel %vm172, %v4732, %v4734
    %v4740 = vadd.f32 %v4717, %v4731
    %v4741 = vadd.f32 %v4718, %v4733
    %v4742 = vadd.f32 %v4719, %v4735
    %v4743 = vadd.f32 %v4720, %v4734
    %v4744 = vmul.f32 %v52, %v4343
    %v4745 = vmul.f32 %v53, %v4343
    %v4746 = vmul.f32 %v54, %v4343
    %v4747 = vmul.f32 %v55, %v4343
    %v4752 = vrot.slane %v4744, 2
    %v4753 = vrot.slane %v4745, 2
    %v4754 = vsel %vm172, %v4752, %v4753
    %v4755 = vrot.slane %v4746, 2
    %v4756 = vsel %vm172, %v4753, %v4755
    %v4757 = vrot.slane %v4747, 2
    %v4758 = vsel %vm172, %v4755, %v4757
    %4759 = vrot.lane.b32.xlu0 %v4754, 127
    %v4760 = vpop.permute.xlu0 %4759
    %4761 = vrot.lane.b32.xlu0 %v4756, 127
    %v4762 = vpop.permute.xlu0 %4761
    %4763 = vrot.lane.b32.xlu0 %v4758, 127
    %v4764 = vpop.permute.xlu0 %4763
    %4765 = vrot.lane.b32.xlu0 %v4757, 127
    %v4766 = vpop.permute.xlu0 %4765
    %v4771 = vadd.f32 %v4740, %v4760
    %v4772 = vadd.f32 %v4741, %v4762
    %v4773 = vadd.f32 %v4742, %v4764
    %v4774 = vadd.f32 %v4743, %v4766
    %v4775 = vmul.f32 %v62, %v4368
    %v4776 = vmul.f32 %v63, %v4368
    %v4777 = vmul.f32 %v64, %v4368
    %v4778 = vmul.f32 %v65, %v4368
    %v4783 = vrot.slane %v4775, 2
    %v4784 = vrot.slane %v4776, 2
    %v4785 = vsel %vm172, %v4783, %v4784
    %v4786 = vrot.slane %v4777, 2
    %v4787 = vsel %vm172, %v4784, %v4786
    %v4788 = vrot.slane %v4778, 2
    %v4789 = vsel %vm172, %v4786, %v4788
    %v4794 = vadd.f32 %v4771, %v4785
    %v4795 = vadd.f32 %v4772, %v4787
    %v4796 = vadd.f32 %v4773, %v4789
    %v4797 = vadd.f32 %v4774, %v4788
    %v4798 = vmul.f32 %v67, %v4392
    %v4799 = vmul.f32 %v68, %v4392
    %v4800 = vmul.f32 %v69, %v4392
    %v4801 = vmul.f32 %v70, %v4392
    %v4806 = vrot.slane %v4798, 2
    %v4807 = vrot.slane %v4799, 2
    %v4808 = vsel %vm172, %v4806, %v4807
    %v4809 = vrot.slane %v4800, 2
    %v4810 = vsel %vm172, %v4807, %v4809
    %v4811 = vrot.slane %v4801, 2
    %v4812 = vsel %vm172, %v4809, %v4811
    %v4817 = vadd.f32 %v4794, %v4808
    %v4818 = vadd.f32 %v4795, %v4810
    %v4819 = vadd.f32 %v4796, %v4812
    %v4820 = vadd.f32 %v4797, %v4811
    %v4821 = vmul.f32 %v62, %v4416
    %v4822 = vmul.f32 %v63, %v4416
    %v4823 = vmul.f32 %v64, %v4416
    %v4824 = vmul.f32 %v65, %v4416
    %v4829 = vrot.slane %v4821, 2
    %v4830 = vrot.slane %v4822, 2
    %v4831 = vsel %vm172, %v4829, %v4830
    %v4832 = vrot.slane %v4823, 2
    %v4833 = vsel %vm172, %v4830, %v4832
    %v4834 = vrot.slane %v4824, 2
    %v4835 = vsel %vm172, %v4832, %v4834
    %4836 = vrot.lane.b32.xlu0 %v4831, 127
    %v4837 = vpop.permute.xlu0 %4836
    %4838 = vrot.lane.b32.xlu0 %v4833, 127
    %v4839 = vpop.permute.xlu0 %4838
    %4840 = vrot.lane.b32.xlu0 %v4835, 127
    %v4841 = vpop.permute.xlu0 %4840
    %4842 = vrot.lane.b32.xlu0 %v4834, 127
    %v4843 = vpop.permute.xlu0 %4842
    %v4848 = vadd.f32 %v4817, %v4837
    %v4849 = vadd.f32 %v4818, %v4839
    %v4850 = vadd.f32 %v4819, %v4841
    %v4851 = vadd.f32 %v4820, %v4843
    %v4852 = vadd.f32 %v4848, %v4448
    %v4853 = vadd.f32 %v4849, %v4448
    %v4854 = vadd.f32 %v4850, %v4448
    %v4855 = vadd.f32 %v4851, %v4448
    %v4856 = vtanh.pop %v4852
    %v4857 = vtanh.pop %v4853
    %v4858 = vtanh.pop %v4854
    %v4859 = vtanh.pop %v4855
    %v4860 = vmax.f32 %v4658, %v4856
    %v4861 = vmax.f32 %v4659, %v4857
    %v4862 = vmax.f32 %v4660, %v4858
    %v4863 = vmax.f32 %v4661, %v4859
    %v4864 = vmul.f32 %v67, %v4286
    %v4865 = vmul.f32 %v68, %v4286
    %v4866 = vmul.f32 %v69, %v4286
    %v4867 = vmul.f32 %v70, %v4286
    %v4868 = vmul.f32 %v62, %v4291
    %v4869 = vmul.f32 %v63, %v4291
    %v4870 = vmul.f32 %v64, %v4291
    %v4871 = vmul.f32 %v65, %v4291
    %4876 = vrot.lane.b32.xlu0 %v4868, 127
    %v4877 = vpop.permute.xlu0 %4876
    %4878 = vrot.lane.b32.xlu0 %v4869, 127
    %v4879 = vpop.permute.xlu0 %4878
    %4880 = vrot.lane.b32.xlu0 %v4870, 127
    %v4881 = vpop.permute.xlu0 %4880
    %4882 = vrot.lane.b32.xlu0 %v4871, 127
    %v4883 = vpop.permute.xlu0 %4882
    %v4888 = vadd.f32 %v4864, %v4877
    %v4889 = vadd.f32 %v4865, %v4879
    %v4890 = vadd.f32 %v4866, %v4881
    %v4891 = vadd.f32 %v4867, %v4883
    %v4892 = vmul.f32 %v67, %v4300
    %v4893 = vmul.f32 %v68, %v4300
    %v4894 = vmul.f32 %v69, %v4300
    %v4895 = vmul.f32 %v70, %v4300
    %4900 = vrot.lane.b32.xlu0 %v4892, 127
    %v4901 = vpop.permute.xlu0 %4900
    %4902 = vrot.lane.b32.xlu0 %v4893, 127
    %v4903 = vpop.permute.xlu0 %4902
    %4904 = vrot.lane.b32.xlu0 %v4894, 127
    %v4905 = vpop.permute.xlu0 %4904
    %4906 = vrot.lane.b32.xlu0 %v4895, 127
    %v4907 = vpop.permute.xlu0 %4906
    %v4912 = vadd.f32 %v4888, %v4901
    %v4913 = vadd.f32 %v4889, %v4903
    %v4914 = vadd.f32 %v4890, %v4905
    %v4915 = vadd.f32 %v4891, %v4907
    %v4916 = vmul.f32 %v57, %v4325
    %v4917 = vmul.f32 %v58, %v4325
    %v4918 = vmul.f32 %v59, %v4325
    %v4919 = vmul.f32 %v60, %v4325
    %v4924 = vrot.slane %v4916, 2
    %v4925 = vrot.slane %v4917, 2
    %v4926 = vsel %vm172, %v4924, %v4925
    %v4927 = vrot.slane %v4918, 2
    %v4928 = vsel %vm172, %v4925, %v4927
    %v4929 = vrot.slane %v4919, 2
    %v4930 = vsel %vm172, %v4927, %v4929
    %v4935 = vadd.f32 %v4912, %v4926
    %v4936 = vadd.f32 %v4913, %v4928
    %v4937 = vadd.f32 %v4914, %v4930
    %v4938 = vadd.f32 %v4915, %v4929
    %v4939 = vmul.f32 %v52, %v4334
    %v4940 = vmul.f32 %v53, %v4334
    %v4941 = vmul.f32 %v54, %v4334
    %v4942 = vmul.f32 %v55, %v4334
    %v4947 = vrot.slane %v4939, 2
    %v4948 = vrot.slane %v4940, 2
    %v4949 = vsel %vm172, %v4947, %v4948
    %v4950 = vrot.slane %v4941, 2
    %v4951 = vsel %vm172, %v4948, %v4950
    %v4952 = vrot.slane %v4942, 2
    %v4953 = vsel %vm172, %v4950, %v4952
    %4954 = vrot.lane.b32.xlu0 %v4949, 127
    %v4955 = vpop.permute.xlu0 %4954
    %4956 = vrot.lane.b32.xlu0 %v4951, 127
    %v4957 = vpop.permute.xlu0 %4956
    %4958 = vrot.lane.b32.xlu0 %v4953, 127
    %v4959 = vpop.permute.xlu0 %4958
    %4960 = vrot.lane.b32.xlu0 %v4952, 127
    %v4961 = vpop.permute.xlu0 %4960
    %v4966 = vadd.f32 %v4935, %v4955
    %v4967 = vadd.f32 %v4936, %v4957
    %v4968 = vadd.f32 %v4937, %v4959
    %v4969 = vadd.f32 %v4938, %v4961
    %v4970 = vmul.f32 %v57, %v4343
    %v4971 = vmul.f32 %v58, %v4343
    %v4972 = vmul.f32 %v59, %v4343
    %v4973 = vmul.f32 %v60, %v4343
    %v4978 = vrot.slane %v4970, 2
    %v4979 = vrot.slane %v4971, 2
    %v4980 = vsel %vm172, %v4978, %v4979
    %v4981 = vrot.slane %v4972, 2
    %v4982 = vsel %vm172, %v4979, %v4981
    %v4983 = vrot.slane %v4973, 2
    %v4984 = vsel %vm172, %v4981, %v4983
    %4985 = vrot.lane.b32.xlu0 %v4980, 127
    %v4986 = vpop.permute.xlu0 %4985
    %4987 = vrot.lane.b32.xlu0 %v4982, 127
    %v4988 = vpop.permute.xlu0 %4987
    %4989 = vrot.lane.b32.xlu0 %v4984, 127
    %v4990 = vpop.permute.xlu0 %4989
    %4991 = vrot.lane.b32.xlu0 %v4983, 127
    %v4992 = vpop.permute.xlu0 %4991
    %v4997 = vadd.f32 %v4966, %v4986
    %v4998 = vadd.f32 %v4967, %v4988
    %v4999 = vadd.f32 %v4968, %v4990
    %v5000 = vadd.f32 %v4969, %v4992
    %v5001 = vmul.f32 %v67, %v4368
    %v5002 = vmul.f32 %v68, %v4368
    %v5003 = vmul.f32 %v69, %v4368
    %v5004 = vmul.f32 %v70, %v4368
    %v5009 = vrot.slane %v5001, 2
    %v5010 = vrot.slane %v5002, 2
    %v5011 = vsel %vm172, %v5009, %v5010
    %v5012 = vrot.slane %v5003, 2
    %v5013 = vsel %vm172, %v5010, %v5012
    %v5014 = vrot.slane %v5004, 2
    %v5015 = vsel %vm172, %v5012, %v5014
    %v5020 = vadd.f32 %v4997, %v5011
    %v5021 = vadd.f32 %v4998, %v5013
    %v5022 = vadd.f32 %v4999, %v5015
    %v5023 = vadd.f32 %v5000, %v5014
    %v5024 = vmul.f32 %v62, %v4392
    %v5025 = vmul.f32 %v63, %v4392
    %v5026 = vmul.f32 %v64, %v4392
    %v5027 = vmul.f32 %v65, %v4392
    %v5032 = vrot.slane %v5024, 2
    %v5033 = vrot.slane %v5025, 2
    %v5034 = vsel %vm172, %v5032, %v5033
    %v5035 = vrot.slane %v5026, 2
    %v5036 = vsel %vm172, %v5033, %v5035
    %v5037 = vrot.slane %v5027, 2
    %v5038 = vsel %vm172, %v5035, %v5037
    %5039 = vrot.lane.b32.xlu0 %v5034, 127
    %v5040 = vpop.permute.xlu0 %5039
    %5041 = vrot.lane.b32.xlu0 %v5036, 127
    %v5042 = vpop.permute.xlu0 %5041
    %5043 = vrot.lane.b32.xlu0 %v5038, 127
    %v5044 = vpop.permute.xlu0 %5043
    %5045 = vrot.lane.b32.xlu0 %v5037, 127
    %v5046 = vpop.permute.xlu0 %5045
    %v5051 = vadd.f32 %v5020, %v5040
    %v5052 = vadd.f32 %v5021, %v5042
    %v5053 = vadd.f32 %v5022, %v5044
    %v5054 = vadd.f32 %v5023, %v5046
    %v5055 = vmul.f32 %v67, %v4416
    %v5056 = vmul.f32 %v68, %v4416
    %v5057 = vmul.f32 %v69, %v4416
    %v5058 = vmul.f32 %v70, %v4416
    %v5063 = vrot.slane %v5055, 2
    %v5064 = vrot.slane %v5056, 2
    %v5065 = vsel %vm172, %v5063, %v5064
    %v5066 = vrot.slane %v5057, 2
    %v5067 = vsel %vm172, %v5064, %v5066
    %v5068 = vrot.slane %v5058, 2
    %v5069 = vsel %vm172, %v5066, %v5068
    %5070 = vrot.lane.b32.xlu0 %v5065, 127
    %v5071 = vpop.permute.xlu0 %5070
    %5072 = vrot.lane.b32.xlu0 %v5067, 127
    %v5073 = vpop.permute.xlu0 %5072
    %5074 = vrot.lane.b32.xlu0 %v5069, 127
    %v5075 = vpop.permute.xlu0 %5074
    %5076 = vrot.lane.b32.xlu0 %v5068, 127
    %v5077 = vpop.permute.xlu0 %5076
    %v5082 = vadd.f32 %v5051, %v5071
    %v5083 = vadd.f32 %v5052, %v5073
    %v5084 = vadd.f32 %v5053, %v5075
    %v5085 = vadd.f32 %v5054, %v5077
    %v5086 = vadd.f32 %v5082, %v4448
    %v5087 = vadd.f32 %v5083, %v4448
    %v5088 = vadd.f32 %v5084, %v4448
    %v5089 = vadd.f32 %v5085, %v4448
    %v5090 = vtanh.pop %v5086
    %v5091 = vtanh.pop %v5087
    %v5092 = vtanh.pop %v5088
    %v5093 = vtanh.pop %v5089
    %v5094 = vmax.f32 %v4860, %v5090
    %v5095 = vmax.f32 %v4861, %v5091
    %v5096 = vmax.f32 %v4862, %v5092
    %v5097 = vmax.f32 %v4863, %v5093
    %5102 = vrot.lane.b32.xlu0 %v5094, 70
    %v5103 = vpop.permute.xlu0 %5102
    %5104 = vrot.lane.b32.xlu0 %v5095, 70
    %v5105 = vpop.permute.xlu0 %5104
    %5106 = vrot.lane.b32.xlu0 %v5096, 70
    %v5107 = vpop.permute.xlu0 %5106
    %5108 = vrot.lane.b32.xlu0 %v5097, 70
    %v5109 = vpop.permute.xlu0 %5108
    %vm5114 = vcmask 687664
    %5115 = vst.msk [vmem:[#allocation2] sm:$0xff] %vm5114, %v5103
    %5116 = vst.msk [vmem:[#allocation2 + $0x8] sm:$0xff] %vm5114, %v5105
    %5117 = vst.msk [vmem:[#allocation2 + $0x10] sm:$0xff] %vm5114, %v5107
    %vm5118 = vcmask 683568
    %5119 = vst.msk [vmem:[#allocation2 + $0x18] sm:$0xf] %vm5118, %v5109
    %s5120 = sld [smem:[#allocation3 + $0x300]]
    %s5121 = sld [smem:[#allocation3 + $0x301]]
    %s5122 = sld [smem:[#allocation3 + $0x302]]
    %s5123 = sld [smem:[#allocation3 + $0x303]]
    %s5124 = sld [smem:[#allocation3 + $0x304]]
    %s5125 = sld [smem:[#allocation3 + $0x305]]
    %s5126 = sld [smem:[#allocation3 + $0x306]]
    %s5127 = sld [smem:[#allocation3 + $0x307]]
    %s5128 = sld [smem:[#allocation3 + $0x308]]
    %s5129 = sld [smem:[#allocation6 + $0x6]]
    %v5130 = vstv %s5120
    %v5131 = vmul.f32 %v52, %v5130
    %v5132 = vmul.f32 %v53, %v5130
    %v5133 = vmul.f32 %v54, %v5130
    %v5134 = vmul.f32 %v55, %v5130
    %v5135 = vstv %s5121
    %v5136 = vmul.f32 %v57, %v5135
    %v5137 = vmul.f32 %v58, %v5135
    %v5138 = vmul.f32 %v59, %v5135
    %v5139 = vmul.f32 %v60, %v5135
    %v5140 = vadd.f32 %v5131, %v5136
    %v5141 = vadd.f32 %v5132, %v5137
    %v5142 = vadd.f32 %v5133, %v5138
    %v5143 = vadd.f32 %v5134, %v5139
    %v5144 = vstv %s5122
    %v5145 = vmul.f32 %v52, %v5144
    %v5146 = vmul.f32 %v53, %v5144
    %v5147 = vmul.f32 %v54, %v5144
    %v5148 = vmul.f32 %v55, %v5144
    %5153 = vrot.lane.b32.xlu0 %v5145, 127
    %v5154 = vpop.permute.xlu0 %5153
    %5155 = vrot.lane.b32.xlu0 %v5146, 127
    %v5156 = vpop.permute.xlu0 %5155
    %5157 = vrot.lane.b32.xlu0 %v5147, 127
    %v5158 = vpop.permute.xlu0 %5157
    %5159 = vrot.lane.b32.xlu0 %v5148, 127
    %v5160 = vpop.permute.xlu0 %5159
    %v5165 = vadd.f32 %v5140, %v5154
    %v5166 = vadd.f32 %v5141, %v5156
    %v5167 = vadd.f32 %v5142, %v5158
    %v5168 = vadd.f32 %v5143, %v5160
    %v5169 = vstv %s5123
    %v5170 = vmul.f32 %v62, %v5169
    %v5171 = vmul.f32 %v63, %v5169
    %v5172 = vmul.f32 %v64, %v5169
    %v5173 = vmul.f32 %v65, %v5169
    %v5174 = vadd.f32 %v5165, %v5170
    %v5175 = vadd.f32 %v5166, %v5171
    %v5176 = vadd.f32 %v5167, %v5172
    %v5177 = vadd.f32 %v5168, %v5173
    %v5178 = vstv %s5124
    %v5179 = vmul.f32 %v67, %v5178
    %v5180 = vmul.f32 %v68, %v5178
    %v5181 = vmul.f32 %v69, %v5178
    %v5182 = vmul.f32 %v70, %v5178
    %v5183 = vadd.f32 %v5174, %v5179
    %v5184 = vadd.f32 %v5175, %v5180
    %v5185 = vadd.f32 %v5176, %v5181
    %v5186 = vadd.f32 %v5177, %v5182
    %v5187 = vstv %s5125
    %v5188 = vmul.f32 %v62, %v5187
    %v5189 = vmul.f32 %v63, %v5187
    %v5190 = vmul.f32 %v64, %v5187
    %v5191 = vmul.f32 %v65, %v5187
    %5196 = vrot.lane.b32.xlu0 %v5188, 127
    %v5197 = vpop.permute.xlu0 %5196
    %5198 = vrot.lane.b32.xlu0 %v5189, 127
    %v5199 = vpop.permute.xlu0 %5198
    %5200 = vrot.lane.b32.xlu0 %v5190, 127
    %v5201 = vpop.permute.xlu0 %5200
    %5202 = vrot.lane.b32.xlu0 %v5191, 127
    %v5203 = vpop.permute.xlu0 %5202
    %v5208 = vadd.f32 %v5183, %v5197
    %v5209 = vadd.f32 %v5184, %v5199
    %v5210 = vadd.f32 %v5185, %v5201
    %v5211 = vadd.f32 %v5186, %v5203
    %v5212 = vstv %s5126
    %v5213 = vmul.f32 %v52, %v5212
    %v5214 = vmul.f32 %v53, %v5212
    %v5215 = vmul.f32 %v54, %v5212
    %v5216 = vmul.f32 %v55, %v5212
    %v5221 = vrot.slane %v5213, 2
    %v5222 = vrot.slane %v5214, 2
    %v5223 = vsel %vm172, %v5221, %v5222
    %v5224 = vrot.slane %v5215, 2
    %v5225 = vsel %vm172, %v5222, %v5224
    %v5226 = vrot.slane %v5216, 2
    %v5227 = vsel %vm172, %v5224, %v5226
    %v5232 = vadd.f32 %v5208, %v5223
    %v5233 = vadd.f32 %v5209, %v5225
    %v5234 = vadd.f32 %v5210, %v5227
    %v5235 = vadd.f32 %v5211, %v5226
    %v5236 = vstv %s5127
    %v5237 = vmul.f32 %v57, %v5236
    %v5238 = vmul.f32 %v58, %v5236
    %v5239 = vmul.f32 %v59, %v5236
    %v5240 = vmul.f32 %v60, %v5236
    %v5245 = vrot.slane %v5237, 2
    %v5246 = vrot.slane %v5238, 2
    %v5247 = vsel %vm172, %v5245, %v5246
    %v5248 = vrot.slane %v5239, 2
    %v5249 = vsel %vm172, %v5246, %v5248
    %v5250 = vrot.slane %v5240, 2
    %v5251 = vsel %vm172, %v5248, %v5250
    %v5256 = vadd.f32 %v5232, %v5247
    %v5257 = vadd.f32 %v5233, %v5249
    %v5258 = vadd.f32 %v5234, %v5251
    %v5259 = vadd.f32 %v5235, %v5250
    %v5260 = vstv %s5128
    %v5261 = vmul.f32 %v52, %v5260
    %v5262 = vmul.f32 %v53, %v5260
    %v5263 = vmul.f32 %v54, %v5260
    %v5264 = vmul.f32 %v55, %v5260
    %v5269 = vrot.slane %v5261, 2
    %v5270 = vrot.slane %v5262, 2
    %v5271 = vsel %vm172, %v5269, %v5270
    %v5272 = vrot.slane %v5263, 2
    %v5273 = vsel %vm172, %v5270, %v5272
    %v5274 = vrot.slane %v5264, 2
    %v5275 = vsel %vm172, %v5272, %v5274
    %5276 = vrot.lane.b32.xlu0 %v5271, 127
    %v5277 = vpop.permute.xlu0 %5276
    %5278 = vrot.lane.b32.xlu0 %v5273, 127
    %v5279 = vpop.permute.xlu0 %5278
    %5280 = vrot.lane.b32.xlu0 %v5275, 127
    %v5281 = vpop.permute.xlu0 %5280
    %5282 = vrot.lane.b32.xlu0 %v5274, 127
    %v5283 = vpop.permute.xlu0 %5282
    %v5288 = vadd.f32 %v5256, %v5277
    %v5289 = vadd.f32 %v5257, %v5279
    %v5290 = vadd.f32 %v5258, %v5281
    %v5291 = vadd.f32 %v5259, %v5283
    %v5292 = vstv %s5129
    %v5293 = vadd.f32 %v5288, %v5292
    %v5294 = vadd.f32 %v5289, %v5292
    %v5295 = vadd.f32 %v5290, %v5292
    %v5296 = vadd.f32 %v5291, %v5292
    %v5297 = vtanh.pop %v5293
    %v5298 = vtanh.pop %v5294
    %v5299 = vtanh.pop %v5295
    %v5300 = vtanh.pop %v5296
    %v5301 = vmul.f32 %v57, %v5130
    %v5302 = vmul.f32 %v58, %v5130
    %v5303 = vmul.f32 %v59, %v5130
    %v5304 = vmul.f32 %v60, %v5130
    %v5305 = vmul.f32 %v52, %v5135
    %v5306 = vmul.f32 %v53, %v5135
    %v5307 = vmul.f32 %v54, %v5135
    %v5308 = vmul.f32 %v55, %v5135
    %5313 = vrot.lane.b32.xlu0 %v5305, 127
    %v5314 = vpop.permute.xlu0 %5313
    %5315 = vrot.lane.b32.xlu0 %v5306, 127
    %v5316 = vpop.permute.xlu0 %5315
    %5317 = vrot.lane.b32.xlu0 %v5307, 127
    %v5318 = vpop.permute.xlu0 %5317
    %5319 = vrot.lane.b32.xlu0 %v5308, 127
    %v5320 = vpop.permute.xlu0 %5319
    %v5325 = vadd.f32 %v5301, %v5314
    %v5326 = vadd.f32 %v5302, %v5316
    %v5327 = vadd.f32 %v5303, %v5318
    %v5328 = vadd.f32 %v5304, %v5320
    %v5329 = vmul.f32 %v57, %v5144
    %v5330 = vmul.f32 %v58, %v5144
    %v5331 = vmul.f32 %v59, %v5144
    %v5332 = vmul.f32 %v60, %v5144
    %5337 = vrot.lane.b32.xlu0 %v5329, 127
    %v5338 = vpop.permute.xlu0 %5337
    %5339 = vrot.lane.b32.xlu0 %v5330, 127
    %v5340 = vpop.permute.xlu0 %5339
    %5341 = vrot.lane.b32.xlu0 %v5331, 127
    %v5342 = vpop.permute.xlu0 %5341
    %5343 = vrot.lane.b32.xlu0 %v5332, 127
    %v5344 = vpop.permute.xlu0 %5343
    %v5349 = vadd.f32 %v5325, %v5338
    %v5350 = vadd.f32 %v5326, %v5340
    %v5351 = vadd.f32 %v5327, %v5342
    %v5352 = vadd.f32 %v5328, %v5344
    %v5353 = vmul.f32 %v67, %v5169
    %v5354 = vmul.f32 %v68, %v5169
    %v5355 = vmul.f32 %v69, %v5169
    %v5356 = vmul.f32 %v70, %v5169
    %v5357 = vadd.f32 %v5349, %v5353
    %v5358 = vadd.f32 %v5350, %v5354
    %v5359 = vadd.f32 %v5351, %v5355
    %v5360 = vadd.f32 %v5352, %v5356
    %v5361 = vmul.f32 %v62, %v5178
    %v5362 = vmul.f32 %v63, %v5178
    %v5363 = vmul.f32 %v64, %v5178
    %v5364 = vmul.f32 %v65, %v5178
    %5369 = vrot.lane.b32.xlu0 %v5361, 127
    %v5370 = vpop.permute.xlu0 %5369
    %5371 = vrot.lane.b32.xlu0 %v5362, 127
    %v5372 = vpop.permute.xlu0 %5371
    %5373 = vrot.lane.b32.xlu0 %v5363, 127
    %v5374 = vpop.permute.xlu0 %5373
    %5375 = vrot.lane.b32.xlu0 %v5364, 127
    %v5376 = vpop.permute.xlu0 %5375
    %v5381 = vadd.f32 %v5357, %v5370
    %v5382 = vadd.f32 %v5358, %v5372
    %v5383 = vadd.f32 %v5359, %v5374
    %v5384 = vadd.f32 %v5360, %v5376
    %v5385 = vmul.f32 %v67, %v5187
    %v5386 = vmul.f32 %v68, %v5187
    %v5387 = vmul.f32 %v69, %v5187
    %v5388 = vmul.f32 %v70, %v5187
    %5393 = vrot.lane.b32.xlu0 %v5385, 127
    %v5394 = vpop.permute.xlu0 %5393
    %5395 = vrot.lane.b32.xlu0 %v5386, 127
    %v5396 = vpop.permute.xlu0 %5395
    %5397 = vrot.lane.b32.xlu0 %v5387, 127
    %v5398 = vpop.permute.xlu0 %5397
    %5399 = vrot.lane.b32.xlu0 %v5388, 127
    %v5400 = vpop.permute.xlu0 %5399
    %v5405 = vadd.f32 %v5381, %v5394
    %v5406 = vadd.f32 %v5382, %v5396
    %v5407 = vadd.f32 %v5383, %v5398
    %v5408 = vadd.f32 %v5384, %v5400
    %v5409 = vmul.f32 %v57, %v5212
    %v5410 = vmul.f32 %v58, %v5212
    %v5411 = vmul.f32 %v59, %v5212
    %v5412 = vmul.f32 %v60, %v5212
    %v5417 = vrot.slane %v5409, 2
    %v5418 = vrot.slane %v5410, 2
    %v5419 = vsel %vm172, %v5417, %v5418
    %v5420 = vrot.slane %v5411, 2
    %v5421 = vsel %vm172, %v5418, %v5420
    %v5422 = vrot.slane %v5412, 2
    %v5423 = vsel %vm172, %v5420, %v5422
    %v5428 = vadd.f32 %v5405, %v5419
    %v5429 = vadd.f32 %v5406, %v5421
    %v5430 = vadd.f32 %v5407, %v5423
    %v5431 = vadd.f32 %v5408, %v5422
    %v5432 = vmul.f32 %v52, %v5236
    %v5433 = vmul.f32 %v53, %v5236
    %v5434 = vmul.f32 %v54, %v5236
    %v5435 = vmul.f32 %v55, %v5236
    %v5440 = vrot.slane %v5432, 2
    %v5441 = vrot.slane %v5433, 2
    %v5442 = vsel %vm172, %v5440, %v5441
    %v5443 = vrot.slane %v5434, 2
    %v5444 = vsel %vm172, %v5441, %v5443
    %v5445 = vrot.slane %v5435, 2
    %v5446 = vsel %vm172, %v5443, %v5445
    %5447 = vrot.lane.b32.xlu0 %v5442, 127
    %v5448 = vpop.permute.xlu0 %5447
    %5449 = vrot.lane.b32.xlu0 %v5444, 127
    %v5450 = vpop.permute.xlu0 %5449
    %5451 = vrot.lane.b32.xlu0 %v5446, 127
    %v5452 = vpop.permute.xlu0 %5451
    %5453 = vrot.lane.b32.xlu0 %v5445, 127
    %v5454 = vpop.permute.xlu0 %5453
    %v5459 = vadd.f32 %v5428, %v5448
    %v5460 = vadd.f32 %v5429, %v5450
    %v5461 = vadd.f32 %v5430, %v5452
    %v5462 = vadd.f32 %v5431, %v5454
    %v5463 = vmul.f32 %v57, %v5260
    %v5464 = vmul.f32 %v58, %v5260
    %v5465 = vmul.f32 %v59, %v5260
    %v5466 = vmul.f32 %v60, %v5260
    %v5471 = vrot.slane %v5463, 2
    %v5472 = vrot.slane %v5464, 2
    %v5473 = vsel %vm172, %v5471, %v5472
    %v5474 = vrot.slane %v5465, 2
    %v5475 = vsel %vm172, %v5472, %v5474
    %v5476 = vrot.slane %v5466, 2
    %v5477 = vsel %vm172, %v5474, %v5476
    %5478 = vrot.lane.b32.xlu0 %v5473, 127
    %v5479 = vpop.permute.xlu0 %5478
    %5480 = vrot.lane.b32.xlu0 %v5475, 127
    %v5481 = vpop.permute.xlu0 %5480
    %5482 = vrot.lane.b32.xlu0 %v5477, 127
    %v5483 = vpop.permute.xlu0 %5482
    %5484 = vrot.lane.b32.xlu0 %v5476, 127
    %v5485 = vpop.permute.xlu0 %5484
    %v5490 = vadd.f32 %v5459, %v5479
    %v5491 = vadd.f32 %v5460, %v5481
    %v5492 = vadd.f32 %v5461, %v5483
    %v5493 = vadd.f32 %v5462, %v5485
    %v5494 = vadd.f32 %v5490, %v5292
    %v5495 = vadd.f32 %v5491, %v5292
    %v5496 = vadd.f32 %v5492, %v5292
    %v5497 = vadd.f32 %v5493, %v5292
    %v5498 = vtanh.pop %v5494
    %v5499 = vtanh.pop %v5495
    %v5500 = vtanh.pop %v5496
    %v5501 = vtanh.pop %v5497
    %v5502 = vmax.f32 %v5297, %v5498
    %v5503 = vmax.f32 %v5298, %v5499
    %v5504 = vmax.f32 %v5299, %v5500
    %v5505 = vmax.f32 %v5300, %v5501
    %v5506 = vmul.f32 %v62, %v5130
    %v5507 = vmul.f32 %v63, %v5130
    %v5508 = vmul.f32 %v64, %v5130
    %v5509 = vmul.f32 %v65, %v5130
    %v5510 = vmul.f32 %v67, %v5135
    %v5511 = vmul.f32 %v68, %v5135
    %v5512 = vmul.f32 %v69, %v5135
    %v5513 = vmul.f32 %v70, %v5135
    %v5514 = vadd.f32 %v5506, %v5510
    %v5515 = vadd.f32 %v5507, %v5511
    %v5516 = vadd.f32 %v5508, %v5512
    %v5517 = vadd.f32 %v5509, %v5513
    %v5518 = vmul.f32 %v62, %v5144
    %v5519 = vmul.f32 %v63, %v5144
    %v5520 = vmul.f32 %v64, %v5144
    %v5521 = vmul.f32 %v65, %v5144
    %5526 = vrot.lane.b32.xlu0 %v5518, 127
    %v5527 = vpop.permute.xlu0 %5526
    %5528 = vrot.lane.b32.xlu0 %v5519, 127
    %v5529 = vpop.permute.xlu0 %5528
    %5530 = vrot.lane.b32.xlu0 %v5520, 127
    %v5531 = vpop.permute.xlu0 %5530
    %5532 = vrot.lane.b32.xlu0 %v5521, 127
    %v5533 = vpop.permute.xlu0 %5532
    %v5538 = vadd.f32 %v5514, %v5527
    %v5539 = vadd.f32 %v5515, %v5529
    %v5540 = vadd.f32 %v5516, %v5531
    %v5541 = vadd.f32 %v5517, %v5533
    %v5542 = vmul.f32 %v52, %v5169
    %v5543 = vmul.f32 %v53, %v5169
    %v5544 = vmul.f32 %v54, %v5169
    %v5545 = vmul.f32 %v55, %v5169
    %v5550 = vrot.slane %v5542, 2
    %v5551 = vrot.slane %v5543, 2
    %v5552 = vsel %vm172, %v5550, %v5551
    %v5553 = vrot.slane %v5544, 2
    %v5554 = vsel %vm172, %v5551, %v5553
    %v5555 = vrot.slane %v5545, 2
    %v5556 = vsel %vm172, %v5553, %v5555
    %v5561 = vadd.f32 %v5538, %v5552
    %v5562 = vadd.f32 %v5539, %v5554
    %v5563 = vadd.f32 %v5540, %v5556
    %v5564 = vadd.f32 %v5541, %v5555
    %v5565 = vmul.f32 %v57, %v5178
    %v5566 = vmul.f32 %v58, %v5178
    %v5567 = vmul.f32 %v59, %v5178
    %v5568 = vmul.f32 %v60, %v5178
    %v5573 = vrot.slane %v5565, 2
    %v5574 = vrot.slane %v5566, 2
    %v5575 = vsel %vm172, %v5573, %v5574
    %v5576 = vrot.slane %v5567, 2
    %v5577 = vsel %vm172, %v5574, %v5576
    %v5578 = vrot.slane %v5568, 2
    %v5579 = vsel %vm172, %v5576, %v5578
    %v5584 = vadd.f32 %v5561, %v5575
    %v5585 = vadd.f32 %v5562, %v5577
    %v5586 = vadd.f32 %v5563, %v5579
    %v5587 = vadd.f32 %v5564, %v5578
    %v5588 = vmul.f32 %v52, %v5187
    %v5589 = vmul.f32 %v53, %v5187
    %v5590 = vmul.f32 %v54, %v5187
    %v5591 = vmul.f32 %v55, %v5187
    %v5596 = vrot.slane %v5588, 2
    %v5597 = vrot.slane %v5589, 2
    %v5598 = vsel %vm172, %v5596, %v5597
    %v5599 = vrot.slane %v5590, 2
    %v5600 = vsel %vm172, %v5597, %v5599
    %v5601 = vrot.slane %v5591, 2
    %v5602 = vsel %vm172, %v5599, %v5601
    %5603 = vrot.lane.b32.xlu0 %v5598, 127
    %v5604 = vpop.permute.xlu0 %5603
    %5605 = vrot.lane.b32.xlu0 %v5600, 127
    %v5606 = vpop.permute.xlu0 %5605
    %5607 = vrot.lane.b32.xlu0 %v5602, 127
    %v5608 = vpop.permute.xlu0 %5607
    %5609 = vrot.lane.b32.xlu0 %v5601, 127
    %v5610 = vpop.permute.xlu0 %5609
    %v5615 = vadd.f32 %v5584, %v5604
    %v5616 = vadd.f32 %v5585, %v5606
    %v5617 = vadd.f32 %v5586, %v5608
    %v5618 = vadd.f32 %v5587, %v5610
    %v5619 = vmul.f32 %v62, %v5212
    %v5620 = vmul.f32 %v63, %v5212
    %v5621 = vmul.f32 %v64, %v5212
    %v5622 = vmul.f32 %v65, %v5212
    %v5627 = vrot.slane %v5619, 2
    %v5628 = vrot.slane %v5620, 2
    %v5629 = vsel %vm172, %v5627, %v5628
    %v5630 = vrot.slane %v5621, 2
    %v5631 = vsel %vm172, %v5628, %v5630
    %v5632 = vrot.slane %v5622, 2
    %v5633 = vsel %vm172, %v5630, %v5632
    %v5638 = vadd.f32 %v5615, %v5629
    %v5639 = vadd.f32 %v5616, %v5631
    %v5640 = vadd.f32 %v5617, %v5633
    %v5641 = vadd.f32 %v5618, %v5632
    %v5642 = vmul.f32 %v67, %v5236
    %v5643 = vmul.f32 %v68, %v5236
    %v5644 = vmul.f32 %v69, %v5236
    %v5645 = vmul.f32 %v70, %v5236
    %v5650 = vrot.slane %v5642, 2
    %v5651 = vrot.slane %v5643, 2
    %v5652 = vsel %vm172, %v5650, %v5651
    %v5653 = vrot.slane %v5644, 2
    %v5654 = vsel %vm172, %v5651, %v5653
    %v5655 = vrot.slane %v5645, 2
    %v5656 = vsel %vm172, %v5653, %v5655
    %v5661 = vadd.f32 %v5638, %v5652
    %v5662 = vadd.f32 %v5639, %v5654
    %v5663 = vadd.f32 %v5640, %v5656
    %v5664 = vadd.f32 %v5641, %v5655
    %v5665 = vmul.f32 %v62, %v5260
    %v5666 = vmul.f32 %v63, %v5260
    %v5667 = vmul.f32 %v64, %v5260
    %v5668 = vmul.f32 %v65, %v5260
    %v5673 = vrot.slane %v5665, 2
    %v5674 = vrot.slane %v5666, 2
    %v5675 = vsel %vm172, %v5673, %v5674
    %v5676 = vrot.slane %v5667, 2
    %v5677 = vsel %vm172, %v5674, %v5676
    %v5678 = vrot.slane %v5668, 2
    %v5679 = vsel %vm172, %v5676, %v5678
    %5680 = vrot.lane.b32.xlu0 %v5675, 127
    %v5681 = vpop.permute.xlu0 %5680
    %5682 = vrot.lane.b32.xlu0 %v5677, 127
    %v5683 = vpop.permute.xlu0 %5682
    %5684 = vrot.lane.b32.xlu0 %v5679, 127
    %v5685 = vpop.permute.xlu0 %5684
    %5686 = vrot.lane.b32.xlu0 %v5678, 127
    %v5687 = vpop.permute.xlu0 %5686
    %v5692 = vadd.f32 %v5661, %v5681
    %v5693 = vadd.f32 %v5662, %v5683
    %v5694 = vadd.f32 %v5663, %v5685
    %v5695 = vadd.f32 %v5664, %v5687
    %v5696 = vadd.f32 %v5692, %v5292
    %v5697 = vadd.f32 %v5693, %v5292
    %v5698 = vadd.f32 %v5694, %v5292
    %v5699 = vadd.f32 %v5695, %v5292
    %v5700 = vtanh.pop %v5696
    %v5701 = vtanh.pop %v5697
    %v5702 = vtanh.pop %v5698
    %v5703 = vtanh.pop %v5699
    %v5704 = vmax.f32 %v5502, %v5700
    %v5705 = vmax.f32 %v5503, %v5701
    %v5706 = vmax.f32 %v5504, %v5702
    %v5707 = vmax.f32 %v5505, %v5703
    %v5708 = vmul.f32 %v67, %v5130
    %v5709 = vmul.f32 %v68, %v5130
    %v5710 = vmul.f32 %v69, %v5130
    %v5711 = vmul.f32 %v70, %v5130
    %v5712 = vmul.f32 %v62, %v5135
    %v5713 = vmul.f32 %v63, %v5135
    %v5714 = vmul.f32 %v64, %v5135
    %v5715 = vmul.f32 %v65, %v5135
    %5720 = vrot.lane.b32.xlu0 %v5712, 127
    %v5721 = vpop.permute.xlu0 %5720
    %5722 = vrot.lane.b32.xlu0 %v5713, 127
    %v5723 = vpop.permute.xlu0 %5722
    %5724 = vrot.lane.b32.xlu0 %v5714, 127
    %v5725 = vpop.permute.xlu0 %5724
    %5726 = vrot.lane.b32.xlu0 %v5715, 127
    %v5727 = vpop.permute.xlu0 %5726
    %v5732 = vadd.f32 %v5708, %v5721
    %v5733 = vadd.f32 %v5709, %v5723
    %v5734 = vadd.f32 %v5710, %v5725
    %v5735 = vadd.f32 %v5711, %v5727
    %v5736 = vmul.f32 %v67, %v5144
    %v5737 = vmul.f32 %v68, %v5144
    %v5738 = vmul.f32 %v69, %v5144
    %v5739 = vmul.f32 %v70, %v5144
    %5744 = vrot.lane.b32.xlu0 %v5736, 127
    %v5745 = vpop.permute.xlu0 %5744
    %5746 = vrot.lane.b32.xlu0 %v5737, 127
    %v5747 = vpop.permute.xlu0 %5746
    %5748 = vrot.lane.b32.xlu0 %v5738, 127
    %v5749 = vpop.permute.xlu0 %5748
    %5750 = vrot.lane.b32.xlu0 %v5739, 127
    %v5751 = vpop.permute.xlu0 %5750
    %v5756 = vadd.f32 %v5732, %v5745
    %v5757 = vadd.f32 %v5733, %v5747
    %v5758 = vadd.f32 %v5734, %v5749
    %v5759 = vadd.f32 %v5735, %v5751
    %v5760 = vmul.f32 %v57, %v5169
    %v5761 = vmul.f32 %v58, %v5169
    %v5762 = vmul.f32 %v59, %v5169
    %v5763 = vmul.f32 %v60, %v5169
    %v5768 = vrot.slane %v5760, 2
    %v5769 = vrot.slane %v5761, 2
    %v5770 = vsel %vm172, %v5768, %v5769
    %v5771 = vrot.slane %v5762, 2
    %v5772 = vsel %vm172, %v5769, %v5771
    %v5773 = vrot.slane %v5763, 2
    %v5774 = vsel %vm172, %v5771, %v5773
    %v5779 = vadd.f32 %v5756, %v5770
    %v5780 = vadd.f32 %v5757, %v5772
    %v5781 = vadd.f32 %v5758, %v5774
    %v5782 = vadd.f32 %v5759, %v5773
    %v5783 = vmul.f32 %v52, %v5178
    %v5784 = vmul.f32 %v53, %v5178
    %v5785 = vmul.f32 %v54, %v5178
    %v5786 = vmul.f32 %v55, %v5178
    %v5791 = vrot.slane %v5783, 2
    %v5792 = vrot.slane %v5784, 2
    %v5793 = vsel %vm172, %v5791, %v5792
    %v5794 = vrot.slane %v5785, 2
    %v5795 = vsel %vm172, %v5792, %v5794
    %v5796 = vrot.slane %v5786, 2
    %v5797 = vsel %vm172, %v5794, %v5796
    %5798 = vrot.lane.b32.xlu0 %v5793, 127
    %v5799 = vpop.permute.xlu0 %5798
    %5800 = vrot.lane.b32.xlu0 %v5795, 127
    %v5801 = vpop.permute.xlu0 %5800
    %5802 = vrot.lane.b32.xlu0 %v5797, 127
    %v5803 = vpop.permute.xlu0 %5802
    %5804 = vrot.lane.b32.xlu0 %v5796, 127
    %v5805 = vpop.permute.xlu0 %5804
    %v5810 = vadd.f32 %v5779, %v5799
    %v5811 = vadd.f32 %v5780, %v5801
    %v5812 = vadd.f32 %v5781, %v5803
    %v5813 = vadd.f32 %v5782, %v5805
    %v5814 = vmul.f32 %v57, %v5187
    %v5815 = vmul.f32 %v58, %v5187
    %v5816 = vmul.f32 %v59, %v5187
    %v5817 = vmul.f32 %v60, %v5187
    %v5822 = vrot.slane %v5814, 2
    %v5823 = vrot.slane %v5815, 2
    %v5824 = vsel %vm172, %v5822, %v5823
    %v5825 = vrot.slane %v5816, 2
    %v5826 = vsel %vm172, %v5823, %v5825
    %v5827 = vrot.slane %v5817, 2
    %v5828 = vsel %vm172, %v5825, %v5827
    %5829 = vrot.lane.b32.xlu0 %v5824, 127
    %v5830 = vpop.permute.xlu0 %5829
    %5831 = vrot.lane.b32.xlu0 %v5826, 127
    %v5832 = vpop.permute.xlu0 %5831
    %5833 = vrot.lane.b32.xlu0 %v5828, 127
    %v5834 = vpop.permute.xlu0 %5833
    %5835 = vrot.lane.b32.xlu0 %v5827, 127
    %v5836 = vpop.permute.xlu0 %5835
    %v5841 = vadd.f32 %v5810, %v5830
    %v5842 = vadd.f32 %v5811, %v5832
    %v5843 = vadd.f32 %v5812, %v5834
    %v5844 = vadd.f32 %v5813, %v5836
    %v5845 = vmul.f32 %v67, %v5212
    %v5846 = vmul.f32 %v68, %v5212
    %v5847 = vmul.f32 %v69, %v5212
    %v5848 = vmul.f32 %v70, %v5212
    %v5853 = vrot.slane %v5845, 2
    %v5854 = vrot.slane %v5846, 2
    %v5855 = vsel %vm172, %v5853, %v5854
    %v5856 = vrot.slane %v5847, 2
    %v5857 = vsel %vm172, %v5854, %v5856
    %v5858 = vrot.slane %v5848, 2
    %v5859 = vsel %vm172, %v5856, %v5858
    %v5864 = vadd.f32 %v5841, %v5855
    %v5865 = vadd.f32 %v5842, %v5857
    %v5866 = vadd.f32 %v5843, %v5859
    %v5867 = vadd.f32 %v5844, %v5858
    %v5868 = vmul.f32 %v62, %v5236
    %v5869 = vmul.f32 %v63, %v5236
    %v5870 = vmul.f32 %v64, %v5236
    %v5871 = vmul.f32 %v65, %v5236
    %v5876 = vrot.slane %v5868, 2
    %v5877 = vrot.slane %v5869, 2
    %v5878 = vsel %vm172, %v5876, %v5877
    %v5879 = vrot.slane %v5870, 2
    %v5880 = vsel %vm172, %v5877, %v5879
    %v5881 = vrot.slane %v5871, 2
    %v5882 = vsel %vm172, %v5879, %v5881
    %5883 = vrot.lane.b32.xlu0 %v5878, 127
    %v5884 = vpop.permute.xlu0 %5883
    %5885 = vrot.lane.b32.xlu0 %v5880, 127
    %v5886 = vpop.permute.xlu0 %5885
    %5887 = vrot.lane.b32.xlu0 %v5882, 127
    %v5888 = vpop.permute.xlu0 %5887
    %5889 = vrot.lane.b32.xlu0 %v5881, 127
    %v5890 = vpop.permute.xlu0 %5889
    %v5895 = vadd.f32 %v5864, %v5884
    %v5896 = vadd.f32 %v5865, %v5886
    %v5897 = vadd.f32 %v5866, %v5888
    %v5898 = vadd.f32 %v5867, %v5890
    %v5899 = vmul.f32 %v67, %v5260
    %v5900 = vmul.f32 %v68, %v5260
    %v5901 = vmul.f32 %v69, %v5260
    %v5902 = vmul.f32 %v70, %v5260
    %v5907 = vrot.slane %v5899, 2
    %v5908 = vrot.slane %v5900, 2
    %v5909 = vsel %vm172, %v5907, %v5908
    %v5910 = vrot.slane %v5901, 2
    %v5911 = vsel %vm172, %v5908, %v5910
    %v5912 = vrot.slane %v5902, 2
    %v5913 = vsel %vm172, %v5910, %v5912
    %5914 = vrot.lane.b32.xlu0 %v5909, 127
    %v5915 = vpop.permute.xlu0 %5914
    %5916 = vrot.lane.b32.xlu0 %v5911, 127
    %v5917 = vpop.permute.xlu0 %5916
    %5918 = vrot.lane.b32.xlu0 %v5913, 127
    %v5919 = vpop.permute.xlu0 %5918
    %5920 = vrot.lane.b32.xlu0 %v5912, 127
    %v5921 = vpop.permute.xlu0 %5920
    %v5926 = vadd.f32 %v5895, %v5915
    %v5927 = vadd.f32 %v5896, %v5917
    %v5928 = vadd.f32 %v5897, %v5919
    %v5929 = vadd.f32 %v5898, %v5921
    %v5930 = vadd.f32 %v5926, %v5292
    %v5931 = vadd.f32 %v5927, %v5292
    %v5932 = vadd.f32 %v5928, %v5292
    %v5933 = vadd.f32 %v5929, %v5292
    %v5934 = vtanh.pop %v5930
    %v5935 = vtanh.pop %v5931
    %v5936 = vtanh.pop %v5932
    %v5937 = vtanh.pop %v5933
    %v5938 = vmax.f32 %v5704, %v5934
    %v5939 = vmax.f32 %v5705, %v5935
    %v5940 = vmax.f32 %v5706, %v5936
    %v5941 = vmax.f32 %v5707, %v5937
    %5946 = vrot.lane.b32.xlu0 %v5938, 84
    %v5947 = vpop.permute.xlu0 %5946
    %5948 = vrot.lane.b32.xlu0 %v5939, 84
    %v5949 = vpop.permute.xlu0 %5948
    %5950 = vrot.lane.b32.xlu0 %v5940, 84
    %v5951 = vpop.permute.xlu0 %5950
    %5952 = vrot.lane.b32.xlu0 %v5941, 84
    %v5953 = vpop.permute.xlu0 %5952
    %vm5958 = vcmask 802464
    %5959 = vst.msk [vmem:[#allocation2] sm:$0xff] %vm5958, %v5947
    %5960 = vst.msk [vmem:[#allocation2 + $0x8] sm:$0xff] %vm5958, %v5949
    %5961 = vst.msk [vmem:[#allocation2 + $0x10] sm:$0xff] %vm5958, %v5951
    %vm5962 = vcmask 798368
    %5963 = vst.msk [vmem:[#allocation2 + $0x18] sm:$0xf] %vm5962, %v5953
    %s5964 = sld [smem:[#allocation3 + $0x380]]
    %s5965 = sld [smem:[#allocation3 + $0x381]]
    %s5966 = sld [smem:[#allocation3 + $0x382]]
    %s5967 = sld [smem:[#allocation3 + $0x383]]
    %s5968 = sld [smem:[#allocation3 + $0x384]]
    %s5969 = sld [smem:[#allocation3 + $0x385]]
    %s5970 = sld [smem:[#allocation3 + $0x386]]
    %s5971 = sld [smem:[#allocation3 + $0x387]]
    %s5972 = sld [smem:[#allocation3 + $0x388]]
    %s5973 = sld [smem:[#allocation6 + $0x7]]
    %v5974 = vstv %s5964
    %v5975 = vmul.f32 %v52, %v5974
    %v5976 = vmul.f32 %v53, %v5974
    %v5977 = vmul.f32 %v54, %v5974
    %v5978 = vmul.f32 %v55, %v5974
    %v5979 = vstv %s5965
    %v5980 = vmul.f32 %v57, %v5979
    %v5981 = vmul.f32 %v58, %v5979
    %v5982 = vmul.f32 %v59, %v5979
    %v5983 = vmul.f32 %v60, %v5979
    %v5984 = vadd.f32 %v5975, %v5980
    %v5985 = vadd.f32 %v5976, %v5981
    %v5986 = vadd.f32 %v5977, %v5982
    %v5987 = vadd.f32 %v5978, %v5983
    %v5988 = vstv %s5966
    %v5989 = vmul.f32 %v52, %v5988
    %v5990 = vmul.f32 %v53, %v5988
    %v5991 = vmul.f32 %v54, %v5988
    %v5992 = vmul.f32 %v55, %v5988
    %5997 = vrot.lane.b32.xlu0 %v5989, 127
    %v5998 = vpop.permute.xlu0 %5997
    %5999 = vrot.lane.b32.xlu0 %v5990, 127
    %v6000 = vpop.permute.xlu0 %5999
    %6001 = vrot.lane.b32.xlu0 %v5991, 127
    %v6002 = vpop.permute.xlu0 %6001
    %6003 = vrot.lane.b32.xlu0 %v5992, 127
    %v6004 = vpop.permute.xlu0 %6003
    %v6009 = vadd.f32 %v5984, %v5998
    %v6010 = vadd.f32 %v5985, %v6000
    %v6011 = vadd.f32 %v5986, %v6002
    %v6012 = vadd.f32 %v5987, %v6004
    %v6013 = vstv %s5967
    %v6014 = vmul.f32 %v62, %v6013
    %v6015 = vmul.f32 %v63, %v6013
    %v6016 = vmul.f32 %v64, %v6013
    %v6017 = vmul.f32 %v65, %v6013
    %v6018 = vadd.f32 %v6009, %v6014
    %v6019 = vadd.f32 %v6010, %v6015
    %v6020 = vadd.f32 %v6011, %v6016
    %v6021 = vadd.f32 %v6012, %v6017
    %v6022 = vstv %s5968
    %v6023 = vmul.f32 %v67, %v6022
    %v6024 = vmul.f32 %v68, %v6022
    %v6025 = vmul.f32 %v69, %v6022
    %v6026 = vmul.f32 %v70, %v6022
    %v6027 = vadd.f32 %v6018, %v6023
    %v6028 = vadd.f32 %v6019, %v6024
    %v6029 = vadd.f32 %v6020, %v6025
    %v6030 = vadd.f32 %v6021, %v6026
    %v6031 = vstv %s5969
    %v6032 = vmul.f32 %v62, %v6031
    %v6033 = vmul.f32 %v63, %v6031
    %v6034 = vmul.f32 %v64, %v6031
    %v6035 = vmul.f32 %v65, %v6031
    %6040 = vrot.lane.b32.xlu0 %v6032, 127
    %v6041 = vpop.permute.xlu0 %6040
    %6042 = vrot.lane.b32.xlu0 %v6033, 127
    %v6043 = vpop.permute.xlu0 %6042
    %6044 = vrot.lane.b32.xlu0 %v6034, 127
    %v6045 = vpop.permute.xlu0 %6044
    %6046 = vrot.lane.b32.xlu0 %v6035, 127
    %v6047 = vpop.permute.xlu0 %6046
    %v6052 = vadd.f32 %v6027, %v6041
    %v6053 = vadd.f32 %v6028, %v6043
    %v6054 = vadd.f32 %v6029, %v6045
    %v6055 = vadd.f32 %v6030, %v6047
    %v6056 = vstv %s5970
    %v6057 = vmul.f32 %v52, %v6056
    %v6058 = vmul.f32 %v53, %v6056
    %v6059 = vmul.f32 %v54, %v6056
    %v6060 = vmul.f32 %v55, %v6056
    %v6065 = vrot.slane %v6057, 2
    %v6066 = vrot.slane %v6058, 2
    %v6067 = vsel %vm172, %v6065, %v6066
    %v6068 = vrot.slane %v6059, 2
    %v6069 = vsel %vm172, %v6066, %v6068
    %v6070 = vrot.slane %v6060, 2
    %v6071 = vsel %vm172, %v6068, %v6070
    %v6076 = vadd.f32 %v6052, %v6067
    %v6077 = vadd.f32 %v6053, %v6069
    %v6078 = vadd.f32 %v6054, %v6071
    %v6079 = vadd.f32 %v6055, %v6070
    %v6080 = vstv %s5971
    %v6081 = vmul.f32 %v57, %v6080
    %v6082 = vmul.f32 %v58, %v6080
    %v6083 = vmul.f32 %v59, %v6080
    %v6084 = vmul.f32 %v60, %v6080
    %v6089 = vrot.slane %v6081, 2
    %v6090 = vrot.slane %v6082, 2
    %v6091 = vsel %vm172, %v6089, %v6090
    %v6092 = vrot.slane %v6083, 2
    %v6093 = vsel %vm172, %v6090, %v6092
    %v6094 = vrot.slane %v6084, 2
    %v6095 = vsel %vm172, %v6092, %v6094
    %v6100 = vadd.f32 %v6076, %v6091
    %v6101 = vadd.f32 %v6077, %v6093
    %v6102 = vadd.f32 %v6078, %v6095
    %v6103 = vadd.f32 %v6079, %v6094
    %v6104 = vstv %s5972
    %v6105 = vmul.f32 %v52, %v6104
    %v6106 = vmul.f32 %v53, %v6104
    %v6107 = vmul.f32 %v54, %v6104
    %v6108 = vmul.f32 %v55, %v6104
    %v6113 = vrot.slane %v6105, 2
    %v6114 = vrot.slane %v6106, 2
    %v6115 = vsel %vm172, %v6113, %v6114
    %v6116 = vrot.slane %v6107, 2
    %v6117 = vsel %vm172, %v6114, %v6116
    %v6118 = vrot.slane %v6108, 2
    %v6119 = vsel %vm172, %v6116, %v6118
    %6120 = vrot.lane.b32.xlu0 %v6115, 127
    %v6121 = vpop.permute.xlu0 %6120
    %6122 = vrot.lane.b32.xlu0 %v6117, 127
    %v6123 = vpop.permute.xlu0 %6122
    %6124 = vrot.lane.b32.xlu0 %v6119, 127
    %v6125 = vpop.permute.xlu0 %6124
    %6126 = vrot.lane.b32.xlu0 %v6118, 127
    %v6127 = vpop.permute.xlu0 %6126
    %v6132 = vadd.f32 %v6100, %v6121
    %v6133 = vadd.f32 %v6101, %v6123
    %v6134 = vadd.f32 %v6102, %v6125
    %v6135 = vadd.f32 %v6103, %v6127
    %v6136 = vstv %s5973
    %v6137 = vadd.f32 %v6132, %v6136
    %v6138 = vadd.f32 %v6133, %v6136
    %v6139 = vadd.f32 %v6134, %v6136
    %v6140 = vadd.f32 %v6135, %v6136
    %v6141 = vtanh.pop %v6137
    %v6142 = vtanh.pop %v6138
    %v6143 = vtanh.pop %v6139
    %v6144 = vtanh.pop %v6140
    %v6145 = vmul.f32 %v57, %v5974
    %v6146 = vmul.f32 %v58, %v5974
    %v6147 = vmul.f32 %v59, %v5974
    %v6148 = vmul.f32 %v60, %v5974
    %v6149 = vmul.f32 %v52, %v5979
    %v6150 = vmul.f32 %v53, %v5979
    %v6151 = vmul.f32 %v54, %v5979
    %v6152 = vmul.f32 %v55, %v5979
    %6157 = vrot.lane.b32.xlu0 %v6149, 127
    %v6158 = vpop.permute.xlu0 %6157
    %6159 = vrot.lane.b32.xlu0 %v6150, 127
    %v6160 = vpop.permute.xlu0 %6159
    %6161 = vrot.lane.b32.xlu0 %v6151, 127
    %v6162 = vpop.permute.xlu0 %6161
    %6163 = vrot.lane.b32.xlu0 %v6152, 127
    %v6164 = vpop.permute.xlu0 %6163
    %v6169 = vadd.f32 %v6145, %v6158
    %v6170 = vadd.f32 %v6146, %v6160
    %v6171 = vadd.f32 %v6147, %v6162
    %v6172 = vadd.f32 %v6148, %v6164
    %v6173 = vmul.f32 %v57, %v5988
    %v6174 = vmul.f32 %v58, %v5988
    %v6175 = vmul.f32 %v59, %v5988
    %v6176 = vmul.f32 %v60, %v5988
    %6181 = vrot.lane.b32.xlu0 %v6173, 127
    %v6182 = vpop.permute.xlu0 %6181
    %6183 = vrot.lane.b32.xlu0 %v6174, 127
    %v6184 = vpop.permute.xlu0 %6183
    %6185 = vrot.lane.b32.xlu0 %v6175, 127
    %v6186 = vpop.permute.xlu0 %6185
    %6187 = vrot.lane.b32.xlu0 %v6176, 127
    %v6188 = vpop.permute.xlu0 %6187
    %v6193 = vadd.f32 %v6169, %v6182
    %v6194 = vadd.f32 %v6170, %v6184
    %v6195 = vadd.f32 %v6171, %v6186
    %v6196 = vadd.f32 %v6172, %v6188
    %v6197 = vmul.f32 %v67, %v6013
    %v6198 = vmul.f32 %v68, %v6013
    %v6199 = vmul.f32 %v69, %v6013
    %v6200 = vmul.f32 %v70, %v6013
    %v6201 = vadd.f32 %v6193, %v6197
    %v6202 = vadd.f32 %v6194, %v6198
    %v6203 = vadd.f32 %v6195, %v6199
    %v6204 = vadd.f32 %v6196, %v6200
    %v6205 = vmul.f32 %v62, %v6022
    %v6206 = vmul.f32 %v63, %v6022
    %v6207 = vmul.f32 %v64, %v6022
    %v6208 = vmul.f32 %v65, %v6022
    %6213 = vrot.lane.b32.xlu0 %v6205, 127
    %v6214 = vpop.permute.xlu0 %6213
    %6215 = vrot.lane.b32.xlu0 %v6206, 127
    %v6216 = vpop.permute.xlu0 %6215
    %6217 = vrot.lane.b32.xlu0 %v6207, 127
    %v6218 = vpop.permute.xlu0 %6217
    %6219 = vrot.lane.b32.xlu0 %v6208, 127
    %v6220 = vpop.permute.xlu0 %6219
    %v6225 = vadd.f32 %v6201, %v6214
    %v6226 = vadd.f32 %v6202, %v6216
    %v6227 = vadd.f32 %v6203, %v6218
    %v6228 = vadd.f32 %v6204, %v6220
    %v6229 = vmul.f32 %v67, %v6031
    %v6230 = vmul.f32 %v68, %v6031
    %v6231 = vmul.f32 %v69, %v6031
    %v6232 = vmul.f32 %v70, %v6031
    %6237 = vrot.lane.b32.xlu0 %v6229, 127
    %v6238 = vpop.permute.xlu0 %6237
    %6239 = vrot.lane.b32.xlu0 %v6230, 127
    %v6240 = vpop.permute.xlu0 %6239
    %6241 = vrot.lane.b32.xlu0 %v6231, 127
    %v6242 = vpop.permute.xlu0 %6241
    %6243 = vrot.lane.b32.xlu0 %v6232, 127
    %v6244 = vpop.permute.xlu0 %6243
    %v6249 = vadd.f32 %v6225, %v6238
    %v6250 = vadd.f32 %v6226, %v6240
    %v6251 = vadd.f32 %v6227, %v6242
    %v6252 = vadd.f32 %v6228, %v6244
    %v6253 = vmul.f32 %v57, %v6056
    %v6254 = vmul.f32 %v58, %v6056
    %v6255 = vmul.f32 %v59, %v6056
    %v6256 = vmul.f32 %v60, %v6056
    %v6261 = vrot.slane %v6253, 2
    %v6262 = vrot.slane %v6254, 2
    %v6263 = vsel %vm172, %v6261, %v6262
    %v6264 = vrot.slane %v6255, 2
    %v6265 = vsel %vm172, %v6262, %v6264
    %v6266 = vrot.slane %v6256, 2
    %v6267 = vsel %vm172, %v6264, %v6266
    %v6272 = vadd.f32 %v6249, %v6263
    %v6273 = vadd.f32 %v6250, %v6265
    %v6274 = vadd.f32 %v6251, %v6267
    %v6275 = vadd.f32 %v6252, %v6266
    %v6276 = vmul.f32 %v52, %v6080
    %v6277 = vmul.f32 %v53, %v6080
    %v6278 = vmul.f32 %v54, %v6080
    %v6279 = vmul.f32 %v55, %v6080
    %v6284 = vrot.slane %v6276, 2
    %v6285 = vrot.slane %v6277, 2
    %v6286 = vsel %vm172, %v6284, %v6285
    %v6287 = vrot.slane %v6278, 2
    %v6288 = vsel %vm172, %v6285, %v6287
    %v6289 = vrot.slane %v6279, 2
    %v6290 = vsel %vm172, %v6287, %v6289
    %6291 = vrot.lane.b32.xlu0 %v6286, 127
    %v6292 = vpop.permute.xlu0 %6291
    %6293 = vrot.lane.b32.xlu0 %v6288, 127
    %v6294 = vpop.permute.xlu0 %6293
    %6295 = vrot.lane.b32.xlu0 %v6290, 127
    %v6296 = vpop.permute.xlu0 %6295
    %6297 = vrot.lane.b32.xlu0 %v6289, 127
    %v6298 = vpop.permute.xlu0 %6297
    %v6303 = vadd.f32 %v6272, %v6292
    %v6304 = vadd.f32 %v6273, %v6294
    %v6305 = vadd.f32 %v6274, %v6296
    %v6306 = vadd.f32 %v6275, %v6298
    %v6307 = vmul.f32 %v57, %v6104
    %v6308 = vmul.f32 %v58, %v6104
    %v6309 = vmul.f32 %v59, %v6104
    %v6310 = vmul.f32 %v60, %v6104
    %v6315 = vrot.slane %v6307, 2
    %v6316 = vrot.slane %v6308, 2
    %v6317 = vsel %vm172, %v6315, %v6316
    %v6318 = vrot.slane %v6309, 2
    %v6319 = vsel %vm172, %v6316, %v6318
    %v6320 = vrot.slane %v6310, 2
    %v6321 = vsel %vm172, %v6318, %v6320
    %6322 = vrot.lane.b32.xlu0 %v6317, 127
    %v6323 = vpop.permute.xlu0 %6322
    %6324 = vrot.lane.b32.xlu0 %v6319, 127
    %v6325 = vpop.permute.xlu0 %6324
    %6326 = vrot.lane.b32.xlu0 %v6321, 127
    %v6327 = vpop.permute.xlu0 %6326
    %6328 = vrot.lane.b32.xlu0 %v6320, 127
    %v6329 = vpop.permute.xlu0 %6328
    %v6334 = vadd.f32 %v6303, %v6323
    %v6335 = vadd.f32 %v6304, %v6325
    %v6336 = vadd.f32 %v6305, %v6327
    %v6337 = vadd.f32 %v6306, %v6329
    %v6338 = vadd.f32 %v6334, %v6136
    %v6339 = vadd.f32 %v6335, %v6136
    %v6340 = vadd.f32 %v6336, %v6136
    %v6341 = vadd.f32 %v6337, %v6136
    %v6342 = vtanh.pop %v6338
    %v6343 = vtanh.pop %v6339
    %v6344 = vtanh.pop %v6340
    %v6345 = vtanh.pop %v6341
    %v6346 = vmax.f32 %v6141, %v6342
    %v6347 = vmax.f32 %v6142, %v6343
    %v6348 = vmax.f32 %v6143, %v6344
    %v6349 = vmax.f32 %v6144, %v6345
    %v6350 = vmul.f32 %v62, %v5974
    %v6351 = vmul.f32 %v63, %v5974
    %v6352 = vmul.f32 %v64, %v5974
    %v6353 = vmul.f32 %v65, %v5974
    %v6354 = vmul.f32 %v67, %v5979
    %v6355 = vmul.f32 %v68, %v5979
    %v6356 = vmul.f32 %v69, %v5979
    %v6357 = vmul.f32 %v70, %v5979
    %v6358 = vadd.f32 %v6350, %v6354
    %v6359 = vadd.f32 %v6351, %v6355
    %v6360 = vadd.f32 %v6352, %v6356
    %v6361 = vadd.f32 %v6353, %v6357
    %v6362 = vmul.f32 %v62, %v5988
    %v6363 = vmul.f32 %v63, %v5988
    %v6364 = vmul.f32 %v64, %v5988
    %v6365 = vmul.f32 %v65, %v5988
    %6370 = vrot.lane.b32.xlu0 %v6362, 127
    %v6371 = vpop.permute.xlu0 %6370
    %6372 = vrot.lane.b32.xlu0 %v6363, 127
    %v6373 = vpop.permute.xlu0 %6372
    %6374 = vrot.lane.b32.xlu0 %v6364, 127
    %v6375 = vpop.permute.xlu0 %6374
    %6376 = vrot.lane.b32.xlu0 %v6365, 127
    %v6377 = vpop.permute.xlu0 %6376
    %v6382 = vadd.f32 %v6358, %v6371
    %v6383 = vadd.f32 %v6359, %v6373
    %v6384 = vadd.f32 %v6360, %v6375
    %v6385 = vadd.f32 %v6361, %v6377
    %v6386 = vmul.f32 %v52, %v6013
    %v6387 = vmul.f32 %v53, %v6013
    %v6388 = vmul.f32 %v54, %v6013
    %v6389 = vmul.f32 %v55, %v6013
    %v6394 = vrot.slane %v6386, 2
    %v6395 = vrot.slane %v6387, 2
    %v6396 = vsel %vm172, %v6394, %v6395
    %v6397 = vrot.slane %v6388, 2
    %v6398 = vsel %vm172, %v6395, %v6397
    %v6399 = vrot.slane %v6389, 2
    %v6400 = vsel %vm172, %v6397, %v6399
    %v6405 = vadd.f32 %v6382, %v6396
    %v6406 = vadd.f32 %v6383, %v6398
    %v6407 = vadd.f32 %v6384, %v6400
    %v6408 = vadd.f32 %v6385, %v6399
    %v6409 = vmul.f32 %v57, %v6022
    %v6410 = vmul.f32 %v58, %v6022
    %v6411 = vmul.f32 %v59, %v6022
    %v6412 = vmul.f32 %v60, %v6022
    %v6417 = vrot.slane %v6409, 2
    %v6418 = vrot.slane %v6410, 2
    %v6419 = vsel %vm172, %v6417, %v6418
    %v6420 = vrot.slane %v6411, 2
    %v6421 = vsel %vm172, %v6418, %v6420
    %v6422 = vrot.slane %v6412, 2
    %v6423 = vsel %vm172, %v6420, %v6422
    %v6428 = vadd.f32 %v6405, %v6419
    %v6429 = vadd.f32 %v6406, %v6421
    %v6430 = vadd.f32 %v6407, %v6423
    %v6431 = vadd.f32 %v6408, %v6422
    %v6432 = vmul.f32 %v52, %v6031
    %v6433 = vmul.f32 %v53, %v6031
    %v6434 = vmul.f32 %v54, %v6031
    %v6435 = vmul.f32 %v55, %v6031
    %v6440 = vrot.slane %v6432, 2
    %v6441 = vrot.slane %v6433, 2
    %v6442 = vsel %vm172, %v6440, %v6441
    %v6443 = vrot.slane %v6434, 2
    %v6444 = vsel %vm172, %v6441, %v6443
    %v6445 = vrot.slane %v6435, 2
    %v6446 = vsel %vm172, %v6443, %v6445
    %6447 = vrot.lane.b32.xlu0 %v6442, 127
    %v6448 = vpop.permute.xlu0 %6447
    %6449 = vrot.lane.b32.xlu0 %v6444, 127
    %v6450 = vpop.permute.xlu0 %6449
    %6451 = vrot.lane.b32.xlu0 %v6446, 127
    %v6452 = vpop.permute.xlu0 %6451
    %6453 = vrot.lane.b32.xlu0 %v6445, 127
    %v6454 = vpop.permute.xlu0 %6453
    %v6459 = vadd.f32 %v6428, %v6448
    %v6460 = vadd.f32 %v6429, %v6450
    %v6461 = vadd.f32 %v6430, %v6452
    %v6462 = vadd.f32 %v6431, %v6454
    %v6463 = vmul.f32 %v62, %v6056
    %v6464 = vmul.f32 %v63, %v6056
    %v6465 = vmul.f32 %v64, %v6056
    %v6466 = vmul.f32 %v65, %v6056
    %v6471 = vrot.slane %v6463, 2
    %v6472 = vrot.slane %v6464, 2
    %v6473 = vsel %vm172, %v6471, %v6472
    %v6474 = vrot.slane %v6465, 2
    %v6475 = vsel %vm172, %v6472, %v6474
    %v6476 = vrot.slane %v6466, 2
    %v6477 = vsel %vm172, %v6474, %v6476
    %v6482 = vadd.f32 %v6459, %v6473
    %v6483 = vadd.f32 %v6460, %v6475
    %v6484 = vadd.f32 %v6461, %v6477
    %v6485 = vadd.f32 %v6462, %v6476
    %v6486 = vmul.f32 %v67, %v6080
    %v6487 = vmul.f32 %v68, %v6080
    %v6488 = vmul.f32 %v69, %v6080
    %v6489 = vmul.f32 %v70, %v6080
    %v6494 = vrot.slane %v6486, 2
    %v6495 = vrot.slane %v6487, 2
    %v6496 = vsel %vm172, %v6494, %v6495
    %v6497 = vrot.slane %v6488, 2
    %v6498 = vsel %vm172, %v6495, %v6497
    %v6499 = vrot.slane %v6489, 2
    %v6500 = vsel %vm172, %v6497, %v6499
    %v6505 = vadd.f32 %v6482, %v6496
    %v6506 = vadd.f32 %v6483, %v6498
    %v6507 = vadd.f32 %v6484, %v6500
    %v6508 = vadd.f32 %v6485, %v6499
    %v6509 = vmul.f32 %v62, %v6104
    %v6510 = vmul.f32 %v63, %v6104
    %v6511 = vmul.f32 %v64, %v6104
    %v6512 = vmul.f32 %v65, %v6104
    %v6517 = vrot.slane %v6509, 2
    %v6518 = vrot.slane %v6510, 2
    %v6519 = vsel %vm172, %v6517, %v6518
    %v6520 = vrot.slane %v6511, 2
    %v6521 = vsel %vm172, %v6518, %v6520
    %v6522 = vrot.slane %v6512, 2
    %v6523 = vsel %vm172, %v6520, %v6522
    %6524 = vrot.lane.b32.xlu0 %v6519, 127
    %v6525 = vpop.permute.xlu0 %6524
    %6526 = vrot.lane.b32.xlu0 %v6521, 127
    %v6527 = vpop.permute.xlu0 %6526
    %6528 = vrot.lane.b32.xlu0 %v6523, 127
    %v6529 = vpop.permute.xlu0 %6528
    %6530 = vrot.lane.b32.xlu0 %v6522, 127
    %v6531 = vpop.permute.xlu0 %6530
    %v6536 = vadd.f32 %v6505, %v6525
    %v6537 = vadd.f32 %v6506, %v6527
    %v6538 = vadd.f32 %v6507, %v6529
    %v6539 = vadd.f32 %v6508, %v6531
    %v6540 = vadd.f32 %v6536, %v6136
    %v6541 = vadd.f32 %v6537, %v6136
    %v6542 = vadd.f32 %v6538, %v6136
    %v6543 = vadd.f32 %v6539, %v6136
    %v6544 = vtanh.pop %v6540
    %v6545 = vtanh.pop %v6541
    %v6546 = vtanh.pop %v6542
    %v6547 = vtanh.pop %v6543
    %v6548 = vmax.f32 %v6346, %v6544
    %v6549 = vmax.f32 %v6347, %v6545
    %v6550 = vmax.f32 %v6348, %v6546
    %v6551 = vmax.f32 %v6349, %v6547
    %v6552 = vmul.f32 %v67, %v5974
    %v6553 = vmul.f32 %v68, %v5974
    %v6554 = vmul.f32 %v69, %v5974
    %v6555 = vmul.f32 %v70, %v5974
    %v6556 = vmul.f32 %v62, %v5979
    %v6557 = vmul.f32 %v63, %v5979
    %v6558 = vmul.f32 %v64, %v5979
    %v6559 = vmul.f32 %v65, %v5979
    %6564 = vrot.lane.b32.xlu0 %v6556, 127
    %v6565 = vpop.permute.xlu0 %6564
    %6566 = vrot.lane.b32.xlu0 %v6557, 127
    %v6567 = vpop.permute.xlu0 %6566
    %6568 = vrot.lane.b32.xlu0 %v6558, 127
    %v6569 = vpop.permute.xlu0 %6568
    %6570 = vrot.lane.b32.xlu0 %v6559, 127
    %v6571 = vpop.permute.xlu0 %6570
    %v6576 = vadd.f32 %v6552, %v6565
    %v6577 = vadd.f32 %v6553, %v6567
    %v6578 = vadd.f32 %v6554, %v6569
    %v6579 = vadd.f32 %v6555, %v6571
    %v6580 = vmul.f32 %v67, %v5988
    %v6581 = vmul.f32 %v68, %v5988
    %v6582 = vmul.f32 %v69, %v5988
    %v6583 = vmul.f32 %v70, %v5988
    %6588 = vrot.lane.b32.xlu0 %v6580, 127
    %v6589 = vpop.permute.xlu0 %6588
    %6590 = vrot.lane.b32.xlu0 %v6581, 127
    %v6591 = vpop.permute.xlu0 %6590
    %6592 = vrot.lane.b32.xlu0 %v6582, 127
    %v6593 = vpop.permute.xlu0 %6592
    %6594 = vrot.lane.b32.xlu0 %v6583, 127
    %v6595 = vpop.permute.xlu0 %6594
    %v6600 = vadd.f32 %v6576, %v6589
    %v6601 = vadd.f32 %v6577, %v6591
    %v6602 = vadd.f32 %v6578, %v6593
    %v6603 = vadd.f32 %v6579, %v6595
    %v6604 = vmul.f32 %v57, %v6013
    %v6605 = vmul.f32 %v58, %v6013
    %v6606 = vmul.f32 %v59, %v6013
    %v6607 = vmul.f32 %v60, %v6013
    %v6612 = vrot.slane %v6604, 2
    %v6613 = vrot.slane %v6605, 2
    %v6614 = vsel %vm172, %v6612, %v6613
    %v6615 = vrot.slane %v6606, 2
    %v6616 = vsel %vm172, %v6613, %v6615
    %v6617 = vrot.slane %v6607, 2
    %v6618 = vsel %vm172, %v6615, %v6617
    %v6623 = vadd.f32 %v6600, %v6614
    %v6624 = vadd.f32 %v6601, %v6616
    %v6625 = vadd.f32 %v6602, %v6618
    %v6626 = vadd.f32 %v6603, %v6617
    %v6627 = vmul.f32 %v52, %v6022
    %v6628 = vmul.f32 %v53, %v6022
    %v6629 = vmul.f32 %v54, %v6022
    %v6630 = vmul.f32 %v55, %v6022
    %v6635 = vrot.slane %v6627, 2
    %v6636 = vrot.slane %v6628, 2
    %v6637 = vsel %vm172, %v6635, %v6636
    %v6638 = vrot.slane %v6629, 2
    %v6639 = vsel %vm172, %v6636, %v6638
    %v6640 = vrot.slane %v6630, 2
    %v6641 = vsel %vm172, %v6638, %v6640
    %6642 = vrot.lane.b32.xlu0 %v6637, 127
    %v6643 = vpop.permute.xlu0 %6642
    %6644 = vrot.lane.b32.xlu0 %v6639, 127
    %v6645 = vpop.permute.xlu0 %6644
    %6646 = vrot.lane.b32.xlu0 %v6641, 127
    %v6647 = vpop.permute.xlu0 %6646
    %6648 = vrot.lane.b32.xlu0 %v6640, 127
    %v6649 = vpop.permute.xlu0 %6648
    %v6654 = vadd.f32 %v6623, %v6643
    %v6655 = vadd.f32 %v6624, %v6645
    %v6656 = vadd.f32 %v6625, %v6647
    %v6657 = vadd.f32 %v6626, %v6649
    %v6658 = vmul.f32 %v57, %v6031
    %v6659 = vmul.f32 %v58, %v6031
    %v6660 = vmul.f32 %v59, %v6031
    %v6661 = vmul.f32 %v60, %v6031
    %v6666 = vrot.slane %v6658, 2
    %v6667 = vrot.slane %v6659, 2
    %v6668 = vsel %vm172, %v6666, %v6667
    %v6669 = vrot.slane %v6660, 2
    %v6670 = vsel %vm172, %v6667, %v6669
    %v6671 = vrot.slane %v6661, 2
    %v6672 = vsel %vm172, %v6669, %v6671
    %6673 = vrot.lane.b32.xlu0 %v6668, 127
    %v6674 = vpop.permute.xlu0 %6673
    %6675 = vrot.lane.b32.xlu0 %v6670, 127
    %v6676 = vpop.permute.xlu0 %6675
    %6677 = vrot.lane.b32.xlu0 %v6672, 127
    %v6678 = vpop.permute.xlu0 %6677
    %6679 = vrot.lane.b32.xlu0 %v6671, 127
    %v6680 = vpop.permute.xlu0 %6679
    %v6685 = vadd.f32 %v6654, %v6674
    %v6686 = vadd.f32 %v6655, %v6676
    %v6687 = vadd.f32 %v6656, %v6678
    %v6688 = vadd.f32 %v6657, %v6680
    %v6689 = vmul.f32 %v67, %v6056
    %v6690 = vmul.f32 %v68, %v6056
    %v6691 = vmul.f32 %v69, %v6056
    %v6692 = vmul.f32 %v70, %v6056
    %v6697 = vrot.slane %v6689, 2
    %v6698 = vrot.slane %v6690, 2
    %v6699 = vsel %vm172, %v6697, %v6698
    %v6700 = vrot.slane %v6691, 2
    %v6701 = vsel %vm172, %v6698, %v6700
    %v6702 = vrot.slane %v6692, 2
    %v6703 = vsel %vm172, %v6700, %v6702
    %v6708 = vadd.f32 %v6685, %v6699
    %v6709 = vadd.f32 %v6686, %v6701
    %v6710 = vadd.f32 %v6687, %v6703
    %v6711 = vadd.f32 %v6688, %v6702
    %v6712 = vmul.f32 %v62, %v6080
    %v6713 = vmul.f32 %v63, %v6080
    %v6714 = vmul.f32 %v64, %v6080
    %v6715 = vmul.f32 %v65, %v6080
    %v6720 = vrot.slane %v6712, 2
    %v6721 = vrot.slane %v6713, 2
    %v6722 = vsel %vm172, %v6720, %v6721
    %v6723 = vrot.slane %v6714, 2
    %v6724 = vsel %vm172, %v6721, %v6723
    %v6725 = vrot.slane %v6715, 2
    %v6726 = vsel %vm172, %v6723, %v6725
    %6727 = vrot.lane.b32.xlu0 %v6722, 127
    %v6728 = vpop.permute.xlu0 %6727
    %6729 = vrot.lane.b32.xlu0 %v6724, 127
    %v6730 = vpop.permute.xlu0 %6729
    %6731 = vrot.lane.b32.xlu0 %v6726, 127
    %v6732 = vpop.permute.xlu0 %6731
    %6733 = vrot.lane.b32.xlu0 %v6725, 127
    %v6734 = vpop.permute.xlu0 %6733
    %v6739 = vadd.f32 %v6708, %v6728
    %v6740 = vadd.f32 %v6709, %v6730
    %v6741 = vadd.f32 %v6710, %v6732
    %v6742 = vadd.f32 %v6711, %v6734
    %v6743 = vmul.f32 %v67, %v6104
    %v6744 = vmul.f32 %v68, %v6104
    %v6745 = vmul.f32 %v69, %v6104
    %v6746 = vmul.f32 %v70, %v6104
    %v6751 = vrot.slane %v6743, 2
    %v6752 = vrot.slane %v6744, 2
    %v6753 = vsel %vm172, %v6751, %v6752
    %v6754 = vrot.slane %v6745, 2
    %v6755 = vsel %vm172, %v6752, %v6754
    %v6756 = vrot.slane %v6746, 2
    %v6757 = vsel %vm172, %v6754, %v6756
    %6758 = vrot.lane.b32.xlu0 %v6753, 127
    %v6759 = vpop.permute.xlu0 %6758
    %6760 = vrot.lane.b32.xlu0 %v6755, 127
    %v6761 = vpop.permute.xlu0 %6760
    %6762 = vrot.lane.b32.xlu0 %v6757, 127
    %v6763 = vpop.permute.xlu0 %6762
    %6764 = vrot.lane.b32.xlu0 %v6756, 127
    %v6765 = vpop.permute.xlu0 %6764
    %v6770 = vadd.f32 %v6739, %v6759
    %v6771 = vadd.f32 %v6740, %v6761
    %v6772 = vadd.f32 %v6741, %v6763
    %v6773 = vadd.f32 %v6742, %v6765
    %v6774 = vadd.f32 %v6770, %v6136
    %v6775 = vadd.f32 %v6771, %v6136
    %v6776 = vadd.f32 %v6772, %v6136
    %v6777 = vadd.f32 %v6773, %v6136
    %v6778 = vtanh.pop %v6774
    %v6779 = vtanh.pop %v6775
    %v6780 = vtanh.pop %v6776
    %v6781 = vtanh.pop %v6777
    %v6782 = vmax.f32 %v6548, %v6778
    %v6783 = vmax.f32 %v6549, %v6779
    %v6784 = vmax.f32 %v6550, %v6780
    %v6785 = vmax.f32 %v6551, %v6781
    %6790 = vrot.lane.b32.xlu0 %v6782, 98
    %v6791 = vpop.permute.xlu0 %6790
    %6792 = vrot.lane.b32.xlu0 %v6783, 98
    %v6793 = vpop.permute.xlu0 %6792
    %6794 = vrot.lane.b32.xlu0 %v6784, 98
    %v6795 = vpop.permute.xlu0 %6794
    %6796 = vrot.lane.b32.xlu0 %v6785, 98
    %v6797 = vpop.permute.xlu0 %6796
    %vm6802 = vcmask 917264
    %6803 = vst.msk [vmem:[#allocation2] sm:$0xff] %vm6802, %v6791
    %6804 = vst.msk [vmem:[#allocation2 + $0x8] sm:$0xff] %vm6802, %v6793
    %6805 = vst.msk [vmem:[#allocation2 + $0x10] sm:$0xff] %vm6802, %v6795
    %vm6806 = vcmask 913168
    %6807 = vst.msk [vmem:[#allocation2 + $0x18] sm:$0xf] %vm6806, %v6797
    %v6808 = vld [vmem:[#allocation2] sm:$0x3]
    %v6809 = vld [vmem:[%s3] sm:$0xff]
    %v6810 = vld [vmem:[%s3 + $0x8] sm:$0xff]
    %v6811 = vld [vmem:[%s3 + $0x10] sm:$0xff]
    %v6812 = vld [vmem:[%s3 + $0x18] sm:$0xff]
    %v6813 = vld [vmem:[%s3 + $0x20] sm:$0xff]
    %v6814 = vld [vmem:[%s3 + $0x28] sm:$0xff]
    %v6815 = vld [vmem:[%s3 + $0x30] sm:$0xff]
    %v6816 = vld [vmem:[%s3 + $0x38] sm:$0xff]
    %v6817 = vld [vmem:[%s3 + $0x40] sm:$0xff]
    %v6818 = vld [vmem:[%s3 + $0x48] sm:$0xff]
    %v6819 = vld [vmem:[%s3 + $0x50] sm:$0xff]
    %v6820 = vld [vmem:[%s3 + $0x58] sm:$0xff]
    %v6821 = vld [vmem:[%s3 + $0x60] sm:$0xff]
    %v6822 = vld [vmem:[%s3 + $0x68] sm:$0xff]
    %v6823 = vld [vmem:[#allocation2 + $0x2] sm:$0x3]
    %s6824 = scalar_lea.vmem %s3, 112
    %v6825 = vld [vmem:[%s6824] sm:$0xff]
    %v6826 = vld [vmem:[%s6824 + $0x8] sm:$0xff]
    %v6827 = vld [vmem:[%s6824 + $0x10] sm:$0xff]
    %v6828 = vld [vmem:[%s6824 + $0x18] sm:$0xff]
    %v6829 = vld [vmem:[%s6824 + $0x20] sm:$0xff]
    %v6830 = vld [vmem:[%s6824 + $0x28] sm:$0xff]
    %v6831 = vld [vmem:[%s6824 + $0x30] sm:$0xff]
    %v6832 = vld [vmem:[%s6824 + $0x38] sm:$0xff]
    %v6833 = vld [vmem:[%s6824 + $0x40] sm:$0xff]
    %v6834 = vld [vmem:[%s6824 + $0x48] sm:$0xff]
    %v6835 = vld [vmem:[%s6824 + $0x50] sm:$0xff]
    %v6836 = vld [vmem:[%s6824 + $0x58] sm:$0xff]
    %v6837 = vld [vmem:[%s6824 + $0x60] sm:$0xff]
    %v6838 = vld [vmem:[%s6824 + $0x68] sm:$0xff]
    %vm6839 = vcmask 916480
    %v6841 = vsel %vm6839, %v6823, 0
    %6843 = vmatpush.msra.mxu0 0.0
    %6844 = vmatpush.msra.mxu0 0.0
    %6845 = vmatpush.msra.mxu0 %v6838
    %6846 = vmatpush.msra.mxu0 %v6837
    %6847 = vmatpush.msra.mxu0 %v6836
    %6848 = vmatpush.msra.mxu0 %v6835
    %6849 = vmatpush.msra.mxu0 %v6834
    %6850 = vmatpush.msra.mxu0 %v6833
    %6851 = vmatpush.msra.mxu0 %v6832
    %6852 = vmatpush.msra.mxu0 %v6831
    %6853 = vmatpush.msra.mxu0 %v6830
    %6854 = vmatpush.msra.mxu0 %v6829
    %6855 = vmatpush.msra.mxu0 %v6828
    %6856 = vmatpush.msra.mxu0 %v6827
    %6857 = vmatpush.msra.mxu0 %v6826
    %6858 = vmatpush.msra.mxu0 %v6825
    %6859 = vmatmul.f32.gmra.mxu0 %v6841
    %v6860 = vpop.f32.mrf.mxu0
    %v6861 = vadd.f32 0.0, %v6860
    %6862 = vdwg.mxu0
    %v6864 = vsel %vm6839, %v6808, 0
    %6866 = vmatpush.msra.mxu0 0.0
    %6867 = vmatpush.msra.mxu0 0.0
    %6868 = vmatpush.msra.mxu0 %v6822
    %6869 = vmatpush.msra.mxu0 %v6821
    %6870 = vmatpush.msra.mxu0 %v6820
    %6871 = vmatpush.msra.mxu0 %v6819
    %6872 = vmatpush.msra.mxu0 %v6818
    %6873 = vmatpush.msra.mxu0 %v6817
    %6874 = vmatpush.msra.mxu0 %v6816
    %6875 = vmatpush.msra.mxu0 %v6815
    %6876 = vmatpush.msra.mxu0 %v6814
    %6877 = vmatpush.msra.mxu0 %v6813
    %6878 = vmatpush.msra.mxu0 %v6812
    %6879 = vmatpush.msra.mxu0 %v6811
    %6880 = vmatpush.msra.mxu0 %v6810
    %6881 = vmatpush.msra.mxu0 %v6809
    %6882 = vmatmul.f32.gmra.mxu0 %v6864
    %v6883 = vpop.f32.mrf.mxu0
    %v6884 = vadd.f32 %v6861, %v6883
    %6885 = vdwg.mxu0
    %v6886 = vld [vmem:[#allocation2 + $0x4] sm:$0x3]
    %s6887 = scalar_lea.vmem %s3, 224
    %v6888 = vld [vmem:[%s6887] sm:$0xff]
    %v6889 = vld [vmem:[%s6887 + $0x8] sm:$0xff]
    %v6890 = vld [vmem:[%s6887 + $0x10] sm:$0xff]
    %v6891 = vld [vmem:[%s6887 + $0x18] sm:$0xff]
    %v6892 = vld [vmem:[%s6887 + $0x20] sm:$0xff]
    %v6893 = vld [vmem:[%s6887 + $0x28] sm:$0xff]
    %v6894 = vld [vmem:[%s6887 + $0x30] sm:$0xff]
    %v6895 = vld [vmem:[%s6887 + $0x38] sm:$0xff]
    %v6896 = vld [vmem:[%s6887 + $0x40] sm:$0xff]
    %v6897 = vld [vmem:[%s6887 + $0x48] sm:$0xff]
    %v6898 = vld [vmem:[%s6887 + $0x50] sm:$0xff]
    %v6899 = vld [vmem:[%s6887 + $0x58] sm:$0xff]
    %v6900 = vld [vmem:[%s6887 + $0x60] sm:$0xff]
    %v6901 = vld [vmem:[%s6887 + $0x68] sm:$0xff]
    %v6903 = vsel %vm6839, %v6886, 0
    %6905 = vmatpush.msra.mxu0 0.0
    %6906 = vmatpush.msra.mxu0 0.0
    %6907 = vmatpush.msra.mxu0 %v6901
    %6908 = vmatpush.msra.mxu0 %v6900
    %6909 = vmatpush.msra.mxu0 %v6899
    %6910 = vmatpush.msra.mxu0 %v6898
    %6911 = vmatpush.msra.mxu0 %v6897
    %6912 = vmatpush.msra.mxu0 %v6896
    %6913 = vmatpush.msra.mxu0 %v6895
    %6914 = vmatpush.msra.mxu0 %v6894
    %6915 = vmatpush.msra.mxu0 %v6893
    %6916 = vmatpush.msra.mxu0 %v6892
    %6917 = vmatpush.msra.mxu0 %v6891
    %6918 = vmatpush.msra.mxu0 %v6890
    %6919 = vmatpush.msra.mxu0 %v6889
    %6920 = vmatpush.msra.mxu0 %v6888
    %6921 = vmatmul.f32.gmra.mxu0 %v6903
    %v6922 = vpop.f32.mrf.mxu0
    %v6923 = vadd.f32 0.0, %v6922
    %6924 = vdwg.mxu0
    %v6925 = vadd.f32 %v6884, %v6923
    %v6926 = vld [vmem:[#allocation2 + $0x6] sm:$0x3]
    %s6927 = scalar_lea.vmem %s3, 336
    %v6928 = vld [vmem:[%s6927] sm:$0xff]
    %v6929 = vld [vmem:[%s6927 + $0x8] sm:$0xff]
    %v6930 = vld [vmem:[%s6927 + $0x10] sm:$0xff]
    %v6931 = vld [vmem:[%s6927 + $0x18] sm:$0xff]
    %v6932 = vld [vmem:[%s6927 + $0x20] sm:$0xff]
    %v6933 = vld [vmem:[%s6927 + $0x28] sm:$0xff]
    %v6934 = vld [vmem:[%s6927 + $0x30] sm:$0xff]
    %v6935 = vld [vmem:[%s6927 + $0x38] sm:$0xff]
    %v6936 = vld [vmem:[%s6927 + $0x40] sm:$0xff]
    %v6937 = vld [vmem:[%s6927 + $0x48] sm:$0xff]
    %v6938 = vld [vmem:[%s6927 + $0x50] sm:$0xff]
    %v6939 = vld [vmem:[%s6927 + $0x58] sm:$0xff]
    %v6940 = vld [vmem:[%s6927 + $0x60] sm:$0xff]
    %v6941 = vld [vmem:[%s6927 + $0x68] sm:$0xff]
    %v6943 = vsel %vm6839, %v6926, 0
    %6945 = vmatpush.msra.mxu0 0.0
    %6946 = vmatpush.msra.mxu0 0.0
    %6947 = vmatpush.msra.mxu0 %v6941
    %6948 = vmatpush.msra.mxu0 %v6940
    %6949 = vmatpush.msra.mxu0 %v6939
    %6950 = vmatpush.msra.mxu0 %v6938
    %6951 = vmatpush.msra.mxu0 %v6937
    %6952 = vmatpush.msra.mxu0 %v6936
    %6953 = vmatpush.msra.mxu0 %v6935
    %6954 = vmatpush.msra.mxu0 %v6934
    %6955 = vmatpush.msra.mxu0 %v6933
    %6956 = vmatpush.msra.mxu0 %v6932
    %6957 = vmatpush.msra.mxu0 %v6931
    %6958 = vmatpush.msra.mxu0 %v6930
    %6959 = vmatpush.msra.mxu0 %v6929
    %6960 = vmatpush.msra.mxu0 %v6928
    %6961 = vmatmul.f32.gmra.mxu0 %v6943
    %v6962 = vpop.f32.mrf.mxu0
    %v6963 = vadd.f32 0.0, %v6962
    %6964 = vdwg.mxu0
    %v6965 = vadd.f32 %v6925, %v6963
    %v6966 = vld [vmem:[#allocation2 + $0x8] sm:$0x3]
    %s6967 = scalar_lea.vmem %s3, 448
    %v6968 = vld [vmem:[%s6967] sm:$0xff]
    %v6969 = vld [vmem:[%s6967 + $0x8] sm:$0xff]
    %v6970 = vld [vmem:[%s6967 + $0x10] sm:$0xff]
    %v6971 = vld [vmem:[%s6967 + $0x18] sm:$0xff]
    %v6972 = vld [vmem:[%s6967 + $0x20] sm:$0xff]
    %v6973 = vld [vmem:[%s6967 + $0x28] sm:$0xff]
    %v6974 = vld [vmem:[%s6967 + $0x30] sm:$0xff]
    %v6975 = vld [vmem:[%s6967 + $0x38] sm:$0xff]
    %v6976 = vld [vmem:[%s6967 + $0x40] sm:$0xff]
    %v6977 = vld [vmem:[%s6967 + $0x48] sm:$0xff]
    %v6978 = vld [vmem:[%s6967 + $0x50] sm:$0xff]
    %v6979 = vld [vmem:[%s6967 + $0x58] sm:$0xff]
    %v6980 = vld [vmem:[%s6967 + $0x60] sm:$0xff]
    %v6981 = vld [vmem:[%s6967 + $0x68] sm:$0xff]
    %v6983 = vsel %vm6839, %v6966, 0
    %6985 = vmatpush.msra.mxu0 0.0
    %6986 = vmatpush.msra.mxu0 0.0
    %6987 = vmatpush.msra.mxu0 %v6981
    %6988 = vmatpush.msra.mxu0 %v6980
    %6989 = vmatpush.msra.mxu0 %v6979
    %6990 = vmatpush.msra.mxu0 %v6978
    %6991 = vmatpush.msra.mxu0 %v6977
    %6992 = vmatpush.msra.mxu0 %v6976
    %6993 = vmatpush.msra.mxu0 %v6975
    %6994 = vmatpush.msra.mxu0 %v6974
    %6995 = vmatpush.msra.mxu0 %v6973
    %6996 = vmatpush.msra.mxu0 %v6972
    %6997 = vmatpush.msra.mxu0 %v6971
    %6998 = vmatpush.msra.mxu0 %v6970
    %6999 = vmatpush.msra.mxu0 %v6969
    %7000 = vmatpush.msra.mxu0 %v6968
    %7001 = vmatmul.f32.gmra.mxu0 %v6983
    %v7002 = vpop.f32.mrf.mxu0
    %v7003 = vadd.f32 0.0, %v7002
    %7004 = vdwg.mxu0
    %v7005 = vadd.f32 %v6965, %v7003
    %v7006 = vld [vmem:[#allocation2 + $0xa] sm:$0x3]
    %s7007 = scalar_lea.vmem %s3, 560
    %v7008 = vld [vmem:[%s7007] sm:$0xff]
    %v7009 = vld [vmem:[%s7007 + $0x8] sm:$0xff]
    %v7010 = vld [vmem:[%s7007 + $0x10] sm:$0xff]
    %v7011 = vld [vmem:[%s7007 + $0x18] sm:$0xff]
    %v7012 = vld [vmem:[%s7007 + $0x20] sm:$0xff]
    %v7013 = vld [vmem:[%s7007 + $0x28] sm:$0xff]
    %v7014 = vld [vmem:[%s7007 + $0x30] sm:$0xff]
    %v7015 = vld [vmem:[%s7007 + $0x38] sm:$0xff]
    %v7016 = vld [vmem:[%s7007 + $0x40] sm:$0xff]
    %v7017 = vld [vmem:[%s7007 + $0x48] sm:$0xff]
    %v7018 = vld [vmem:[%s7007 + $0x50] sm:$0xff]
    %v7019 = vld [vmem:[%s7007 + $0x58] sm:$0xff]
    %v7020 = vld [vmem:[%s7007 + $0x60] sm:$0xff]
    %v7021 = vld [vmem:[%s7007 + $0x68] sm:$0xff]
    %v7023 = vsel %vm6839, %v7006, 0
    %7025 = vmatpush.msra.mxu0 0.0
    %7026 = vmatpush.msra.mxu0 0.0
    %7027 = vmatpush.msra.mxu0 %v7021
    %7028 = vmatpush.msra.mxu0 %v7020
    %7029 = vmatpush.msra.mxu0 %v7019
    %7030 = vmatpush.msra.mxu0 %v7018
    %7031 = vmatpush.msra.mxu0 %v7017
    %7032 = vmatpush.msra.mxu0 %v7016
    %7033 = vmatpush.msra.mxu0 %v7015
    %7034 = vmatpush.msra.mxu0 %v7014
    %7035 = vmatpush.msra.mxu0 %v7013
    %7036 = vmatpush.msra.mxu0 %v7012
    %7037 = vmatpush.msra.mxu0 %v7011
    %7038 = vmatpush.msra.mxu0 %v7010
    %7039 = vmatpush.msra.mxu0 %v7009
    %7040 = vmatpush.msra.mxu0 %v7008
    %7041 = vmatmul.f32.gmra.mxu0 %v7023
    %v7042 = vpop.f32.mrf.mxu0
    %v7043 = vadd.f32 0.0, %v7042
    %7044 = vdwg.mxu0
    %v7045 = vadd.f32 %v7005, %v7043
    %v7046 = vld [vmem:[#allocation2 + $0xc] sm:$0x3]
    %s7047 = scalar_lea.vmem %s3, 672
    %v7048 = vld [vmem:[%s7047] sm:$0xff]
    %v7049 = vld [vmem:[%s7047 + $0x8] sm:$0xff]
    %v7050 = vld [vmem:[%s7047 + $0x10] sm:$0xff]
    %v7051 = vld [vmem:[%s7047 + $0x18] sm:$0xff]
    %v7052 = vld [vmem:[%s7047 + $0x20] sm:$0xff]
    %v7053 = vld [vmem:[%s7047 + $0x28] sm:$0xff]
    %v7054 = vld [vmem:[%s7047 + $0x30] sm:$0xff]
    %v7055 = vld [vmem:[%s7047 + $0x38] sm:$0xff]
    %v7056 = vld [vmem:[%s7047 + $0x40] sm:$0xff]
    %v7057 = vld [vmem:[%s7047 + $0x48] sm:$0xff]
    %v7058 = vld [vmem:[%s7047 + $0x50] sm:$0xff]
    %v7059 = vld [vmem:[%s7047 + $0x58] sm:$0xff]
    %v7060 = vld [vmem:[%s7047 + $0x60] sm:$0xff]
    %v7061 = vld [vmem:[%s7047 + $0x68] sm:$0xff]
    %v7063 = vsel %vm6839, %v7046, 0
    %7065 = vmatpush.msra.mxu0 0.0
    %7066 = vmatpush.msra.mxu0 0.0
    %7067 = vmatpush.msra.mxu0 %v7061
    %7068 = vmatpush.msra.mxu0 %v7060
    %7069 = vmatpush.msra.mxu0 %v7059
    %7070 = vmatpush.msra.mxu0 %v7058
    %7071 = vmatpush.msra.mxu0 %v7057
    %7072 = vmatpush.msra.mxu0 %v7056
    %7073 = vmatpush.msra.mxu0 %v7055
    %7074 = vmatpush.msra.mxu0 %v7054
    %7075 = vmatpush.msra.mxu0 %v7053
    %7076 = vmatpush.msra.mxu0 %v7052
    %7077 = vmatpush.msra.mxu0 %v7051
    %7078 = vmatpush.msra.mxu0 %v7050
    %7079 = vmatpush.msra.mxu0 %v7049
    %7080 = vmatpush.msra.mxu0 %v7048
    %7081 = vmatmul.f32.gmra.mxu0 %v7063
    %v7082 = vpop.f32.mrf.mxu0
    %v7083 = vadd.f32 0.0, %v7082
    %7084 = vdwg.mxu0
    %v7085 = vadd.f32 %v7045, %v7083
    %v7086 = vld [vmem:[#allocation2 + $0xe] sm:$0x3]
    %s7087 = scalar_lea.vmem %s3, 784
    %v7088 = vld [vmem:[%s7087] sm:$0xff]
    %v7089 = vld [vmem:[%s7087 + $0x8] sm:$0xff]
    %v7090 = vld [vmem:[%s7087 + $0x10] sm:$0xff]
    %v7091 = vld [vmem:[%s7087 + $0x18] sm:$0xff]
    %v7092 = vld [vmem:[%s7087 + $0x20] sm:$0xff]
    %v7093 = vld [vmem:[%s7087 + $0x28] sm:$0xff]
    %v7094 = vld [vmem:[%s7087 + $0x30] sm:$0xff]
    %v7095 = vld [vmem:[%s7087 + $0x38] sm:$0xff]
    %v7096 = vld [vmem:[%s7087 + $0x40] sm:$0xff]
    %v7097 = vld [vmem:[%s7087 + $0x48] sm:$0xff]
    %v7098 = vld [vmem:[%s7087 + $0x50] sm:$0xff]
    %v7099 = vld [vmem:[%s7087 + $0x58] sm:$0xff]
    %v7100 = vld [vmem:[%s7087 + $0x60] sm:$0xff]
    %v7101 = vld [vmem:[%s7087 + $0x68] sm:$0xff]
    %v7103 = vsel %vm6839, %v7086, 0
    %7105 = vmatpush.msra.mxu0 0.0
    %7106 = vmatpush.msra.mxu0 0.0
    %7107 = vmatpush.msra.mxu0 %v7101
    %7108 = vmatpush.msra.mxu0 %v7100
    %7109 = vmatpush.msra.mxu0 %v7099
    %7110 = vmatpush.msra.mxu0 %v7098
    %7111 = vmatpush.msra.mxu0 %v7097
    %7112 = vmatpush.msra.mxu0 %v7096
    %7113 = vmatpush.msra.mxu0 %v7095
    %7114 = vmatpush.msra.mxu0 %v7094
    %7115 = vmatpush.msra.mxu0 %v7093
    %7116 = vmatpush.msra.mxu0 %v7092
    %7117 = vmatpush.msra.mxu0 %v7091
    %7118 = vmatpush.msra.mxu0 %v7090
    %7119 = vmatpush.msra.mxu0 %v7089
    %7120 = vmatpush.msra.mxu0 %v7088
    %7121 = vmatmul.f32.gmra.mxu0 %v7103
    %v7122 = vpop.f32.mrf.mxu0
    %v7123 = vadd.f32 0.0, %v7122
    %7124 = vdwg.mxu0
    %v7125 = vadd.f32 %v7085, %v7123
    %v7126 = vld [vmem:[#allocation2 + $0x10] sm:$0x3]
    %s7127 = scalar_lea.vmem %s3, 896
    %v7128 = vld [vmem:[%s7127] sm:$0xff]
    %v7129 = vld [vmem:[%s7127 + $0x8] sm:$0xff]
    %v7130 = vld [vmem:[%s7127 + $0x10] sm:$0xff]
    %v7131 = vld [vmem:[%s7127 + $0x18] sm:$0xff]
    %v7132 = vld [vmem:[%s7127 + $0x20] sm:$0xff]
    %v7133 = vld [vmem:[%s7127 + $0x28] sm:$0xff]
    %v7134 = vld [vmem:[%s7127 + $0x30] sm:$0xff]
    %v7135 = vld [vmem:[%s7127 + $0x38] sm:$0xff]
    %v7136 = vld [vmem:[%s7127 + $0x40] sm:$0xff]
    %v7137 = vld [vmem:[%s7127 + $0x48] sm:$0xff]
    %v7138 = vld [vmem:[%s7127 + $0x50] sm:$0xff]
    %v7139 = vld [vmem:[%s7127 + $0x58] sm:$0xff]
    %v7140 = vld [vmem:[%s7127 + $0x60] sm:$0xff]
    %v7141 = vld [vmem:[%s7127 + $0x68] sm:$0xff]
    %v7143 = vsel %vm6839, %v7126, 0
    %7145 = vmatpush.msra.mxu0 0.0
    %7146 = vmatpush.msra.mxu0 0.0
    %7147 = vmatpush.msra.mxu0 %v7141
    %7148 = vmatpush.msra.mxu0 %v7140
    %7149 = vmatpush.msra.mxu0 %v7139
    %7150 = vmatpush.msra.mxu0 %v7138
    %7151 = vmatpush.msra.mxu0 %v7137
    %7152 = vmatpush.msra.mxu0 %v7136
    %7153 = vmatpush.msra.mxu0 %v7135
    %7154 = vmatpush.msra.mxu0 %v7134
    %7155 = vmatpush.msra.mxu0 %v7133
    %7156 = vmatpush.msra.mxu0 %v7132
    %7157 = vmatpush.msra.mxu0 %v7131
    %7158 = vmatpush.msra.mxu0 %v7130
    %7159 = vmatpush.msra.mxu0 %v7129
    %7160 = vmatpush.msra.mxu0 %v7128
    %7161 = vmatmul.f32.gmra.mxu0 %v7143
    %v7162 = vpop.f32.mrf.mxu0
    %v7163 = vadd.f32 0.0, %v7162
    %7164 = vdwg.mxu0
    %v7165 = vadd.f32 %v7125, %v7163
    %v7166 = vld [vmem:[#allocation2 + $0x12] sm:$0x3]
    %s7167 = scalar_lea.vmem %s3, 1008
    %v7168 = vld [vmem:[%s7167] sm:$0xff]
    %v7169 = vld [vmem:[%s7167 + $0x8] sm:$0xff]
    %v7170 = vld [vmem:[%s7167 + $0x10] sm:$0xff]
    %v7171 = vld [vmem:[%s7167 + $0x18] sm:$0xff]
    %v7172 = vld [vmem:[%s7167 + $0x20] sm:$0xff]
    %v7173 = vld [vmem:[%s7167 + $0x28] sm:$0xff]
    %v7174 = vld [vmem:[%s7167 + $0x30] sm:$0xff]
    %v7175 = vld [vmem:[%s7167 + $0x38] sm:$0xff]
    %v7176 = vld [vmem:[%s7167 + $0x40] sm:$0xff]
    %v7177 = vld [vmem:[%s7167 + $0x48] sm:$0xff]
    %v7178 = vld [vmem:[%s7167 + $0x50] sm:$0xff]
    %v7179 = vld [vmem:[%s7167 + $0x58] sm:$0xff]
    %v7180 = vld [vmem:[%s7167 + $0x60] sm:$0xff]
    %v7181 = vld [vmem:[%s7167 + $0x68] sm:$0xff]
    %v7183 = vsel %vm6839, %v7166, 0
    %7185 = vmatpush.msra.mxu0 0.0
    %7186 = vmatpush.msra.mxu0 0.0
    %7187 = vmatpush.msra.mxu0 %v7181
    %7188 = vmatpush.msra.mxu0 %v7180
    %7189 = vmatpush.msra.mxu0 %v7179
    %7190 = vmatpush.msra.mxu0 %v7178
    %7191 = vmatpush.msra.mxu0 %v7177
    %7192 = vmatpush.msra.mxu0 %v7176
    %7193 = vmatpush.msra.mxu0 %v7175
    %7194 = vmatpush.msra.mxu0 %v7174
    %7195 = vmatpush.msra.mxu0 %v7173
    %7196 = vmatpush.msra.mxu0 %v7172
    %7197 = vmatpush.msra.mxu0 %v7171
    %7198 = vmatpush.msra.mxu0 %v7170
    %7199 = vmatpush.msra.mxu0 %v7169
    %7200 = vmatpush.msra.mxu0 %v7168
    %7201 = vmatmul.f32.gmra.mxu0 %v7183
    %v7202 = vpop.f32.mrf.mxu0
    %v7203 = vadd.f32 0.0, %v7202
    %7204 = vdwg.mxu0
    %v7205 = vadd.f32 %v7165, %v7203
    %v7206 = vld [vmem:[#allocation2 + $0x14] sm:$0x3]
    %s7207 = scalar_lea.vmem %s3, 1120
    %v7208 = vld [vmem:[%s7207] sm:$0xff]
    %v7209 = vld [vmem:[%s7207 + $0x8] sm:$0xff]
    %v7210 = vld [vmem:[%s7207 + $0x10] sm:$0xff]
    %v7211 = vld [vmem:[%s7207 + $0x18] sm:$0xff]
    %v7212 = vld [vmem:[%s7207 + $0x20] sm:$0xff]
    %v7213 = vld [vmem:[%s7207 + $0x28] sm:$0xff]
    %v7214 = vld [vmem:[%s7207 + $0x30] sm:$0xff]
    %v7215 = vld [vmem:[%s7207 + $0x38] sm:$0xff]
    %v7216 = vld [vmem:[%s7207 + $0x40] sm:$0xff]
    %v7217 = vld [vmem:[%s7207 + $0x48] sm:$0xff]
    %v7218 = vld [vmem:[%s7207 + $0x50] sm:$0xff]
    %v7219 = vld [vmem:[%s7207 + $0x58] sm:$0xff]
    %v7220 = vld [vmem:[%s7207 + $0x60] sm:$0xff]
    %v7221 = vld [vmem:[%s7207 + $0x68] sm:$0xff]
    %v7223 = vsel %vm6839, %v7206, 0
    %7225 = vmatpush.msra.mxu0 0.0
    %7226 = vmatpush.msra.mxu0 0.0
    %7227 = vmatpush.msra.mxu0 %v7221
    %7228 = vmatpush.msra.mxu0 %v7220
    %7229 = vmatpush.msra.mxu0 %v7219
    %7230 = vmatpush.msra.mxu0 %v7218
    %7231 = vmatpush.msra.mxu0 %v7217
    %7232 = vmatpush.msra.mxu0 %v7216
    %7233 = vmatpush.msra.mxu0 %v7215
    %7234 = vmatpush.msra.mxu0 %v7214
    %7235 = vmatpush.msra.mxu0 %v7213
    %7236 = vmatpush.msra.mxu0 %v7212
    %7237 = vmatpush.msra.mxu0 %v7211
    %7238 = vmatpush.msra.mxu0 %v7210
    %7239 = vmatpush.msra.mxu0 %v7209
    %7240 = vmatpush.msra.mxu0 %v7208
    %7241 = vmatmul.f32.gmra.mxu0 %v7223
    %v7242 = vpop.f32.mrf.mxu0
    %v7243 = vadd.f32 0.0, %v7242
    %7244 = vdwg.mxu0
    %v7245 = vadd.f32 %v7205, %v7243
    %v7246 = vld [vmem:[#allocation2 + $0x16] sm:$0x3]
    %s7247 = scalar_lea.vmem %s3, 1232
    %v7248 = vld [vmem:[%s7247] sm:$0xff]
    %v7249 = vld [vmem:[%s7247 + $0x8] sm:$0xff]
    %v7250 = vld [vmem:[%s7247 + $0x10] sm:$0xff]
    %v7251 = vld [vmem:[%s7247 + $0x18] sm:$0xff]
    %v7252 = vld [vmem:[%s7247 + $0x20] sm:$0xff]
    %v7253 = vld [vmem:[%s7247 + $0x28] sm:$0xff]
    %v7254 = vld [vmem:[%s7247 + $0x30] sm:$0xff]
    %v7255 = vld [vmem:[%s7247 + $0x38] sm:$0xff]
    %v7256 = vld [vmem:[%s7247 + $0x40] sm:$0xff]
    %v7257 = vld [vmem:[%s7247 + $0x48] sm:$0xff]
    %v7258 = vld [vmem:[%s7247 + $0x50] sm:$0xff]
    %v7259 = vld [vmem:[%s7247 + $0x58] sm:$0xff]
    %v7260 = vld [vmem:[%s7247 + $0x60] sm:$0xff]
    %v7261 = vld [vmem:[%s7247 + $0x68] sm:$0xff]
    %v7263 = vsel %vm6839, %v7246, 0
    %7265 = vmatpush.msra.mxu0 0.0
    %7266 = vmatpush.msra.mxu0 0.0
    %7267 = vmatpush.msra.mxu0 %v7261
    %7268 = vmatpush.msra.mxu0 %v7260
    %7269 = vmatpush.msra.mxu0 %v7259
    %7270 = vmatpush.msra.mxu0 %v7258
    %7271 = vmatpush.msra.mxu0 %v7257
    %7272 = vmatpush.msra.mxu0 %v7256
    %7273 = vmatpush.msra.mxu0 %v7255
    %7274 = vmatpush.msra.mxu0 %v7254
    %7275 = vmatpush.msra.mxu0 %v7253
    %7276 = vmatpush.msra.mxu0 %v7252
    %7277 = vmatpush.msra.mxu0 %v7251
    %7278 = vmatpush.msra.mxu0 %v7250
    %7279 = vmatpush.msra.mxu0 %v7249
    %7280 = vmatpush.msra.mxu0 %v7248
    %7281 = vmatmul.f32.gmra.mxu0 %v7263
    %v7282 = vpop.f32.mrf.mxu0
    %v7283 = vadd.f32 0.0, %v7282
    %7284 = vdwg.mxu0
    %v7285 = vadd.f32 %v7245, %v7283
    %v7286 = vld [vmem:[#allocation2 + $0x18] sm:$0x3]
    %s7287 = scalar_lea.vmem %s3, 1344
    %v7288 = vld [vmem:[%s7287] sm:$0xff]
    %v7289 = vld [vmem:[%s7287 + $0x8] sm:$0xff]
    %v7290 = vld [vmem:[%s7287 + $0x10] sm:$0xff]
    %v7291 = vld [vmem:[%s7287 + $0x18] sm:$0xff]
    %v7292 = vld [vmem:[%s7287 + $0x20] sm:$0xff]
    %v7293 = vld [vmem:[%s7287 + $0x28] sm:$0xff]
    %v7294 = vld [vmem:[%s7287 + $0x30] sm:$0xff]
    %v7295 = vld [vmem:[%s7287 + $0x38] sm:$0xff]
    %v7296 = vld [vmem:[%s7287 + $0x40] sm:$0xff]
    %v7297 = vld [vmem:[%s7287 + $0x48] sm:$0xff]
    %v7298 = vld [vmem:[%s7287 + $0x50] sm:$0xff]
    %v7299 = vld [vmem:[%s7287 + $0x58] sm:$0xff]
    %v7300 = vld [vmem:[%s7287 + $0x60] sm:$0xff]
    %v7301 = vld [vmem:[%s7287 + $0x68] sm:$0xff]
    %v7303 = vsel %vm6839, %v7286, 0
    %7305 = vmatpush.msra.mxu0 0.0
    %7306 = vmatpush.msra.mxu0 0.0
    %7307 = vmatpush.msra.mxu0 %v7301
    %7308 = vmatpush.msra.mxu0 %v7300
    %7309 = vmatpush.msra.mxu0 %v7299
    %7310 = vmatpush.msra.mxu0 %v7298
    %7311 = vmatpush.msra.mxu0 %v7297
    %7312 = vmatpush.msra.mxu0 %v7296
    %7313 = vmatpush.msra.mxu0 %v7295
    %7314 = vmatpush.msra.mxu0 %v7294
    %7315 = vmatpush.msra.mxu0 %v7293
    %7316 = vmatpush.msra.mxu0 %v7292
    %7317 = vmatpush.msra.mxu0 %v7291
    %7318 = vmatpush.msra.mxu0 %v7290
    %7319 = vmatpush.msra.mxu0 %v7289
    %7320 = vmatpush.msra.mxu0 %v7288
    %7321 = vmatmul.f32.gmra.mxu0 %v7303
    %v7322 = vpop.f32.mrf.mxu0
    %v7323 = vadd.f32 0.0, %v7322
    %7324 = vdwg.mxu0
    %v7325 = vadd.f32 %v7285, %v7323
    %v7326 = vld [vmem:[#allocation2 + $0x1a] sm:$0x3]
    %s7327 = scalar_lea.vmem %s3, 1456
    %v7328 = vld [vmem:[%s7327] sm:$0xff]
    %v7329 = vld [vmem:[%s7327 + $0x8] sm:$0xff]
    %v7330 = vld [vmem:[%s7327 + $0x10] sm:$0xff]
    %v7331 = vld [vmem:[%s7327 + $0x18] sm:$0xff]
    %v7332 = vld [vmem:[%s7327 + $0x20] sm:$0xff]
    %v7333 = vld [vmem:[%s7327 + $0x28] sm:$0xff]
    %v7334 = vld [vmem:[%s7327 + $0x30] sm:$0xff]
    %v7335 = vld [vmem:[%s7327 + $0x38] sm:$0xff]
    %v7336 = vld [vmem:[%s7327 + $0x40] sm:$0xff]
    %v7337 = vld [vmem:[%s7327 + $0x48] sm:$0xff]
    %v7338 = vld [vmem:[%s7327 + $0x50] sm:$0xff]
    %v7339 = vld [vmem:[%s7327 + $0x58] sm:$0xff]
    %v7340 = vld [vmem:[%s7327 + $0x60] sm:$0xff]
    %v7341 = vld [vmem:[%s7327 + $0x68] sm:$0xff]
    %v7343 = vsel %vm6839, %v7326, 0
    %7345 = vmatpush.msra.mxu0 0.0
    %7346 = vmatpush.msra.mxu0 0.0
    %7347 = vmatpush.msra.mxu0 %v7341
    %7348 = vmatpush.msra.mxu0 %v7340
    %7349 = vmatpush.msra.mxu0 %v7339
    %7350 = vmatpush.msra.mxu0 %v7338
    %7351 = vmatpush.msra.mxu0 %v7337
    %7352 = vmatpush.msra.mxu0 %v7336
    %7353 = vmatpush.msra.mxu0 %v7335
    %7354 = vmatpush.msra.mxu0 %v7334
    %7355 = vmatpush.msra.mxu0 %v7333
    %7356 = vmatpush.msra.mxu0 %v7332
    %7357 = vmatpush.msra.mxu0 %v7331
    %7358 = vmatpush.msra.mxu0 %v7330
    %7359 = vmatpush.msra.mxu0 %v7329
    %7360 = vmatpush.msra.mxu0 %v7328
    %7361 = vmatmul.f32.gmra.mxu0 %v7343
    %v7362 = vpop.f32.mrf.mxu0
    %v7363 = vadd.f32 0.0, %v7362
    %7364 = vdwg.mxu0
    %v7365 = vadd.f32 %v7325, %v7363
    %v7366 = vld [vmem:[%s4] sm:$0x1]
    %v7368 = vperm.slane %v7366, 0
    %v7370 = vadd.f32 %v7365, %v7368
    %v7371 = vmax.f32 %v7370, 0.0
    %v7372 = vld [vmem:[%s5] sm:$0xff]
    %v7373 = vld [vmem:[%s5 + $0x8] sm:$0xff]
    %v7374 = vld [vmem:[%s5 + $0x10] sm:$0xff]
    %v7375 = vld [vmem:[%s5 + $0x18] sm:$0xff]
    %v7376 = vld [vmem:[%s5 + $0x20] sm:$0xff]
    %v7377 = vld [vmem:[%s5 + $0x28] sm:$0xff]
    %v7378 = vld [vmem:[%s5 + $0x30] sm:$0xff]
    %v7379 = vld [vmem:[%s5 + $0x38] sm:$0xff]
    %v7380 = vld [vmem:[%s5 + $0x40] sm:$0xff]
    %v7381 = vld [vmem:[%s5 + $0x48] sm:$0xff]
    %v7382 = vld [vmem:[%s5 + $0x50] sm:$0xff]
    %v7383 = vld [vmem:[%s5 + $0x58] sm:$0xff]
    %v7384 = vld [vmem:[%s5 + $0x60] sm:$0xf]
    %v7385 = vld [vmem:[%s6] sm:$0x1]
    %v7387 = vperm.slane %v7385, 0
    %vm7389 = vcmask 818176
    %v7391 = vsel %vm7389, %v7371, 0
    %vm7393 = vcmask 1043456
    %v7395 = vsel %vm7393, %v7384, 0
    %7397 = vmatpush.msra.mxu0 0.0
    %7398 = vmatpush.msra.mxu0 0.0
    %7399 = vmatpush.msra.mxu0 0.0
    %7400 = vmatpush.msra.mxu0 %v7395
    %7401 = vmatpush.msra.mxu0 %v7383
    %7402 = vmatpush.msra.mxu0 %v7382
    %7403 = vmatpush.msra.mxu0 %v7381
    %7404 = vmatpush.msra.mxu0 %v7380
    %7405 = vmatpush.msra.mxu0 %v7379
    %7406 = vmatpush.msra.mxu0 %v7378
    %7407 = vmatpush.msra.mxu0 %v7377
    %7408 = vmatpush.msra.mxu0 %v7376
    %7409 = vmatpush.msra.mxu0 %v7375
    %7410 = vmatpush.msra.mxu0 %v7374
    %7411 = vmatpush.msra.mxu0 %v7373
    %7412 = vmatpush.msra.mxu0 %v7372
    %7413 = vmatmul.f32.gmra.mxu0 %v7391
    %v7414 = vpop.f32.mrf.mxu0
    %v7415 = vadd.f32 %v7387, %v7414
    %7416 = vdwg.mxu0
    %vm7417 = vcmask 74752
    %7418 = vst.msk [vmem:[#allocation8] sm:$0x3] %vm7417, %v7415
    // Predicated region
    $region38: #{forward.1} parent=1 // pred_check
      _
    $region39: #{forward.1} parent=1 // pred_check_branch
      %7420 = sbr.rel (0) target = $region41
    $region40: #{forward.1} parent=1 // pred_region
      %7422 = vsyncadd [#allocation4], 0
      %s7424 = sshll.u32 [#allocation8], 4
      %s7425 = int_to_ptr.vmem [resolvable:$true] %s7424
      %s7426 = sshll.u32 %s7, 4
      %s7427 = int_to_ptr.hbm [resolvable:$true] %s7426
      %7429 = dma.vmem_to_hbm [thread:$0]  %s7425, 32, %s7427, [#allocation4]
    $region41: #{forward.1} parent=1 // pred_fallthru
      _
    // Predicated region
    $region42: #{forward.1} parent=1 // pred_check
      _
    $region43: #{forward.1} parent=1 // pred_check_branch
      %7431 = sbr.rel (0) target = $region45
    $region44: #{forward.1} parent=1 // pred_region
      %7433 = dma.done [#allocation4], 32
    $region45: #{forward.1} parent=1 // pred_fallthru
      _
    %7434 = vsyncpa [#allocation4], 1
    %7435 = vsyncpa [#allocation5], 1
    %7436 = vsyncpa [#allocation7], 1

</llo_original>
